<compile_context>
chip_gen: v7x
topology: tpu7x:2x2x1
jax: 0.10.0
libtpu: 0.0.40
codegen_flags: <defaults>
</compile_context>

<pallas_src>
import math

import jax
import jax.numpy as jnp
from jax.experimental import pallas as pl
from jax.experimental.pallas import tpu as pltpu


def _gelu_exact(x):
    # nn.GELU() default (erf-based), computed in f32.
    return 0.5 * x * (1.0 + jax.lax.erf(x * (1.0 / math.sqrt(2.0))))


# --------------------------------------------------------------------------------------
# Kernel 1: MLP (3 linears + exact GELU) and L2-normalization of the original input.
# Gridded over batch tiles only; weights have constant block indices (fetched once,
# single-buffered) and stay VMEM-resident.
# --------------------------------------------------------------------------------------
def mlp_kernel(x_ref, w1_ref, b1_ref, w2_ref, b2_ref, w3_ref, b3_ref,
               xproj_ref, xn_ref):
    x = x_ref[...]                                      # f32

    # ---- MLP: bf16 MXU matmuls, f32 accumulation, f32 bias + GELU ----
    h = jnp.dot(x.astype(jnp.bfloat16), w1_ref[...],
                preferred_element_type=jnp.float32) + b1_ref[...]
    h = _gelu_exact(h)
    h = jnp.dot(h.astype(jnp.bfloat16), w2_ref[...],
                preferred_element_type=jnp.float32) + b2_ref[...]
    h = _gelu_exact(h)
    proj = jnp.dot(h.astype(jnp.bfloat16), w3_ref[...],
                   preferred_element_type=jnp.float32) + b3_ref[...]
    xproj_ref[...] = proj.astype(xproj_ref.dtype)

    # ---- L2-normalize ORIGINAL x (F.normalize p=2, dim=-1, eps=1e-12) ----
    # Single EUP rsqrt; clamp on the squared norm == clamp on the norm at 1e-12.
    sq = jnp.sum(x * x, axis=-1, keepdims=True)
    inv = jax.lax.rsqrt(jnp.maximum(sq, 1e-24))
    xn_ref[...] = (x * inv).astype(xn_ref.dtype)


# --------------------------------------------------------------------------------------
# Kernel 2: weight-normed last layer, tiled over (out_dim, batch).
# scale = g / ||V[:, o]|| is precomputed in f32 and applied AFTER the MXU matmul.
# --------------------------------------------------------------------------------------
def logits_kernel(xn_ref, v_ref, scale_ref, out_ref):
    acc = jnp.dot(xn_ref[...], v_ref[...], preferred_element_type=jnp.float32)
    out_ref[...] = (acc * scale_ref[...]).astype(out_ref.dtype)


# --------------------------------------------------------------------------------------
# Tiling / VMEM helpers.
# --------------------------------------------------------------------------------------
def _vmem_capacity_bytes():
    try:
        return int(pltpu.get_tpu_info().vmem_capacity_bytes)
    except Exception:
        return 64 << 20          # conservative fallback: v7x physical VMEM


def _resident_spec(shape):
    """Constant-index block (fetched exactly once): single-buffer it so resident
    weights cost half the VMEM (matters at hidden=2048 on v5e / v7x)."""
    idx = lambda *_: (0,) * len(shape)
    try:
        return pl.BlockSpec(shape, idx, pipeline_mode=pl.Buffered(1))
    except Exception:            # older jax without pipeline_mode / Buffered
        return pl.BlockSpec(shape, idx)


def _pick_batch_tile(B):
    # MXU-friendly M tiles: 512/256 (multiples of the 256-wide v6e/v7x MXU, and of
    # 128 for v5e).  >= 512 rows per V byte pushes the logits matmul MXU-bound on
    # v6e.  Small batches use a single full-size block.  Ragged last tiles are
    # masked by Pallas.
    if B <= 256:
        return B
    if B % 512 == 0 or B >= 1024:
        return 512
    return 256


def _logits_vmem_bytes(tb, in_dim, tn):
    return (2 * in_dim * tn * 2      # V tile (bf16), double-buffered
            + 2 * tb * in_dim * 2    # x_n tile (bf16), double-buffered
            + 2 * tb * tn * 4        # logits tile (f32), double-buffered
            + 2 * tn * 4)            # scale row (f32)


def _pick_out_tile(out_dim, in_dim, tb, budget):
    # Largest lane-dense (multiple of 128) tile that fits the per-generation VMEM
    # budget.  With budget = physical_VMEM / 2 this gives tn=2048 on v7x (64 MiB
    # VMEM) and tn=4096 on v5e/v6e (128 MiB) at production in_dim=2048.
    if out_dim <= 128:
        return out_dim
    for tn in (4096, 2048, 1024, 512, 256, 128):
        if tn <= out_dim and _logits_vmem_bytes(tb, in_dim, tn) <= budget:
            return tn
    return 128


# --------------------------------------------------------------------------------------
# Fused forward.
# --------------------------------------------------------------------------------------
@jax.jit
def dino_head_forward(x, aux_preds, params):
    """Fused DINOHead forward.  x: (B, in_dim) f32 -> (x_proj, logits, aux_preds)."""
    B, in_dim = x.shape
    w1, b1 = params["w1"], params["b1"]
    w2, b2 = params["w2"], params["b2"]
    w3, b3 = params["w3"], params["b3"]
    v, scale = params["v"], params["scale"]
    hidden = w1.shape[1]
    bottleneck = w3.shape[1]
    out_dim = v.shape[1]

    cap = _vmem_capacity_bytes()
    tb = _pick_batch_tile(B)
    nb = pl.cdiv(B, tb)

    # ---- call 1: MLP + L2 normalize (runs exactly once per batch tile) ----
    mlp_need = (2 * (in_dim * hidden + hidden * hidden + hidden * bottleneck)  # bf16 W, 1 buf
                + 4 * 4 * (2 * hidden + bottleneck)                            # f32 biases
                + 2 * tb * in_dim * 4                                          # x (f32), dbl
                + 2 * tb * bottleneck * 4                                      # x_proj (f32), dbl
                + 2 * tb * in_dim * 2                                          # x_n (bf16), dbl
                + 3 * tb * max(in_dim, hidden) * 4)                            # live f32 temps
    flops1 = 2 * B * (in_dim * hidden + hidden * hidden + hidden * bottleneck)
    bytes1 = (B * in_dim * 4
              + 2 * (in_dim * hidden + hidden * hidden + hidden * bottleneck)
              + 4 * (2 * hidden + bottleneck)
              + B * bottleneck * 4 + B * in_dim * 2)

    x_proj, x_n = pl.pallas_call(
        mlp_kernel,
        out_shape=(
            jax.ShapeDtypeStruct((B, bottleneck), jnp.float32),
            jax.ShapeDtypeStruct((B, in_dim), jnp.bfloat16),   # bf16 feed for call-2 MXU
        ),
        grid=(nb,),
        in_specs=[
            pl.BlockSpec((tb, in_dim), lambda i: (i, 0)),
            _resident_spec((in_dim, hidden)),
            _resident_spec((1, hidden)),
            _resident_spec((hidden, hidden)),
            _resident_spec((1, hidden)),
            _resident_spec((hidden, bottleneck)),
            _resident_spec((1, bottleneck)),
        ],
        out_specs=(
            pl.BlockSpec((tb, bottleneck), lambda i: (i, 0)),
            pl.BlockSpec((tb, in_dim), lambda i: (i, 0)),
        ),
        compiler_params=pltpu.CompilerParams(
            dimension_semantics=("parallel",),
            vmem_limit_bytes=int(min(cap, mlp_need + (16 << 20)))),
        cost_estimate=pl.CostEstimate(
            flops=int(flops1),
            transcendentals=int(B * (2 * hidden + 1)),   # 2 GELU (erf) layers + rsqrt
            bytes_accessed=int(bytes1)),
    )(x, w1, b1, w2, b2, w3, b3)

    # ---- call 2: weight-normed logits.  Grid is (out_dim tiles, batch tiles) with
    # batch as the INNER axis: the V block index (0, j) is constant over the inner
    # loop, so V (the dominant HBM operand) is streamed through VMEM exactly once;
    # only the much smaller x_n stream is revisited per out_dim tile. ----
    tn = _pick_out_tile(out_dim, in_dim, tb, cap // 2)
    gn = pl.cdiv(out_dim, tn)
    vmem2 = int(min(cap, _logits_vmem_bytes(tb, in_dim, tn) + (16 << 20)))
    flops2 = 2 * B * in_dim * out_dim
    bytes2 = (gn * B * in_dim * 2        # x_n re-streamed once per out_dim tile
              + in_dim * out_dim * 2     # V streamed exactly once
              + out_dim * 4              # scale
              + B * out_dim * 4)         # f32 logits writeback
    # TODO(synk): optional per-column int8 (v5e/v6e) / fp8 (v7x) V and bf16 logits
    # would halve the two dominant HBM streams; needs a numerics sign-off.

    logits = pl.pallas_call(
        logits_kernel,
        out_shape=jax.ShapeDtypeStruct((B, out_dim), jnp.float32),
        grid=(gn, nb),
        in_specs=[
            pl.BlockSpec((tb, in_dim), lambda j, i: (i, 0)),
            pl.BlockSpec((in_dim, tn), lambda j, i: (0, j)),   # constant over inner i
            pl.BlockSpec((1, tn), lambda j, i: (0, j)),
        ],
        out_specs=pl.BlockSpec((tb, tn), lambda j, i: (i, j)),
        compiler_params=pltpu.CompilerParams(
            # Megacore splits the outer out_dim axis (keeps total V traffic at 1x).
            dimension_semantics=("parallel", "arbitrary"),
            vmem_limit_bytes=vmem2),
        cost_estimate=pl.CostEstimate(
            flops=int(flops2), transcendentals=0, bytes_accessed=int(bytes2)),
    )(x_n, v, scale)

    return x_proj, logits, aux_preds


# --------------------------------------------------------------------------------------
# Parameter init (trunc_normal std=0.02, zero bias, weight_g = 1) and JAX reference.
# --------------------------------------------------------------------------------------
def init_params(key, in_dim, out_dim, hidden_dim, bottleneck_dim):
    """Weights stored pre-transposed (fan_in, fan_out) in bf16; the weight-norm
    scale g/||V_col|| is precomputed once in f32 (changes only when weights change)."""
    ks = jax.random.split(key, 4)

    def tn(k, shape):
        return 0.02 * jax.random.truncated_normal(k, -2.0, 2.0, shape, jnp.float32)

    w1 = tn(ks[0], (in_dim, hidden_dim)).astype(jnp.bfloat16)
    w2 = tn(ks[1], (hidden_dim, hidden_dim)).astype(jnp.bfloat16)
    w3 = tn(ks[2], (hidden_dim, bottleneck_dim)).astype(jnp.bfloat16)
    v = tn(ks[3], (in_dim, out_dim)).astype(jnp.bfloat16)           # weight_norm direction
    g = jnp.ones((1, out_dim), jnp.float32)                          # weight_norm magnitude

    v32 = v.astype(jnp.float32)
    scale = g / jnp.sqrt(jnp.sum(v32 * v32, axis=0, keepdims=True))  # f32 column norms

    return {
        "w1": w1, "b1": jnp.zeros((1, hidden_dim), jnp.float32),
        "w2": w2, "b2": jnp.zeros((1, hidden_dim), jnp.float32),
        "w3": w3, "b3": jnp.zeros((1, bottleneck_dim), jnp.float32),
        "v": v, "g": g, "scale": scale,
    }


def reference_forward(x, aux_preds, params):
    """Plain-JAX f32 reference (same bf16-stored weights, upcast) for sanity checking."""
    w1 = params["w1"].astype(jnp.float32)
    w2 = params["w2"].astype(jnp.float32)
    w3 = params["w3"].astype(jnp.float32)
    v = params["v"].astype(jnp.float32)
    h = _gelu_exact(x @ w1 + params["b1"])
    h = _gelu_exact(h @ w2 + params["b2"])
    x_proj = h @ w3 + params["b3"]
    x_n = x / jnp.maximum(jnp.linalg.norm(x, axis=-1, keepdims=True), 1e-12)
    logits = (x_n @ v) * params["scale"]
    return x_proj, logits, aux_preds


if __name__ == "__main__":
    # Small but lane-dense shapes chosen so both grid axes of the logits call are
    # exercised (gn=2 out_dim tiles, nb=3 batch tiles with tb=256).
    B = 768
    in_dim = 128
    hidden_dim = 256
    bottleneck_dim = 128
    out_dim = 8192

    key = jax.random.PRNGKey(0)
    k_x, k_aux, k_p = jax.random.split(key, 3)
    x = jax.random.normal(k_x, (B, in_dim), jnp.float32)
    aux_preds = jax.random.normal(k_aux, (B, 4), jnp.float32)   # opaque pass-through
    params = init_params(k_p, in_dim, out_dim, hidden_dim, bottleneck_dim)

    x_proj, logits, aux_out = dino_head_forward(x, aux_preds, params)
    jax.block_until_ready((x_proj, logits, aux_out))

    # Sanity check against the plain-JAX reference (bf16-activation tolerance).
    rp, rl, _ = reference_forward(x, aux_preds, params)
    assert x_proj.shape == (B, bottleneck_dim)
    assert logits.shape == (B, out_dim)
    assert jnp.allclose(x_proj, rp, atol=5e-3, rtol=2e-2)
    assert jnp.allclose(logits, rl, atol=5e-3, rtol=2e-2)
    assert jnp.array_equal(aux_out, aux_preds)

    print("KERNEL_OK")
</pallas_src>

<mosaic_0001>
module attributes {stable_mosaic.version = 11 : i64} {
  func.func @logits_kernel(%arg0: i32, %arg1: i32, %arg2: memref<256x128xbf16, #tpu.memory_space<vmem>>, %arg3: memref<128x4096xbf16, #tpu.memory_space<vmem>>, %arg4: memref<1x4096xf32, #tpu.memory_space<vmem>>, %arg5: memref<256x4096xf32, #tpu.memory_space<vmem>>) attributes {dimension_semantics = [#tpu.dimension_semantics<parallel>, #tpu.dimension_semantics<arbitrary>], iteration_bounds = array<i64: 2, 3>, scalar_prefetch = 0 : i64, scratch_operands = 0 : i64, tpu.core_type = #tpu.core_type<tc>, window_params = [{transform_indices = @transform_0, window_bounds = array<i64: 256, 128>}, {transform_indices = @transform_1, window_bounds = array<i64: 128, 4096>}, {transform_indices = @transform_2, window_bounds = array<i64: 1, 4096>}, {transform_indices = @transform_3, window_bounds = array<i64: 256, 4096>}]} {
    %c0 = arith.constant 0 : index
    %c0_0 = arith.constant 0 : index
    %0 = vector.load %arg2[%c0, %c0_0] : memref<256x128xbf16, #tpu.memory_space<vmem>>, vector<256x128xbf16>
    %c0_1 = arith.constant 0 : index
    %c0_2 = arith.constant 0 : index
    %1 = vector.load %arg3[%c0_1, %c0_2] : memref<128x4096xbf16, #tpu.memory_space<vmem>>, vector<128x4096xbf16>
    %cst = arith.constant dense<0.000000e+00> : vector<256x4096xf32>
    %2 = tpu.matmul %0, %1, %cst {dimension_numbers = #tpu.dot_dimension_numbers<[1], [0], [0], [1], [0, 0, 1, 1], [], []>} : vector<256x128xbf16>, vector<128x4096xbf16>, vector<256x4096xf32> -> vector<256x4096xf32>
    %c0_3 = arith.constant 0 : index
    %c0_4 = arith.constant 0 : index
    %3 = vector.load %arg4[%c0_3, %c0_4] : memref<1x4096xf32, #tpu.memory_space<vmem>>, vector<1x4096xf32>
    %4 = vector.broadcast %3 : vector<1x4096xf32> to vector<256x4096xf32>
    %5 = arith.mulf %2, %4 : vector<256x4096xf32>
    %c0_5 = arith.constant 0 : index
    %c0_6 = arith.constant 0 : index
    %6 = vector.load %arg5[%c0_5, %c0_6] : memref<256x4096xf32, #tpu.memory_space<vmem>>, vector<256x4096xf32>
    tpu.vector_store %arg5[%c0_5, %c0_6], %5 {strides = array<i32>} : memref<256x4096xf32, #tpu.memory_space<vmem>>, vector<256x4096xf32>,
    return
  }
  func.func @transform_0(%arg0: i32, %arg1: i32) -> (i32, i32) {
    %c0_i32 = arith.constant 0 : i32
    %c0_i32_0 = arith.constant 0 : i32
    return %arg1, %c0_i32 : i32, i32
  }
  func.func @transform_1(%arg0: i32, %arg1: i32) -> (i32, i32) {
    %c0_i32 = arith.constant 0 : i32
    %c0_i32_0 = arith.constant 0 : i32
    return %c0_i32, %arg0 : i32, i32
  }
  func.func @transform_2(%arg0: i32, %arg1: i32) -> (i32, i32) {
    %c0_i32 = arith.constant 0 : i32
    %c0_i32_0 = arith.constant 0 : i32
    return %c0_i32, %arg0 : i32, i32
  }
  func.func @transform_3(%arg0: i32, %arg1: i32) -> (i32, i32) {
    %c0_i32 = arith.constant 0 : i32
    return %arg1, %arg0 : i32, i32
  }
}

module attributes {stable_mosaic.version = 11 : i64} {
  func.func @mlp_kernel(%arg0: i32, %arg1: memref<256x128xf32, #tpu.memory_space<vmem>>, %arg2: memref<128x256xbf16, #tpu.memory_space<vmem>>, %arg3: memref<1x256xf32, #tpu.memory_space<vmem>>, %arg4: memref<256x256xbf16, #tpu.memory_space<vmem>>, %arg5: memref<1x256xf32, #tpu.memory_space<vmem>>, %arg6: memref<256x128xbf16, #tpu.memory_space<vmem>>, %arg7: memref<1x128xf32, #tpu.memory_space<vmem>>, %arg8: memref<256x128xf32, #tpu.memory_space<vmem>>, %arg9: memref<256x128xbf16, #tpu.memory_space<vmem>>) attributes {dimension_semantics = [#tpu.dimension_semantics<parallel>], iteration_bounds = array<i64: 3>, scalar_prefetch = 0 : i64, scratch_operands = 0 : i64, tpu.core_type = #tpu.core_type<tc>, window_params = [{transform_indices = @transform_0, window_bounds = array<i64: 256, 128>}, {pipeline_mode = #tpu.pipeline_mode<synchronous>, transform_indices = @transform_1, window_bounds = array<i64: 128, 256>}, {pipeline_mode = #tpu.pipeline_mode<synchronous>, transform_indices = @transform_2, window_bounds = array<i64: 1, 256>}, {pipeline_mode = #tpu.pipeline_mode<synchronous>, transform_indices = @transform_3, window_bounds = array<i64: 256, 256>}, {pipeline_mode = #tpu.pipeline_mode<synchronous>, transform_indices = @transform_4, window_bounds = array<i64: 1, 256>}, {pipeline_mode = #tpu.pipeline_mode<synchronous>, transform_indices = @transform_5, window_bounds = array<i64: 256, 128>}, {pipeline_mode = #tpu.pipeline_mode<synchronous>, transform_indices = @transform_6, window_bounds = array<i64: 1, 128>}, {transform_indices = @transform_7, window_bounds = array<i64: 256, 128>}, {transform_indices = @transform_8, window_bounds = array<i64: 256, 128>}]} {
    %c0 = arith.constant 0 : index
    %c0_0 = arith.constant 0 : index
    %0 = vector.load %arg1[%c0, %c0_0] : memref<256x128xf32, #tpu.memory_space<vmem>>, vector<256x128xf32>
    %1 = arith.truncf %0 : vector<256x128xf32> to vector<256x128xbf16>
    %c0_1 = arith.constant 0 : index
    %c0_2 = arith.constant 0 : index
    %2 = vector.load %arg2[%c0_1, %c0_2] : memref<128x256xbf16, #tpu.memory_space<vmem>>, vector<128x256xbf16>
    %cst = arith.constant dense<0.000000e+00> : vector<256x256xf32>
    %3 = tpu.matmul %1, %2, %cst {dimension_numbers = #tpu.dot_dimension_numbers<[1], [0], [0], [1], [0, 0, 1, 1], [], []>} : vector<256x128xbf16>, vector<128x256xbf16>, vector<256x256xf32> -> vector<256x256xf32>
    %c0_3 = arith.constant 0 : index
    %c0_4 = arith.constant 0 : index
    %4 = vector.load %arg3[%c0_3, %c0_4] : memref<1x256xf32, #tpu.memory_space<vmem>>, vector<1x256xf32>
    %5 = vector.broadcast %4 : vector<1x256xf32> to vector<256x256xf32>
    %6 = arith.addf %3, %5 : vector<256x256xf32>
    %cst_5 = arith.constant 5.000000e-01 : f32
    %7 = vector.broadcast %cst_5 : f32 to vector<256x256xf32>
    %8 = arith.mulf %7, %6 : vector<256x256xf32>
    %cst_6 = arith.constant 0.707106769 : f32
    %9 = vector.broadcast %cst_6 : f32 to vector<256x256xf32>
    %10 = arith.mulf %6, %9 : vector<256x256xf32>
    %11 = math.erf %10 : vector<256x256xf32>
    %cst_7 = arith.constant 1.000000e+00 : f32
    %12 = vector.broadcast %cst_7 : f32 to vector<256x256xf32>
    %13 = arith.addf %12, %11 : vector<256x256xf32>
    %14 = arith.mulf %8, %13 : vector<256x256xf32>
    %15 = arith.truncf %14 : vector<256x256xf32> to vector<256x256xbf16>
    %c0_8 = arith.constant 0 : index
    %c0_9 = arith.constant 0 : index
    %16 = vector.load %arg4[%c0_8, %c0_9] : memref<256x256xbf16, #tpu.memory_space<vmem>>, vector<256x256xbf16>
    %cst_10 = arith.constant dense<0.000000e+00> : vector<256x256xf32>
    %17 = tpu.matmul %15, %16, %cst_10 {dimension_numbers = #tpu.dot_dimension_numbers<[1], [0], [0], [1], [0, 0, 1, 1], [], []>} : vector<256x256xbf16>, vector<256x256xbf16>, vector<256x256xf32> -> vector<256x256xf32>
    %c0_11 = arith.constant 0 : index
    %c0_12 = arith.constant 0 : index
    %18 = vector.load %arg5[%c0_11, %c0_12] : memref<1x256xf32, #tpu.memory_space<vmem>>, vector<1x256xf32>
    %19 = vector.broadcast %18 : vector<1x256xf32> to vector<256x256xf32>
    %20 = arith.addf %17, %19 : vector<256x256xf32>
    %cst_13 = arith.constant 5.000000e-01 : f32
    %21 = vector.broadcast %cst_13 : f32 to vector<256x256xf32>
    %22 = arith.mulf %21, %20 : vector<256x256xf32>
    %cst_14 = arith.constant 0.707106769 : f32
    %23 = vector.broadcast %cst_14 : f32 to vector<256x256xf32>
    %24 = arith.mulf %20, %23 : vector<256x256xf32>
    %25 = math.erf %24 : vector<256x256xf32>
    %cst_15 = arith.constant 1.000000e+00 : f32
    %26 = vector.broadcast %cst_15 : f32 to vector<256x256xf32>
    %27 = arith.addf %26, %25 : vector<256x256xf32>
    %28 = arith.mulf %22, %27 : vector<256x256xf32>
    %29 = arith.truncf %28 : vector<256x256xf32> to vector<256x256xbf16>
    %c0_16 = arith.constant 0 : index
    %c0_17 = arith.constant 0 : index
    %30 = vector.load %arg6[%c0_16, %c0_17] : memref<256x128xbf16, #tpu.memory_space<vmem>>, vector<256x128xbf16>
    %cst_18 = arith.constant dense<0.000000e+00> : vector<256x128xf32>
    %31 = tpu.matmul %29, %30, %cst_18 {dimension_numbers = #tpu.dot_dimension_numbers<[1], [0], [0], [1], [0, 0, 1, 1], [], []>} : vector<256x256xbf16>, vector<256x128xbf16>, vector<256x128xf32> -> vector<256x128xf32>
    %c0_19 = arith.constant 0 : index
    %c0_20 = arith.constant 0 : index
    %32 = vector.load %arg7[%c0_19, %c0_20] : memref<1x128xf32, #tpu.memory_space<vmem>>, vector<1x128xf32>
    %33 = vector.broadcast %32 : vector<1x128xf32> to vector<256x128xf32>
    %34 = arith.addf %31, %33 : vector<256x128xf32>
    %c0_21 = arith.constant 0 : index
    %c0_22 = arith.constant 0 : index
    %35 = vector.load %arg8[%c0_21, %c0_22] : memref<256x128xf32, #tpu.memory_space<vmem>>, vector<256x128xf32>
    tpu.vector_store %arg8[%c0_21, %c0_22], %34 {strides = array<i32>} : memref<256x128xf32, #tpu.memory_space<vmem>>, vector<256x128xf32>,
    %36 = arith.mulf %0, %0 : vector<256x128xf32>
    %cst_23 = arith.constant dense<0.000000e+00> : vector<256xf32>
    %37 = vector.multi_reduction <add>, %36, %cst_23 [1] : vector<256x128xf32> to vector<256xf32>
    %38 = vector.shape_cast %37 : vector<256xf32> to vector<256x1xf32>
    %cst_24 = arith.constant 1.000000e-24 : f32
    %39 = vector.broadcast %cst_24 : f32 to vector<256x1xf32>
    %40 = arith.maximumf %38, %39 : vector<256x1xf32>
    %41 = math.rsqrt %40 : vector<256x1xf32>
    %42 = vector.broadcast %41 : vector<256x1xf32> to vector<256x128xf32>
    %43 = arith.mulf %0, %42 : vector<256x128xf32>
    %44 = arith.truncf %43 : vector<256x128xf32> to vector<256x128xbf16>
    %c0_25 = arith.constant 0 : index
    %c0_26 = arith.constant 0 : index
    %45 = vector.load %arg9[%c0_25, %c0_26] : memref<256x128xbf16, #tpu.memory_space<vmem>>, vector<256x128xbf16>
    tpu.vector_store %arg9[%c0_25, %c0_26], %44 {strides = array<i32>} : memref<256x128xbf16, #tpu.memory_space<vmem>>, vector<256x128xbf16>,
    return
  }
  func.func @transform_0(%arg0: i32) -> (i32, i32) {
    %c0_i32 = arith.constant 0 : i32
    %c0_i32_0 = arith.constant 0 : i32
    return %arg0, %c0_i32 : i32, i32
  }
  func.func @transform_1(%arg0: i32) -> (i32, i32) {
    %c0_i32 = arith.constant 0 : i32
    %c0_i32_0 = arith.constant 0 : i32
    %c0_i32_1 = arith.constant 0 : i32
    return %c0_i32, %c0_i32_0 : i32, i32
  }
  func.func @transform_2(%arg0: i32) -> (i32, i32) {
    %c0_i32 = arith.constant 0 : i32
    %c0_i32_0 = arith.constant 0 : i32
    %c0_i32_1 = arith.constant 0 : i32
    return %c0_i32, %c0_i32_0 : i32, i32
  }
  func.func @transform_3(%arg0: i32) -> (i32, i32) {
    %c0_i32 = arith.constant 0 : i32
    %c0_i32_0 = arith.constant 0 : i32
    %c0_i32_1 = arith.constant 0 : i32
    return %c0_i32, %c0_i32_0 : i32, i32
  }
  func.func @transform_4(%arg0: i32) -> (i32, i32) {
    %c0_i32 = arith.constant 0 : i32
    %c0_i32_0 = arith.constant 0 : i32
    %c0_i32_1 = arith.constant 0 : i32
    return %c0_i32, %c0_i32_0 : i32, i32
  }
  func.func @transform_5(%arg0: i32) -> (i32, i32) {
    %c0_i32 = arith.constant 0 : i32
    %c0_i32_0 = arith.constant 0 : i32
    %c0_i32_1 = arith.constant 0 : i32
    return %c0_i32, %c0_i32_0 : i32, i32
  }
  func.func @transform_6(%arg0: i32) -> (i32, i32) {
    %c0_i32 = arith.constant 0 : i32
    %c0_i32_0 = arith.constant 0 : i32
    %c0_i32_1 = arith.constant 0 : i32
    return %c0_i32, %c0_i32_0 : i32, i32
  }
  func.func @transform_7(%arg0: i32) -> (i32, i32) {
    %c0_i32 = arith.constant 0 : i32
    %c0_i32_0 = arith.constant 0 : i32
    return %arg0, %c0_i32 : i32, i32
  }
  func.func @transform_8(%arg0: i32) -> (i32, i32) {
    %c0_i32 = arith.constant 0 : i32
    %c0_i32_0 = arith.constant 0 : i32
    return %arg0, %c0_i32 : i32, i32
  }
}

</mosaic_0001>

<llo_original>
// kernel: dino_head_forward.2
$region0: #{dino_head_forward.2}
  #allocation0 [shape = 'u32[]', space=smem, size = 0x4, offset = 0x4, fixed_abs, tag = 'smem constant byte address 0x4 - core index']
  #allocation1 [shape = 'u32[144,128]{1,0:T(1,128)}', space=vmem, size = 0x12000, scoped, tag = 'internal scratch']
  %s0 = inlined_call_operand.hbm [shape: f32[768,128], index: 0, kind: input, shape index: {}]
  %s1 = inlined_call_operand.hbm [shape: bf16[128,256], index: 1, kind: input, shape index: {}]
  %s2 = inlined_call_operand.hbm [shape: f32[1,256], index: 2, kind: input, shape index: {}]
  %s3 = inlined_call_operand.hbm [shape: bf16[256,256], index: 3, kind: input, shape index: {}]
  %s4 = inlined_call_operand.hbm [shape: f32[1,256], index: 4, kind: input, shape index: {}]
  %s5 = inlined_call_operand.hbm [shape: bf16[256,128], index: 5, kind: input, shape index: {}]
  %s6 = inlined_call_operand.hbm [shape: f32[1,128], index: 6, kind: input, shape index: {}]
  %s7 = inlined_call_operand.hbm [shape: f32[768,128], index: 7, kind: output, shape index: {0}]
  %s8 = inlined_call_operand.vmem [shape: bf16[768,128], index: 8, kind: output, shape index: {1}]
  %9 = xla_tuple %s7, %s8
  %s10 = sld [smem:[#allocation0]]
  $region97: #{dino_head_forward.2} parent=0
    _
  %s12 = ssub.s32 1, %s10
  %s13 = scalar_select 0, %s12, %s10
  $region1: #{dino_head_forward.2} parent=0
    #allocation2 [shape = 'u8[262144]{0}', space=vmem, size = 0x40000, scoped, tag = 'input window, operand 0']
    #allocation3 [shape = 's32[2]{0}', space=sflag, size = 0x8, scoped, tag = 'scoped memory for dino_head_forward.2']
    #allocation4 [shape = 's32[2]{0}', space=sflag, size = 0x8, scoped, tag = 'scoped memory for dino_head_forward.2']
    #allocation5 [shape = 'u8[65536]{0}', space=vmem, size = 0x10000, scoped, tag = 'input window, operand 1, single buffered']
    #allocation6 [shape = 's32[1]{0}', space=sflag, size = 0x4, scoped, tag = 'scoped memory for dino_head_forward.2']
    #allocation7 [shape = 'u8[1024]{0}', space=vmem, size = 0x400, scoped, tag = 'input window, operand 2, single buffered']
    #allocation8 [shape = 'u8[131072]{0}', space=vmem, size = 0x20000, scoped, tag = 'input window, operand 3, single buffered']
    #allocation9 [shape = 's32[1]{0}', space=sflag, size = 0x4, scoped, tag = 'scoped memory for dino_head_forward.2']
    #allocation10 [shape = 'u8[1024]{0}', space=vmem, size = 0x400, scoped, tag = 'input window, operand 4, single buffered']
    #allocation11 [shape = 'u8[65536]{0}', space=vmem, size = 0x10000, scoped, tag = 'input window, operand 5, single buffered']
    #allocation12 [shape = 's32[1]{0}', space=sflag, size = 0x4, scoped, tag = 'scoped memory for dino_head_forward.2']
    #allocation13 [shape = 'u8[512]{0}', space=vmem, size = 0x400, scoped, tag = 'input window, operand 6, single buffered']
    #allocation14 [shape = 'u8[262144]{0}', space=vmem, size = 0x40000, scoped, tag = 'output window, operand 0']
    %14 = vsyncpa [#allocation3], 0
    %s15 = scalar_lea.sflag [#allocation3], 1
    %16 = vsyncpa %s15, 0
    %17 = vsyncpa [#allocation6], 0
    %18 = vsyncpa [#allocation9], 0
    %19 = vsyncpa [#allocation12], 0
    %20 = vsyncpa [#allocation4], 0
    %s21 = scalar_lea.sflag [#allocation4], 1
    %22 = vsyncpa %s21, 0
    loop: start=0, step=1, limit=5
    $region2: #{dino_head_forward.2} parent=1 // loop_pre_header
      _
    $region3: #{dino_head_forward.2} parent=1 // loop_header
      %s24 = sphi 0, %s28
      %p25 = scmp.ge.s32.totalorder %s24, 5
      %s34 = sphi 0, %s36
      %s37 = sphi 0, %s34
      %s38 = sphi 0, %s37
      %s54 = sphi 0, %s38
      %s58 = sphi 0, %s58
      %s60 = sphi 0, %s58
      %s61 = sphi 0, %s60
      %s75 = sphi 0, %s61
      %s79 = sphi 0, %s79
      %s81 = sphi 0, %s79
      %s82 = sphi 0, %s81
      %s96 = sphi 0, %s82
      %s100 = sphi 0, %s100
      %s102 = sphi 0, %s100
      %s103 = sphi 0, %s102
      %s117 = sphi 0, %s103
      %s121 = sphi 0, %s121
      %s123 = sphi 0, %s121
      %s124 = sphi 0, %s123
      %s138 = sphi 0, %s124
      %s142 = sphi 0, %s142
      %s144 = sphi 0, %s142
      %s145 = sphi 0, %s144
      %s159 = sphi 0, %s145
      %s163 = sphi 0, %s163
      %s165 = sphi 0, %s163
      %s166 = sphi 0, %s165
      %s180 = sphi 0, %s166
      %s186 = sphi 0, %s188
      %s189 = sphi 0, %s186
      %s190 = sphi 0, %s189
      %s206 = sphi 0, %s190
      %s212 = sphi 0, %s214
      %s215 = sphi 0, %s212
      %s216 = sphi 0, %s215
      %s232 = sphi 0, %s216
    $region4: #{dino_head_forward.2} parent=1 // loop_header_branch
      %27 = sbr.rel (%p25) target = $region8
    $region5: #{dino_head_forward.2} parent=1 // loop_body
      %s29 = ssub.s32 %s24, 1
      %s30 = ssub.s32 %s24, 2
      %s31 = sadd.s32 %s24, 1
      %s32 = ssub.s32 %s24, %s31
      %p33 = scmp.eq.s32.totalorder %s32, 0
      %s35 = sadd.s32 %s34, 1
      %s36 = scalar_select %p33, %s34, %s35
      %p39 = pneg %p33
      %p40 = scmp.eq.s32.totalorder %s24, 2
      %p41 = por %p39, %p40
      %p42 = scmp.ne.s32.totalorder %s34, %s37
      %p43 = scmp.eq.s32.totalorder %s24, 0
      %p44 = por %p42, %p43
      %p45 = scmp.ne.s32.totalorder %s34, %s37
      %p46 = scmp.eq.s32.totalorder %s29, 2
      %p47 = por %p45, %p46
      %p48 = scmp.ne.s32.totalorder %s37, %s38
      %p49 = scmp.eq.s32.totalorder %s29, 0
      %p50 = por %p48, %p49
      %p51 = scmp.ne.s32.totalorder %s37, %s38
      %p52 = scmp.eq.s32.totalorder %s30, 2
      %p53 = por %p51, %p52
      %p55 = scmp.ne.s32.totalorder %s38, %s54
      %p56 = scmp.eq.s32.totalorder %s30, 0
      %p57 = por %p55, %p56
      %s59 = sadd.s32 %s58, 1
      %p62 = scmp.eq.s32.totalorder %s24, 2
      %p63 = scmp.ne.s32.totalorder %s58, %s60
      %p64 = scmp.eq.s32.totalorder %s24, 0
      %p65 = por %p63, %p64
      %p66 = scmp.ne.s32.totalorder %s58, %s60
      %p67 = scmp.eq.s32.totalorder %s29, 2
      %p68 = por %p66, %p67
      %p69 = scmp.ne.s32.totalorder %s60, %s61
      %p70 = scmp.eq.s32.totalorder %s29, 0
      %p71 = por %p69, %p70
      %p72 = scmp.ne.s32.totalorder %s60, %s61
      %p73 = scmp.eq.s32.totalorder %s30, 2
      %p74 = por %p72, %p73
      %p76 = scmp.ne.s32.totalorder %s61, %s75
      %p77 = scmp.eq.s32.totalorder %s30, 0
      %p78 = por %p76, %p77
      %s80 = sadd.s32 %s79, 1
      %p83 = scmp.eq.s32.totalorder %s24, 2
      %p84 = scmp.ne.s32.totalorder %s79, %s81
      %p85 = scmp.eq.s32.totalorder %s24, 0
      %p86 = por %p84, %p85
      %p87 = scmp.ne.s32.totalorder %s79, %s81
      %p88 = scmp.eq.s32.totalorder %s29, 2
      %p89 = por %p87, %p88
      %p90 = scmp.ne.s32.totalorder %s81, %s82
      %p91 = scmp.eq.s32.totalorder %s29, 0
      %p92 = por %p90, %p91
      %p93 = scmp.ne.s32.totalorder %s81, %s82
      %p94 = scmp.eq.s32.totalorder %s30, 2
      %p95 = por %p93, %p94
      %p97 = scmp.ne.s32.totalorder %s82, %s96
      %p98 = scmp.eq.s32.totalorder %s30, 0
      %p99 = por %p97, %p98
      %s101 = sadd.s32 %s100, 1
      %p104 = scmp.eq.s32.totalorder %s24, 2
      %p105 = scmp.ne.s32.totalorder %s100, %s102
      %p106 = scmp.eq.s32.totalorder %s24, 0
      %p107 = por %p105, %p106
      %p108 = scmp.ne.s32.totalorder %s100, %s102
      %p109 = scmp.eq.s32.totalorder %s29, 2
      %p110 = por %p108, %p109
      %p111 = scmp.ne.s32.totalorder %s102, %s103
      %p112 = scmp.eq.s32.totalorder %s29, 0
      %p113 = por %p111, %p112
      %p114 = scmp.ne.s32.totalorder %s102, %s103
      %p115 = scmp.eq.s32.totalorder %s30, 2
      %p116 = por %p114, %p115
      %p118 = scmp.ne.s32.totalorder %s103, %s117
      %p119 = scmp.eq.s32.totalorder %s30, 0
      %p120 = por %p118, %p119
      %s122 = sadd.s32 %s121, 1
      %p125 = scmp.eq.s32.totalorder %s24, 2
      %p126 = scmp.ne.s32.totalorder %s121, %s123
      %p127 = scmp.eq.s32.totalorder %s24, 0
      %p128 = por %p126, %p127
      %p129 = scmp.ne.s32.totalorder %s121, %s123
      %p130 = scmp.eq.s32.totalorder %s29, 2
      %p131 = por %p129, %p130
      %p132 = scmp.ne.s32.totalorder %s123, %s124
      %p133 = scmp.eq.s32.totalorder %s29, 0
      %p134 = por %p132, %p133
      %p135 = scmp.ne.s32.totalorder %s123, %s124
      %p136 = scmp.eq.s32.totalorder %s30, 2
      %p137 = por %p135, %p136
      %p139 = scmp.ne.s32.totalorder %s124, %s138
      %p140 = scmp.eq.s32.totalorder %s30, 0
      %p141 = por %p139, %p140
      %s143 = sadd.s32 %s142, 1
      %p146 = scmp.eq.s32.totalorder %s24, 2
      %p147 = scmp.ne.s32.totalorder %s142, %s144
      %p148 = scmp.eq.s32.totalorder %s24, 0
      %p149 = por %p147, %p148
      %p150 = scmp.ne.s32.totalorder %s142, %s144
      %p151 = scmp.eq.s32.totalorder %s29, 2
      %p152 = por %p150, %p151
      %p153 = scmp.ne.s32.totalorder %s144, %s145
      %p154 = scmp.eq.s32.totalorder %s29, 0
      %p155 = por %p153, %p154
      %p156 = scmp.ne.s32.totalorder %s144, %s145
      %p157 = scmp.eq.s32.totalorder %s30, 2
      %p158 = por %p156, %p157
      %p160 = scmp.ne.s32.totalorder %s145, %s159
      %p161 = scmp.eq.s32.totalorder %s30, 0
      %p162 = por %p160, %p161
      %s164 = sadd.s32 %s163, 1
      %p167 = scmp.eq.s32.totalorder %s24, 2
      %p168 = scmp.ne.s32.totalorder %s163, %s165
      %p169 = scmp.eq.s32.totalorder %s24, 0
      %p170 = por %p168, %p169
      %p171 = scmp.ne.s32.totalorder %s163, %s165
      %p172 = scmp.eq.s32.totalorder %s29, 2
      %p173 = por %p171, %p172
      %p174 = scmp.ne.s32.totalorder %s165, %s166
      %p175 = scmp.eq.s32.totalorder %s29, 0
      %p176 = por %p174, %p175
      %p177 = scmp.ne.s32.totalorder %s165, %s166
      %p178 = scmp.eq.s32.totalorder %s30, 2
      %p179 = por %p177, %p178
      %p181 = scmp.ne.s32.totalorder %s166, %s180
      %p182 = scmp.eq.s32.totalorder %s30, 0
      %p183 = por %p181, %p182
      %s184 = ssub.s32 %s24, %s31
      %p185 = scmp.eq.s32.totalorder %s184, 0
      %s187 = sadd.s32 %s186, 1
      %s188 = scalar_select %p185, %s186, %s187
      %p191 = pneg %p185
      %p192 = scmp.eq.s32.totalorder %s24, 2
      %p193 = por %p191, %p192
      %p194 = scmp.ne.s32.totalorder %s186, %s189
      %p195 = scmp.eq.s32.totalorder %s24, 0
      %p196 = por %p194, %p195
      %p197 = scmp.ne.s32.totalorder %s186, %s189
      %p198 = scmp.eq.s32.totalorder %s29, 2
      %p199 = por %p197, %p198
      %p200 = scmp.ne.s32.totalorder %s189, %s190
      %p201 = scmp.eq.s32.totalorder %s29, 0
      %p202 = por %p200, %p201
      %p203 = scmp.ne.s32.totalorder %s189, %s190
      %p204 = scmp.eq.s32.totalorder %s30, 2
      %p205 = por %p203, %p204
      %p207 = scmp.ne.s32.totalorder %s190, %s206
      %p208 = scmp.eq.s32.totalorder %s30, 0
      %p209 = por %p207, %p208
      %s210 = ssub.s32 %s24, %s31
      %p211 = scmp.eq.s32.totalorder %s210, 0
      %s213 = sadd.s32 %s212, 1
      %s214 = scalar_select %p211, %s212, %s213
      %p217 = pneg %p211
      %p218 = scmp.eq.s32.totalorder %s24, 2
      %p219 = por %p217, %p218
      %p220 = scmp.ne.s32.totalorder %s212, %s215
      %p221 = scmp.eq.s32.totalorder %s24, 0
      %p222 = por %p220, %p221
      %p223 = scmp.ne.s32.totalorder %s212, %s215
      %p224 = scmp.eq.s32.totalorder %s29, 2
      %p225 = por %p223, %p224
      %p226 = scmp.ne.s32.totalorder %s215, %s216
      %p227 = scmp.eq.s32.totalorder %s29, 0
      %p228 = por %p226, %p227
      %p229 = scmp.ne.s32.totalorder %s215, %s216
      %p230 = scmp.eq.s32.totalorder %s30, 2
      %p231 = por %p229, %p230
      %p233 = scmp.ne.s32.totalorder %s216, %s232
      %p234 = scmp.eq.s32.totalorder %s30, 0
      %p235 = por %p233, %p234
      %p236 = scmp.le.s32.totalorder 1, %s24
      %p237 = scmp.lt.s32.totalorder %s24, 4
      %p238 = pnand %p236, %p237
      %p239 = pneg %p238
      // Predicated region
      $region9: #{dino_head_forward.2} parent=5 // pred_check
        _
      $region10: #{dino_head_forward.2} parent=5 // pred_check_branch
        %241 = sbr.rel (%p238) target = $region12
      $region11: #{dino_head_forward.2} parent=5 // pred_region
        %s242 = ssub.s32 %s24, 1
        // Predicated region
        $region13: #{dino_head_forward.2} parent=11 // pred_check
          %p243 = pneg %p71
        $region14: #{dino_head_forward.2} parent=11 // pred_check_branch
          %245 = sbr.rel (%p243) target = $region16
        $region15: #{dino_head_forward.2} parent=11 // pred_region
          %s247 = ssub.s32 2048, 2048
          %248 = vsyncadd [#allocation6], %s247
          %s249 = sshll.u32 [#allocation5], 4
          %s250 = int_to_ptr.vmem [resolvable:$true] %s249
          %255 = dma.hbm_to_vmem [thread:$0]  %s1, 2048, %s250, [#allocation6], 128, 128, 8
        $region16: #{dino_head_forward.2} parent=11 // pred_fallthru
          _
        // Predicated region
        $region17: #{dino_head_forward.2} parent=11 // pred_check
          %p256 = pneg %p92
        $region18: #{dino_head_forward.2} parent=11 // pred_check_branch
          %258 = sbr.rel (%p256) target = $region20
        $region19: #{dino_head_forward.2} parent=11 // pred_region
          %s260 = ssub.s32 32, 32
          %261 = vsyncadd [#allocation6], %s260
          %s263 = sshll.u32 [#allocation7], 4
          %s264 = int_to_ptr.vmem [resolvable:$true] %s263
          %266 = dma.hbm_to_vmem [thread:$0]  %s2, 32, %s264, [#allocation6]
        $region20: #{dino_head_forward.2} parent=11 // pred_fallthru
          _
        // Predicated region
        $region21: #{dino_head_forward.2} parent=11 // pred_check
          %p267 = pneg %p113
        $region22: #{dino_head_forward.2} parent=11 // pred_check_branch
          %269 = sbr.rel (%p267) target = $region24
        $region23: #{dino_head_forward.2} parent=11 // pred_region
          %s271 = ssub.s32 4096, 4096
          %272 = vsyncadd [#allocation9], %s271
          %s273 = sshll.u32 [#allocation8], 4
          %s274 = int_to_ptr.vmem [resolvable:$true] %s273
          %279 = dma.hbm_to_vmem [thread:$0]  %s3, 4096, %s274, [#allocation9], 128, 128, 8
        $region24: #{dino_head_forward.2} parent=11 // pred_fallthru
          _
        // Predicated region
        $region25: #{dino_head_forward.2} parent=11 // pred_check
          %p280 = pneg %p134
        $region26: #{dino_head_forward.2} parent=11 // pred_check_branch
          %282 = sbr.rel (%p280) target = $region28
        $region27: #{dino_head_forward.2} parent=11 // pred_region
          %s284 = ssub.s32 32, 32
          %285 = vsyncadd [#allocation9], %s284
          %s287 = sshll.u32 [#allocation10], 4
          %s288 = int_to_ptr.vmem [resolvable:$true] %s287
          %290 = dma.hbm_to_vmem [thread:$0]  %s4, 32, %s288, [#allocation9]
        $region28: #{dino_head_forward.2} parent=11 // pred_fallthru
          _
        // Predicated region
        $region29: #{dino_head_forward.2} parent=11 // pred_check
          %p291 = pneg %p155
        $region30: #{dino_head_forward.2} parent=11 // pred_check_branch
          %293 = sbr.rel (%p291) target = $region32
        $region31: #{dino_head_forward.2} parent=11 // pred_region
          %s295 = ssub.s32 2048, 2048
          %296 = vsyncadd [#allocation12], %s295
          %s297 = sshll.u32 [#allocation11], 4
          %s298 = int_to_ptr.vmem [resolvable:$true] %s297
          %303 = dma.hbm_to_vmem [thread:$0]  %s5, 2048, %s298, [#allocation12], 64, 64, 4
        $region32: #{dino_head_forward.2} parent=11 // pred_fallthru
          _
        // Predicated region
        $region33: #{dino_head_forward.2} parent=11 // pred_check
          %p304 = pneg %p176
        $region34: #{dino_head_forward.2} parent=11 // pred_check_branch
          %306 = sbr.rel (%p304) target = $region36
        $region35: #{dino_head_forward.2} parent=11 // pred_region
          %s308 = ssub.s32 16, 16
          %309 = vsyncadd [#allocation12], %s308
          %s311 = sshll.u32 [#allocation13], 4
          %s312 = int_to_ptr.vmem [resolvable:$true] %s311
          %314 = dma.hbm_to_vmem [thread:$0]  %s6, 16, %s312, [#allocation12]
        $region36: #{dino_head_forward.2} parent=11 // pred_fallthru
          _
      $region12: #{dino_head_forward.2} parent=5 // pred_fallthru
        _
      %p315 = scmp.lt.s32.totalorder %s24, 3
      // Predicated region
      $region37: #{dino_head_forward.2} parent=5 // pred_check
        %p316 = pneg %p315
      $region38: #{dino_head_forward.2} parent=5 // pred_check_branch
        %318 = sbr.rel (%p316) target = $region40
      $region39: #{dino_head_forward.2} parent=5 // pred_region
        // Predicated region
        $region41: #{dino_head_forward.2} parent=39 // pred_check
          %p319 = pneg %p44
        $region42: #{dino_head_forward.2} parent=39 // pred_check_branch
          %321 = sbr.rel (%p319) target = $region44
        $region43: #{dino_head_forward.2} parent=39 // pred_region
          %s322 = sand.u32 %s34, 1
          %s323 = scalar_lea.sflag [#allocation3], %s322
          %s324 = sand.u32 %s34, 1
          %s325 = smul.addr %s324, 256
          %s326 = scalar_lea.vmem [#allocation2], %s325
          %s327 = smul.u32 32, %s24
          %s329 = ssub.s32 4096, 4096
          %330 = vsyncadd %s323, %s329
          %s331 = smul.addr %s327, 128
          %s332 = scalar_lea.hbm %s0, %s331
          %s333 = sshll.u32 %s326, 4
          %s334 = int_to_ptr.vmem [resolvable:$true] %s333
          %339 = dma.hbm_to_vmem [thread:$0]  %s332, 4096, %s334, %s323, 128, 128, 8
        $region44: #{dino_head_forward.2} parent=39 // pred_fallthru
          _
      $region40: #{dino_head_forward.2} parent=5 // pred_fallthru
        _
      %p340 = scmp.le.s32.totalorder 1, %s24
      %p341 = scmp.lt.s32.totalorder %s24, 4
      %p342 = pnand %p340, %p341
      %p343 = pneg %p342
      // Predicated region
      $region45: #{dino_head_forward.2} parent=5 // pred_check
        _
      $region46: #{dino_head_forward.2} parent=5 // pred_check_branch
        %345 = sbr.rel (%p342) target = $region48
      $region47: #{dino_head_forward.2} parent=5 // pred_region
        %s346 = ssub.s32 %s24, 1
        %s347 = sand.u32 %s37, 1
        %s348 = scalar_lea.sflag [#allocation3], %s347
        %s349 = sand.u32 %s37, 1
        %s350 = smul.addr %s349, 256
        %s351 = scalar_lea.vmem [#allocation2], %s350
        // Predicated region
        $region49: #{dino_head_forward.2} parent=47 // pred_check
          %p352 = pneg %p50
        $region50: #{dino_head_forward.2} parent=47 // pred_check_branch
          %354 = sbr.rel (%p352) target = $region52
        $region51: #{dino_head_forward.2} parent=47 // pred_region
          %355 = dma.done %s348, 4096
        $region52: #{dino_head_forward.2} parent=47 // pred_fallthru
          _
        // Predicated region
        $region53: #{dino_head_forward.2} parent=47 // pred_check
          %p356 = pneg %p71
        $region54: #{dino_head_forward.2} parent=47 // pred_check_branch
          %358 = sbr.rel (%p356) target = $region56
        $region55: #{dino_head_forward.2} parent=47 // pred_region
          %359 = dma.done [#allocation6], 2048
        $region56: #{dino_head_forward.2} parent=47 // pred_fallthru
          _
        // Predicated region
        $region57: #{dino_head_forward.2} parent=47 // pred_check
          %p360 = pneg %p92
        $region58: #{dino_head_forward.2} parent=47 // pred_check_branch
          %362 = sbr.rel (%p360) target = $region60
        $region59: #{dino_head_forward.2} parent=47 // pred_region
          %363 = dma.done [#allocation6], 32
        $region60: #{dino_head_forward.2} parent=47 // pred_fallthru
          _
        // Predicated region
        $region61: #{dino_head_forward.2} parent=47 // pred_check
          %p364 = pneg %p113
        $region62: #{dino_head_forward.2} parent=47 // pred_check_branch
          %366 = sbr.rel (%p364) target = $region64
        $region63: #{dino_head_forward.2} parent=47 // pred_region
          %367 = dma.done [#allocation9], 4096
        $region64: #{dino_head_forward.2} parent=47 // pred_fallthru
          _
        // Predicated region
        $region65: #{dino_head_forward.2} parent=47 // pred_check
          %p368 = pneg %p134
        $region66: #{dino_head_forward.2} parent=47 // pred_check_branch
          %370 = sbr.rel (%p368) target = $region68
        $region67: #{dino_head_forward.2} parent=47 // pred_region
          %371 = dma.done [#allocation9], 32
        $region68: #{dino_head_forward.2} parent=47 // pred_fallthru
          _
        // Predicated region
        $region69: #{dino_head_forward.2} parent=47 // pred_check
          %p372 = pneg %p155
        $region70: #{dino_head_forward.2} parent=47 // pred_check_branch
          %374 = sbr.rel (%p372) target = $region72
        $region71: #{dino_head_forward.2} parent=47 // pred_region
          %375 = dma.done [#allocation12], 2048
        $region72: #{dino_head_forward.2} parent=47 // pred_fallthru
          _
        // Predicated region
        $region73: #{dino_head_forward.2} parent=47 // pred_check
          %p376 = pneg %p176
        $region74: #{dino_head_forward.2} parent=47 // pred_check_branch
          %378 = sbr.rel (%p376) target = $region76
        $region75: #{dino_head_forward.2} parent=47 // pred_region
          %379 = dma.done [#allocation12], 16
        $region76: #{dino_head_forward.2} parent=47 // pred_fallthru
          _
        %s380 = sand.u32 %s37, 1
        %s381 = scalar_lea.sflag [#allocation3], %s380
        %s382 = sand.u32 %s37, 1
        %s383 = smul.addr %s382, 256
        %s384 = scalar_lea.vmem [#allocation2], %s383
        %p385 = pneg %p50
        %p386 = pneg %p47
        %p387 = pneg %p71
        %p388 = pneg %p68
        %p389 = pneg %p92
        %p390 = pneg %p89
        %p391 = pneg %p113
        %p392 = pneg %p110
        %p393 = pneg %p134
        %p394 = pneg %p131
        %p395 = pneg %p155
        %p396 = pneg %p152
        %p397 = pneg %p176
        %p398 = pneg %p173
        %p399 = pneg %p202
        %p400 = pneg %p199
        %s401 = sand.u32 %s189, 1
        %s402 = scalar_lea.sflag [#allocation4], %s401
        %s403 = sand.u32 %s189, 1
        %s404 = smul.addr %s403, 256
        %s405 = scalar_lea.vmem [#allocation14], %s404
        %p406 = pneg %p228
        %p407 = pneg %p225
        %s408 = smul.u32 32, %s29
        %p409 = scmp.lt.s32.totalorder %s408, 95
        %s410 = scalar_select %p409, %s408, 95
        %s411 = smul.addr %s410, 4
        %s412 = scalar_lea.vmem %s8, %s411
        %s413 = smul.u32 32, %s29
        %s414 = smul.u32 32, %s29
        %s415 = smul.u32 32, %s29
        %p416 = scmp.lt.s32.totalorder %s415, 95
        %s417 = scalar_select %p416, %s415, 95
        %s418 = smul.addr %s417, 4
        %s419 = scalar_lea.vmem %s8, %s418
        %s420 = smul.u32 32, %s29
        %v422 = vld [vmem:[%s351] sm:$0xff]
        %v423 = vld [vmem:[%s351 + $0x8] sm:$0xff]
        %v424 = vld [vmem:[%s351 + $0x10] sm:$0xff]
        %v425 = vld [vmem:[%s351 + $0x18] sm:$0xff]
        %v426 = vld [vmem:[%s351 + $0x20] sm:$0xff]
        %v427 = vld [vmem:[%s351 + $0x28] sm:$0xff]
        %v428 = vld [vmem:[%s351 + $0x30] sm:$0xff]
        %v429 = vld [vmem:[%s351 + $0x38] sm:$0xff]
        %v430 = vld [vmem:[%s351 + $0x40] sm:$0xff]
        %v431 = vld [vmem:[%s351 + $0x48] sm:$0xff]
        %v432 = vld [vmem:[%s351 + $0x50] sm:$0xff]
        %v433 = vld [vmem:[%s351 + $0x58] sm:$0xff]
        %v434 = vld [vmem:[%s351 + $0x60] sm:$0xff]
        %v435 = vld [vmem:[%s351 + $0x68] sm:$0xff]
        %v436 = vld [vmem:[%s351 + $0x70] sm:$0xff]
        %v437 = vld [vmem:[%s351 + $0x78] sm:$0xff]
        %v438 = vld [vmem:[%s351 + $0x80] sm:$0xff]
        %v439 = vld [vmem:[%s351 + $0x88] sm:$0xff]
        %v440 = vld [vmem:[%s351 + $0x90] sm:$0xff]
        %v441 = vld [vmem:[%s351 + $0x98] sm:$0xff]
        %v442 = vld [vmem:[%s351 + $0xa0] sm:$0xff]
        %v443 = vld [vmem:[%s351 + $0xa8] sm:$0xff]
        %v444 = vld [vmem:[%s351 + $0xb0] sm:$0xff]
        %v445 = vld [vmem:[%s351 + $0xb8] sm:$0xff]
        %v446 = vld [vmem:[%s351 + $0xc0] sm:$0xff]
        %v447 = vld [vmem:[%s351 + $0xc8] sm:$0xff]
        %v448 = vld [vmem:[%s351 + $0xd0] sm:$0xff]
        %v449 = vld [vmem:[%s351 + $0xd8] sm:$0xff]
        %v450 = vld [vmem:[%s351 + $0xe0] sm:$0xff]
        %v451 = vld [vmem:[%s351 + $0xe8] sm:$0xff]
        %v452 = vld [vmem:[%s351 + $0xf0] sm:$0xff]
        %v453 = vld [vmem:[%s351 + $0xf8] sm:$0xff]
        %v454 = vpack.c.bf16 %v423, %v422
        %v455 = vpack.c.bf16 %v425, %v424
        %v456 = vpack.c.bf16 %v427, %v426
        %v457 = vpack.c.bf16 %v429, %v428
        %v458 = vpack.c.bf16 %v431, %v430
        %v459 = vpack.c.bf16 %v433, %v432
        %v460 = vpack.c.bf16 %v435, %v434
        %v461 = vpack.c.bf16 %v437, %v436
        %v462 = vpack.c.bf16 %v439, %v438
        %v463 = vpack.c.bf16 %v441, %v440
        %v464 = vpack.c.bf16 %v443, %v442
        %v465 = vpack.c.bf16 %v445, %v444
        %v466 = vpack.c.bf16 %v447, %v446
        %v467 = vpack.c.bf16 %v449, %v448
        %v468 = vpack.c.bf16 %v451, %v450
        %v469 = vpack.c.bf16 %v453, %v452
        %v470 = vld [vmem:[#allocation5] sm:$0xff]
        %v471 = vld [vmem:[#allocation5 + $0x8] sm:$0xff]
        %v472 = vld [vmem:[#allocation5 + $0x10] sm:$0xff]
        %v473 = vld [vmem:[#allocation5 + $0x18] sm:$0xff]
        %v474 = vld [vmem:[#allocation5 + $0x20] sm:$0xff]
        %v475 = vld [vmem:[#allocation5 + $0x28] sm:$0xff]
        %v476 = vld [vmem:[#allocation5 + $0x30] sm:$0xff]
        %v477 = vld [vmem:[#allocation5 + $0x38] sm:$0xff]
        %v478 = vld [vmem:[#allocation5 + $0x40] sm:$0xff]
        %v479 = vld [vmem:[#allocation5 + $0x48] sm:$0xff]
        %v480 = vld [vmem:[#allocation5 + $0x50] sm:$0xff]
        %v481 = vld [vmem:[#allocation5 + $0x58] sm:$0xff]
        %v482 = vld [vmem:[#allocation5 + $0x60] sm:$0xff]
        %v483 = vld [vmem:[#allocation5 + $0x68] sm:$0xff]
        %v484 = vld [vmem:[#allocation5 + $0x70] sm:$0xff]
        %v485 = vld [vmem:[#allocation5 + $0x78] sm:$0xff]
        %v486 = vld [vmem:[#allocation7] sm:$0x3]
        %v488 = vlaneseq
        %v489 = vshrl.u32 %v488, 7
        %v490 = vsub.s32 0, %v489
        %v491 = vrot.slane %v486, %v490
        %v492 = vlaneseq
        %v493 = vshrl.u32 %v492, 7
        %v494 = vsub.s32 1, %v493
        %v495 = vrot.slane %v486, %v494
        %v514 = vunpack.c.l.b16 %v470
        %v515 = vunpack.c.h.b16 %v470
        %v516 = vunpack.c.l.b16 %v471
        %v517 = vunpack.c.h.b16 %v471
        %v518 = vunpack.c.l.b16 %v472
        %v519 = vunpack.c.h.b16 %v472
        %v520 = vunpack.c.l.b16 %v473
        %v521 = vunpack.c.h.b16 %v473
        %v522 = vunpack.c.l.b16 %v474
        %v523 = vunpack.c.h.b16 %v474
        %v524 = vunpack.c.l.b16 %v475
        %v525 = vunpack.c.h.b16 %v475
        %v526 = vunpack.c.l.b16 %v476
        %v527 = vunpack.c.h.b16 %v476
        %v528 = vunpack.c.l.b16 %v477
        %v529 = vunpack.c.h.b16 %v477
        %v530 = vunpack.c.l.b16 %v478
        %v531 = vunpack.c.h.b16 %v478
        %v532 = vunpack.c.l.b16 %v479
        %v533 = vunpack.c.h.b16 %v479
        %v534 = vunpack.c.l.b16 %v480
        %v535 = vunpack.c.h.b16 %v480
        %v536 = vunpack.c.l.b16 %v481
        %v537 = vunpack.c.h.b16 %v481
        %v538 = vunpack.c.l.b16 %v482
        %v539 = vunpack.c.h.b16 %v482
        %v540 = vunpack.c.l.b16 %v483
        %v541 = vunpack.c.h.b16 %v483
        %v542 = vunpack.c.l.b16 %v484
        %v543 = vunpack.c.h.b16 %v484
        %v544 = vunpack.c.l.b16 %v485
        %v545 = vunpack.c.h.b16 %v485
        %v546 = vpack.c.b16 %v516, %v514
        %v547 = vpack.c.b16 %v517, %v515
        %v548 = vpack.c.b16 %v520, %v518
        %v549 = vpack.c.b16 %v521, %v519
        %v550 = vpack.c.b16 %v524, %v522
        %v551 = vpack.c.b16 %v525, %v523
        %v552 = vpack.c.b16 %v528, %v526
        %v553 = vpack.c.b16 %v529, %v527
        %v554 = vpack.c.b16 %v532, %v530
        %v555 = vpack.c.b16 %v533, %v531
        %v556 = vpack.c.b16 %v536, %v534
        %v557 = vpack.c.b16 %v537, %v535
        %v558 = vpack.c.b16 %v540, %v538
        %v559 = vpack.c.b16 %v541, %v539
        %v560 = vpack.c.b16 %v544, %v542
        %v561 = vpack.c.b16 %v545, %v543
        %578 = vmatprep.subr.bf16.mxu0 %v547
        %579 = vmatpush1.bf16.msra.mxu0 %v546
        %580 = vmatprep.subr.bf16.mxu0 %v549
        %581 = vmatpush1.bf16.msra.mxu0 %v548
        %582 = vmatprep.subr.bf16.mxu0 %v551
        %583 = vmatpush1.bf16.msra.mxu0 %v550
        %584 = vmatprep.subr.bf16.mxu0 %v553
        %585 = vmatpush1.bf16.msra.mxu0 %v552
        %586 = vmatprep.subr.bf16.mxu0 %v555
        %587 = vmatpush1.bf16.msra.mxu0 %v554
        %588 = vmatprep.subr.bf16.mxu0 %v557
        %589 = vmatpush1.bf16.msra.mxu0 %v556
        %590 = vmatprep.subr.bf16.mxu0 %v559
        %591 = vmatpush1.bf16.msra.mxu0 %v558
        %592 = vmatprep.subr.bf16.mxu0 %v561
        %593 = vmatpush1.bf16.msra.mxu0 %v560
        %594 = vmatprep.subr.bf16.mxu0 0
        %595 = vmatpush1.bf16.msra.mxu0 0
        %596 = vmatprep.subr.bf16.mxu0 0
        %597 = vmatpush1.bf16.msra.mxu0 0
        %598 = vmatprep.subr.bf16.mxu0 0
        %599 = vmatpush1.bf16.msra.mxu0 0
        %600 = vmatprep.subr.bf16.mxu0 0
        %601 = vmatpush1.bf16.msra.mxu0 0
        %602 = vmatprep.subr.bf16.mxu0 0
        %603 = vmatpush1.bf16.msra.mxu0 0
        %604 = vmatprep.subr.bf16.mxu0 0
        %605 = vmatpush1.bf16.msra.mxu0 0
        %606 = vmatprep.subr.bf16.mxu0 0
        %607 = vmatpush1.bf16.msra.mxu0 0
        %608 = vmatprep.subr.bf16.mxu0 0
        %609 = vmatpush1.bf16.msra.mxu0 0
        %610 = vmatprep.mubr.bf16.mxu0 0
        %611 = vmatmul.mubr.bf16.gmra.mrb[0].mxu0 %v454
        %v612 = vpop.f32.mrb[0].mxu0
        %v613 = vadd.f32 %v491, %v612
        %v614 = vpop.f32.mrb[0].mxu0
        %v615 = vadd.f32 %v495, %v614
        %v616 = vpop.f32.mrb[0].mxu0
        %v617 = vadd.f32 %v491, %v616
        %v618 = vpop.f32.mrb[0].mxu0
        %v619 = vadd.f32 %v495, %v618
        %620 = vmatprep.mubr.bf16.mxu0 0
        %621 = vmatmul.mubr.bf16.gmra.mrb[0].mxu0 %v455
        %v622 = vpop.f32.mrb[0].mxu0
        %v623 = vadd.f32 %v491, %v622
        %v624 = vpop.f32.mrb[0].mxu0
        %v625 = vadd.f32 %v495, %v624
        %v626 = vpop.f32.mrb[0].mxu0
        %v627 = vadd.f32 %v491, %v626
        %v628 = vpop.f32.mrb[0].mxu0
        %v629 = vadd.f32 %v495, %v628
        %630 = vmatprep.mubr.bf16.mxu0 0
        %631 = vmatmul.mubr.bf16.gmra.mrb[0].mxu0 %v456
        %v632 = vpop.f32.mrb[0].mxu0
        %v633 = vadd.f32 %v491, %v632
        %v634 = vpop.f32.mrb[0].mxu0
        %v635 = vadd.f32 %v495, %v634
        %v636 = vpop.f32.mrb[0].mxu0
        %v637 = vadd.f32 %v491, %v636
        %v638 = vpop.f32.mrb[0].mxu0
        %v639 = vadd.f32 %v495, %v638
        %640 = vmatprep.mubr.bf16.mxu0 0
        %641 = vmatmul.mubr.bf16.gmra.mrb[0].mxu0 %v457
        %v642 = vpop.f32.mrb[0].mxu0
        %v643 = vadd.f32 %v491, %v642
        %v644 = vpop.f32.mrb[0].mxu0
        %v645 = vadd.f32 %v495, %v644
        %v646 = vpop.f32.mrb[0].mxu0
        %v647 = vadd.f32 %v491, %v646
        %v648 = vpop.f32.mrb[0].mxu0
        %v649 = vadd.f32 %v495, %v648
        %650 = vmatprep.mubr.bf16.mxu0 0
        %651 = vmatmul.mubr.bf16.gmra.mrb[0].mxu0 %v458
        %v652 = vpop.f32.mrb[0].mxu0
        %v653 = vadd.f32 %v491, %v652
        %v654 = vpop.f32.mrb[0].mxu0
        %v655 = vadd.f32 %v495, %v654
        %v656 = vpop.f32.mrb[0].mxu0
        %v657 = vadd.f32 %v491, %v656
        %v658 = vpop.f32.mrb[0].mxu0
        %v659 = vadd.f32 %v495, %v658
        %660 = vmatprep.mubr.bf16.mxu0 0
        %661 = vmatmul.mubr.bf16.gmra.mrb[0].mxu0 %v459
        %v662 = vpop.f32.mrb[0].mxu0
        %v663 = vadd.f32 %v491, %v662
        %v664 = vpop.f32.mrb[0].mxu0
        %v665 = vadd.f32 %v495, %v664
        %v666 = vpop.f32.mrb[0].mxu0
        %v667 = vadd.f32 %v491, %v666
        %v668 = vpop.f32.mrb[0].mxu0
        %v669 = vadd.f32 %v495, %v668
        %670 = vmatprep.mubr.bf16.mxu0 0
        %671 = vmatmul.mubr.bf16.gmra.mrb[0].mxu0 %v460
        %v672 = vpop.f32.mrb[0].mxu0
        %v673 = vadd.f32 %v491, %v672
        %v674 = vpop.f32.mrb[0].mxu0
        %v675 = vadd.f32 %v495, %v674
        %v676 = vpop.f32.mrb[0].mxu0
        %v677 = vadd.f32 %v491, %v676
        %v678 = vpop.f32.mrb[0].mxu0
        %v679 = vadd.f32 %v495, %v678
        %680 = vmatprep.mubr.bf16.mxu0 0
        %681 = vmatmul.mubr.bf16.gmra.mrb[0].mxu0 %v461
        %v682 = vpop.f32.mrb[0].mxu0
        %v683 = vadd.f32 %v491, %v682
        %v684 = vpop.f32.mrb[0].mxu0
        %v685 = vadd.f32 %v495, %v684
        %v686 = vpop.f32.mrb[0].mxu0
        %v687 = vadd.f32 %v491, %v686
        %v688 = vpop.f32.mrb[0].mxu0
        %v689 = vadd.f32 %v495, %v688
        %690 = vmatprep.mubr.bf16.mxu0 0
        %691 = vmatmul.mubr.bf16.gmra.mrb[0].mxu0 %v462
        %v692 = vpop.f32.mrb[0].mxu0
        %v693 = vadd.f32 %v491, %v692
        %v694 = vpop.f32.mrb[0].mxu0
        %v695 = vadd.f32 %v495, %v694
        %v696 = vpop.f32.mrb[0].mxu0
        %v697 = vadd.f32 %v491, %v696
        %v698 = vpop.f32.mrb[0].mxu0
        %v699 = vadd.f32 %v495, %v698
        %700 = vmatprep.mubr.bf16.mxu0 0
        %701 = vmatmul.mubr.bf16.gmra.mrb[0].mxu0 %v463
        %v702 = vpop.f32.mrb[0].mxu0
        %v703 = vadd.f32 %v491, %v702
        %v704 = vpop.f32.mrb[0].mxu0
        %v705 = vadd.f32 %v495, %v704
        %v706 = vpop.f32.mrb[0].mxu0
        %v707 = vadd.f32 %v491, %v706
        %v708 = vpop.f32.mrb[0].mxu0
        %v709 = vadd.f32 %v495, %v708
        %710 = vmatprep.mubr.bf16.mxu0 0
        %711 = vmatmul.mubr.bf16.gmra.mrb[0].mxu0 %v464
        %v712 = vpop.f32.mrb[0].mxu0
        %v713 = vadd.f32 %v491, %v712
        %v714 = vpop.f32.mrb[0].mxu0
        %v715 = vadd.f32 %v495, %v714
        %v716 = vpop.f32.mrb[0].mxu0
        %v717 = vadd.f32 %v491, %v716
        %v718 = vpop.f32.mrb[0].mxu0
        %v719 = vadd.f32 %v495, %v718
        %720 = vmatprep.mubr.bf16.mxu0 0
        %721 = vmatmul.mubr.bf16.gmra.mrb[0].mxu0 %v465
        %v722 = vpop.f32.mrb[0].mxu0
        %v723 = vadd.f32 %v491, %v722
        %v724 = vpop.f32.mrb[0].mxu0
        %v725 = vadd.f32 %v495, %v724
        %v726 = vpop.f32.mrb[0].mxu0
        %v727 = vadd.f32 %v491, %v726
        %v728 = vpop.f32.mrb[0].mxu0
        %v729 = vadd.f32 %v495, %v728
        %730 = vmatprep.mubr.bf16.mxu0 0
        %731 = vmatmul.mubr.bf16.gmra.mrb[0].mxu0 %v466
        %v732 = vpop.f32.mrb[0].mxu0
        %v733 = vadd.f32 %v491, %v732
        %v734 = vpop.f32.mrb[0].mxu0
        %v735 = vadd.f32 %v495, %v734
        %v736 = vpop.f32.mrb[0].mxu0
        %v737 = vadd.f32 %v491, %v736
        %v738 = vpop.f32.mrb[0].mxu0
        %v739 = vadd.f32 %v495, %v738
        %740 = vmatprep.mubr.bf16.mxu0 0
        %741 = vmatmul.mubr.bf16.gmra.mrb[0].mxu0 %v467
        %v742 = vpop.f32.mrb[0].mxu0
        %v743 = vadd.f32 %v491, %v742
        %v744 = vpop.f32.mrb[0].mxu0
        %v745 = vadd.f32 %v495, %v744
        %v746 = vpop.f32.mrb[0].mxu0
        %v747 = vadd.f32 %v491, %v746
        %v748 = vpop.f32.mrb[0].mxu0
        %v749 = vadd.f32 %v495, %v748
        %750 = vmatprep.mubr.bf16.mxu0 0
        %751 = vmatmul.mubr.bf16.gmra.mrb[0].mxu0 %v468
        %v752 = vpop.f32.mrb[0].mxu0
        %v753 = vadd.f32 %v491, %v752
        %v754 = vpop.f32.mrb[0].mxu0
        %v755 = vadd.f32 %v495, %v754
        %v756 = vpop.f32.mrb[0].mxu0
        %v757 = vadd.f32 %v491, %v756
        %v758 = vpop.f32.mrb[0].mxu0
        %v759 = vadd.f32 %v495, %v758
        %760 = vmatprep.mubr.bf16.mxu0 0
        %761 = vmatmul.mubr.bf16.gmra.mrb[0].mxu0 %v469
        %v762 = vpop.f32.mrb[0].mxu0
        %v763 = vadd.f32 %v491, %v762
        %v764 = vpop.f32.mrb[0].mxu0
        %v765 = vadd.f32 %v495, %v764
        %v766 = vpop.f32.mrb[0].mxu0
        %v767 = vadd.f32 %v491, %v766
        %v768 = vpop.f32.mrb[0].mxu0
        %v769 = vadd.f32 %v495, %v768
        %770 = vdwg.mxu0
        %v771 = vmul.f32 %v613, 0.5
        %v772 = vmul.f32 %v615, 0.5
        %v773 = vmul.f32 %v617, 0.5
        %v774 = vmul.f32 %v619, 0.5
        %v775 = vmul.f32 %v623, 0.5
        %v776 = vmul.f32 %v625, 0.5
        %v777 = vmul.f32 %v627, 0.5
        %v778 = vmul.f32 %v629, 0.5
        %v779 = vmul.f32 %v633, 0.5
        %v780 = vmul.f32 %v635, 0.5
        %v781 = vmul.f32 %v637, 0.5
        %v782 = vmul.f32 %v639, 0.5
        %v783 = vmul.f32 %v643, 0.5
        %v784 = vmul.f32 %v645, 0.5
        %v785 = vmul.f32 %v647, 0.5
        %v786 = vmul.f32 %v649, 0.5
        %v787 = vmul.f32 %v653, 0.5
        %v788 = vmul.f32 %v655, 0.5
        %v789 = vmul.f32 %v657, 0.5
        %v790 = vmul.f32 %v659, 0.5
        %v791 = vmul.f32 %v663, 0.5
        %v792 = vmul.f32 %v665, 0.5
        %v793 = vmul.f32 %v667, 0.5
        %v794 = vmul.f32 %v669, 0.5
        %v795 = vmul.f32 %v673, 0.5
        %v796 = vmul.f32 %v675, 0.5
        %v797 = vmul.f32 %v677, 0.5
        %v798 = vmul.f32 %v679, 0.5
        %v799 = vmul.f32 %v683, 0.5
        %v800 = vmul.f32 %v685, 0.5
        %v801 = vmul.f32 %v687, 0.5
        %v802 = vmul.f32 %v689, 0.5
        %v803 = vmul.f32 %v693, 0.5
        %v804 = vmul.f32 %v695, 0.5
        %v805 = vmul.f32 %v697, 0.5
        %v806 = vmul.f32 %v699, 0.5
        %v807 = vmul.f32 %v703, 0.5
        %v808 = vmul.f32 %v705, 0.5
        %v809 = vmul.f32 %v707, 0.5
        %v810 = vmul.f32 %v709, 0.5
        %v811 = vmul.f32 %v713, 0.5
        %v812 = vmul.f32 %v715, 0.5
        %v813 = vmul.f32 %v717, 0.5
        %v814 = vmul.f32 %v719, 0.5
        %v815 = vmul.f32 %v723, 0.5
        %v816 = vmul.f32 %v725, 0.5
        %v817 = vmul.f32 %v727, 0.5
        %v818 = vmul.f32 %v729, 0.5
        %v819 = vmul.f32 %v733, 0.5
        %v820 = vmul.f32 %v735, 0.5
        %v821 = vmul.f32 %v737, 0.5
        %v822 = vmul.f32 %v739, 0.5
        %v823 = vmul.f32 %v743, 0.5
        %v824 = vmul.f32 %v745, 0.5
        %v825 = vmul.f32 %v747, 0.5
        %v826 = vmul.f32 %v749, 0.5
        %v827 = vmul.f32 %v753, 0.5
        %v828 = vmul.f32 %v755, 0.5
        %v829 = vmul.f32 %v757, 0.5
        %v830 = vmul.f32 %v759, 0.5
        %v831 = vmul.f32 %v763, 0.5
        %v832 = vmul.f32 %v765, 0.5
        %v833 = vmul.f32 %v767, 0.5
        %v834 = vmul.f32 %v769, 0.5
        %v835 = vmul.f32 %v613, 0.70710677
        %v836 = vmul.f32 %v615, 0.70710677
        %v837 = vmul.f32 %v617, 0.70710677
        %v838 = vmul.f32 %v619, 0.70710677
        %v839 = vmul.f32 %v623, 0.70710677
        %v840 = vmul.f32 %v625, 0.70710677
        %v841 = vmul.f32 %v627, 0.70710677
        %v842 = vmul.f32 %v629, 0.70710677
        %v843 = vmul.f32 %v633, 0.70710677
        %v844 = vmul.f32 %v635, 0.70710677
        %v845 = vmul.f32 %v637, 0.70710677
        %v846 = vmul.f32 %v639, 0.70710677
        %v847 = vmul.f32 %v643, 0.70710677
        %v848 = vmul.f32 %v645, 0.70710677
        %v849 = vmul.f32 %v647, 0.70710677
        %v850 = vmul.f32 %v649, 0.70710677
        %v851 = vmul.f32 %v653, 0.70710677
        %v852 = vmul.f32 %v655, 0.70710677
        %v853 = vmul.f32 %v657, 0.70710677
        %v854 = vmul.f32 %v659, 0.70710677
        %v855 = vmul.f32 %v663, 0.70710677
        %v856 = vmul.f32 %v665, 0.70710677
        %v857 = vmul.f32 %v667, 0.70710677
        %v858 = vmul.f32 %v669, 0.70710677
        %v859 = vmul.f32 %v673, 0.70710677
        %v860 = vmul.f32 %v675, 0.70710677
        %v861 = vmul.f32 %v677, 0.70710677
        %v862 = vmul.f32 %v679, 0.70710677
        %v863 = vmul.f32 %v683, 0.70710677
        %v864 = vmul.f32 %v685, 0.70710677
        %v865 = vmul.f32 %v687, 0.70710677
        %v866 = vmul.f32 %v689, 0.70710677
        %v867 = vmul.f32 %v693, 0.70710677
        %v868 = vmul.f32 %v695, 0.70710677
        %v869 = vmul.f32 %v697, 0.70710677
        %v870 = vmul.f32 %v699, 0.70710677
        %v871 = vmul.f32 %v703, 0.70710677
        %v872 = vmul.f32 %v705, 0.70710677
        %v873 = vmul.f32 %v707, 0.70710677
        %v874 = vmul.f32 %v709, 0.70710677
        %v875 = vmul.f32 %v713, 0.70710677
        %v876 = vmul.f32 %v715, 0.70710677
        %v877 = vmul.f32 %v717, 0.70710677
        %v878 = vmul.f32 %v719, 0.70710677
        %v879 = vmul.f32 %v723, 0.70710677
        %v880 = vmul.f32 %v725, 0.70710677
        %v881 = vmul.f32 %v727, 0.70710677
        %v882 = vmul.f32 %v729, 0.70710677
        %v883 = vmul.f32 %v733, 0.70710677
        %v884 = vmul.f32 %v735, 0.70710677
        %v885 = vmul.f32 %v737, 0.70710677
        %v886 = vmul.f32 %v739, 0.70710677
        %v887 = vmul.f32 %v743, 0.70710677
        %v888 = vmul.f32 %v745, 0.70710677
        %v889 = vmul.f32 %v747, 0.70710677
        %v890 = vmul.f32 %v749, 0.70710677
        %v891 = vmul.f32 %v753, 0.70710677
        %v892 = vmul.f32 %v755, 0.70710677
        %v893 = vmul.f32 %v757, 0.70710677
        %v894 = vmul.f32 %v759, 0.70710677
        %v895 = vmul.f32 %v763, 0.70710677
        %v896 = vmul.f32 %v765, 0.70710677
        %v897 = vmul.f32 %v767, 0.70710677
        %v898 = vmul.f32 %v769, 0.70710677
        %v899 = verf.f32.pop %v835
        %v900 = verf.f32.pop %v836
        %v901 = verf.f32.pop %v837
        %v902 = verf.f32.pop %v838
        %v903 = verf.f32.pop %v839
        %v904 = verf.f32.pop %v840
        %v905 = verf.f32.pop %v841
        %v906 = verf.f32.pop %v842
        %v907 = verf.f32.pop %v843
        %v908 = verf.f32.pop %v844
        %v909 = verf.f32.pop %v845
        %v910 = verf.f32.pop %v846
        %v911 = verf.f32.pop %v847
        %v912 = verf.f32.pop %v848
        %v913 = verf.f32.pop %v849
        %v914 = verf.f32.pop %v850
        %v915 = verf.f32.pop %v851
        %v916 = verf.f32.pop %v852
        %v917 = verf.f32.pop %v853
        %v918 = verf.f32.pop %v854
        %v919 = verf.f32.pop %v855
        %v920 = verf.f32.pop %v856
        %v921 = verf.f32.pop %v857
        %v922 = verf.f32.pop %v858
        %v923 = verf.f32.pop %v859
        %v924 = verf.f32.pop %v860
        %v925 = verf.f32.pop %v861
        %v926 = verf.f32.pop %v862
        %v927 = verf.f32.pop %v863
        %v928 = verf.f32.pop %v864
        %v929 = verf.f32.pop %v865
        %v930 = verf.f32.pop %v866
        %v931 = verf.f32.pop %v867
        %v932 = verf.f32.pop %v868
        %v933 = verf.f32.pop %v869
        %v934 = verf.f32.pop %v870
        %v935 = verf.f32.pop %v871
        %v936 = verf.f32.pop %v872
        %v937 = verf.f32.pop %v873
        %v938 = verf.f32.pop %v874
        %v939 = verf.f32.pop %v875
        %v940 = verf.f32.pop %v876
        %v941 = verf.f32.pop %v877
        %v942 = verf.f32.pop %v878
        %v943 = verf.f32.pop %v879
        %v944 = verf.f32.pop %v880
        %v945 = verf.f32.pop %v881
        %v946 = verf.f32.pop %v882
        %v947 = verf.f32.pop %v883
        %v948 = verf.f32.pop %v884
        %v949 = verf.f32.pop %v885
        %v950 = verf.f32.pop %v886
        %v951 = verf.f32.pop %v887
        %v952 = verf.f32.pop %v888
        %v953 = verf.f32.pop %v889
        %v954 = verf.f32.pop %v890
        %v955 = verf.f32.pop %v891
        %v956 = verf.f32.pop %v892
        %v957 = verf.f32.pop %v893
        %v958 = verf.f32.pop %v894
        %v959 = verf.f32.pop %v895
        %v960 = verf.f32.pop %v896
        %v961 = verf.f32.pop %v897
        %v962 = verf.f32.pop %v898
        %v963 = vadd.f32 %v899, 1.0
        %v964 = vadd.f32 %v900, 1.0
        %v965 = vadd.f32 %v901, 1.0
        %v966 = vadd.f32 %v902, 1.0
        %v967 = vadd.f32 %v903, 1.0
        %v968 = vadd.f32 %v904, 1.0
        %v969 = vadd.f32 %v905, 1.0
        %v970 = vadd.f32 %v906, 1.0
        %v971 = vadd.f32 %v907, 1.0
        %v972 = vadd.f32 %v908, 1.0
        %v973 = vadd.f32 %v909, 1.0
        %v974 = vadd.f32 %v910, 1.0
        %v975 = vadd.f32 %v911, 1.0
        %v976 = vadd.f32 %v912, 1.0
        %v977 = vadd.f32 %v913, 1.0
        %v978 = vadd.f32 %v914, 1.0
        %v979 = vadd.f32 %v915, 1.0
        %v980 = vadd.f32 %v916, 1.0
        %v981 = vadd.f32 %v917, 1.0
        %v982 = vadd.f32 %v918, 1.0
        %v983 = vadd.f32 %v919, 1.0
        %v984 = vadd.f32 %v920, 1.0
        %v985 = vadd.f32 %v921, 1.0
        %v986 = vadd.f32 %v922, 1.0
        %v987 = vadd.f32 %v923, 1.0
        %v988 = vadd.f32 %v924, 1.0
        %v989 = vadd.f32 %v925, 1.0
        %v990 = vadd.f32 %v926, 1.0
        %v991 = vadd.f32 %v927, 1.0
        %v992 = vadd.f32 %v928, 1.0
        %v993 = vadd.f32 %v929, 1.0
        %v994 = vadd.f32 %v930, 1.0
        %v995 = vadd.f32 %v931, 1.0
        %v996 = vadd.f32 %v932, 1.0
        %v997 = vadd.f32 %v933, 1.0
        %v998 = vadd.f32 %v934, 1.0
        %v999 = vadd.f32 %v935, 1.0
        %v1000 = vadd.f32 %v936, 1.0
        %v1001 = vadd.f32 %v937, 1.0
        %v1002 = vadd.f32 %v938, 1.0
        %v1003 = vadd.f32 %v939, 1.0
        %v1004 = vadd.f32 %v940, 1.0
        %v1005 = vadd.f32 %v941, 1.0
        %v1006 = vadd.f32 %v942, 1.0
        %v1007 = vadd.f32 %v943, 1.0
        %v1008 = vadd.f32 %v944, 1.0
        %v1009 = vadd.f32 %v945, 1.0
        %v1010 = vadd.f32 %v946, 1.0
        %v1011 = vadd.f32 %v947, 1.0
        %v1012 = vadd.f32 %v948, 1.0
        %v1013 = vadd.f32 %v949, 1.0
        %v1014 = vadd.f32 %v950, 1.0
        %v1015 = vadd.f32 %v951, 1.0
        %v1016 = vadd.f32 %v952, 1.0
        %v1017 = vadd.f32 %v953, 1.0
        %v1018 = vadd.f32 %v954, 1.0
        %v1019 = vadd.f32 %v955, 1.0
        %v1020 = vadd.f32 %v956, 1.0
        %v1021 = vadd.f32 %v957, 1.0
        %v1022 = vadd.f32 %v958, 1.0
        %v1023 = vadd.f32 %v959, 1.0
        %v1024 = vadd.f32 %v960, 1.0
        %v1025 = vadd.f32 %v961, 1.0
        %v1026 = vadd.f32 %v962, 1.0
        %v1027 = vmul.f32 %v771, %v963
        %v1028 = vmul.f32 %v772, %v964
        %v1029 = vmul.f32 %v773, %v965
        %v1030 = vmul.f32 %v774, %v966
        %v1031 = vmul.f32 %v775, %v967
        %v1032 = vmul.f32 %v776, %v968
        %v1033 = vmul.f32 %v777, %v969
        %v1034 = vmul.f32 %v778, %v970
        %v1035 = vmul.f32 %v779, %v971
        %v1036 = vmul.f32 %v780, %v972
        %v1037 = vmul.f32 %v781, %v973
        %v1038 = vmul.f32 %v782, %v974
        %v1039 = vmul.f32 %v783, %v975
        %v1040 = vmul.f32 %v784, %v976
        %v1041 = vmul.f32 %v785, %v977
        %v1042 = vmul.f32 %v786, %v978
        %v1043 = vmul.f32 %v787, %v979
        %v1044 = vmul.f32 %v788, %v980
        %v1045 = vmul.f32 %v789, %v981
        %v1046 = vmul.f32 %v790, %v982
        %v1047 = vmul.f32 %v791, %v983
        %v1048 = vmul.f32 %v792, %v984
        %v1049 = vmul.f32 %v793, %v985
        %v1050 = vmul.f32 %v794, %v986
        %v1051 = vmul.f32 %v795, %v987
        %v1052 = vmul.f32 %v796, %v988
        %v1053 = vmul.f32 %v797, %v989
        %v1054 = vmul.f32 %v798, %v990
        %v1055 = vmul.f32 %v799, %v991
        %v1056 = vmul.f32 %v800, %v992
        %v1057 = vmul.f32 %v801, %v993
        %v1058 = vmul.f32 %v802, %v994
        %v1059 = vmul.f32 %v803, %v995
        %v1060 = vmul.f32 %v804, %v996
        %v1061 = vmul.f32 %v805, %v997
        %v1062 = vmul.f32 %v806, %v998
        %v1063 = vmul.f32 %v807, %v999
        %v1064 = vmul.f32 %v808, %v1000
        %v1065 = vmul.f32 %v809, %v1001
        %v1066 = vmul.f32 %v810, %v1002
        %v1067 = vmul.f32 %v811, %v1003
        %v1068 = vmul.f32 %v812, %v1004
        %v1069 = vmul.f32 %v813, %v1005
        %v1070 = vmul.f32 %v814, %v1006
        %v1071 = vmul.f32 %v815, %v1007
        %v1072 = vmul.f32 %v816, %v1008
        %v1073 = vmul.f32 %v817, %v1009
        %v1074 = vmul.f32 %v818, %v1010
        %v1075 = vmul.f32 %v819, %v1011
        %v1076 = vmul.f32 %v820, %v1012
        %v1077 = vmul.f32 %v821, %v1013
        %v1078 = vmul.f32 %v822, %v1014
        %v1079 = vmul.f32 %v823, %v1015
        %v1080 = vmul.f32 %v824, %v1016
        %v1081 = vmul.f32 %v825, %v1017
        %v1082 = vmul.f32 %v826, %v1018
        %v1083 = vmul.f32 %v827, %v1019
        %v1084 = vmul.f32 %v828, %v1020
        %v1085 = vmul.f32 %v829, %v1021
        %v1086 = vmul.f32 %v830, %v1022
        %v1087 = vmul.f32 %v831, %v1023
        %v1088 = vmul.f32 %v832, %v1024
        %v1089 = vmul.f32 %v833, %v1025
        %v1090 = vmul.f32 %v834, %v1026
        %v1091 = vpack.c.bf16 %v1029, %v1027
        %v1092 = vpack.c.bf16 %v1030, %v1028
        %v1093 = vpack.c.bf16 %v1033, %v1031
        %v1094 = vpack.c.bf16 %v1034, %v1032
        %v1095 = vpack.c.bf16 %v1037, %v1035
        %v1096 = vpack.c.bf16 %v1038, %v1036
        %v1097 = vpack.c.bf16 %v1041, %v1039
        %v1098 = vpack.c.bf16 %v1042, %v1040
        %v1099 = vpack.c.bf16 %v1045, %v1043
        %v1100 = vpack.c.bf16 %v1046, %v1044
        %v1101 = vpack.c.bf16 %v1049, %v1047
        %v1102 = vpack.c.bf16 %v1050, %v1048
        %v1103 = vpack.c.bf16 %v1053, %v1051
        %v1104 = vpack.c.bf16 %v1054, %v1052
        %v1105 = vpack.c.bf16 %v1057, %v1055
        %v1106 = vpack.c.bf16 %v1058, %v1056
        %v1107 = vpack.c.bf16 %v1061, %v1059
        %v1108 = vpack.c.bf16 %v1062, %v1060
        %v1109 = vpack.c.bf16 %v1065, %v1063
        %v1110 = vpack.c.bf16 %v1066, %v1064
        %v1111 = vpack.c.bf16 %v1069, %v1067
        %v1112 = vpack.c.bf16 %v1070, %v1068
        %v1113 = vpack.c.bf16 %v1073, %v1071
        %v1114 = vpack.c.bf16 %v1074, %v1072
        %v1115 = vpack.c.bf16 %v1077, %v1075
        %v1116 = vpack.c.bf16 %v1078, %v1076
        %v1117 = vpack.c.bf16 %v1081, %v1079
        %v1118 = vpack.c.bf16 %v1082, %v1080
        %v1119 = vpack.c.bf16 %v1085, %v1083
        %v1120 = vpack.c.bf16 %v1086, %v1084
        %v1121 = vpack.c.bf16 %v1089, %v1087
        %v1122 = vpack.c.bf16 %v1090, %v1088
        %v1123 = vld [vmem:[#allocation8] sm:$0xff]
        %v1124 = vld [vmem:[#allocation8 + $0x8] sm:$0xff]
        %v1125 = vld [vmem:[#allocation8 + $0x10] sm:$0xff]
        %v1126 = vld [vmem:[#allocation8 + $0x18] sm:$0xff]
        %v1127 = vld [vmem:[#allocation8 + $0x20] sm:$0xff]
        %v1128 = vld [vmem:[#allocation8 + $0x28] sm:$0xff]
        %v1129 = vld [vmem:[#allocation8 + $0x30] sm:$0xff]
        %v1130 = vld [vmem:[#allocation8 + $0x38] sm:$0xff]
        %v1131 = vld [vmem:[#allocation8 + $0x40] sm:$0xff]
        %v1132 = vld [vmem:[#allocation8 + $0x48] sm:$0xff]
        %v1133 = vld [vmem:[#allocation8 + $0x50] sm:$0xff]
        %v1134 = vld [vmem:[#allocation8 + $0x58] sm:$0xff]
        %v1135 = vld [vmem:[#allocation8 + $0x60] sm:$0xff]
        %v1136 = vld [vmem:[#allocation8 + $0x68] sm:$0xff]
        %v1137 = vld [vmem:[#allocation8 + $0x70] sm:$0xff]
        %v1138 = vld [vmem:[#allocation8 + $0x78] sm:$0xff]
        %v1139 = vld [vmem:[#allocation8 + $0x80] sm:$0xff]
        %v1140 = vld [vmem:[#allocation8 + $0x88] sm:$0xff]
        %v1141 = vld [vmem:[#allocation8 + $0x90] sm:$0xff]
        %v1142 = vld [vmem:[#allocation8 + $0x98] sm:$0xff]
        %v1143 = vld [vmem:[#allocation8 + $0xa0] sm:$0xff]
        %v1144 = vld [vmem:[#allocation8 + $0xa8] sm:$0xff]
        %v1145 = vld [vmem:[#allocation8 + $0xb0] sm:$0xff]
        %v1146 = vld [vmem:[#allocation8 + $0xb8] sm:$0xff]
        %v1147 = vld [vmem:[#allocation8 + $0xc0] sm:$0xff]
        %v1148 = vld [vmem:[#allocation8 + $0xc8] sm:$0xff]
        %v1149 = vld [vmem:[#allocation8 + $0xd0] sm:$0xff]
        %v1150 = vld [vmem:[#allocation8 + $0xd8] sm:$0xff]
        %v1151 = vld [vmem:[#allocation8 + $0xe0] sm:$0xff]
        %v1152 = vld [vmem:[#allocation8 + $0xe8] sm:$0xff]
        %v1153 = vld [vmem:[#allocation8 + $0xf0] sm:$0xff]
        %v1154 = vld [vmem:[#allocation8 + $0xf8] sm:$0xff]
        %v1155 = vld [vmem:[#allocation10] sm:$0x3]
        %v1157 = vlaneseq
        %v1158 = vshrl.u32 %v1157, 7
        %v1159 = vsub.s32 0, %v1158
        %v1160 = vrot.slane %v1155, %v1159
        %v1161 = vlaneseq
        %v1162 = vshrl.u32 %v1161, 7
        %v1163 = vsub.s32 1, %v1162
        %v1164 = vrot.slane %v1155, %v1163
        %v1199 = vunpack.c.l.b16 %v1123
        %v1200 = vunpack.c.h.b16 %v1123
        %v1201 = vunpack.c.l.b16 %v1124
        %v1202 = vunpack.c.h.b16 %v1124
        %v1203 = vunpack.c.l.b16 %v1125
        %v1204 = vunpack.c.h.b16 %v1125
        %v1205 = vunpack.c.l.b16 %v1126
        %v1206 = vunpack.c.h.b16 %v1126
        %v1207 = vunpack.c.l.b16 %v1127
        %v1208 = vunpack.c.h.b16 %v1127
        %v1209 = vunpack.c.l.b16 %v1128
        %v1210 = vunpack.c.h.b16 %v1128
        %v1211 = vunpack.c.l.b16 %v1129
        %v1212 = vunpack.c.h.b16 %v1129
        %v1213 = vunpack.c.l.b16 %v1130
        %v1214 = vunpack.c.h.b16 %v1130
        %v1215 = vunpack.c.l.b16 %v1131
        %v1216 = vunpack.c.h.b16 %v1131
        %v1217 = vunpack.c.l.b16 %v1132
        %v1218 = vunpack.c.h.b16 %v1132
        %v1219 = vunpack.c.l.b16 %v1133
        %v1220 = vunpack.c.h.b16 %v1133
        %v1221 = vunpack.c.l.b16 %v1134
        %v1222 = vunpack.c.h.b16 %v1134
        %v1223 = vunpack.c.l.b16 %v1135
        %v1224 = vunpack.c.h.b16 %v1135
        %v1225 = vunpack.c.l.b16 %v1136
        %v1226 = vunpack.c.h.b16 %v1136
        %v1227 = vunpack.c.l.b16 %v1137
        %v1228 = vunpack.c.h.b16 %v1137
        %v1229 = vunpack.c.l.b16 %v1138
        %v1230 = vunpack.c.h.b16 %v1138
        %v1231 = vunpack.c.l.b16 %v1139
        %v1232 = vunpack.c.h.b16 %v1139
        %v1233 = vunpack.c.l.b16 %v1140
        %v1234 = vunpack.c.h.b16 %v1140
        %v1235 = vunpack.c.l.b16 %v1141
        %v1236 = vunpack.c.h.b16 %v1141
        %v1237 = vunpack.c.l.b16 %v1142
        %v1238 = vunpack.c.h.b16 %v1142
        %v1239 = vunpack.c.l.b16 %v1143
        %v1240 = vunpack.c.h.b16 %v1143
        %v1241 = vunpack.c.l.b16 %v1144
        %v1242 = vunpack.c.h.b16 %v1144
        %v1243 = vunpack.c.l.b16 %v1145
        %v1244 = vunpack.c.h.b16 %v1145
        %v1245 = vunpack.c.l.b16 %v1146
        %v1246 = vunpack.c.h.b16 %v1146
        %v1247 = vunpack.c.l.b16 %v1147
        %v1248 = vunpack.c.h.b16 %v1147
        %v1249 = vunpack.c.l.b16 %v1148
        %v1250 = vunpack.c.h.b16 %v1148
        %v1251 = vunpack.c.l.b16 %v1149
        %v1252 = vunpack.c.h.b16 %v1149
        %v1253 = vunpack.c.l.b16 %v1150
        %v1254 = vunpack.c.h.b16 %v1150
        %v1255 = vunpack.c.l.b16 %v1151
        %v1256 = vunpack.c.h.b16 %v1151
        %v1257 = vunpack.c.l.b16 %v1152
        %v1258 = vunpack.c.h.b16 %v1152
        %v1259 = vunpack.c.l.b16 %v1153
        %v1260 = vunpack.c.h.b16 %v1153
        %v1261 = vunpack.c.l.b16 %v1154
        %v1262 = vunpack.c.h.b16 %v1154
        %v1263 = vpack.c.b16 %v1201, %v1199
        %v1264 = vpack.c.b16 %v1202, %v1200
        %v1265 = vpack.c.b16 %v1205, %v1203
        %v1266 = vpack.c.b16 %v1206, %v1204
        %v1267 = vpack.c.b16 %v1209, %v1207
        %v1268 = vpack.c.b16 %v1210, %v1208
        %v1269 = vpack.c.b16 %v1213, %v1211
        %v1270 = vpack.c.b16 %v1214, %v1212
        %v1271 = vpack.c.b16 %v1217, %v1215
        %v1272 = vpack.c.b16 %v1218, %v1216
        %v1273 = vpack.c.b16 %v1221, %v1219
        %v1274 = vpack.c.b16 %v1222, %v1220
        %v1275 = vpack.c.b16 %v1225, %v1223
        %v1276 = vpack.c.b16 %v1226, %v1224
        %v1277 = vpack.c.b16 %v1229, %v1227
        %v1278 = vpack.c.b16 %v1230, %v1228
        %v1279 = vpack.c.b16 %v1233, %v1231
        %v1280 = vpack.c.b16 %v1234, %v1232
        %v1281 = vpack.c.b16 %v1237, %v1235
        %v1282 = vpack.c.b16 %v1238, %v1236
        %v1283 = vpack.c.b16 %v1241, %v1239
        %v1284 = vpack.c.b16 %v1242, %v1240
        %v1285 = vpack.c.b16 %v1245, %v1243
        %v1286 = vpack.c.b16 %v1246, %v1244
        %v1287 = vpack.c.b16 %v1249, %v1247
        %v1288 = vpack.c.b16 %v1250, %v1248
        %v1289 = vpack.c.b16 %v1253, %v1251
        %v1290 = vpack.c.b16 %v1254, %v1252
        %v1291 = vpack.c.b16 %v1257, %v1255
        %v1292 = vpack.c.b16 %v1258, %v1256
        %v1293 = vpack.c.b16 %v1261, %v1259
        %v1294 = vpack.c.b16 %v1262, %v1260
        %1327 = vmatprep.subr.bf16.mxu0 %v1264
        %1328 = vmatpush1.bf16.msra.mxu0 %v1263
        %1329 = vmatprep.subr.bf16.mxu0 %v1266
        %1330 = vmatpush1.bf16.msra.mxu0 %v1265
        %1331 = vmatprep.subr.bf16.mxu0 %v1268
        %1332 = vmatpush1.bf16.msra.mxu0 %v1267
        %1333 = vmatprep.subr.bf16.mxu0 %v1270
        %1334 = vmatpush1.bf16.msra.mxu0 %v1269
        %1335 = vmatprep.subr.bf16.mxu0 %v1272
        %1336 = vmatpush1.bf16.msra.mxu0 %v1271
        %1337 = vmatprep.subr.bf16.mxu0 %v1274
        %1338 = vmatpush1.bf16.msra.mxu0 %v1273
        %1339 = vmatprep.subr.bf16.mxu0 %v1276
        %1340 = vmatpush1.bf16.msra.mxu0 %v1275
        %1341 = vmatprep.subr.bf16.mxu0 %v1278
        %1342 = vmatpush1.bf16.msra.mxu0 %v1277
        %1343 = vmatprep.subr.bf16.mxu0 %v1280
        %1344 = vmatpush1.bf16.msra.mxu0 %v1279
        %1345 = vmatprep.subr.bf16.mxu0 %v1282
        %1346 = vmatpush1.bf16.msra.mxu0 %v1281
        %1347 = vmatprep.subr.bf16.mxu0 %v1284
        %1348 = vmatpush1.bf16.msra.mxu0 %v1283
        %1349 = vmatprep.subr.bf16.mxu0 %v1286
        %1350 = vmatpush1.bf16.msra.mxu0 %v1285
        %1351 = vmatprep.subr.bf16.mxu0 %v1288
        %1352 = vmatpush1.bf16.msra.mxu0 %v1287
        %1353 = vmatprep.subr.bf16.mxu0 %v1290
        %1354 = vmatpush1.bf16.msra.mxu0 %v1289
        %1355 = vmatprep.subr.bf16.mxu0 %v1292
        %1356 = vmatpush1.bf16.msra.mxu0 %v1291
        %1357 = vmatprep.subr.bf16.mxu0 %v1294
        %1358 = vmatpush1.bf16.msra.mxu0 %v1293
        %1359 = vmatprep.mubr.bf16.mxu0 %v1092
        %1360 = vmatmul.mubr.bf16.gmra.mrb[0].mxu0 %v1091
        %v1361 = vpop.f32.mrb[0].mxu0
        %v1362 = vadd.f32 %v1160, %v1361
        %v1363 = vpop.f32.mrb[0].mxu0
        %v1364 = vadd.f32 %v1164, %v1363
        %v1365 = vpop.f32.mrb[0].mxu0
        %v1366 = vadd.f32 %v1160, %v1365
        %v1367 = vpop.f32.mrb[0].mxu0
        %v1368 = vadd.f32 %v1164, %v1367
        %1369 = vmatprep.mubr.bf16.mxu0 %v1094
        %1370 = vmatmul.mubr.bf16.gmra.mrb[0].mxu0 %v1093
        %v1371 = vpop.f32.mrb[0].mxu0
        %v1372 = vadd.f32 %v1160, %v1371
        %v1373 = vpop.f32.mrb[0].mxu0
        %v1374 = vadd.f32 %v1164, %v1373
        %v1375 = vpop.f32.mrb[0].mxu0
        %v1376 = vadd.f32 %v1160, %v1375
        %v1377 = vpop.f32.mrb[0].mxu0
        %v1378 = vadd.f32 %v1164, %v1377
        %1379 = vmatprep.mubr.bf16.mxu0 %v1096
        %1380 = vmatmul.mubr.bf16.gmra.mrb[0].mxu0 %v1095
        %v1381 = vpop.f32.mrb[0].mxu0
        %v1382 = vadd.f32 %v1160, %v1381
        %v1383 = vpop.f32.mrb[0].mxu0
        %v1384 = vadd.f32 %v1164, %v1383
        %v1385 = vpop.f32.mrb[0].mxu0
        %v1386 = vadd.f32 %v1160, %v1385
        %v1387 = vpop.f32.mrb[0].mxu0
        %v1388 = vadd.f32 %v1164, %v1387
        %1389 = vmatprep.mubr.bf16.mxu0 %v1098
        %1390 = vmatmul.mubr.bf16.gmra.mrb[0].mxu0 %v1097
        %v1391 = vpop.f32.mrb[0].mxu0
        %v1392 = vadd.f32 %v1160, %v1391
        %v1393 = vpop.f32.mrb[0].mxu0
        %v1394 = vadd.f32 %v1164, %v1393
        %v1395 = vpop.f32.mrb[0].mxu0
        %v1396 = vadd.f32 %v1160, %v1395
        %v1397 = vpop.f32.mrb[0].mxu0
        %v1398 = vadd.f32 %v1164, %v1397
        %1399 = vmatprep.mubr.bf16.mxu0 %v1100
        %1400 = vmatmul.mubr.bf16.gmra.mrb[0].mxu0 %v1099
        %v1401 = vpop.f32.mrb[0].mxu0
        %v1402 = vadd.f32 %v1160, %v1401
        %v1403 = vpop.f32.mrb[0].mxu0
        %v1404 = vadd.f32 %v1164, %v1403
        %v1405 = vpop.f32.mrb[0].mxu0
        %v1406 = vadd.f32 %v1160, %v1405
        %v1407 = vpop.f32.mrb[0].mxu0
        %v1408 = vadd.f32 %v1164, %v1407
        %1409 = vmatprep.mubr.bf16.mxu0 %v1102
        %1410 = vmatmul.mubr.bf16.gmra.mrb[0].mxu0 %v1101
        %v1411 = vpop.f32.mrb[0].mxu0
        %v1412 = vadd.f32 %v1160, %v1411
        %v1413 = vpop.f32.mrb[0].mxu0
        %v1414 = vadd.f32 %v1164, %v1413
        %v1415 = vpop.f32.mrb[0].mxu0
        %v1416 = vadd.f32 %v1160, %v1415
        %v1417 = vpop.f32.mrb[0].mxu0
        %v1418 = vadd.f32 %v1164, %v1417
        %1419 = vmatprep.mubr.bf16.mxu0 %v1104
        %1420 = vmatmul.mubr.bf16.gmra.mrb[0].mxu0 %v1103
        %v1421 = vpop.f32.mrb[0].mxu0
        %v1422 = vadd.f32 %v1160, %v1421
        %v1423 = vpop.f32.mrb[0].mxu0
        %v1424 = vadd.f32 %v1164, %v1423
        %v1425 = vpop.f32.mrb[0].mxu0
        %v1426 = vadd.f32 %v1160, %v1425
        %v1427 = vpop.f32.mrb[0].mxu0
        %v1428 = vadd.f32 %v1164, %v1427
        %1429 = vmatprep.mubr.bf16.mxu0 %v1106
        %1430 = vmatmul.mubr.bf16.gmra.mrb[0].mxu0 %v1105
        %v1431 = vpop.f32.mrb[0].mxu0
        %v1432 = vadd.f32 %v1160, %v1431
        %v1433 = vpop.f32.mrb[0].mxu0
        %v1434 = vadd.f32 %v1164, %v1433
        %v1435 = vpop.f32.mrb[0].mxu0
        %v1436 = vadd.f32 %v1160, %v1435
        %v1437 = vpop.f32.mrb[0].mxu0
        %v1438 = vadd.f32 %v1164, %v1437
        %1439 = vmatprep.mubr.bf16.mxu0 %v1108
        %1440 = vmatmul.mubr.bf16.gmra.mrb[0].mxu0 %v1107
        %v1441 = vpop.f32.mrb[0].mxu0
        %v1442 = vadd.f32 %v1160, %v1441
        %v1443 = vpop.f32.mrb[0].mxu0
        %v1444 = vadd.f32 %v1164, %v1443
        %v1445 = vpop.f32.mrb[0].mxu0
        %v1446 = vadd.f32 %v1160, %v1445
        %v1447 = vpop.f32.mrb[0].mxu0
        %v1448 = vadd.f32 %v1164, %v1447
        %1449 = vmatprep.mubr.bf16.mxu0 %v1110
        %1450 = vmatmul.mubr.bf16.gmra.mrb[0].mxu0 %v1109
        %v1451 = vpop.f32.mrb[0].mxu0
        %v1452 = vadd.f32 %v1160, %v1451
        %v1453 = vpop.f32.mrb[0].mxu0
        %v1454 = vadd.f32 %v1164, %v1453
        %v1455 = vpop.f32.mrb[0].mxu0
        %v1456 = vadd.f32 %v1160, %v1455
        %v1457 = vpop.f32.mrb[0].mxu0
        %v1458 = vadd.f32 %v1164, %v1457
        %1459 = vmatprep.mubr.bf16.mxu0 %v1112
        %1460 = vmatmul.mubr.bf16.gmra.mrb[0].mxu0 %v1111
        %v1461 = vpop.f32.mrb[0].mxu0
        %v1462 = vadd.f32 %v1160, %v1461
        %v1463 = vpop.f32.mrb[0].mxu0
        %v1464 = vadd.f32 %v1164, %v1463
        %v1465 = vpop.f32.mrb[0].mxu0
        %v1466 = vadd.f32 %v1160, %v1465
        %v1467 = vpop.f32.mrb[0].mxu0
        %v1468 = vadd.f32 %v1164, %v1467
        %1469 = vmatprep.mubr.bf16.mxu0 %v1114
        %1470 = vmatmul.mubr.bf16.gmra.mrb[0].mxu0 %v1113
        %v1471 = vpop.f32.mrb[0].mxu0
        %v1472 = vadd.f32 %v1160, %v1471
        %v1473 = vpop.f32.mrb[0].mxu0
        %v1474 = vadd.f32 %v1164, %v1473
        %v1475 = vpop.f32.mrb[0].mxu0
        %v1476 = vadd.f32 %v1160, %v1475
        %v1477 = vpop.f32.mrb[0].mxu0
        %v1478 = vadd.f32 %v1164, %v1477
        %1479 = vmatprep.mubr.bf16.mxu0 %v1116
        %1480 = vmatmul.mubr.bf16.gmra.mrb[0].mxu0 %v1115
        %v1481 = vpop.f32.mrb[0].mxu0
        %v1482 = vadd.f32 %v1160, %v1481
        %v1483 = vpop.f32.mrb[0].mxu0
        %v1484 = vadd.f32 %v1164, %v1483
        %v1485 = vpop.f32.mrb[0].mxu0
        %v1486 = vadd.f32 %v1160, %v1485
        %v1487 = vpop.f32.mrb[0].mxu0
        %v1488 = vadd.f32 %v1164, %v1487
        %1489 = vmatprep.mubr.bf16.mxu0 %v1118
        %1490 = vmatmul.mubr.bf16.gmra.mrb[0].mxu0 %v1117
        %v1491 = vpop.f32.mrb[0].mxu0
        %v1492 = vadd.f32 %v1160, %v1491
        %v1493 = vpop.f32.mrb[0].mxu0
        %v1494 = vadd.f32 %v1164, %v1493
        %v1495 = vpop.f32.mrb[0].mxu0
        %v1496 = vadd.f32 %v1160, %v1495
        %v1497 = vpop.f32.mrb[0].mxu0
        %v1498 = vadd.f32 %v1164, %v1497
        %1499 = vmatprep.mubr.bf16.mxu0 %v1120
        %1500 = vmatmul.mubr.bf16.gmra.mrb[0].mxu0 %v1119
        %v1501 = vpop.f32.mrb[0].mxu0
        %v1502 = vadd.f32 %v1160, %v1501
        %v1503 = vpop.f32.mrb[0].mxu0
        %v1504 = vadd.f32 %v1164, %v1503
        %v1505 = vpop.f32.mrb[0].mxu0
        %v1506 = vadd.f32 %v1160, %v1505
        %v1507 = vpop.f32.mrb[0].mxu0
        %v1508 = vadd.f32 %v1164, %v1507
        %1509 = vmatprep.mubr.bf16.mxu0 %v1122
        %1510 = vmatmul.mubr.bf16.gmra.mrb[0].mxu0 %v1121
        %v1511 = vpop.f32.mrb[0].mxu0
        %v1512 = vadd.f32 %v1160, %v1511
        %v1513 = vpop.f32.mrb[0].mxu0
        %v1514 = vadd.f32 %v1164, %v1513
        %v1515 = vpop.f32.mrb[0].mxu0
        %v1516 = vadd.f32 %v1160, %v1515
        %v1517 = vpop.f32.mrb[0].mxu0
        %v1518 = vadd.f32 %v1164, %v1517
        %1519 = vdwg.mxu0
        %v1520 = vmul.f32 %v1362, 0.5
        %v1521 = vmul.f32 %v1364, 0.5
        %v1522 = vmul.f32 %v1366, 0.5
        %v1523 = vmul.f32 %v1368, 0.5
        %v1524 = vmul.f32 %v1372, 0.5
        %v1525 = vmul.f32 %v1374, 0.5
        %v1526 = vmul.f32 %v1376, 0.5
        %v1527 = vmul.f32 %v1378, 0.5
        %v1528 = vmul.f32 %v1382, 0.5
        %v1529 = vmul.f32 %v1384, 0.5
        %v1530 = vmul.f32 %v1386, 0.5
        %v1531 = vmul.f32 %v1388, 0.5
        %v1532 = vmul.f32 %v1392, 0.5
        %v1533 = vmul.f32 %v1394, 0.5
        %v1534 = vmul.f32 %v1396, 0.5
        %v1535 = vmul.f32 %v1398, 0.5
        %v1536 = vmul.f32 %v1402, 0.5
        %v1537 = vmul.f32 %v1404, 0.5
        %v1538 = vmul.f32 %v1406, 0.5
        %v1539 = vmul.f32 %v1408, 0.5
        %v1540 = vmul.f32 %v1412, 0.5
        %v1541 = vmul.f32 %v1414, 0.5
        %v1542 = vmul.f32 %v1416, 0.5
        %v1543 = vmul.f32 %v1418, 0.5
        %v1544 = vmul.f32 %v1422, 0.5
        %v1545 = vmul.f32 %v1424, 0.5
        %v1546 = vmul.f32 %v1426, 0.5
        %v1547 = vmul.f32 %v1428, 0.5
        %v1548 = vmul.f32 %v1432, 0.5
        %v1549 = vmul.f32 %v1434, 0.5
        %v1550 = vmul.f32 %v1436, 0.5
        %v1551 = vmul.f32 %v1438, 0.5
        %v1552 = vmul.f32 %v1442, 0.5
        %v1553 = vmul.f32 %v1444, 0.5
        %v1554 = vmul.f32 %v1446, 0.5
        %v1555 = vmul.f32 %v1448, 0.5
        %v1556 = vmul.f32 %v1452, 0.5
        %v1557 = vmul.f32 %v1454, 0.5
        %v1558 = vmul.f32 %v1456, 0.5
        %v1559 = vmul.f32 %v1458, 0.5
        %v1560 = vmul.f32 %v1462, 0.5
        %v1561 = vmul.f32 %v1464, 0.5
        %v1562 = vmul.f32 %v1466, 0.5
        %v1563 = vmul.f32 %v1468, 0.5
        %v1564 = vmul.f32 %v1472, 0.5
        %v1565 = vmul.f32 %v1474, 0.5
        %v1566 = vmul.f32 %v1476, 0.5
        %v1567 = vmul.f32 %v1478, 0.5
        %v1568 = vmul.f32 %v1482, 0.5
        %v1569 = vmul.f32 %v1484, 0.5
        %v1570 = vmul.f32 %v1486, 0.5
        %v1571 = vmul.f32 %v1488, 0.5
        %v1572 = vmul.f32 %v1492, 0.5
        %v1573 = vmul.f32 %v1494, 0.5
        %v1574 = vmul.f32 %v1496, 0.5
        %v1575 = vmul.f32 %v1498, 0.5
        %v1576 = vmul.f32 %v1502, 0.5
        %v1577 = vmul.f32 %v1504, 0.5
        %v1578 = vmul.f32 %v1506, 0.5
        %v1579 = vmul.f32 %v1508, 0.5
        %v1580 = vmul.f32 %v1512, 0.5
        %v1581 = vmul.f32 %v1514, 0.5
        %v1582 = vmul.f32 %v1516, 0.5
        %v1583 = vmul.f32 %v1518, 0.5
        %v1584 = vmul.f32 %v1362, 0.70710677
        %v1585 = vmul.f32 %v1364, 0.70710677
        %v1586 = vmul.f32 %v1366, 0.70710677
        %v1587 = vmul.f32 %v1368, 0.70710677
        %v1588 = vmul.f32 %v1372, 0.70710677
        %v1589 = vmul.f32 %v1374, 0.70710677
        %v1590 = vmul.f32 %v1376, 0.70710677
        %v1591 = vmul.f32 %v1378, 0.70710677
        %v1592 = vmul.f32 %v1382, 0.70710677
        %v1593 = vmul.f32 %v1384, 0.70710677
        %v1594 = vmul.f32 %v1386, 0.70710677
        %v1595 = vmul.f32 %v1388, 0.70710677
        %v1596 = vmul.f32 %v1392, 0.70710677
        %v1597 = vmul.f32 %v1394, 0.70710677
        %v1598 = vmul.f32 %v1396, 0.70710677
        %v1599 = vmul.f32 %v1398, 0.70710677
        %v1600 = vmul.f32 %v1402, 0.70710677
        %v1601 = vmul.f32 %v1404, 0.70710677
        %v1602 = vmul.f32 %v1406, 0.70710677
        %v1603 = vmul.f32 %v1408, 0.70710677
        %v1604 = vmul.f32 %v1412, 0.70710677
        %v1605 = vmul.f32 %v1414, 0.70710677
        %v1606 = vmul.f32 %v1416, 0.70710677
        %v1607 = vmul.f32 %v1418, 0.70710677
        %v1608 = vmul.f32 %v1422, 0.70710677
        %v1609 = vmul.f32 %v1424, 0.70710677
        %v1610 = vmul.f32 %v1426, 0.70710677
        %v1611 = vmul.f32 %v1428, 0.70710677
        %v1612 = vmul.f32 %v1432, 0.70710677
        %v1613 = vmul.f32 %v1434, 0.70710677
        %v1614 = vmul.f32 %v1436, 0.70710677
        %v1615 = vmul.f32 %v1438, 0.70710677
        %v1616 = vmul.f32 %v1442, 0.70710677
        %v1617 = vmul.f32 %v1444, 0.70710677
        %v1618 = vmul.f32 %v1446, 0.70710677
        %v1619 = vmul.f32 %v1448, 0.70710677
        %v1620 = vmul.f32 %v1452, 0.70710677
        %v1621 = vmul.f32 %v1454, 0.70710677
        %v1622 = vmul.f32 %v1456, 0.70710677
        %v1623 = vmul.f32 %v1458, 0.70710677
        %v1624 = vmul.f32 %v1462, 0.70710677
        %v1625 = vmul.f32 %v1464, 0.70710677
        %v1626 = vmul.f32 %v1466, 0.70710677
        %v1627 = vmul.f32 %v1468, 0.70710677
        %v1628 = vmul.f32 %v1472, 0.70710677
        %v1629 = vmul.f32 %v1474, 0.70710677
        %v1630 = vmul.f32 %v1476, 0.70710677
        %v1631 = vmul.f32 %v1478, 0.70710677
        %v1632 = vmul.f32 %v1482, 0.70710677
        %v1633 = vmul.f32 %v1484, 0.70710677
        %v1634 = vmul.f32 %v1486, 0.70710677
        %v1635 = vmul.f32 %v1488, 0.70710677
        %v1636 = vmul.f32 %v1492, 0.70710677
        %v1637 = vmul.f32 %v1494, 0.70710677
        %v1638 = vmul.f32 %v1496, 0.70710677
        %v1639 = vmul.f32 %v1498, 0.70710677
        %v1640 = vmul.f32 %v1502, 0.70710677
        %v1641 = vmul.f32 %v1504, 0.70710677
        %v1642 = vmul.f32 %v1506, 0.70710677
        %v1643 = vmul.f32 %v1508, 0.70710677
        %v1644 = vmul.f32 %v1512, 0.70710677
        %v1645 = vmul.f32 %v1514, 0.70710677
        %v1646 = vmul.f32 %v1516, 0.70710677
        %v1647 = vmul.f32 %v1518, 0.70710677
        %v1648 = verf.f32.pop %v1584
        %v1649 = verf.f32.pop %v1585
        %v1650 = verf.f32.pop %v1586
        %v1651 = verf.f32.pop %v1587
        %v1652 = verf.f32.pop %v1588
        %v1653 = verf.f32.pop %v1589
        %v1654 = verf.f32.pop %v1590
        %v1655 = verf.f32.pop %v1591
        %v1656 = verf.f32.pop %v1592
        %v1657 = verf.f32.pop %v1593
        %v1658 = verf.f32.pop %v1594
        %v1659 = verf.f32.pop %v1595
        %v1660 = verf.f32.pop %v1596
        %v1661 = verf.f32.pop %v1597
        %v1662 = verf.f32.pop %v1598
        %v1663 = verf.f32.pop %v1599
        %v1664 = verf.f32.pop %v1600
        %v1665 = verf.f32.pop %v1601
        %v1666 = verf.f32.pop %v1602
        %v1667 = verf.f32.pop %v1603
        %v1668 = verf.f32.pop %v1604
        %v1669 = verf.f32.pop %v1605
        %v1670 = verf.f32.pop %v1606
        %v1671 = verf.f32.pop %v1607
        %v1672 = verf.f32.pop %v1608
        %v1673 = verf.f32.pop %v1609
        %v1674 = verf.f32.pop %v1610
        %v1675 = verf.f32.pop %v1611
        %v1676 = verf.f32.pop %v1612
        %v1677 = verf.f32.pop %v1613
        %v1678 = verf.f32.pop %v1614
        %v1679 = verf.f32.pop %v1615
        %v1680 = verf.f32.pop %v1616
        %v1681 = verf.f32.pop %v1617
        %v1682 = verf.f32.pop %v1618
        %v1683 = verf.f32.pop %v1619
        %v1684 = verf.f32.pop %v1620
        %v1685 = verf.f32.pop %v1621
        %v1686 = verf.f32.pop %v1622
        %v1687 = verf.f32.pop %v1623
        %v1688 = verf.f32.pop %v1624
        %v1689 = verf.f32.pop %v1625
        %v1690 = verf.f32.pop %v1626
        %v1691 = verf.f32.pop %v1627
        %v1692 = verf.f32.pop %v1628
        %v1693 = verf.f32.pop %v1629
        %v1694 = verf.f32.pop %v1630
        %v1695 = verf.f32.pop %v1631
        %v1696 = verf.f32.pop %v1632
        %v1697 = verf.f32.pop %v1633
        %v1698 = verf.f32.pop %v1634
        %v1699 = verf.f32.pop %v1635
        %v1700 = verf.f32.pop %v1636
        %v1701 = verf.f32.pop %v1637
        %v1702 = verf.f32.pop %v1638
        %v1703 = verf.f32.pop %v1639
        %v1704 = verf.f32.pop %v1640
        %v1705 = verf.f32.pop %v1641
        %v1706 = verf.f32.pop %v1642
        %v1707 = verf.f32.pop %v1643
        %v1708 = verf.f32.pop %v1644
        %v1709 = verf.f32.pop %v1645
        %v1710 = verf.f32.pop %v1646
        %v1711 = verf.f32.pop %v1647
        %v1712 = vadd.f32 %v1648, 1.0
        %v1713 = vadd.f32 %v1649, 1.0
        %v1714 = vadd.f32 %v1650, 1.0
        %v1715 = vadd.f32 %v1651, 1.0
        %v1716 = vadd.f32 %v1652, 1.0
        %v1717 = vadd.f32 %v1653, 1.0
        %v1718 = vadd.f32 %v1654, 1.0
        %v1719 = vadd.f32 %v1655, 1.0
        %v1720 = vadd.f32 %v1656, 1.0
        %v1721 = vadd.f32 %v1657, 1.0
        %v1722 = vadd.f32 %v1658, 1.0
        %v1723 = vadd.f32 %v1659, 1.0
        %v1724 = vadd.f32 %v1660, 1.0
        %v1725 = vadd.f32 %v1661, 1.0
        %v1726 = vadd.f32 %v1662, 1.0
        %v1727 = vadd.f32 %v1663, 1.0
        %v1728 = vadd.f32 %v1664, 1.0
        %v1729 = vadd.f32 %v1665, 1.0
        %v1730 = vadd.f32 %v1666, 1.0
        %v1731 = vadd.f32 %v1667, 1.0
        %v1732 = vadd.f32 %v1668, 1.0
        %v1733 = vadd.f32 %v1669, 1.0
        %v1734 = vadd.f32 %v1670, 1.0
        %v1735 = vadd.f32 %v1671, 1.0
        %v1736 = vadd.f32 %v1672, 1.0
        %v1737 = vadd.f32 %v1673, 1.0
        %v1738 = vadd.f32 %v1674, 1.0
        %v1739 = vadd.f32 %v1675, 1.0
        %v1740 = vadd.f32 %v1676, 1.0
        %v1741 = vadd.f32 %v1677, 1.0
        %v1742 = vadd.f32 %v1678, 1.0
        %v1743 = vadd.f32 %v1679, 1.0
        %v1744 = vadd.f32 %v1680, 1.0
        %v1745 = vadd.f32 %v1681, 1.0
        %v1746 = vadd.f32 %v1682, 1.0
        %v1747 = vadd.f32 %v1683, 1.0
        %v1748 = vadd.f32 %v1684, 1.0
        %v1749 = vadd.f32 %v1685, 1.0
        %v1750 = vadd.f32 %v1686, 1.0
        %v1751 = vadd.f32 %v1687, 1.0
        %v1752 = vadd.f32 %v1688, 1.0
        %v1753 = vadd.f32 %v1689, 1.0
        %v1754 = vadd.f32 %v1690, 1.0
        %v1755 = vadd.f32 %v1691, 1.0
        %v1756 = vadd.f32 %v1692, 1.0
        %v1757 = vadd.f32 %v1693, 1.0
        %v1758 = vadd.f32 %v1694, 1.0
        %v1759 = vadd.f32 %v1695, 1.0
        %v1760 = vadd.f32 %v1696, 1.0
        %v1761 = vadd.f32 %v1697, 1.0
        %v1762 = vadd.f32 %v1698, 1.0
        %v1763 = vadd.f32 %v1699, 1.0
        %v1764 = vadd.f32 %v1700, 1.0
        %v1765 = vadd.f32 %v1701, 1.0
        %v1766 = vadd.f32 %v1702, 1.0
        %v1767 = vadd.f32 %v1703, 1.0
        %v1768 = vadd.f32 %v1704, 1.0
        %v1769 = vadd.f32 %v1705, 1.0
        %v1770 = vadd.f32 %v1706, 1.0
        %v1771 = vadd.f32 %v1707, 1.0
        %v1772 = vadd.f32 %v1708, 1.0
        %v1773 = vadd.f32 %v1709, 1.0
        %v1774 = vadd.f32 %v1710, 1.0
        %v1775 = vadd.f32 %v1711, 1.0
        %v1776 = vmul.f32 %v1520, %v1712
        %v1777 = vmul.f32 %v1521, %v1713
        %v1778 = vmul.f32 %v1522, %v1714
        %v1779 = vmul.f32 %v1523, %v1715
        %v1780 = vmul.f32 %v1524, %v1716
        %v1781 = vmul.f32 %v1525, %v1717
        %v1782 = vmul.f32 %v1526, %v1718
        %v1783 = vmul.f32 %v1527, %v1719
        %v1784 = vmul.f32 %v1528, %v1720
        %v1785 = vmul.f32 %v1529, %v1721
        %v1786 = vmul.f32 %v1530, %v1722
        %v1787 = vmul.f32 %v1531, %v1723
        %v1788 = vmul.f32 %v1532, %v1724
        %v1789 = vmul.f32 %v1533, %v1725
        %v1790 = vmul.f32 %v1534, %v1726
        %v1791 = vmul.f32 %v1535, %v1727
        %v1792 = vmul.f32 %v1536, %v1728
        %v1793 = vmul.f32 %v1537, %v1729
        %v1794 = vmul.f32 %v1538, %v1730
        %v1795 = vmul.f32 %v1539, %v1731
        %v1796 = vmul.f32 %v1540, %v1732
        %v1797 = vmul.f32 %v1541, %v1733
        %v1798 = vmul.f32 %v1542, %v1734
        %v1799 = vmul.f32 %v1543, %v1735
        %v1800 = vmul.f32 %v1544, %v1736
        %v1801 = vmul.f32 %v1545, %v1737
        %v1802 = vmul.f32 %v1546, %v1738
        %v1803 = vmul.f32 %v1547, %v1739
        %v1804 = vmul.f32 %v1548, %v1740
        %v1805 = vmul.f32 %v1549, %v1741
        %v1806 = vmul.f32 %v1550, %v1742
        %v1807 = vmul.f32 %v1551, %v1743
        %v1808 = vmul.f32 %v1552, %v1744
        %v1809 = vmul.f32 %v1553, %v1745
        %v1810 = vmul.f32 %v1554, %v1746
        %v1811 = vmul.f32 %v1555, %v1747
        %v1812 = vmul.f32 %v1556, %v1748
        %v1813 = vmul.f32 %v1557, %v1749
        %v1814 = vmul.f32 %v1558, %v1750
        %v1815 = vmul.f32 %v1559, %v1751
        %v1816 = vmul.f32 %v1560, %v1752
        %v1817 = vmul.f32 %v1561, %v1753
        %v1818 = vmul.f32 %v1562, %v1754
        %v1819 = vmul.f32 %v1563, %v1755
        %v1820 = vmul.f32 %v1564, %v1756
        %v1821 = vmul.f32 %v1565, %v1757
        %v1822 = vmul.f32 %v1566, %v1758
        %v1823 = vmul.f32 %v1567, %v1759
        %v1824 = vmul.f32 %v1568, %v1760
        %v1825 = vmul.f32 %v1569, %v1761
        %v1826 = vmul.f32 %v1570, %v1762
        %v1827 = vmul.f32 %v1571, %v1763
        %v1828 = vmul.f32 %v1572, %v1764
        %v1829 = vmul.f32 %v1573, %v1765
        %v1830 = vmul.f32 %v1574, %v1766
        %v1831 = vmul.f32 %v1575, %v1767
        %v1832 = vmul.f32 %v1576, %v1768
        %v1833 = vmul.f32 %v1577, %v1769
        %v1834 = vmul.f32 %v1578, %v1770
        %v1835 = vmul.f32 %v1579, %v1771
        %v1836 = vmul.f32 %v1580, %v1772
        %v1837 = vmul.f32 %v1581, %v1773
        %v1838 = vmul.f32 %v1582, %v1774
        %v1839 = vmul.f32 %v1583, %v1775
        %v1840 = vpack.c.bf16 %v1778, %v1776
        %v1841 = vpack.c.bf16 %v1779, %v1777
        %v1842 = vpack.c.bf16 %v1782, %v1780
        %v1843 = vpack.c.bf16 %v1783, %v1781
        %v1844 = vpack.c.bf16 %v1786, %v1784
        %v1845 = vpack.c.bf16 %v1787, %v1785
        %v1846 = vpack.c.bf16 %v1790, %v1788
        %v1847 = vpack.c.bf16 %v1791, %v1789
        %v1848 = vpack.c.bf16 %v1794, %v1792
        %v1849 = vpack.c.bf16 %v1795, %v1793
        %v1850 = vpack.c.bf16 %v1798, %v1796
        %v1851 = vpack.c.bf16 %v1799, %v1797
        %v1852 = vpack.c.bf16 %v1802, %v1800
        %v1853 = vpack.c.bf16 %v1803, %v1801
        %v1854 = vpack.c.bf16 %v1806, %v1804
        %v1855 = vpack.c.bf16 %v1807, %v1805
        %v1856 = vpack.c.bf16 %v1810, %v1808
        %v1857 = vpack.c.bf16 %v1811, %v1809
        %v1858 = vpack.c.bf16 %v1814, %v1812
        %v1859 = vpack.c.bf16 %v1815, %v1813
        %v1860 = vpack.c.bf16 %v1818, %v1816
        %v1861 = vpack.c.bf16 %v1819, %v1817
        %v1862 = vpack.c.bf16 %v1822, %v1820
        %v1863 = vpack.c.bf16 %v1823, %v1821
        %v1864 = vpack.c.bf16 %v1826, %v1824
        %v1865 = vpack.c.bf16 %v1827, %v1825
        %v1866 = vpack.c.bf16 %v1830, %v1828
        %v1867 = vpack.c.bf16 %v1831, %v1829
        %v1868 = vpack.c.bf16 %v1834, %v1832
        %v1869 = vpack.c.bf16 %v1835, %v1833
        %v1870 = vpack.c.bf16 %v1838, %v1836
        %v1871 = vpack.c.bf16 %v1839, %v1837
        %v1872 = vld [vmem:[#allocation11] sm:$0xf]
        %v1873 = vld [vmem:[#allocation11 + $0x4] sm:$0xf]
        %v1874 = vld [vmem:[#allocation11 + $0x8] sm:$0xf]
        %v1875 = vld [vmem:[#allocation11 + $0xc] sm:$0xf]
        %v1876 = vld [vmem:[#allocation11 + $0x10] sm:$0xf]
        %v1877 = vld [vmem:[#allocation11 + $0x14] sm:$0xf]
        %v1878 = vld [vmem:[#allocation11 + $0x18] sm:$0xf]
        %v1879 = vld [vmem:[#allocation11 + $0x1c] sm:$0xf]
        %v1880 = vld [vmem:[#allocation11 + $0x20] sm:$0xf]
        %v1881 = vld [vmem:[#allocation11 + $0x24] sm:$0xf]
        %v1882 = vld [vmem:[#allocation11 + $0x28] sm:$0xf]
        %v1883 = vld [vmem:[#allocation11 + $0x2c] sm:$0xf]
        %v1884 = vld [vmem:[#allocation11 + $0x30] sm:$0xf]
        %v1885 = vld [vmem:[#allocation11 + $0x34] sm:$0xf]
        %v1886 = vld [vmem:[#allocation11 + $0x38] sm:$0xf]
        %v1887 = vld [vmem:[#allocation11 + $0x3c] sm:$0xf]
        %v1888 = vld [vmem:[#allocation11 + $0x40] sm:$0xf]
        %v1889 = vld [vmem:[#allocation11 + $0x44] sm:$0xf]
        %v1890 = vld [vmem:[#allocation11 + $0x48] sm:$0xf]
        %v1891 = vld [vmem:[#allocation11 + $0x4c] sm:$0xf]
        %v1892 = vld [vmem:[#allocation11 + $0x50] sm:$0xf]
        %v1893 = vld [vmem:[#allocation11 + $0x54] sm:$0xf]
        %v1894 = vld [vmem:[#allocation11 + $0x58] sm:$0xf]
        %v1895 = vld [vmem:[#allocation11 + $0x5c] sm:$0xf]
        %v1896 = vld [vmem:[#allocation11 + $0x60] sm:$0xf]
        %v1897 = vld [vmem:[#allocation11 + $0x64] sm:$0xf]
        %v1898 = vld [vmem:[#allocation11 + $0x68] sm:$0xf]
        %v1899 = vld [vmem:[#allocation11 + $0x6c] sm:$0xf]
        %v1900 = vld [vmem:[#allocation11 + $0x70] sm:$0xf]
        %v1901 = vld [vmem:[#allocation11 + $0x74] sm:$0xf]
        %v1902 = vld [vmem:[#allocation11 + $0x78] sm:$0xf]
        %v1903 = vld [vmem:[#allocation11 + $0x7c] sm:$0xf]
        %v1904 = vld [vmem:[#allocation13] sm:$0x1]
        %v1906 = vlaneseq
        %v1907 = vshrl.u32 %v1906, 7
        %v1908 = vsub.s32 0, %v1907
        %v1909 = vrot.slane %v1904, %v1908
        %v1943 = vunpack.c.l.b16 %v1872
        %v1944 = vunpack.c.l.b16 %v1873
        %v1945 = vunpack.c.l.b16 %v1874
        %v1946 = vunpack.c.l.b16 %v1875
        %v1947 = vunpack.c.l.b16 %v1876
        %v1948 = vunpack.c.l.b16 %v1877
        %v1949 = vunpack.c.l.b16 %v1878
        %v1950 = vunpack.c.l.b16 %v1879
        %v1951 = vunpack.c.l.b16 %v1880
        %v1952 = vunpack.c.l.b16 %v1881
        %v1953 = vunpack.c.l.b16 %v1882
        %v1954 = vunpack.c.l.b16 %v1883
        %v1955 = vunpack.c.l.b16 %v1884
        %v1956 = vunpack.c.l.b16 %v1885
        %v1957 = vunpack.c.l.b16 %v1886
        %v1958 = vunpack.c.l.b16 %v1887
        %v1959 = vunpack.c.l.b16 %v1888
        %v1960 = vunpack.c.l.b16 %v1889
        %v1961 = vunpack.c.l.b16 %v1890
        %v1962 = vunpack.c.l.b16 %v1891
        %v1963 = vunpack.c.l.b16 %v1892
        %v1964 = vunpack.c.l.b16 %v1893
        %v1965 = vunpack.c.l.b16 %v1894
        %v1966 = vunpack.c.l.b16 %v1895
        %v1967 = vunpack.c.l.b16 %v1896
        %v1968 = vunpack.c.l.b16 %v1897
        %v1969 = vunpack.c.l.b16 %v1898
        %v1970 = vunpack.c.l.b16 %v1899
        %v1971 = vunpack.c.l.b16 %v1900
        %v1972 = vunpack.c.l.b16 %v1901
        %v1973 = vunpack.c.l.b16 %v1902
        %v1974 = vunpack.c.l.b16 %v1903
        %v1975 = vpack.c.b16 %v1944, %v1943
        %v1976 = vpack.c.b16 %v1946, %v1945
        %v1977 = vpack.c.b16 %v1948, %v1947
        %v1978 = vpack.c.b16 %v1950, %v1949
        %v1979 = vpack.c.b16 %v1952, %v1951
        %v1980 = vpack.c.b16 %v1954, %v1953
        %v1981 = vpack.c.b16 %v1956, %v1955
        %v1982 = vpack.c.b16 %v1958, %v1957
        %v1983 = vpack.c.b16 %v1960, %v1959
        %v1984 = vpack.c.b16 %v1962, %v1961
        %v1985 = vpack.c.b16 %v1964, %v1963
        %v1986 = vpack.c.b16 %v1966, %v1965
        %v1987 = vpack.c.b16 %v1968, %v1967
        %v1988 = vpack.c.b16 %v1970, %v1969
        %v1989 = vpack.c.b16 %v1972, %v1971
        %v1990 = vpack.c.b16 %v1974, %v1973
        %2007 = vmatprep.subr.bf16.mxu0 0
        %2008 = vmatpush1.bf16.msra.mxu0 %v1975
        %2009 = vmatprep.subr.bf16.mxu0 0
        %2010 = vmatpush1.bf16.msra.mxu0 %v1976
        %2011 = vmatprep.subr.bf16.mxu0 0
        %2012 = vmatpush1.bf16.msra.mxu0 %v1977
        %2013 = vmatprep.subr.bf16.mxu0 0
        %2014 = vmatpush1.bf16.msra.mxu0 %v1978
        %2015 = vmatprep.subr.bf16.mxu0 0
        %2016 = vmatpush1.bf16.msra.mxu0 %v1979
        %2017 = vmatprep.subr.bf16.mxu0 0
        %2018 = vmatpush1.bf16.msra.mxu0 %v1980
        %2019 = vmatprep.subr.bf16.mxu0 0
        %2020 = vmatpush1.bf16.msra.mxu0 %v1981
        %2021 = vmatprep.subr.bf16.mxu0 0
        %2022 = vmatpush1.bf16.msra.mxu0 %v1982
        %2023 = vmatprep.subr.bf16.mxu0 0
        %2024 = vmatpush1.bf16.msra.mxu0 %v1983
        %2025 = vmatprep.subr.bf16.mxu0 0
        %2026 = vmatpush1.bf16.msra.mxu0 %v1984
        %2027 = vmatprep.subr.bf16.mxu0 0
        %2028 = vmatpush1.bf16.msra.mxu0 %v1985
        %2029 = vmatprep.subr.bf16.mxu0 0
        %2030 = vmatpush1.bf16.msra.mxu0 %v1986
        %2031 = vmatprep.subr.bf16.mxu0 0
        %2032 = vmatpush1.bf16.msra.mxu0 %v1987
        %2033 = vmatprep.subr.bf16.mxu0 0
        %2034 = vmatpush1.bf16.msra.mxu0 %v1988
        %2035 = vmatprep.subr.bf16.mxu0 0
        %2036 = vmatpush1.bf16.msra.mxu0 %v1989
        %2037 = vmatprep.subr.bf16.mxu0 0
        %2038 = vmatpush1.bf16.msra.mxu0 %v1990
        %2039 = vmatprep.mubr.bf16.mxu0 %v1841
        %2040 = vmatmul.mubr.bf16.gmra.mrb[0].mxu0 %v1840
        %v2041 = vpop.f32.mrb[0].mxu0
        %v2042 = vadd.f32 %v1909, %v2041
        %v2043 = vpop.f32.mrb[0].mxu0
        %v2044 = vpop.f32.mrb[0].mxu0
        %v2045 = vadd.f32 %v1909, %v2044
        %v2046 = vpop.f32.mrb[0].mxu0
        %2047 = vmatprep.mubr.bf16.mxu0 %v1843
        %2048 = vmatmul.mubr.bf16.gmra.mrb[0].mxu0 %v1842
        %v2049 = vpop.f32.mrb[0].mxu0
        %v2050 = vadd.f32 %v1909, %v2049
        %v2051 = vpop.f32.mrb[0].mxu0
        %v2052 = vpop.f32.mrb[0].mxu0
        %v2053 = vadd.f32 %v1909, %v2052
        %v2054 = vpop.f32.mrb[0].mxu0
        %2055 = vmatprep.mubr.bf16.mxu0 %v1845
        %2056 = vmatmul.mubr.bf16.gmra.mrb[0].mxu0 %v1844
        %v2057 = vpop.f32.mrb[0].mxu0
        %v2058 = vadd.f32 %v1909, %v2057
        %v2059 = vpop.f32.mrb[0].mxu0
        %v2060 = vpop.f32.mrb[0].mxu0
        %v2061 = vadd.f32 %v1909, %v2060
        %v2062 = vpop.f32.mrb[0].mxu0
        %2063 = vmatprep.mubr.bf16.mxu0 %v1847
        %2064 = vmatmul.mubr.bf16.gmra.mrb[0].mxu0 %v1846
        %v2065 = vpop.f32.mrb[0].mxu0
        %v2066 = vadd.f32 %v1909, %v2065
        %v2067 = vpop.f32.mrb[0].mxu0
        %v2068 = vpop.f32.mrb[0].mxu0
        %v2069 = vadd.f32 %v1909, %v2068
        %v2070 = vpop.f32.mrb[0].mxu0
        %2071 = vmatprep.mubr.bf16.mxu0 %v1849
        %2072 = vmatmul.mubr.bf16.gmra.mrb[0].mxu0 %v1848
        %v2073 = vpop.f32.mrb[0].mxu0
        %v2074 = vadd.f32 %v1909, %v2073
        %v2075 = vpop.f32.mrb[0].mxu0
        %v2076 = vpop.f32.mrb[0].mxu0
        %v2077 = vadd.f32 %v1909, %v2076
        %v2078 = vpop.f32.mrb[0].mxu0
        %2079 = vmatprep.mubr.bf16.mxu0 %v1851
        %2080 = vmatmul.mubr.bf16.gmra.mrb[0].mxu0 %v1850
        %v2081 = vpop.f32.mrb[0].mxu0
        %v2082 = vadd.f32 %v1909, %v2081
        %v2083 = vpop.f32.mrb[0].mxu0
        %v2084 = vpop.f32.mrb[0].mxu0
        %v2085 = vadd.f32 %v1909, %v2084
        %v2086 = vpop.f32.mrb[0].mxu0
        %2087 = vmatprep.mubr.bf16.mxu0 %v1853
        %2088 = vmatmul.mubr.bf16.gmra.mrb[0].mxu0 %v1852
        %v2089 = vpop.f32.mrb[0].mxu0
        %v2090 = vadd.f32 %v1909, %v2089
        %v2091 = vpop.f32.mrb[0].mxu0
        %v2092 = vpop.f32.mrb[0].mxu0
        %v2093 = vadd.f32 %v1909, %v2092
        %v2094 = vpop.f32.mrb[0].mxu0
        %2095 = vmatprep.mubr.bf16.mxu0 %v1855
        %2096 = vmatmul.mubr.bf16.gmra.mrb[0].mxu0 %v1854
        %v2097 = vpop.f32.mrb[0].mxu0
        %v2098 = vadd.f32 %v1909, %v2097
        %v2099 = vpop.f32.mrb[0].mxu0
        %v2100 = vpop.f32.mrb[0].mxu0
        %v2101 = vadd.f32 %v1909, %v2100
        %v2102 = vpop.f32.mrb[0].mxu0
        %2103 = vmatprep.mubr.bf16.mxu0 %v1857
        %2104 = vmatmul.mubr.bf16.gmra.mrb[0].mxu0 %v1856
        %v2105 = vpop.f32.mrb[0].mxu0
        %v2106 = vadd.f32 %v1909, %v2105
        %v2107 = vpop.f32.mrb[0].mxu0
        %v2108 = vpop.f32.mrb[0].mxu0
        %v2109 = vadd.f32 %v1909, %v2108
        %v2110 = vpop.f32.mrb[0].mxu0
        %2111 = vmatprep.mubr.bf16.mxu0 %v1859
        %2112 = vmatmul.mubr.bf16.gmra.mrb[0].mxu0 %v1858
        %v2113 = vpop.f32.mrb[0].mxu0
        %v2114 = vadd.f32 %v1909, %v2113
        %v2115 = vpop.f32.mrb[0].mxu0
        %v2116 = vpop.f32.mrb[0].mxu0
        %v2117 = vadd.f32 %v1909, %v2116
        %v2118 = vpop.f32.mrb[0].mxu0
        %2119 = vmatprep.mubr.bf16.mxu0 %v1861
        %2120 = vmatmul.mubr.bf16.gmra.mrb[0].mxu0 %v1860
        %v2121 = vpop.f32.mrb[0].mxu0
        %v2122 = vadd.f32 %v1909, %v2121
        %v2123 = vpop.f32.mrb[0].mxu0
        %v2124 = vpop.f32.mrb[0].mxu0
        %v2125 = vadd.f32 %v1909, %v2124
        %v2126 = vpop.f32.mrb[0].mxu0
        %2127 = vmatprep.mubr.bf16.mxu0 %v1863
        %2128 = vmatmul.mubr.bf16.gmra.mrb[0].mxu0 %v1862
        %v2129 = vpop.f32.mrb[0].mxu0
        %v2130 = vadd.f32 %v1909, %v2129
        %v2131 = vpop.f32.mrb[0].mxu0
        %v2132 = vpop.f32.mrb[0].mxu0
        %v2133 = vadd.f32 %v1909, %v2132
        %v2134 = vpop.f32.mrb[0].mxu0
        %2135 = vmatprep.mubr.bf16.mxu0 %v1865
        %2136 = vmatmul.mubr.bf16.gmra.mrb[0].mxu0 %v1864
        %v2137 = vpop.f32.mrb[0].mxu0
        %v2138 = vadd.f32 %v1909, %v2137
        %v2139 = vpop.f32.mrb[0].mxu0
        %v2140 = vpop.f32.mrb[0].mxu0
        %v2141 = vadd.f32 %v1909, %v2140
        %v2142 = vpop.f32.mrb[0].mxu0
        %2143 = vmatprep.mubr.bf16.mxu0 %v1867
        %2144 = vmatmul.mubr.bf16.gmra.mrb[0].mxu0 %v1866
        %v2145 = vpop.f32.mrb[0].mxu0
        %v2146 = vadd.f32 %v1909, %v2145
        %v2147 = vpop.f32.mrb[0].mxu0
        %v2148 = vpop.f32.mrb[0].mxu0
        %v2149 = vadd.f32 %v1909, %v2148
        %v2150 = vpop.f32.mrb[0].mxu0
        %2151 = vmatprep.mubr.bf16.mxu0 %v1869
        %2152 = vmatmul.mubr.bf16.gmra.mrb[0].mxu0 %v1868
        %v2153 = vpop.f32.mrb[0].mxu0
        %v2154 = vadd.f32 %v1909, %v2153
        %v2155 = vpop.f32.mrb[0].mxu0
        %v2156 = vpop.f32.mrb[0].mxu0
        %v2157 = vadd.f32 %v1909, %v2156
        %v2158 = vpop.f32.mrb[0].mxu0
        %2159 = vmatprep.mubr.bf16.mxu0 %v1871
        %2160 = vmatmul.mubr.bf16.gmra.mrb[0].mxu0 %v1870
        %v2161 = vpop.f32.mrb[0].mxu0
        %v2162 = vadd.f32 %v1909, %v2161
        %v2163 = vpop.f32.mrb[0].mxu0
        %v2164 = vpop.f32.mrb[0].mxu0
        %v2165 = vadd.f32 %v1909, %v2164
        %v2166 = vpop.f32.mrb[0].mxu0
        %2167 = vdwg.mxu0
        %2168 = vst [vmem:[%s405] sm:$0xff] %v2042
        %2169 = vst [vmem:[%s405 + $0x8] sm:$0xff] %v2045
        %2170 = vst [vmem:[%s405 + $0x10] sm:$0xff] %v2050
        %2171 = vst [vmem:[%s405 + $0x18] sm:$0xff] %v2053
        %2172 = vst [vmem:[%s405 + $0x20] sm:$0xff] %v2058
        %2173 = vst [vmem:[%s405 + $0x28] sm:$0xff] %v2061
        %2174 = vst [vmem:[%s405 + $0x30] sm:$0xff] %v2066
        %2175 = vst [vmem:[%s405 + $0x38] sm:$0xff] %v2069
        %2176 = vst [vmem:[%s405 + $0x40] sm:$0xff] %v2074
        %2177 = vst [vmem:[%s405 + $0x48] sm:$0xff] %v2077
        %2178 = vst [vmem:[%s405 + $0x50] sm:$0xff] %v2082
        %2179 = vst [vmem:[%s405 + $0x58] sm:$0xff] %v2085
        %2180 = vst [vmem:[%s405 + $0x60] sm:$0xff] %v2090
        %2181 = vst [vmem:[%s405 + $0x68] sm:$0xff] %v2093
        %2182 = vst [vmem:[%s405 + $0x70] sm:$0xff] %v2098
        %2183 = vst [vmem:[%s405 + $0x78] sm:$0xff] %v2101
        %2184 = vst [vmem:[%s405 + $0x80] sm:$0xff] %v2106
        %2185 = vst [vmem:[%s405 + $0x88] sm:$0xff] %v2109
        %2186 = vst [vmem:[%s405 + $0x90] sm:$0xff] %v2114
        %2187 = vst [vmem:[%s405 + $0x98] sm:$0xff] %v2117
        %2188 = vst [vmem:[%s405 + $0xa0] sm:$0xff] %v2122
        %2189 = vst [vmem:[%s405 + $0xa8] sm:$0xff] %v2125
        %2190 = vst [vmem:[%s405 + $0xb0] sm:$0xff] %v2130
        %2191 = vst [vmem:[%s405 + $0xb8] sm:$0xff] %v2133
        %2192 = vst [vmem:[%s405 + $0xc0] sm:$0xff] %v2138
        %2193 = vst [vmem:[%s405 + $0xc8] sm:$0xff] %v2141
        %2194 = vst [vmem:[%s405 + $0xd0] sm:$0xff] %v2146
        %2195 = vst [vmem:[%s405 + $0xd8] sm:$0xff] %v2149
        %2196 = vst [vmem:[%s405 + $0xe0] sm:$0xff] %v2154
        %2197 = vst [vmem:[%s405 + $0xe8] sm:$0xff] %v2157
        %2198 = vst [vmem:[%s405 + $0xf0] sm:$0xff] %v2162
        %2199 = vst [vmem:[%s405 + $0xf8] sm:$0xff] %v2165
        %v2200 = vmul.f32 %v422, %v422
        %v2201 = vmul.f32 %v423, %v423
        %v2202 = vmul.f32 %v424, %v424
        %v2203 = vmul.f32 %v425, %v425
        %v2204 = vmul.f32 %v426, %v426
        %v2205 = vmul.f32 %v427, %v427
        %v2206 = vmul.f32 %v428, %v428
        %v2207 = vmul.f32 %v429, %v429
        %v2208 = vmul.f32 %v430, %v430
        %v2209 = vmul.f32 %v431, %v431
        %v2210 = vmul.f32 %v432, %v432
        %v2211 = vmul.f32 %v433, %v433
        %v2212 = vmul.f32 %v434, %v434
        %v2213 = vmul.f32 %v435, %v435
        %v2214 = vmul.f32 %v436, %v436
        %v2215 = vmul.f32 %v437, %v437
        %v2216 = vmul.f32 %v438, %v438
        %v2217 = vmul.f32 %v439, %v439
        %v2218 = vmul.f32 %v440, %v440
        %v2219 = vmul.f32 %v441, %v441
        %v2220 = vmul.f32 %v442, %v442
        %v2221 = vmul.f32 %v443, %v443
        %v2222 = vmul.f32 %v444, %v444
        %v2223 = vmul.f32 %v445, %v445
        %v2224 = vmul.f32 %v446, %v446
        %v2225 = vmul.f32 %v447, %v447
        %v2226 = vmul.f32 %v448, %v448
        %v2227 = vmul.f32 %v449, %v449
        %v2228 = vmul.f32 %v450, %v450
        %v2229 = vmul.f32 %v451, %v451
        %v2230 = vmul.f32 %v452, %v452
        %v2231 = vmul.f32 %v453, %v453
        %2232 = vadd.xlane.f32.xlu0 %v2200
        %v2233 = vpop.xlane.xlu0 %2232
        %2234 = vadd.xlane.f32.xlu0 %v2201
        %v2235 = vpop.xlane.xlu0 %2234
        %2236 = vadd.xlane.f32.xlu0 %v2202
        %v2237 = vpop.xlane.xlu0 %2236
        %2238 = vadd.xlane.f32.xlu0 %v2203
        %v2239 = vpop.xlane.xlu0 %2238
        %2240 = vadd.xlane.f32.xlu0 %v2204
        %v2241 = vpop.xlane.xlu0 %2240
        %2242 = vadd.xlane.f32.xlu0 %v2205
        %v2243 = vpop.xlane.xlu0 %2242
        %2244 = vadd.xlane.f32.xlu0 %v2206
        %v2245 = vpop.xlane.xlu0 %2244
        %2246 = vadd.xlane.f32.xlu0 %v2207
        %v2247 = vpop.xlane.xlu0 %2246
        %2248 = vadd.xlane.f32.xlu0 %v2208
        %v2249 = vpop.xlane.xlu0 %2248
        %2250 = vadd.xlane.f32.xlu0 %v2209
        %v2251 = vpop.xlane.xlu0 %2250
        %2252 = vadd.xlane.f32.xlu0 %v2210
        %v2253 = vpop.xlane.xlu0 %2252
        %2254 = vadd.xlane.f32.xlu0 %v2211
        %v2255 = vpop.xlane.xlu0 %2254
        %2256 = vadd.xlane.f32.xlu0 %v2212
        %v2257 = vpop.xlane.xlu0 %2256
        %2258 = vadd.xlane.f32.xlu0 %v2213
        %v2259 = vpop.xlane.xlu0 %2258
        %2260 = vadd.xlane.f32.xlu0 %v2214
        %v2261 = vpop.xlane.xlu0 %2260
        %2262 = vadd.xlane.f32.xlu0 %v2215
        %v2263 = vpop.xlane.xlu0 %2262
        %2264 = vadd.xlane.f32.xlu0 %v2216
        %v2265 = vpop.xlane.xlu0 %2264
        %2266 = vadd.xlane.f32.xlu0 %v2217
        %v2267 = vpop.xlane.xlu0 %2266
        %2268 = vadd.xlane.f32.xlu0 %v2218
        %v2269 = vpop.xlane.xlu0 %2268
        %2270 = vadd.xlane.f32.xlu0 %v2219
        %v2271 = vpop.xlane.xlu0 %2270
        %2272 = vadd.xlane.f32.xlu0 %v2220
        %v2273 = vpop.xlane.xlu0 %2272
        %2274 = vadd.xlane.f32.xlu0 %v2221
        %v2275 = vpop.xlane.xlu0 %2274
        %2276 = vadd.xlane.f32.xlu0 %v2222
        %v2277 = vpop.xlane.xlu0 %2276
        %2278 = vadd.xlane.f32.xlu0 %v2223
        %v2279 = vpop.xlane.xlu0 %2278
        %2280 = vadd.xlane.f32.xlu0 %v2224
        %v2281 = vpop.xlane.xlu0 %2280
        %2282 = vadd.xlane.f32.xlu0 %v2225
        %v2283 = vpop.xlane.xlu0 %2282
        %2284 = vadd.xlane.f32.xlu0 %v2226
        %v2285 = vpop.xlane.xlu0 %2284
        %2286 = vadd.xlane.f32.xlu0 %v2227
        %v2287 = vpop.xlane.xlu0 %2286
        %2288 = vadd.xlane.f32.xlu0 %v2228
        %v2289 = vpop.xlane.xlu0 %2288
        %2290 = vadd.xlane.f32.xlu0 %v2229
        %v2291 = vpop.xlane.xlu0 %2290
        %2292 = vadd.xlane.f32.xlu0 %v2230
        %v2293 = vpop.xlane.xlu0 %2292
        %2294 = vadd.xlane.f32.xlu0 %v2231
        %v2295 = vpop.xlane.xlu0 %2294
        %v2296 = vmax.f32 %v2233, 1e-24
        %v2297 = vmax.f32 %v2235, 1e-24
        %v2298 = vmax.f32 %v2237, 1e-24
        %v2299 = vmax.f32 %v2239, 1e-24
        %v2300 = vmax.f32 %v2241, 1e-24
        %v2301 = vmax.f32 %v2243, 1e-24
        %v2302 = vmax.f32 %v2245, 1e-24
        %v2303 = vmax.f32 %v2247, 1e-24
        %v2304 = vmax.f32 %v2249, 1e-24
        %v2305 = vmax.f32 %v2251, 1e-24
        %v2306 = vmax.f32 %v2253, 1e-24
        %v2307 = vmax.f32 %v2255, 1e-24
        %v2308 = vmax.f32 %v2257, 1e-24
        %v2309 = vmax.f32 %v2259, 1e-24
        %v2310 = vmax.f32 %v2261, 1e-24
        %v2311 = vmax.f32 %v2263, 1e-24
        %v2312 = vmax.f32 %v2265, 1e-24
        %v2313 = vmax.f32 %v2267, 1e-24
        %v2314 = vmax.f32 %v2269, 1e-24
        %v2315 = vmax.f32 %v2271, 1e-24
        %v2316 = vmax.f32 %v2273, 1e-24
        %v2317 = vmax.f32 %v2275, 1e-24
        %v2318 = vmax.f32 %v2277, 1e-24
        %v2319 = vmax.f32 %v2279, 1e-24
        %v2320 = vmax.f32 %v2281, 1e-24
        %v2321 = vmax.f32 %v2283, 1e-24
        %v2322 = vmax.f32 %v2285, 1e-24
        %v2323 = vmax.f32 %v2287, 1e-24
        %v2324 = vmax.f32 %v2289, 1e-24
        %v2325 = vmax.f32 %v2291, 1e-24
        %v2326 = vmax.f32 %v2293, 1e-24
        %v2327 = vmax.f32 %v2295, 1e-24
        %v2328 = vrsqrt.pop %v2296
        %v2329 = vrsqrt.pop %v2297
        %v2330 = vrsqrt.pop %v2298
        %v2331 = vrsqrt.pop %v2299
        %v2332 = vrsqrt.pop %v2300
        %v2333 = vrsqrt.pop %v2301
        %v2334 = vrsqrt.pop %v2302
        %v2335 = vrsqrt.pop %v2303
        %v2336 = vrsqrt.pop %v2304
        %v2337 = vrsqrt.pop %v2305
        %v2338 = vrsqrt.pop %v2306
        %v2339 = vrsqrt.pop %v2307
        %v2340 = vrsqrt.pop %v2308
        %v2341 = vrsqrt.pop %v2309
        %v2342 = vrsqrt.pop %v2310
        %v2343 = vrsqrt.pop %v2311
        %v2344 = vrsqrt.pop %v2312
        %v2345 = vrsqrt.pop %v2313
        %v2346 = vrsqrt.pop %v2314
        %v2347 = vrsqrt.pop %v2315
        %v2348 = vrsqrt.pop %v2316
        %v2349 = vrsqrt.pop %v2317
        %v2350 = vrsqrt.pop %v2318
        %v2351 = vrsqrt.pop %v2319
        %v2352 = vrsqrt.pop %v2320
        %v2353 = vrsqrt.pop %v2321
        %v2354 = vrsqrt.pop %v2322
        %v2355 = vrsqrt.pop %v2323
        %v2356 = vrsqrt.pop %v2324
        %v2357 = vrsqrt.pop %v2325
        %v2358 = vrsqrt.pop %v2326
        %v2359 = vrsqrt.pop %v2327
        %v2360 = vmul.f32 %v422, %v2328
        %v2361 = vmul.f32 %v423, %v2329
        %v2362 = vmul.f32 %v424, %v2330
        %v2363 = vmul.f32 %v425, %v2331
        %v2364 = vmul.f32 %v426, %v2332
        %v2365 = vmul.f32 %v427, %v2333
        %v2366 = vmul.f32 %v428, %v2334
        %v2367 = vmul.f32 %v429, %v2335
        %v2368 = vmul.f32 %v430, %v2336
        %v2369 = vmul.f32 %v431, %v2337
        %v2370 = vmul.f32 %v432, %v2338
        %v2371 = vmul.f32 %v433, %v2339
        %v2372 = vmul.f32 %v434, %v2340
        %v2373 = vmul.f32 %v435, %v2341
        %v2374 = vmul.f32 %v436, %v2342
        %v2375 = vmul.f32 %v437, %v2343
        %v2376 = vmul.f32 %v438, %v2344
        %v2377 = vmul.f32 %v439, %v2345
        %v2378 = vmul.f32 %v440, %v2346
        %v2379 = vmul.f32 %v441, %v2347
        %v2380 = vmul.f32 %v442, %v2348
        %v2381 = vmul.f32 %v443, %v2349
        %v2382 = vmul.f32 %v444, %v2350
        %v2383 = vmul.f32 %v445, %v2351
        %v2384 = vmul.f32 %v446, %v2352
        %v2385 = vmul.f32 %v447, %v2353
        %v2386 = vmul.f32 %v448, %v2354
        %v2387 = vmul.f32 %v449, %v2355
        %v2388 = vmul.f32 %v450, %v2356
        %v2389 = vmul.f32 %v451, %v2357
        %v2390 = vmul.f32 %v452, %v2358
        %v2391 = vmul.f32 %v453, %v2359
        %v2392 = vpack.c.bf16 %v2361, %v2360
        %v2393 = vpack.c.bf16 %v2363, %v2362
        %v2394 = vpack.c.bf16 %v2365, %v2364
        %v2395 = vpack.c.bf16 %v2367, %v2366
        %v2396 = vpack.c.bf16 %v2369, %v2368
        %v2397 = vpack.c.bf16 %v2371, %v2370
        %v2398 = vpack.c.bf16 %v2373, %v2372
        %v2399 = vpack.c.bf16 %v2375, %v2374
        %v2400 = vpack.c.bf16 %v2377, %v2376
        %v2401 = vpack.c.bf16 %v2379, %v2378
        %v2402 = vpack.c.bf16 %v2381, %v2380
        %v2403 = vpack.c.bf16 %v2383, %v2382
        %v2404 = vpack.c.bf16 %v2385, %v2384
        %v2405 = vpack.c.bf16 %v2387, %v2386
        %v2406 = vpack.c.bf16 %v2389, %v2388
        %v2407 = vpack.c.bf16 %v2391, %v2390
        %v2424 = vunpack.c.l.b16 %v2392
        %v2425 = vunpack.c.h.b16 %v2392
        %v2426 = vunpack.c.l.b16 %v2393
        %v2427 = vunpack.c.h.b16 %v2393
        %v2428 = vunpack.c.l.b16 %v2394
        %v2429 = vunpack.c.h.b16 %v2394
        %v2430 = vunpack.c.l.b16 %v2395
        %v2431 = vunpack.c.h.b16 %v2395
        %v2432 = vunpack.c.l.b16 %v2396
        %v2433 = vunpack.c.h.b16 %v2396
        %v2434 = vunpack.c.l.b16 %v2397
        %v2435 = vunpack.c.h.b16 %v2397
        %v2436 = vunpack.c.l.b16 %v2398
        %v2437 = vunpack.c.h.b16 %v2398
        %v2438 = vunpack.c.l.b16 %v2399
        %v2439 = vunpack.c.h.b16 %v2399
        %v2440 = vunpack.c.l.b16 %v2400
        %v2441 = vunpack.c.h.b16 %v2400
        %v2442 = vunpack.c.l.b16 %v2401
        %v2443 = vunpack.c.h.b16 %v2401
        %v2444 = vunpack.c.l.b16 %v2402
        %v2445 = vunpack.c.h.b16 %v2402
        %v2446 = vunpack.c.l.b16 %v2403
        %v2447 = vunpack.c.h.b16 %v2403
        %v2448 = vunpack.c.l.b16 %v2404
        %v2449 = vunpack.c.h.b16 %v2404
        %v2450 = vunpack.c.l.b16 %v2405
        %v2451 = vunpack.c.h.b16 %v2405
        %v2452 = vunpack.c.l.b16 %v2406
        %v2453 = vunpack.c.h.b16 %v2406
        %v2454 = vunpack.c.l.b16 %v2407
        %v2455 = vunpack.c.h.b16 %v2407
        %v2456 = vpack.c.b16 %v2424, %v2424
        %v2457 = vpack.c.b16 %v2425, %v2425
        %v2458 = vpack.c.b16 %v2426, %v2426
        %v2459 = vpack.c.b16 %v2427, %v2427
        %v2460 = vpack.c.b16 %v2428, %v2428
        %v2461 = vpack.c.b16 %v2429, %v2429
        %v2462 = vpack.c.b16 %v2430, %v2430
        %v2463 = vpack.c.b16 %v2431, %v2431
        %v2464 = vpack.c.b16 %v2432, %v2432
        %v2465 = vpack.c.b16 %v2433, %v2433
        %v2466 = vpack.c.b16 %v2434, %v2434
        %v2467 = vpack.c.b16 %v2435, %v2435
        %v2468 = vpack.c.b16 %v2436, %v2436
        %v2469 = vpack.c.b16 %v2437, %v2437
        %v2470 = vpack.c.b16 %v2438, %v2438
        %v2471 = vpack.c.b16 %v2439, %v2439
        %v2472 = vpack.c.b16 %v2440, %v2440
        %v2473 = vpack.c.b16 %v2441, %v2441
        %v2474 = vpack.c.b16 %v2442, %v2442
        %v2475 = vpack.c.b16 %v2443, %v2443
        %v2476 = vpack.c.b16 %v2444, %v2444
        %v2477 = vpack.c.b16 %v2445, %v2445
        %v2478 = vpack.c.b16 %v2446, %v2446
        %v2479 = vpack.c.b16 %v2447, %v2447
        %v2480 = vpack.c.b16 %v2448, %v2448
        %v2481 = vpack.c.b16 %v2449, %v2449
        %v2482 = vpack.c.b16 %v2450, %v2450
        %v2483 = vpack.c.b16 %v2451, %v2451
        %v2484 = vpack.c.b16 %v2452, %v2452
        %v2485 = vpack.c.b16 %v2453, %v2453
        %v2486 = vpack.c.b16 %v2454, %v2454
        %v2487 = vpack.c.b16 %v2455, %v2455
        %2520 = vst [vmem:[%s419] sm:$0xf] %v2456
        %2521 = vst [vmem:[%s419 + $0x4] sm:$0xf] %v2457
        %2522 = vst [vmem:[%s419 + $0x8] sm:$0xf] %v2458
        %2523 = vst [vmem:[%s419 + $0xc] sm:$0xf] %v2459
        %2524 = vst [vmem:[%s419 + $0x10] sm:$0xf] %v2460
        %2525 = vst [vmem:[%s419 + $0x14] sm:$0xf] %v2461
        %2526 = vst [vmem:[%s419 + $0x18] sm:$0xf] %v2462
        %2527 = vst [vmem:[%s419 + $0x1c] sm:$0xf] %v2463
        %2528 = vst [vmem:[%s419 + $0x20] sm:$0xf] %v2464
        %2529 = vst [vmem:[%s419 + $0x24] sm:$0xf] %v2465
        %2530 = vst [vmem:[%s419 + $0x28] sm:$0xf] %v2466
        %2531 = vst [vmem:[%s419 + $0x2c] sm:$0xf] %v2467
        %2532 = vst [vmem:[%s419 + $0x30] sm:$0xf] %v2468
        %2533 = vst [vmem:[%s419 + $0x34] sm:$0xf] %v2469
        %2534 = vst [vmem:[%s419 + $0x38] sm:$0xf] %v2470
        %2535 = vst [vmem:[%s419 + $0x3c] sm:$0xf] %v2471
        %2536 = vst [vmem:[%s419 + $0x40] sm:$0xf] %v2472
        %2537 = vst [vmem:[%s419 + $0x44] sm:$0xf] %v2473
        %2538 = vst [vmem:[%s419 + $0x48] sm:$0xf] %v2474
        %2539 = vst [vmem:[%s419 + $0x4c] sm:$0xf] %v2475
        %2540 = vst [vmem:[%s419 + $0x50] sm:$0xf] %v2476
        %2541 = vst [vmem:[%s419 + $0x54] sm:$0xf] %v2477
        %2542 = vst [vmem:[%s419 + $0x58] sm:$0xf] %v2478
        %2543 = vst [vmem:[%s419 + $0x5c] sm:$0xf] %v2479
        %2544 = vst [vmem:[%s419 + $0x60] sm:$0xf] %v2480
        %2545 = vst [vmem:[%s419 + $0x64] sm:$0xf] %v2481
        %2546 = vst [vmem:[%s419 + $0x68] sm:$0xf] %v2482
        %2547 = vst [vmem:[%s419 + $0x6c] sm:$0xf] %v2483
        %2548 = vst [vmem:[%s419 + $0x70] sm:$0xf] %v2484
        %2549 = vst [vmem:[%s419 + $0x74] sm:$0xf] %v2485
        %2550 = vst [vmem:[%s419 + $0x78] sm:$0xf] %v2486
        %2551 = vst [vmem:[%s419 + $0x7c] sm:$0xf] %v2487
        %s2552 = sand.u32 %s189, 1
        %s2553 = scalar_lea.sflag [#allocation4], %s2552
        %s2554 = sand.u32 %s189, 1
        %s2555 = smul.addr %s2554, 256
        %s2556 = scalar_lea.vmem [#allocation14], %s2555
        %s2557 = smul.u32 32, %s29
        %p2558 = scmp.lt.s32.totalorder %s2557, 95
        %s2559 = scalar_select %p2558, %s2557, 95
        %s2560 = smul.addr %s2559, 4
        %s2561 = scalar_lea.vmem %s8, %s2560
        // Predicated region
        $region77: #{dino_head_forward.2} parent=47 // pred_check
          %p2562 = pneg %p199
        $region78: #{dino_head_forward.2} parent=47 // pred_check_branch
          %2564 = sbr.rel (%p2562) target = $region80
        $region79: #{dino_head_forward.2} parent=47 // pred_region
          %s2565 = smul.u32 32, %s29
          %s2567 = ssub.s32 4096, 4096
          %2568 = vsyncadd %s2553, %s2567
          %s2569 = smul.addr %s2565, 128
          %s2570 = scalar_lea.hbm %s7, %s2569
          %s2571 = sshll.u32 %s2556, 4
          %s2572 = int_to_ptr.vmem [resolvable:$true] %s2571
          %2577 = dma.vmem_to_hbm [thread:$0]  %s2572, 4096, %s2570, %s2553, 128, 128, 8
        $region80: #{dino_head_forward.2} parent=47 // pred_fallthru
          _
        // Predicated region
        $region81: #{dino_head_forward.2} parent=47 // pred_check
          %p2578 = pneg %p225
        $region82: #{dino_head_forward.2} parent=47 // pred_check_branch
          %2580 = sbr.rel (%p2578) target = $region84
        $region83: #{dino_head_forward.2} parent=47 // pred_region
          %s2581 = smul.u32 32, %s29
        $region84: #{dino_head_forward.2} parent=47 // pred_fallthru
          _
      $region48: #{dino_head_forward.2} parent=5 // pred_fallthru
        _
      %p2582 = scmp.le.s32.totalorder 2, %s24
      // Predicated region
      $region85: #{dino_head_forward.2} parent=5 // pred_check
        %p2583 = pneg %p2582
      $region86: #{dino_head_forward.2} parent=5 // pred_check_branch
        %2585 = sbr.rel (%p2583) target = $region88
      $region87: #{dino_head_forward.2} parent=5 // pred_region
        %s2586 = ssub.s32 %s24, 2
        // Predicated region
        $region89: #{dino_head_forward.2} parent=87 // pred_check
          %p2587 = pneg %p205
        $region90: #{dino_head_forward.2} parent=87 // pred_check_branch
          %2589 = sbr.rel (%p2587) target = $region92
        $region91: #{dino_head_forward.2} parent=87 // pred_region
          %s2590 = sand.u32 %s190, 1
          %s2591 = scalar_lea.sflag [#allocation4], %s2590
          %s2592 = sand.u32 %s190, 1
          %s2593 = smul.addr %s2592, 256
          %s2594 = scalar_lea.vmem [#allocation14], %s2593
          %2595 = dma.done %s2591, 4096
        $region92: #{dino_head_forward.2} parent=87 // pred_fallthru
          _
        // Predicated region
        $region93: #{dino_head_forward.2} parent=87 // pred_check
          %p2596 = pneg %p231
        $region94: #{dino_head_forward.2} parent=87 // pred_check_branch
          %2598 = sbr.rel (%p2596) target = $region96
        $region95: #{dino_head_forward.2} parent=87 // pred_region
          %s2599 = smul.u32 32, %s30
          %p2600 = scmp.lt.s32.totalorder %s2599, 95
          %s2601 = scalar_select %p2600, %s2599, 95
          %s2602 = smul.addr %s2601, 4
          %s2603 = scalar_lea.vmem %s8, %s2602
        $region96: #{dino_head_forward.2} parent=87 // pred_fallthru
          _
      $region88: #{dino_head_forward.2} parent=5 // pred_fallthru
        _
    $region6: #{dino_head_forward.2} parent=1 // loop_footer
      %s28 = sadd.s32 1, %s24
    $region7: #{dino_head_forward.2} parent=1 // loop_footer_branch
      %23 = sbr.rel target = $region3
    $region8: #{dino_head_forward.2} parent=1 // loop_exit
      _
    %2604 = vsyncpa [#allocation3], 1
    %s2605 = scalar_lea.sflag [#allocation3], 1
    %2606 = vsyncpa %s2605, 1
    %2607 = vsyncpa [#allocation6], 1
    %2608 = vsyncpa [#allocation9], 1
    %2609 = vsyncpa [#allocation12], 1
    %2610 = vsyncpa [#allocation4], 1
    %s2611 = scalar_lea.sflag [#allocation4], 1
    %2612 = vsyncpa %s2611, 1

// kernel: dino_head_forward.3
$region0: #{dino_head_forward.3}
  #allocation0 [shape = 'u32[]', space=smem, size = 0x4, offset = 0x4, fixed_abs, tag = 'smem constant byte address 0x4 - core index']
  #allocation1 [shape = 'u32[144,128]{1,0:T(1,128)}', space=vmem, size = 0x12000, scoped, tag = 'internal scratch']
  %s0 = inlined_call_operand.vmem [shape: bf16[768,128], index: 0, kind: input, shape index: {}]
  %s1 = inlined_call_operand.hbm [shape: bf16[128,8192], index: 1, kind: input, shape index: {}]
  %s2 = inlined_call_operand.hbm [shape: f32[1,8192], index: 2, kind: input, shape index: {}]
  %s3 = inlined_call_operand.hbm [shape: f32[768,8192], index: 3, kind: output, shape index: {}]
  %s4 = sld [smem:[#allocation0]]
  $region53: #{dino_head_forward.3} parent=0
    _
  %s6 = ssub.s32 1, %s4
  %s7 = scalar_select 0, %s6, %s4
  $region1: #{dino_head_forward.3} parent=0
    #allocation2 [shape = 'u8[2097152]{0}', space=vmem, size = 0x200000, scoped, tag = 'input window, operand 1']
    #allocation3 [shape = 's32[2]{0}', space=sflag, size = 0x8, scoped, tag = 'scoped memory for dino_head_forward.3']
    #allocation4 [shape = 's32[2]{0}', space=sflag, size = 0x8, scoped, tag = 'scoped memory for dino_head_forward.3']
    #allocation5 [shape = 'u8[32768]{0}', space=vmem, size = 0x8000, scoped, tag = 'input window, operand 2']
    #allocation6 [shape = 's32[2]{0}', space=sflag, size = 0x8, scoped, tag = 'scoped memory for dino_head_forward.3']
    #allocation7 [shape = 'u8[8388608]{0}', space=vmem, size = 0x800000, scoped, tag = 'output window, operand 0']
    %8 = vsyncpa [#allocation3], 0
    %s9 = scalar_lea.sflag [#allocation3], 1
    %10 = vsyncpa %s9, 0
    %11 = vsyncpa [#allocation6], 0
    %s12 = scalar_lea.sflag [#allocation6], 1
    %13 = vsyncpa %s12, 0
    %14 = vsyncpa [#allocation4], 0
    %s15 = scalar_lea.sflag [#allocation4], 1
    %16 = vsyncpa %s15, 0
    loop: start=0, step=1, limit=8
    $region2: #{dino_head_forward.3} parent=1 // loop_pre_header
      _
    $region3: #{dino_head_forward.3} parent=1 // loop_header
      %s18 = sphi 0, %s22
      %p19 = scmp.ge.s32.totalorder %s18, 8
      %s25 = sphi 0, %s37
      %s26 = sphi 0, %s33
      %s27 = sphi 0, %s25
      %s28 = sphi 0, %s26
      %s29 = sphi 0, %s27
      %s30 = sphi 0, %s28
      %s40 = sphi 0, %s42
      %s43 = sphi 0, %s40
      %s44 = sphi 0, %s43
      %s60 = sphi 0, %s44
      %s66 = sphi 0, %s68
      %s69 = sphi 0, %s66
      %s70 = sphi 0, %s69
      %s86 = sphi 0, %s70
      %s92 = sphi 0, %s94
      %s95 = sphi 0, %s92
      %s96 = sphi 0, %s95
      %s112 = sphi 0, %s96
      %s120 = sphi 0, %s122
      %s123 = sphi 0, %s120
      %s124 = sphi 0, %s123
      %s140 = sphi 0, %s124
    $region4: #{dino_head_forward.3} parent=1 // loop_header_branch
      %21 = sbr.rel (%p19) target = $region8
    $region5: #{dino_head_forward.3} parent=1 // loop_body
      %s23 = ssub.s32 %s18, 1
      %s24 = ssub.s32 %s18, 2
      %s31 = sadd.s32 1, %s26
      %p32 = scmp.ge.s32.totalorder %s31, 3
      %s33 = scalar_select %p32, 0, %s31
      %s34 = sadd.s32 1, %s25
      %s35 = scalar_select %p32, %s34, %s25
      %p36 = scmp.ge.s32.totalorder %s35, 2
      %s37 = scalar_select %p36, 0, %s35
      %s38 = ssub.s32 %s26, %s33
      %p39 = scmp.eq.s32.totalorder %s38, 0
      %s41 = sadd.s32 %s40, 1
      %s42 = scalar_select %p39, %s40, %s41
      %p45 = pneg %p39
      %p46 = scmp.eq.s32.totalorder %s18, 5
      %p47 = por %p45, %p46
      %p48 = scmp.ne.s32.totalorder %s40, %s43
      %p49 = scmp.eq.s32.totalorder %s18, 0
      %p50 = por %p48, %p49
      %p51 = scmp.ne.s32.totalorder %s40, %s43
      %p52 = scmp.eq.s32.totalorder %s23, 5
      %p53 = por %p51, %p52
      %p54 = scmp.ne.s32.totalorder %s43, %s44
      %p55 = scmp.eq.s32.totalorder %s23, 0
      %p56 = por %p54, %p55
      %p57 = scmp.ne.s32.totalorder %s43, %s44
      %p58 = scmp.eq.s32.totalorder %s24, 5
      %p59 = por %p57, %p58
      %p61 = scmp.ne.s32.totalorder %s44, %s60
      %p62 = scmp.eq.s32.totalorder %s24, 0
      %p63 = por %p61, %p62
      %s64 = ssub.s32 %s25, %s37
      %p65 = scmp.eq.s32.totalorder %s64, 0
      %s67 = sadd.s32 %s66, 1
      %s68 = scalar_select %p65, %s66, %s67
      %p71 = pneg %p65
      %p72 = scmp.eq.s32.totalorder %s18, 5
      %p73 = por %p71, %p72
      %p74 = scmp.ne.s32.totalorder %s66, %s69
      %p75 = scmp.eq.s32.totalorder %s18, 0
      %p76 = por %p74, %p75
      %p77 = scmp.ne.s32.totalorder %s66, %s69
      %p78 = scmp.eq.s32.totalorder %s23, 5
      %p79 = por %p77, %p78
      %p80 = scmp.ne.s32.totalorder %s69, %s70
      %p81 = scmp.eq.s32.totalorder %s23, 0
      %p82 = por %p80, %p81
      %p83 = scmp.ne.s32.totalorder %s69, %s70
      %p84 = scmp.eq.s32.totalorder %s24, 5
      %p85 = por %p83, %p84
      %p87 = scmp.ne.s32.totalorder %s70, %s86
      %p88 = scmp.eq.s32.totalorder %s24, 0
      %p89 = por %p87, %p88
      %s90 = ssub.s32 %s25, %s37
      %p91 = scmp.eq.s32.totalorder %s90, 0
      %s93 = sadd.s32 %s92, 1
      %s94 = scalar_select %p91, %s92, %s93
      %p97 = pneg %p91
      %p98 = scmp.eq.s32.totalorder %s18, 5
      %p99 = por %p97, %p98
      %p100 = scmp.ne.s32.totalorder %s92, %s95
      %p101 = scmp.eq.s32.totalorder %s18, 0
      %p102 = por %p100, %p101
      %p103 = scmp.ne.s32.totalorder %s92, %s95
      %p104 = scmp.eq.s32.totalorder %s23, 5
      %p105 = por %p103, %p104
      %p106 = scmp.ne.s32.totalorder %s95, %s96
      %p107 = scmp.eq.s32.totalorder %s23, 0
      %p108 = por %p106, %p107
      %p109 = scmp.ne.s32.totalorder %s95, %s96
      %p110 = scmp.eq.s32.totalorder %s24, 5
      %p111 = por %p109, %p110
      %p113 = scmp.ne.s32.totalorder %s96, %s112
      %p114 = scmp.eq.s32.totalorder %s24, 0
      %p115 = por %p113, %p114
      %s116 = ssub.s32 %s26, %s33
      %s117 = ssub.s32 %s25, %s37
      %s118 = sor.u32 %s116, %s117
      %p119 = scmp.eq.s32.totalorder %s118, 0
      %s121 = sadd.s32 %s120, 1
      %s122 = scalar_select %p119, %s120, %s121
      %p125 = pneg %p119
      %p126 = scmp.eq.s32.totalorder %s18, 5
      %p127 = por %p125, %p126
      %p128 = scmp.ne.s32.totalorder %s120, %s123
      %p129 = scmp.eq.s32.totalorder %s18, 0
      %p130 = por %p128, %p129
      %p131 = scmp.ne.s32.totalorder %s120, %s123
      %p132 = scmp.eq.s32.totalorder %s23, 5
      %p133 = por %p131, %p132
      %p134 = scmp.ne.s32.totalorder %s123, %s124
      %p135 = scmp.eq.s32.totalorder %s23, 0
      %p136 = por %p134, %p135
      %p137 = scmp.ne.s32.totalorder %s123, %s124
      %p138 = scmp.eq.s32.totalorder %s24, 5
      %p139 = por %p137, %p138
      %p141 = scmp.ne.s32.totalorder %s124, %s140
      %p142 = scmp.eq.s32.totalorder %s24, 0
      %p143 = por %p141, %p142
      %p144 = scmp.le.s32.totalorder 1, %s18
      %p145 = scmp.lt.s32.totalorder %s18, 7
      %p146 = pnand %p144, %p145
      %p147 = pneg %p146
      // Predicated region
      $region9: #{dino_head_forward.3} parent=5 // pred_check
        _
      $region10: #{dino_head_forward.3} parent=5 // pred_check_branch
        %149 = sbr.rel (%p146) target = $region12
      $region11: #{dino_head_forward.3} parent=5 // pred_region
        %s150 = ssub.s32 %s18, 1
      $region12: #{dino_head_forward.3} parent=5 // pred_fallthru
        _
      %p151 = scmp.lt.s32.totalorder %s18, 6
      // Predicated region
      $region13: #{dino_head_forward.3} parent=5 // pred_check
        %p152 = pneg %p151
      $region14: #{dino_head_forward.3} parent=5 // pred_check_branch
        %154 = sbr.rel (%p152) target = $region16
      $region15: #{dino_head_forward.3} parent=5 // pred_region
        // Predicated region
        $region17: #{dino_head_forward.3} parent=15 // pred_check
          %p155 = pneg %p50
        $region18: #{dino_head_forward.3} parent=15 // pred_check_branch
          %157 = sbr.rel (%p155) target = $region20
        $region19: #{dino_head_forward.3} parent=15 // pred_region
          %s158 = smul.u32 32, %s26
          %p159 = scmp.lt.s32.totalorder %s158, 95
          %s160 = scalar_select %p159, %s158, 95
          %s161 = smul.addr %s160, 4
          %s162 = scalar_lea.vmem %s0, %s161
          %s163 = smul.u32 32, %s26
        $region20: #{dino_head_forward.3} parent=15 // pred_fallthru
          _
        // Predicated region
        $region21: #{dino_head_forward.3} parent=15 // pred_check
          %p164 = pneg %p76
        $region22: #{dino_head_forward.3} parent=15 // pred_check_branch
          %166 = sbr.rel (%p164) target = $region24
        $region23: #{dino_head_forward.3} parent=15 // pred_region
          %s167 = sand.u32 %s66, 1
          %s168 = scalar_lea.sflag [#allocation3], %s167
          %s169 = sand.u32 %s66, 1
          %s170 = smul.addr %s169, 2048
          %s171 = scalar_lea.vmem [#allocation2], %s170
          %s172 = smul.u32 32, %s25
          %s174 = ssub.s32 32768, 32768
          %175 = vsyncadd %s168, %s174
          %s176 = smul.addr %s172, 64
          %s177 = scalar_lea.hbm %s1, %s176
          %s178 = sshll.u32 %s171, 4
          %s179 = int_to_ptr.vmem [resolvable:$true] %s178
          %184 = dma.hbm_to_vmem [thread:$0]  %s177, 32768, %s179, %s168, 4096, 2048, 128
        $region24: #{dino_head_forward.3} parent=15 // pred_fallthru
          _
        // Predicated region
        $region25: #{dino_head_forward.3} parent=15 // pred_check
          %p185 = pneg %p102
        $region26: #{dino_head_forward.3} parent=15 // pred_check_branch
          %187 = sbr.rel (%p185) target = $region28
        $region27: #{dino_head_forward.3} parent=15 // pred_region
          %s188 = sand.u32 %s92, 1
          %s189 = scalar_lea.sflag [#allocation6], %s188
          %s190 = sand.u32 %s92, 1
          %s191 = smul.addr %s190, 32
          %s192 = scalar_lea.vmem [#allocation5], %s191
          %s193 = smul.u32 32, %s25
          %s195 = ssub.s32 512, 512
          %196 = vsyncadd %s189, %s195
          %s197 = smul.addr %s193, 16
          %s198 = scalar_lea.hbm %s2, %s197
          %s200 = sshll.u32 %s192, 4
          %s201 = int_to_ptr.vmem [resolvable:$true] %s200
          %203 = dma.hbm_to_vmem [thread:$0]  %s198, 512, %s201, %s189
        $region28: #{dino_head_forward.3} parent=15 // pred_fallthru
          _
      $region16: #{dino_head_forward.3} parent=5 // pred_fallthru
        _
      %p204 = scmp.le.s32.totalorder 1, %s18
      %p205 = scmp.lt.s32.totalorder %s18, 7
      %p206 = pnand %p204, %p205
      %p207 = pneg %p206
      // Predicated region
      $region29: #{dino_head_forward.3} parent=5 // pred_check
        _
      $region30: #{dino_head_forward.3} parent=5 // pred_check_branch
        %209 = sbr.rel (%p206) target = $region32
      $region31: #{dino_head_forward.3} parent=5 // pred_region
        %s210 = ssub.s32 %s18, 1
        %s211 = sand.u32 %s69, 1
        %s212 = scalar_lea.sflag [#allocation3], %s211
        %s213 = sand.u32 %s69, 1
        %s214 = smul.addr %s213, 2048
        %s215 = scalar_lea.vmem [#allocation2], %s214
        // Predicated region
        $region33: #{dino_head_forward.3} parent=31 // pred_check
          %p216 = pneg %p82
        $region34: #{dino_head_forward.3} parent=31 // pred_check_branch
          %218 = sbr.rel (%p216) target = $region36
        $region35: #{dino_head_forward.3} parent=31 // pred_region
          %219 = dma.done %s212, 32768
        $region36: #{dino_head_forward.3} parent=31 // pred_fallthru
          _
        %s220 = sand.u32 %s95, 1
        %s221 = scalar_lea.sflag [#allocation6], %s220
        %s222 = sand.u32 %s95, 1
        %s223 = smul.addr %s222, 32
        %s224 = scalar_lea.vmem [#allocation5], %s223
        // Predicated region
        $region37: #{dino_head_forward.3} parent=31 // pred_check
          %p225 = pneg %p108
        $region38: #{dino_head_forward.3} parent=31 // pred_check_branch
          %227 = sbr.rel (%p225) target = $region40
        $region39: #{dino_head_forward.3} parent=31 // pred_region
          %228 = dma.done %s221, 512
        $region40: #{dino_head_forward.3} parent=31 // pred_fallthru
          _
        %s229 = smul.u32 32, %s28
        %p230 = scmp.lt.s32.totalorder %s229, 95
        %s231 = scalar_select %p230, %s229, 95
        %s232 = smul.addr %s231, 4
        %s233 = scalar_lea.vmem %s0, %s232
        %p234 = pneg %p56
        %p235 = pneg %p53
        %s236 = sand.u32 %s69, 1
        %s237 = scalar_lea.sflag [#allocation3], %s236
        %s238 = sand.u32 %s69, 1
        %s239 = smul.addr %s238, 2048
        %s240 = scalar_lea.vmem [#allocation2], %s239
        %p241 = pneg %p82
        %p242 = pneg %p79
        %s243 = sand.u32 %s95, 1
        %s244 = scalar_lea.sflag [#allocation6], %s243
        %s245 = sand.u32 %s95, 1
        %s246 = smul.addr %s245, 32
        %s247 = scalar_lea.vmem [#allocation5], %s246
        %p248 = pneg %p108
        %p249 = pneg %p105
        %p250 = pneg %p136
        %p251 = pneg %p133
        %s252 = sand.u32 %s123, 1
        %s253 = scalar_lea.sflag [#allocation4], %s252
        %s254 = sand.u32 %s123, 1
        %s255 = smul.addr %s254, 8192
        %s256 = scalar_lea.vmem [#allocation7], %s255
        %s257 = smul.u32 32, %s28
        %p258 = scmp.lt.s32.totalorder %s257, 95
        %s259 = scalar_select %p258, %s257, 95
        %s260 = smul.addr %s259, 4
        %s261 = scalar_lea.vmem %s0, %s260
        %s262 = smul.u32 32, %s28
        %s263 = smul.u32 32, %s27
        %s264 = smul.u32 32, %s27
        %s265 = smul.u32 32, %s28
        %s266 = smul.u32 32, %s27
        %v268 = vld [vmem:[%s261] sm:$0xf]
        %v269 = vld [vmem:[%s261 + $0x4] sm:$0xf]
        %v270 = vld [vmem:[%s261 + $0x8] sm:$0xf]
        %v271 = vld [vmem:[%s261 + $0xc] sm:$0xf]
        %v272 = vld [vmem:[%s261 + $0x10] sm:$0xf]
        %v273 = vld [vmem:[%s261 + $0x14] sm:$0xf]
        %v274 = vld [vmem:[%s261 + $0x18] sm:$0xf]
        %v275 = vld [vmem:[%s261 + $0x1c] sm:$0xf]
        %v276 = vld [vmem:[%s261 + $0x20] sm:$0xf]
        %v277 = vld [vmem:[%s261 + $0x24] sm:$0xf]
        %v278 = vld [vmem:[%s261 + $0x28] sm:$0xf]
        %v279 = vld [vmem:[%s261 + $0x2c] sm:$0xf]
        %v280 = vld [vmem:[%s261 + $0x30] sm:$0xf]
        %v281 = vld [vmem:[%s261 + $0x34] sm:$0xf]
        %v282 = vld [vmem:[%s261 + $0x38] sm:$0xf]
        %v283 = vld [vmem:[%s261 + $0x3c] sm:$0xf]
        %v284 = vld [vmem:[%s261 + $0x40] sm:$0xf]
        %v285 = vld [vmem:[%s261 + $0x44] sm:$0xf]
        %v286 = vld [vmem:[%s261 + $0x48] sm:$0xf]
        %v287 = vld [vmem:[%s261 + $0x4c] sm:$0xf]
        %v288 = vld [vmem:[%s261 + $0x50] sm:$0xf]
        %v289 = vld [vmem:[%s261 + $0x54] sm:$0xf]
        %v290 = vld [vmem:[%s261 + $0x58] sm:$0xf]
        %v291 = vld [vmem:[%s261 + $0x5c] sm:$0xf]
        %v292 = vld [vmem:[%s261 + $0x60] sm:$0xf]
        %v293 = vld [vmem:[%s261 + $0x64] sm:$0xf]
        %v294 = vld [vmem:[%s261 + $0x68] sm:$0xf]
        %v295 = vld [vmem:[%s261 + $0x6c] sm:$0xf]
        %v296 = vld [vmem:[%s261 + $0x70] sm:$0xf]
        %v297 = vld [vmem:[%s261 + $0x74] sm:$0xf]
        %v298 = vld [vmem:[%s261 + $0x78] sm:$0xf]
        %v299 = vld [vmem:[%s261 + $0x7c] sm:$0xf]
        %v300 = vld [vmem:[%s215] sm:$0xff]
        %v301 = vld [vmem:[%s215 + $0x8] sm:$0xff]
        %v302 = vld [vmem:[%s215 + $0x10] sm:$0xff]
        %v303 = vld [vmem:[%s215 + $0x18] sm:$0xff]
        %v304 = vld [vmem:[%s215 + $0x20] sm:$0xff]
        %v305 = vld [vmem:[%s215 + $0x28] sm:$0xff]
        %v306 = vld [vmem:[%s215 + $0x30] sm:$0xff]
        %v307 = vld [vmem:[%s215 + $0x38] sm:$0xff]
        %v308 = vld [vmem:[%s215 + $0x40] sm:$0xff]
        %v309 = vld [vmem:[%s215 + $0x48] sm:$0xff]
        %v310 = vld [vmem:[%s215 + $0x50] sm:$0xff]
        %v311 = vld [vmem:[%s215 + $0x58] sm:$0xff]
        %v312 = vld [vmem:[%s215 + $0x60] sm:$0xff]
        %v313 = vld [vmem:[%s215 + $0x68] sm:$0xff]
        %v314 = vld [vmem:[%s215 + $0x70] sm:$0xff]
        %v315 = vld [vmem:[%s215 + $0x78] sm:$0xff]
        %v316 = vld [vmem:[%s215 + $0x80] sm:$0xff]
        %v317 = vld [vmem:[%s215 + $0x88] sm:$0xff]
        %v318 = vld [vmem:[%s215 + $0x90] sm:$0xff]
        %v319 = vld [vmem:[%s215 + $0x98] sm:$0xff]
        %v320 = vld [vmem:[%s215 + $0xa0] sm:$0xff]
        %v321 = vld [vmem:[%s215 + $0xa8] sm:$0xff]
        %v322 = vld [vmem:[%s215 + $0xb0] sm:$0xff]
        %v323 = vld [vmem:[%s215 + $0xb8] sm:$0xff]
        %v324 = vld [vmem:[%s215 + $0xc0] sm:$0xff]
        %v325 = vld [vmem:[%s215 + $0xc8] sm:$0xff]
        %v326 = vld [vmem:[%s215 + $0xd0] sm:$0xff]
        %v327 = vld [vmem:[%s215 + $0xd8] sm:$0xff]
        %v328 = vld [vmem:[%s215 + $0xe0] sm:$0xff]
        %v329 = vld [vmem:[%s215 + $0xe8] sm:$0xff]
        %v330 = vld [vmem:[%s215 + $0xf0] sm:$0xff]
        %v331 = vld [vmem:[%s215 + $0xf8] sm:$0xff]
        %v332 = vld [vmem:[%s215 + $0x100] sm:$0xff]
        %v333 = vld [vmem:[%s215 + $0x108] sm:$0xff]
        %v334 = vld [vmem:[%s215 + $0x110] sm:$0xff]
        %v335 = vld [vmem:[%s215 + $0x118] sm:$0xff]
        %v336 = vld [vmem:[%s215 + $0x120] sm:$0xff]
        %v337 = vld [vmem:[%s215 + $0x128] sm:$0xff]
        %v338 = vld [vmem:[%s215 + $0x130] sm:$0xff]
        %v339 = vld [vmem:[%s215 + $0x138] sm:$0xff]
        %v340 = vld [vmem:[%s215 + $0x140] sm:$0xff]
        %v341 = vld [vmem:[%s215 + $0x148] sm:$0xff]
        %v342 = vld [vmem:[%s215 + $0x150] sm:$0xff]
        %v343 = vld [vmem:[%s215 + $0x158] sm:$0xff]
        %v344 = vld [vmem:[%s215 + $0x160] sm:$0xff]
        %v345 = vld [vmem:[%s215 + $0x168] sm:$0xff]
        %v346 = vld [vmem:[%s215 + $0x170] sm:$0xff]
        %v347 = vld [vmem:[%s215 + $0x178] sm:$0xff]
        %v348 = vld [vmem:[%s215 + $0x180] sm:$0xff]
        %v349 = vld [vmem:[%s215 + $0x188] sm:$0xff]
        %v350 = vld [vmem:[%s215 + $0x190] sm:$0xff]
        %v351 = vld [vmem:[%s215 + $0x198] sm:$0xff]
        %v352 = vld [vmem:[%s215 + $0x1a0] sm:$0xff]
        %v353 = vld [vmem:[%s215 + $0x1a8] sm:$0xff]
        %v354 = vld [vmem:[%s215 + $0x1b0] sm:$0xff]
        %v355 = vld [vmem:[%s215 + $0x1b8] sm:$0xff]
        %v356 = vld [vmem:[%s215 + $0x1c0] sm:$0xff]
        %v357 = vld [vmem:[%s215 + $0x1c8] sm:$0xff]
        %v358 = vld [vmem:[%s215 + $0x1d0] sm:$0xff]
        %v359 = vld [vmem:[%s215 + $0x1d8] sm:$0xff]
        %v360 = vld [vmem:[%s215 + $0x1e0] sm:$0xff]
        %v361 = vld [vmem:[%s215 + $0x1e8] sm:$0xff]
        %v362 = vld [vmem:[%s215 + $0x1f0] sm:$0xff]
        %v363 = vld [vmem:[%s215 + $0x1f8] sm:$0xff]
        %v364 = vld [vmem:[%s215 + $0x200] sm:$0xff]
        %v365 = vld [vmem:[%s215 + $0x208] sm:$0xff]
        %v366 = vld [vmem:[%s215 + $0x210] sm:$0xff]
        %v367 = vld [vmem:[%s215 + $0x218] sm:$0xff]
        %v368 = vld [vmem:[%s215 + $0x220] sm:$0xff]
        %v369 = vld [vmem:[%s215 + $0x228] sm:$0xff]
        %v370 = vld [vmem:[%s215 + $0x230] sm:$0xff]
        %v371 = vld [vmem:[%s215 + $0x238] sm:$0xff]
        %v372 = vld [vmem:[%s215 + $0x240] sm:$0xff]
        %v373 = vld [vmem:[%s215 + $0x248] sm:$0xff]
        %v374 = vld [vmem:[%s215 + $0x250] sm:$0xff]
        %v375 = vld [vmem:[%s215 + $0x258] sm:$0xff]
        %v376 = vld [vmem:[%s215 + $0x260] sm:$0xff]
        %v377 = vld [vmem:[%s215 + $0x268] sm:$0xff]
        %v378 = vld [vmem:[%s215 + $0x270] sm:$0xff]
        %v379 = vld [vmem:[%s215 + $0x278] sm:$0xff]
        %v380 = vld [vmem:[%s215 + $0x280] sm:$0xff]
        %v381 = vld [vmem:[%s215 + $0x288] sm:$0xff]
        %v382 = vld [vmem:[%s215 + $0x290] sm:$0xff]
        %v383 = vld [vmem:[%s215 + $0x298] sm:$0xff]
        %v384 = vld [vmem:[%s215 + $0x2a0] sm:$0xff]
        %v385 = vld [vmem:[%s215 + $0x2a8] sm:$0xff]
        %v386 = vld [vmem:[%s215 + $0x2b0] sm:$0xff]
        %v387 = vld [vmem:[%s215 + $0x2b8] sm:$0xff]
        %v388 = vld [vmem:[%s215 + $0x2c0] sm:$0xff]
        %v389 = vld [vmem:[%s215 + $0x2c8] sm:$0xff]
        %v390 = vld [vmem:[%s215 + $0x2d0] sm:$0xff]
        %v391 = vld [vmem:[%s215 + $0x2d8] sm:$0xff]
        %v392 = vld [vmem:[%s215 + $0x2e0] sm:$0xff]
        %v393 = vld [vmem:[%s215 + $0x2e8] sm:$0xff]
        %v394 = vld [vmem:[%s215 + $0x2f0] sm:$0xff]
        %v395 = vld [vmem:[%s215 + $0x2f8] sm:$0xff]
        %v396 = vld [vmem:[%s215 + $0x300] sm:$0xff]
        %v397 = vld [vmem:[%s215 + $0x308] sm:$0xff]
        %v398 = vld [vmem:[%s215 + $0x310] sm:$0xff]
        %v399 = vld [vmem:[%s215 + $0x318] sm:$0xff]
        %v400 = vld [vmem:[%s215 + $0x320] sm:$0xff]
        %v401 = vld [vmem:[%s215 + $0x328] sm:$0xff]
        %v402 = vld [vmem:[%s215 + $0x330] sm:$0xff]
        %v403 = vld [vmem:[%s215 + $0x338] sm:$0xff]
        %v404 = vld [vmem:[%s215 + $0x340] sm:$0xff]
        %v405 = vld [vmem:[%s215 + $0x348] sm:$0xff]
        %v406 = vld [vmem:[%s215 + $0x350] sm:$0xff]
        %v407 = vld [vmem:[%s215 + $0x358] sm:$0xff]
        %v408 = vld [vmem:[%s215 + $0x360] sm:$0xff]
        %v409 = vld [vmem:[%s215 + $0x368] sm:$0xff]
        %v410 = vld [vmem:[%s215 + $0x370] sm:$0xff]
        %v411 = vld [vmem:[%s215 + $0x378] sm:$0xff]
        %v412 = vld [vmem:[%s215 + $0x380] sm:$0xff]
        %v413 = vld [vmem:[%s215 + $0x388] sm:$0xff]
        %v414 = vld [vmem:[%s215 + $0x390] sm:$0xff]
        %v415 = vld [vmem:[%s215 + $0x398] sm:$0xff]
        %v416 = vld [vmem:[%s215 + $0x3a0] sm:$0xff]
        %v417 = vld [vmem:[%s215 + $0x3a8] sm:$0xff]
        %v418 = vld [vmem:[%s215 + $0x3b0] sm:$0xff]
        %v419 = vld [vmem:[%s215 + $0x3b8] sm:$0xff]
        %v420 = vld [vmem:[%s215 + $0x3c0] sm:$0xff]
        %v421 = vld [vmem:[%s215 + $0x3c8] sm:$0xff]
        %v422 = vld [vmem:[%s215 + $0x3d0] sm:$0xff]
        %v423 = vld [vmem:[%s215 + $0x3d8] sm:$0xff]
        %v424 = vld [vmem:[%s215 + $0x3e0] sm:$0xff]
        %v425 = vld [vmem:[%s215 + $0x3e8] sm:$0xff]
        %v426 = vld [vmem:[%s215 + $0x3f0] sm:$0xff]
        %v427 = vld [vmem:[%s215 + $0x3f8] sm:$0xff]
        %v428 = vld [vmem:[%s215 + $0x400] sm:$0xff]
        %v429 = vld [vmem:[%s215 + $0x408] sm:$0xff]
        %v430 = vld [vmem:[%s215 + $0x410] sm:$0xff]
        %v431 = vld [vmem:[%s215 + $0x418] sm:$0xff]
        %v432 = vld [vmem:[%s215 + $0x420] sm:$0xff]
        %v433 = vld [vmem:[%s215 + $0x428] sm:$0xff]
        %v434 = vld [vmem:[%s215 + $0x430] sm:$0xff]
        %v435 = vld [vmem:[%s215 + $0x438] sm:$0xff]
        %v436 = vld [vmem:[%s215 + $0x440] sm:$0xff]
        %v437 = vld [vmem:[%s215 + $0x448] sm:$0xff]
        %v438 = vld [vmem:[%s215 + $0x450] sm:$0xff]
        %v439 = vld [vmem:[%s215 + $0x458] sm:$0xff]
        %v440 = vld [vmem:[%s215 + $0x460] sm:$0xff]
        %v441 = vld [vmem:[%s215 + $0x468] sm:$0xff]
        %v442 = vld [vmem:[%s215 + $0x470] sm:$0xff]
        %v443 = vld [vmem:[%s215 + $0x478] sm:$0xff]
        %v444 = vld [vmem:[%s215 + $0x480] sm:$0xff]
        %v445 = vld [vmem:[%s215 + $0x488] sm:$0xff]
        %v446 = vld [vmem:[%s215 + $0x490] sm:$0xff]
        %v447 = vld [vmem:[%s215 + $0x498] sm:$0xff]
        %v448 = vld [vmem:[%s215 + $0x4a0] sm:$0xff]
        %v449 = vld [vmem:[%s215 + $0x4a8] sm:$0xff]
        %v450 = vld [vmem:[%s215 + $0x4b0] sm:$0xff]
        %v451 = vld [vmem:[%s215 + $0x4b8] sm:$0xff]
        %v452 = vld [vmem:[%s215 + $0x4c0] sm:$0xff]
        %v453 = vld [vmem:[%s215 + $0x4c8] sm:$0xff]
        %v454 = vld [vmem:[%s215 + $0x4d0] sm:$0xff]
        %v455 = vld [vmem:[%s215 + $0x4d8] sm:$0xff]
        %v456 = vld [vmem:[%s215 + $0x4e0] sm:$0xff]
        %v457 = vld [vmem:[%s215 + $0x4e8] sm:$0xff]
        %v458 = vld [vmem:[%s215 + $0x4f0] sm:$0xff]
        %v459 = vld [vmem:[%s215 + $0x4f8] sm:$0xff]
        %v460 = vld [vmem:[%s215 + $0x500] sm:$0xff]
        %v461 = vld [vmem:[%s215 + $0x508] sm:$0xff]
        %v462 = vld [vmem:[%s215 + $0x510] sm:$0xff]
        %v463 = vld [vmem:[%s215 + $0x518] sm:$0xff]
        %v464 = vld [vmem:[%s215 + $0x520] sm:$0xff]
        %v465 = vld [vmem:[%s215 + $0x528] sm:$0xff]
        %v466 = vld [vmem:[%s215 + $0x530] sm:$0xff]
        %v467 = vld [vmem:[%s215 + $0x538] sm:$0xff]
        %v468 = vld [vmem:[%s215 + $0x540] sm:$0xff]
        %v469 = vld [vmem:[%s215 + $0x548] sm:$0xff]
        %v470 = vld [vmem:[%s215 + $0x550] sm:$0xff]
        %v471 = vld [vmem:[%s215 + $0x558] sm:$0xff]
        %v472 = vld [vmem:[%s215 + $0x560] sm:$0xff]
        %v473 = vld [vmem:[%s215 + $0x568] sm:$0xff]
        %v474 = vld [vmem:[%s215 + $0x570] sm:$0xff]
        %v475 = vld [vmem:[%s215 + $0x578] sm:$0xff]
        %v476 = vld [vmem:[%s215 + $0x580] sm:$0xff]
        %v477 = vld [vmem:[%s215 + $0x588] sm:$0xff]
        %v478 = vld [vmem:[%s215 + $0x590] sm:$0xff]
        %v479 = vld [vmem:[%s215 + $0x598] sm:$0xff]
        %v480 = vld [vmem:[%s215 + $0x5a0] sm:$0xff]
        %v481 = vld [vmem:[%s215 + $0x5a8] sm:$0xff]
        %v482 = vld [vmem:[%s215 + $0x5b0] sm:$0xff]
        %v483 = vld [vmem:[%s215 + $0x5b8] sm:$0xff]
        %v484 = vld [vmem:[%s215 + $0x5c0] sm:$0xff]
        %v485 = vld [vmem:[%s215 + $0x5c8] sm:$0xff]
        %v486 = vld [vmem:[%s215 + $0x5d0] sm:$0xff]
        %v487 = vld [vmem:[%s215 + $0x5d8] sm:$0xff]
        %v488 = vld [vmem:[%s215 + $0x5e0] sm:$0xff]
        %v489 = vld [vmem:[%s215 + $0x5e8] sm:$0xff]
        %v490 = vld [vmem:[%s215 + $0x5f0] sm:$0xff]
        %v491 = vld [vmem:[%s215 + $0x5f8] sm:$0xff]
        %v492 = vld [vmem:[%s215 + $0x600] sm:$0xff]
        %v493 = vld [vmem:[%s215 + $0x608] sm:$0xff]
        %v494 = vld [vmem:[%s215 + $0x610] sm:$0xff]
        %v495 = vld [vmem:[%s215 + $0x618] sm:$0xff]
        %v496 = vld [vmem:[%s215 + $0x620] sm:$0xff]
        %v497 = vld [vmem:[%s215 + $0x628] sm:$0xff]
        %v498 = vld [vmem:[%s215 + $0x630] sm:$0xff]
        %v499 = vld [vmem:[%s215 + $0x638] sm:$0xff]
        %v500 = vld [vmem:[%s215 + $0x640] sm:$0xff]
        %v501 = vld [vmem:[%s215 + $0x648] sm:$0xff]
        %v502 = vld [vmem:[%s215 + $0x650] sm:$0xff]
        %v503 = vld [vmem:[%s215 + $0x658] sm:$0xff]
        %v504 = vld [vmem:[%s215 + $0x660] sm:$0xff]
        %v505 = vld [vmem:[%s215 + $0x668] sm:$0xff]
        %v506 = vld [vmem:[%s215 + $0x670] sm:$0xff]
        %v507 = vld [vmem:[%s215 + $0x678] sm:$0xff]
        %v508 = vld [vmem:[%s215 + $0x680] sm:$0xff]
        %v509 = vld [vmem:[%s215 + $0x688] sm:$0xff]
        %v510 = vld [vmem:[%s215 + $0x690] sm:$0xff]
        %v511 = vld [vmem:[%s215 + $0x698] sm:$0xff]
        %v512 = vld [vmem:[%s215 + $0x6a0] sm:$0xff]
        %v513 = vld [vmem:[%s215 + $0x6a8] sm:$0xff]
        %v514 = vld [vmem:[%s215 + $0x6b0] sm:$0xff]
        %v515 = vld [vmem:[%s215 + $0x6b8] sm:$0xff]
        %v516 = vld [vmem:[%s215 + $0x6c0] sm:$0xff]
        %v517 = vld [vmem:[%s215 + $0x6c8] sm:$0xff]
        %v518 = vld [vmem:[%s215 + $0x6d0] sm:$0xff]
        %v519 = vld [vmem:[%s215 + $0x6d8] sm:$0xff]
        %v520 = vld [vmem:[%s215 + $0x6e0] sm:$0xff]
        %v521 = vld [vmem:[%s215 + $0x6e8] sm:$0xff]
        %v522 = vld [vmem:[%s215 + $0x6f0] sm:$0xff]
        %v523 = vld [vmem:[%s215 + $0x6f8] sm:$0xff]
        %v524 = vld [vmem:[%s215 + $0x700] sm:$0xff]
        %v525 = vld [vmem:[%s215 + $0x708] sm:$0xff]
        %v526 = vld [vmem:[%s215 + $0x710] sm:$0xff]
        %v527 = vld [vmem:[%s215 + $0x718] sm:$0xff]
        %v528 = vld [vmem:[%s215 + $0x720] sm:$0xff]
        %v529 = vld [vmem:[%s215 + $0x728] sm:$0xff]
        %v530 = vld [vmem:[%s215 + $0x730] sm:$0xff]
        %v531 = vld [vmem:[%s215 + $0x738] sm:$0xff]
        %v532 = vld [vmem:[%s215 + $0x740] sm:$0xff]
        %v533 = vld [vmem:[%s215 + $0x748] sm:$0xff]
        %v534 = vld [vmem:[%s215 + $0x750] sm:$0xff]
        %v535 = vld [vmem:[%s215 + $0x758] sm:$0xff]
        %v536 = vld [vmem:[%s215 + $0x760] sm:$0xff]
        %v537 = vld [vmem:[%s215 + $0x768] sm:$0xff]
        %v538 = vld [vmem:[%s215 + $0x770] sm:$0xff]
        %v539 = vld [vmem:[%s215 + $0x778] sm:$0xff]
        %v540 = vld [vmem:[%s215 + $0x780] sm:$0xff]
        %v541 = vld [vmem:[%s215 + $0x788] sm:$0xff]
        %v542 = vld [vmem:[%s215 + $0x790] sm:$0xff]
        %v543 = vld [vmem:[%s215 + $0x798] sm:$0xff]
        %v544 = vld [vmem:[%s215 + $0x7a0] sm:$0xff]
        %v545 = vld [vmem:[%s215 + $0x7a8] sm:$0xff]
        %v546 = vld [vmem:[%s215 + $0x7b0] sm:$0xff]
        %v547 = vld [vmem:[%s215 + $0x7b8] sm:$0xff]
        %v548 = vld [vmem:[%s215 + $0x7c0] sm:$0xff]
        %v549 = vld [vmem:[%s215 + $0x7c8] sm:$0xff]
        %v550 = vld [vmem:[%s215 + $0x7d0] sm:$0xff]
        %v551 = vld [vmem:[%s215 + $0x7d8] sm:$0xff]
        %v552 = vld [vmem:[%s215 + $0x7e0] sm:$0xff]
        %v553 = vld [vmem:[%s215 + $0x7e8] sm:$0xff]
        %v554 = vld [vmem:[%s215 + $0x7f0] sm:$0xff]
        %v555 = vld [vmem:[%s215 + $0x7f8] sm:$0xff]
        %v588 = vunpack.c.l.b16 %v268
        %v589 = vunpack.c.l.b16 %v269
        %v590 = vunpack.c.l.b16 %v270
        %v591 = vunpack.c.l.b16 %v271
        %v592 = vunpack.c.l.b16 %v272
        %v593 = vunpack.c.l.b16 %v273
        %v594 = vunpack.c.l.b16 %v274
        %v595 = vunpack.c.l.b16 %v275
        %v596 = vunpack.c.l.b16 %v276
        %v597 = vunpack.c.l.b16 %v277
        %v598 = vunpack.c.l.b16 %v278
        %v599 = vunpack.c.l.b16 %v279
        %v600 = vunpack.c.l.b16 %v280
        %v601 = vunpack.c.l.b16 %v281
        %v602 = vunpack.c.l.b16 %v282
        %v603 = vunpack.c.l.b16 %v283
        %v604 = vunpack.c.l.b16 %v284
        %v605 = vunpack.c.l.b16 %v285
        %v606 = vunpack.c.l.b16 %v286
        %v607 = vunpack.c.l.b16 %v287
        %v608 = vunpack.c.l.b16 %v288
        %v609 = vunpack.c.l.b16 %v289
        %v610 = vunpack.c.l.b16 %v290
        %v611 = vunpack.c.l.b16 %v291
        %v612 = vunpack.c.l.b16 %v292
        %v613 = vunpack.c.l.b16 %v293
        %v614 = vunpack.c.l.b16 %v294
        %v615 = vunpack.c.l.b16 %v295
        %v616 = vunpack.c.l.b16 %v296
        %v617 = vunpack.c.l.b16 %v297
        %v618 = vunpack.c.l.b16 %v298
        %v619 = vunpack.c.l.b16 %v299
        %v620 = vpack.c.b16 %v589, %v588
        %v621 = vpack.c.b16 %v591, %v590
        %v622 = vpack.c.b16 %v593, %v592
        %v623 = vpack.c.b16 %v595, %v594
        %v624 = vpack.c.b16 %v597, %v596
        %v625 = vpack.c.b16 %v599, %v598
        %v626 = vpack.c.b16 %v601, %v600
        %v627 = vpack.c.b16 %v603, %v602
        %v628 = vpack.c.b16 %v605, %v604
        %v629 = vpack.c.b16 %v607, %v606
        %v630 = vpack.c.b16 %v609, %v608
        %v631 = vpack.c.b16 %v611, %v610
        %v632 = vpack.c.b16 %v613, %v612
        %v633 = vpack.c.b16 %v615, %v614
        %v634 = vpack.c.b16 %v617, %v616
        %v635 = vpack.c.b16 %v619, %v618
        %v908 = vunpack.c.l.b16 %v300
        %v909 = vunpack.c.h.b16 %v300
        %v910 = vunpack.c.l.b16 %v301
        %v911 = vunpack.c.h.b16 %v301
        %v912 = vunpack.c.l.b16 %v302
        %v913 = vunpack.c.h.b16 %v302
        %v914 = vunpack.c.l.b16 %v303
        %v915 = vunpack.c.h.b16 %v303
        %v916 = vunpack.c.l.b16 %v304
        %v917 = vunpack.c.h.b16 %v304
        %v918 = vunpack.c.l.b16 %v305
        %v919 = vunpack.c.h.b16 %v305
        %v920 = vunpack.c.l.b16 %v306
        %v921 = vunpack.c.h.b16 %v306
        %v922 = vunpack.c.l.b16 %v307
        %v923 = vunpack.c.h.b16 %v307
        %v924 = vunpack.c.l.b16 %v308
        %v925 = vunpack.c.h.b16 %v308
        %v926 = vunpack.c.l.b16 %v309
        %v927 = vunpack.c.h.b16 %v309
        %v928 = vunpack.c.l.b16 %v310
        %v929 = vunpack.c.h.b16 %v310
        %v930 = vunpack.c.l.b16 %v311
        %v931 = vunpack.c.h.b16 %v311
        %v932 = vunpack.c.l.b16 %v312
        %v933 = vunpack.c.h.b16 %v312
        %v934 = vunpack.c.l.b16 %v313
        %v935 = vunpack.c.h.b16 %v313
        %v936 = vunpack.c.l.b16 %v314
        %v937 = vunpack.c.h.b16 %v314
        %v938 = vunpack.c.l.b16 %v315
        %v939 = vunpack.c.h.b16 %v315
        %v940 = vunpack.c.l.b16 %v316
        %v941 = vunpack.c.h.b16 %v316
        %v942 = vunpack.c.l.b16 %v317
        %v943 = vunpack.c.h.b16 %v317
        %v944 = vunpack.c.l.b16 %v318
        %v945 = vunpack.c.h.b16 %v318
        %v946 = vunpack.c.l.b16 %v319
        %v947 = vunpack.c.h.b16 %v319
        %v948 = vunpack.c.l.b16 %v320
        %v949 = vunpack.c.h.b16 %v320
        %v950 = vunpack.c.l.b16 %v321
        %v951 = vunpack.c.h.b16 %v321
        %v952 = vunpack.c.l.b16 %v322
        %v953 = vunpack.c.h.b16 %v322
        %v954 = vunpack.c.l.b16 %v323
        %v955 = vunpack.c.h.b16 %v323
        %v956 = vunpack.c.l.b16 %v324
        %v957 = vunpack.c.h.b16 %v324
        %v958 = vunpack.c.l.b16 %v325
        %v959 = vunpack.c.h.b16 %v325
        %v960 = vunpack.c.l.b16 %v326
        %v961 = vunpack.c.h.b16 %v326
        %v962 = vunpack.c.l.b16 %v327
        %v963 = vunpack.c.h.b16 %v327
        %v964 = vunpack.c.l.b16 %v328
        %v965 = vunpack.c.h.b16 %v328
        %v966 = vunpack.c.l.b16 %v329
        %v967 = vunpack.c.h.b16 %v329
        %v968 = vunpack.c.l.b16 %v330
        %v969 = vunpack.c.h.b16 %v330
        %v970 = vunpack.c.l.b16 %v331
        %v971 = vunpack.c.h.b16 %v331
        %v972 = vunpack.c.l.b16 %v332
        %v973 = vunpack.c.h.b16 %v332
        %v974 = vunpack.c.l.b16 %v333
        %v975 = vunpack.c.h.b16 %v333
        %v976 = vunpack.c.l.b16 %v334
        %v977 = vunpack.c.h.b16 %v334
        %v978 = vunpack.c.l.b16 %v335
        %v979 = vunpack.c.h.b16 %v335
        %v980 = vunpack.c.l.b16 %v336
        %v981 = vunpack.c.h.b16 %v336
        %v982 = vunpack.c.l.b16 %v337
        %v983 = vunpack.c.h.b16 %v337
        %v984 = vunpack.c.l.b16 %v338
        %v985 = vunpack.c.h.b16 %v338
        %v986 = vunpack.c.l.b16 %v339
        %v987 = vunpack.c.h.b16 %v339
        %v988 = vunpack.c.l.b16 %v340
        %v989 = vunpack.c.h.b16 %v340
        %v990 = vunpack.c.l.b16 %v341
        %v991 = vunpack.c.h.b16 %v341
        %v992 = vunpack.c.l.b16 %v342
        %v993 = vunpack.c.h.b16 %v342
        %v994 = vunpack.c.l.b16 %v343
        %v995 = vunpack.c.h.b16 %v343
        %v996 = vunpack.c.l.b16 %v344
        %v997 = vunpack.c.h.b16 %v344
        %v998 = vunpack.c.l.b16 %v345
        %v999 = vunpack.c.h.b16 %v345
        %v1000 = vunpack.c.l.b16 %v346
        %v1001 = vunpack.c.h.b16 %v346
        %v1002 = vunpack.c.l.b16 %v347
        %v1003 = vunpack.c.h.b16 %v347
        %v1004 = vunpack.c.l.b16 %v348
        %v1005 = vunpack.c.h.b16 %v348
        %v1006 = vunpack.c.l.b16 %v349
        %v1007 = vunpack.c.h.b16 %v349
        %v1008 = vunpack.c.l.b16 %v350
        %v1009 = vunpack.c.h.b16 %v350
        %v1010 = vunpack.c.l.b16 %v351
        %v1011 = vunpack.c.h.b16 %v351
        %v1012 = vunpack.c.l.b16 %v352
        %v1013 = vunpack.c.h.b16 %v352
        %v1014 = vunpack.c.l.b16 %v353
        %v1015 = vunpack.c.h.b16 %v353
        %v1016 = vunpack.c.l.b16 %v354
        %v1017 = vunpack.c.h.b16 %v354
        %v1018 = vunpack.c.l.b16 %v355
        %v1019 = vunpack.c.h.b16 %v355
        %v1020 = vunpack.c.l.b16 %v356
        %v1021 = vunpack.c.h.b16 %v356
        %v1022 = vunpack.c.l.b16 %v357
        %v1023 = vunpack.c.h.b16 %v357
        %v1024 = vunpack.c.l.b16 %v358
        %v1025 = vunpack.c.h.b16 %v358
        %v1026 = vunpack.c.l.b16 %v359
        %v1027 = vunpack.c.h.b16 %v359
        %v1028 = vunpack.c.l.b16 %v360
        %v1029 = vunpack.c.h.b16 %v360
        %v1030 = vunpack.c.l.b16 %v361
        %v1031 = vunpack.c.h.b16 %v361
        %v1032 = vunpack.c.l.b16 %v362
        %v1033 = vunpack.c.h.b16 %v362
        %v1034 = vunpack.c.l.b16 %v363
        %v1035 = vunpack.c.h.b16 %v363
        %v1036 = vunpack.c.l.b16 %v364
        %v1037 = vunpack.c.h.b16 %v364
        %v1038 = vunpack.c.l.b16 %v365
        %v1039 = vunpack.c.h.b16 %v365
        %v1040 = vunpack.c.l.b16 %v366
        %v1041 = vunpack.c.h.b16 %v366
        %v1042 = vunpack.c.l.b16 %v367
        %v1043 = vunpack.c.h.b16 %v367
        %v1044 = vunpack.c.l.b16 %v368
        %v1045 = vunpack.c.h.b16 %v368
        %v1046 = vunpack.c.l.b16 %v369
        %v1047 = vunpack.c.h.b16 %v369
        %v1048 = vunpack.c.l.b16 %v370
        %v1049 = vunpack.c.h.b16 %v370
        %v1050 = vunpack.c.l.b16 %v371
        %v1051 = vunpack.c.h.b16 %v371
        %v1052 = vunpack.c.l.b16 %v372
        %v1053 = vunpack.c.h.b16 %v372
        %v1054 = vunpack.c.l.b16 %v373
        %v1055 = vunpack.c.h.b16 %v373
        %v1056 = vunpack.c.l.b16 %v374
        %v1057 = vunpack.c.h.b16 %v374
        %v1058 = vunpack.c.l.b16 %v375
        %v1059 = vunpack.c.h.b16 %v375
        %v1060 = vunpack.c.l.b16 %v376
        %v1061 = vunpack.c.h.b16 %v376
        %v1062 = vunpack.c.l.b16 %v377
        %v1063 = vunpack.c.h.b16 %v377
        %v1064 = vunpack.c.l.b16 %v378
        %v1065 = vunpack.c.h.b16 %v378
        %v1066 = vunpack.c.l.b16 %v379
        %v1067 = vunpack.c.h.b16 %v379
        %v1068 = vunpack.c.l.b16 %v380
        %v1069 = vunpack.c.h.b16 %v380
        %v1070 = vunpack.c.l.b16 %v381
        %v1071 = vunpack.c.h.b16 %v381
        %v1072 = vunpack.c.l.b16 %v382
        %v1073 = vunpack.c.h.b16 %v382
        %v1074 = vunpack.c.l.b16 %v383
        %v1075 = vunpack.c.h.b16 %v383
        %v1076 = vunpack.c.l.b16 %v384
        %v1077 = vunpack.c.h.b16 %v384
        %v1078 = vunpack.c.l.b16 %v385
        %v1079 = vunpack.c.h.b16 %v385
        %v1080 = vunpack.c.l.b16 %v386
        %v1081 = vunpack.c.h.b16 %v386
        %v1082 = vunpack.c.l.b16 %v387
        %v1083 = vunpack.c.h.b16 %v387
        %v1084 = vunpack.c.l.b16 %v388
        %v1085 = vunpack.c.h.b16 %v388
        %v1086 = vunpack.c.l.b16 %v389
        %v1087 = vunpack.c.h.b16 %v389
        %v1088 = vunpack.c.l.b16 %v390
        %v1089 = vunpack.c.h.b16 %v390
        %v1090 = vunpack.c.l.b16 %v391
        %v1091 = vunpack.c.h.b16 %v391
        %v1092 = vunpack.c.l.b16 %v392
        %v1093 = vunpack.c.h.b16 %v392
        %v1094 = vunpack.c.l.b16 %v393
        %v1095 = vunpack.c.h.b16 %v393
        %v1096 = vunpack.c.l.b16 %v394
        %v1097 = vunpack.c.h.b16 %v394
        %v1098 = vunpack.c.l.b16 %v395
        %v1099 = vunpack.c.h.b16 %v395
        %v1100 = vunpack.c.l.b16 %v396
        %v1101 = vunpack.c.h.b16 %v396
        %v1102 = vunpack.c.l.b16 %v397
        %v1103 = vunpack.c.h.b16 %v397
        %v1104 = vunpack.c.l.b16 %v398
        %v1105 = vunpack.c.h.b16 %v398
        %v1106 = vunpack.c.l.b16 %v399
        %v1107 = vunpack.c.h.b16 %v399
        %v1108 = vunpack.c.l.b16 %v400
        %v1109 = vunpack.c.h.b16 %v400
        %v1110 = vunpack.c.l.b16 %v401
        %v1111 = vunpack.c.h.b16 %v401
        %v1112 = vunpack.c.l.b16 %v402
        %v1113 = vunpack.c.h.b16 %v402
        %v1114 = vunpack.c.l.b16 %v403
        %v1115 = vunpack.c.h.b16 %v403
        %v1116 = vunpack.c.l.b16 %v404
        %v1117 = vunpack.c.h.b16 %v404
        %v1118 = vunpack.c.l.b16 %v405
        %v1119 = vunpack.c.h.b16 %v405
        %v1120 = vunpack.c.l.b16 %v406
        %v1121 = vunpack.c.h.b16 %v406
        %v1122 = vunpack.c.l.b16 %v407
        %v1123 = vunpack.c.h.b16 %v407
        %v1124 = vunpack.c.l.b16 %v408
        %v1125 = vunpack.c.h.b16 %v408
        %v1126 = vunpack.c.l.b16 %v409
        %v1127 = vunpack.c.h.b16 %v409
        %v1128 = vunpack.c.l.b16 %v410
        %v1129 = vunpack.c.h.b16 %v410
        %v1130 = vunpack.c.l.b16 %v411
        %v1131 = vunpack.c.h.b16 %v411
        %v1132 = vunpack.c.l.b16 %v412
        %v1133 = vunpack.c.h.b16 %v412
        %v1134 = vunpack.c.l.b16 %v413
        %v1135 = vunpack.c.h.b16 %v413
        %v1136 = vunpack.c.l.b16 %v414
        %v1137 = vunpack.c.h.b16 %v414
        %v1138 = vunpack.c.l.b16 %v415
        %v1139 = vunpack.c.h.b16 %v415
        %v1140 = vunpack.c.l.b16 %v416
        %v1141 = vunpack.c.h.b16 %v416
        %v1142 = vunpack.c.l.b16 %v417
        %v1143 = vunpack.c.h.b16 %v417
        %v1144 = vunpack.c.l.b16 %v418
        %v1145 = vunpack.c.h.b16 %v418
        %v1146 = vunpack.c.l.b16 %v419
        %v1147 = vunpack.c.h.b16 %v419
        %v1148 = vunpack.c.l.b16 %v420
        %v1149 = vunpack.c.h.b16 %v420
        %v1150 = vunpack.c.l.b16 %v421
        %v1151 = vunpack.c.h.b16 %v421
        %v1152 = vunpack.c.l.b16 %v422
        %v1153 = vunpack.c.h.b16 %v422
        %v1154 = vunpack.c.l.b16 %v423
        %v1155 = vunpack.c.h.b16 %v423
        %v1156 = vunpack.c.l.b16 %v424
        %v1157 = vunpack.c.h.b16 %v424
        %v1158 = vunpack.c.l.b16 %v425
        %v1159 = vunpack.c.h.b16 %v425
        %v1160 = vunpack.c.l.b16 %v426
        %v1161 = vunpack.c.h.b16 %v426
        %v1162 = vunpack.c.l.b16 %v427
        %v1163 = vunpack.c.h.b16 %v427
        %v1164 = vunpack.c.l.b16 %v428
        %v1165 = vunpack.c.h.b16 %v428
        %v1166 = vunpack.c.l.b16 %v429
        %v1167 = vunpack.c.h.b16 %v429
        %v1168 = vunpack.c.l.b16 %v430
        %v1169 = vunpack.c.h.b16 %v430
        %v1170 = vunpack.c.l.b16 %v431
        %v1171 = vunpack.c.h.b16 %v431
        %v1172 = vunpack.c.l.b16 %v432
        %v1173 = vunpack.c.h.b16 %v432
        %v1174 = vunpack.c.l.b16 %v433
        %v1175 = vunpack.c.h.b16 %v433
        %v1176 = vunpack.c.l.b16 %v434
        %v1177 = vunpack.c.h.b16 %v434
        %v1178 = vunpack.c.l.b16 %v435
        %v1179 = vunpack.c.h.b16 %v435
        %v1180 = vunpack.c.l.b16 %v436
        %v1181 = vunpack.c.h.b16 %v436
        %v1182 = vunpack.c.l.b16 %v437
        %v1183 = vunpack.c.h.b16 %v437
        %v1184 = vunpack.c.l.b16 %v438
        %v1185 = vunpack.c.h.b16 %v438
        %v1186 = vunpack.c.l.b16 %v439
        %v1187 = vunpack.c.h.b16 %v439
        %v1188 = vunpack.c.l.b16 %v440
        %v1189 = vunpack.c.h.b16 %v440
        %v1190 = vunpack.c.l.b16 %v441
        %v1191 = vunpack.c.h.b16 %v441
        %v1192 = vunpack.c.l.b16 %v442
        %v1193 = vunpack.c.h.b16 %v442
        %v1194 = vunpack.c.l.b16 %v443
        %v1195 = vunpack.c.h.b16 %v443
        %v1196 = vunpack.c.l.b16 %v444
        %v1197 = vunpack.c.h.b16 %v444
        %v1198 = vunpack.c.l.b16 %v445
        %v1199 = vunpack.c.h.b16 %v445
        %v1200 = vunpack.c.l.b16 %v446
        %v1201 = vunpack.c.h.b16 %v446
        %v1202 = vunpack.c.l.b16 %v447
        %v1203 = vunpack.c.h.b16 %v447
        %v1204 = vunpack.c.l.b16 %v448
        %v1205 = vunpack.c.h.b16 %v448
        %v1206 = vunpack.c.l.b16 %v449
        %v1207 = vunpack.c.h.b16 %v449
        %v1208 = vunpack.c.l.b16 %v450
        %v1209 = vunpack.c.h.b16 %v450
        %v1210 = vunpack.c.l.b16 %v451
        %v1211 = vunpack.c.h.b16 %v451
        %v1212 = vunpack.c.l.b16 %v452
        %v1213 = vunpack.c.h.b16 %v452
        %v1214 = vunpack.c.l.b16 %v453
        %v1215 = vunpack.c.h.b16 %v453
        %v1216 = vunpack.c.l.b16 %v454
        %v1217 = vunpack.c.h.b16 %v454
        %v1218 = vunpack.c.l.b16 %v455
        %v1219 = vunpack.c.h.b16 %v455
        %v1220 = vunpack.c.l.b16 %v456
        %v1221 = vunpack.c.h.b16 %v456
        %v1222 = vunpack.c.l.b16 %v457
        %v1223 = vunpack.c.h.b16 %v457
        %v1224 = vunpack.c.l.b16 %v458
        %v1225 = vunpack.c.h.b16 %v458
        %v1226 = vunpack.c.l.b16 %v459
        %v1227 = vunpack.c.h.b16 %v459
        %v1228 = vunpack.c.l.b16 %v460
        %v1229 = vunpack.c.h.b16 %v460
        %v1230 = vunpack.c.l.b16 %v461
        %v1231 = vunpack.c.h.b16 %v461
        %v1232 = vunpack.c.l.b16 %v462
        %v1233 = vunpack.c.h.b16 %v462
        %v1234 = vunpack.c.l.b16 %v463
        %v1235 = vunpack.c.h.b16 %v463
        %v1236 = vunpack.c.l.b16 %v464
        %v1237 = vunpack.c.h.b16 %v464
        %v1238 = vunpack.c.l.b16 %v465
        %v1239 = vunpack.c.h.b16 %v465
        %v1240 = vunpack.c.l.b16 %v466
        %v1241 = vunpack.c.h.b16 %v466
        %v1242 = vunpack.c.l.b16 %v467
        %v1243 = vunpack.c.h.b16 %v467
        %v1244 = vunpack.c.l.b16 %v468
        %v1245 = vunpack.c.h.b16 %v468
        %v1246 = vunpack.c.l.b16 %v469
        %v1247 = vunpack.c.h.b16 %v469
        %v1248 = vunpack.c.l.b16 %v470
        %v1249 = vunpack.c.h.b16 %v470
        %v1250 = vunpack.c.l.b16 %v471
        %v1251 = vunpack.c.h.b16 %v471
        %v1252 = vunpack.c.l.b16 %v472
        %v1253 = vunpack.c.h.b16 %v472
        %v1254 = vunpack.c.l.b16 %v473
        %v1255 = vunpack.c.h.b16 %v473
        %v1256 = vunpack.c.l.b16 %v474
        %v1257 = vunpack.c.h.b16 %v474
        %v1258 = vunpack.c.l.b16 %v475
        %v1259 = vunpack.c.h.b16 %v475
        %v1260 = vunpack.c.l.b16 %v476
        %v1261 = vunpack.c.h.b16 %v476
        %v1262 = vunpack.c.l.b16 %v477
        %v1263 = vunpack.c.h.b16 %v477
        %v1264 = vunpack.c.l.b16 %v478
        %v1265 = vunpack.c.h.b16 %v478
        %v1266 = vunpack.c.l.b16 %v479
        %v1267 = vunpack.c.h.b16 %v479
        %v1268 = vunpack.c.l.b16 %v480
        %v1269 = vunpack.c.h.b16 %v480
        %v1270 = vunpack.c.l.b16 %v481
        %v1271 = vunpack.c.h.b16 %v481
        %v1272 = vunpack.c.l.b16 %v482
        %v1273 = vunpack.c.h.b16 %v482
        %v1274 = vunpack.c.l.b16 %v483
        %v1275 = vunpack.c.h.b16 %v483
        %v1276 = vunpack.c.l.b16 %v484
        %v1277 = vunpack.c.h.b16 %v484
        %v1278 = vunpack.c.l.b16 %v485
        %v1279 = vunpack.c.h.b16 %v485
        %v1280 = vunpack.c.l.b16 %v486
        %v1281 = vunpack.c.h.b16 %v486
        %v1282 = vunpack.c.l.b16 %v487
        %v1283 = vunpack.c.h.b16 %v487
        %v1284 = vunpack.c.l.b16 %v488
        %v1285 = vunpack.c.h.b16 %v488
        %v1286 = vunpack.c.l.b16 %v489
        %v1287 = vunpack.c.h.b16 %v489
        %v1288 = vunpack.c.l.b16 %v490
        %v1289 = vunpack.c.h.b16 %v490
        %v1290 = vunpack.c.l.b16 %v491
        %v1291 = vunpack.c.h.b16 %v491
        %v1292 = vunpack.c.l.b16 %v492
        %v1293 = vunpack.c.h.b16 %v492
        %v1294 = vunpack.c.l.b16 %v493
        %v1295 = vunpack.c.h.b16 %v493
        %v1296 = vunpack.c.l.b16 %v494
        %v1297 = vunpack.c.h.b16 %v494
        %v1298 = vunpack.c.l.b16 %v495
        %v1299 = vunpack.c.h.b16 %v495
        %v1300 = vunpack.c.l.b16 %v496
        %v1301 = vunpack.c.h.b16 %v496
        %v1302 = vunpack.c.l.b16 %v497
        %v1303 = vunpack.c.h.b16 %v497
        %v1304 = vunpack.c.l.b16 %v498
        %v1305 = vunpack.c.h.b16 %v498
        %v1306 = vunpack.c.l.b16 %v499
        %v1307 = vunpack.c.h.b16 %v499
        %v1308 = vunpack.c.l.b16 %v500
        %v1309 = vunpack.c.h.b16 %v500
        %v1310 = vunpack.c.l.b16 %v501
        %v1311 = vunpack.c.h.b16 %v501
        %v1312 = vunpack.c.l.b16 %v502
        %v1313 = vunpack.c.h.b16 %v502
        %v1314 = vunpack.c.l.b16 %v503
        %v1315 = vunpack.c.h.b16 %v503
        %v1316 = vunpack.c.l.b16 %v504
        %v1317 = vunpack.c.h.b16 %v504
        %v1318 = vunpack.c.l.b16 %v505
        %v1319 = vunpack.c.h.b16 %v505
        %v1320 = vunpack.c.l.b16 %v506
        %v1321 = vunpack.c.h.b16 %v506
        %v1322 = vunpack.c.l.b16 %v507
        %v1323 = vunpack.c.h.b16 %v507
        %v1324 = vunpack.c.l.b16 %v508
        %v1325 = vunpack.c.h.b16 %v508
        %v1326 = vunpack.c.l.b16 %v509
        %v1327 = vunpack.c.h.b16 %v509
        %v1328 = vunpack.c.l.b16 %v510
        %v1329 = vunpack.c.h.b16 %v510
        %v1330 = vunpack.c.l.b16 %v511
        %v1331 = vunpack.c.h.b16 %v511
        %v1332 = vunpack.c.l.b16 %v512
        %v1333 = vunpack.c.h.b16 %v512
        %v1334 = vunpack.c.l.b16 %v513
        %v1335 = vunpack.c.h.b16 %v513
        %v1336 = vunpack.c.l.b16 %v514
        %v1337 = vunpack.c.h.b16 %v514
        %v1338 = vunpack.c.l.b16 %v515
        %v1339 = vunpack.c.h.b16 %v515
        %v1340 = vunpack.c.l.b16 %v516
        %v1341 = vunpack.c.h.b16 %v516
        %v1342 = vunpack.c.l.b16 %v517
        %v1343 = vunpack.c.h.b16 %v517
        %v1344 = vunpack.c.l.b16 %v518
        %v1345 = vunpack.c.h.b16 %v518
        %v1346 = vunpack.c.l.b16 %v519
        %v1347 = vunpack.c.h.b16 %v519
        %v1348 = vunpack.c.l.b16 %v520
        %v1349 = vunpack.c.h.b16 %v520
        %v1350 = vunpack.c.l.b16 %v521
        %v1351 = vunpack.c.h.b16 %v521
        %v1352 = vunpack.c.l.b16 %v522
        %v1353 = vunpack.c.h.b16 %v522
        %v1354 = vunpack.c.l.b16 %v523
        %v1355 = vunpack.c.h.b16 %v523
        %v1356 = vunpack.c.l.b16 %v524
        %v1357 = vunpack.c.h.b16 %v524
        %v1358 = vunpack.c.l.b16 %v525
        %v1359 = vunpack.c.h.b16 %v525
        %v1360 = vunpack.c.l.b16 %v526
        %v1361 = vunpack.c.h.b16 %v526
        %v1362 = vunpack.c.l.b16 %v527
        %v1363 = vunpack.c.h.b16 %v527
        %v1364 = vunpack.c.l.b16 %v528
        %v1365 = vunpack.c.h.b16 %v528
        %v1366 = vunpack.c.l.b16 %v529
        %v1367 = vunpack.c.h.b16 %v529
        %v1368 = vunpack.c.l.b16 %v530
        %v1369 = vunpack.c.h.b16 %v530
        %v1370 = vunpack.c.l.b16 %v531
        %v1371 = vunpack.c.h.b16 %v531
        %v1372 = vunpack.c.l.b16 %v532
        %v1373 = vunpack.c.h.b16 %v532
        %v1374 = vunpack.c.l.b16 %v533
        %v1375 = vunpack.c.h.b16 %v533
        %v1376 = vunpack.c.l.b16 %v534
        %v1377 = vunpack.c.h.b16 %v534
        %v1378 = vunpack.c.l.b16 %v535
        %v1379 = vunpack.c.h.b16 %v535
        %v1380 = vunpack.c.l.b16 %v536
        %v1381 = vunpack.c.h.b16 %v536
        %v1382 = vunpack.c.l.b16 %v537
        %v1383 = vunpack.c.h.b16 %v537
        %v1384 = vunpack.c.l.b16 %v538
        %v1385 = vunpack.c.h.b16 %v538
        %v1386 = vunpack.c.l.b16 %v539
        %v1387 = vunpack.c.h.b16 %v539
        %v1388 = vunpack.c.l.b16 %v540
        %v1389 = vunpack.c.h.b16 %v540
        %v1390 = vunpack.c.l.b16 %v541
        %v1391 = vunpack.c.h.b16 %v541
        %v1392 = vunpack.c.l.b16 %v542
        %v1393 = vunpack.c.h.b16 %v542
        %v1394 = vunpack.c.l.b16 %v543
        %v1395 = vunpack.c.h.b16 %v543
        %v1396 = vunpack.c.l.b16 %v544
        %v1397 = vunpack.c.h.b16 %v544
        %v1398 = vunpack.c.l.b16 %v545
        %v1399 = vunpack.c.h.b16 %v545
        %v1400 = vunpack.c.l.b16 %v546
        %v1401 = vunpack.c.h.b16 %v546
        %v1402 = vunpack.c.l.b16 %v547
        %v1403 = vunpack.c.h.b16 %v547
        %v1404 = vunpack.c.l.b16 %v548
        %v1405 = vunpack.c.h.b16 %v548
        %v1406 = vunpack.c.l.b16 %v549
        %v1407 = vunpack.c.h.b16 %v549
        %v1408 = vunpack.c.l.b16 %v550
        %v1409 = vunpack.c.h.b16 %v550
        %v1410 = vunpack.c.l.b16 %v551
        %v1411 = vunpack.c.h.b16 %v551
        %v1412 = vunpack.c.l.b16 %v552
        %v1413 = vunpack.c.h.b16 %v552
        %v1414 = vunpack.c.l.b16 %v553
        %v1415 = vunpack.c.h.b16 %v553
        %v1416 = vunpack.c.l.b16 %v554
        %v1417 = vunpack.c.h.b16 %v554
        %v1418 = vunpack.c.l.b16 %v555
        %v1419 = vunpack.c.h.b16 %v555
        %v1420 = vpack.c.b16 %v940, %v908
        %v1421 = vpack.c.b16 %v941, %v909
        %v1422 = vpack.c.b16 %v942, %v910
        %v1423 = vpack.c.b16 %v943, %v911
        %v1424 = vpack.c.b16 %v944, %v912
        %v1425 = vpack.c.b16 %v945, %v913
        %v1426 = vpack.c.b16 %v946, %v914
        %v1427 = vpack.c.b16 %v947, %v915
        %v1428 = vpack.c.b16 %v948, %v916
        %v1429 = vpack.c.b16 %v949, %v917
        %v1430 = vpack.c.b16 %v950, %v918
        %v1431 = vpack.c.b16 %v951, %v919
        %v1432 = vpack.c.b16 %v952, %v920
        %v1433 = vpack.c.b16 %v953, %v921
        %v1434 = vpack.c.b16 %v954, %v922
        %v1435 = vpack.c.b16 %v955, %v923
        %v1436 = vpack.c.b16 %v956, %v924
        %v1437 = vpack.c.b16 %v957, %v925
        %v1438 = vpack.c.b16 %v958, %v926
        %v1439 = vpack.c.b16 %v959, %v927
        %v1440 = vpack.c.b16 %v960, %v928
        %v1441 = vpack.c.b16 %v961, %v929
        %v1442 = vpack.c.b16 %v962, %v930
        %v1443 = vpack.c.b16 %v963, %v931
        %v1444 = vpack.c.b16 %v964, %v932
        %v1445 = vpack.c.b16 %v965, %v933
        %v1446 = vpack.c.b16 %v966, %v934
        %v1447 = vpack.c.b16 %v967, %v935
        %v1448 = vpack.c.b16 %v968, %v936
        %v1449 = vpack.c.b16 %v969, %v937
        %v1450 = vpack.c.b16 %v970, %v938
        %v1451 = vpack.c.b16 %v971, %v939
        %v1452 = vpack.c.b16 %v1004, %v972
        %v1453 = vpack.c.b16 %v1005, %v973
        %v1454 = vpack.c.b16 %v1006, %v974
        %v1455 = vpack.c.b16 %v1007, %v975
        %v1456 = vpack.c.b16 %v1008, %v976
        %v1457 = vpack.c.b16 %v1009, %v977
        %v1458 = vpack.c.b16 %v1010, %v978
        %v1459 = vpack.c.b16 %v1011, %v979
        %v1460 = vpack.c.b16 %v1012, %v980
        %v1461 = vpack.c.b16 %v1013, %v981
        %v1462 = vpack.c.b16 %v1014, %v982
        %v1463 = vpack.c.b16 %v1015, %v983
        %v1464 = vpack.c.b16 %v1016, %v984
        %v1465 = vpack.c.b16 %v1017, %v985
        %v1466 = vpack.c.b16 %v1018, %v986
        %v1467 = vpack.c.b16 %v1019, %v987
        %v1468 = vpack.c.b16 %v1020, %v988
        %v1469 = vpack.c.b16 %v1021, %v989
        %v1470 = vpack.c.b16 %v1022, %v990
        %v1471 = vpack.c.b16 %v1023, %v991
        %v1472 = vpack.c.b16 %v1024, %v992
        %v1473 = vpack.c.b16 %v1025, %v993
        %v1474 = vpack.c.b16 %v1026, %v994
        %v1475 = vpack.c.b16 %v1027, %v995
        %v1476 = vpack.c.b16 %v1028, %v996
        %v1477 = vpack.c.b16 %v1029, %v997
        %v1478 = vpack.c.b16 %v1030, %v998
        %v1479 = vpack.c.b16 %v1031, %v999
        %v1480 = vpack.c.b16 %v1032, %v1000
        %v1481 = vpack.c.b16 %v1033, %v1001
        %v1482 = vpack.c.b16 %v1034, %v1002
        %v1483 = vpack.c.b16 %v1035, %v1003
        %v1484 = vpack.c.b16 %v1068, %v1036
        %v1485 = vpack.c.b16 %v1069, %v1037
        %v1486 = vpack.c.b16 %v1070, %v1038
        %v1487 = vpack.c.b16 %v1071, %v1039
        %v1488 = vpack.c.b16 %v1072, %v1040
        %v1489 = vpack.c.b16 %v1073, %v1041
        %v1490 = vpack.c.b16 %v1074, %v1042
        %v1491 = vpack.c.b16 %v1075, %v1043
        %v1492 = vpack.c.b16 %v1076, %v1044
        %v1493 = vpack.c.b16 %v1077, %v1045
        %v1494 = vpack.c.b16 %v1078, %v1046
        %v1495 = vpack.c.b16 %v1079, %v1047
        %v1496 = vpack.c.b16 %v1080, %v1048
        %v1497 = vpack.c.b16 %v1081, %v1049
        %v1498 = vpack.c.b16 %v1082, %v1050
        %v1499 = vpack.c.b16 %v1083, %v1051
        %v1500 = vpack.c.b16 %v1084, %v1052
        %v1501 = vpack.c.b16 %v1085, %v1053
        %v1502 = vpack.c.b16 %v1086, %v1054
        %v1503 = vpack.c.b16 %v1087, %v1055
        %v1504 = vpack.c.b16 %v1088, %v1056
        %v1505 = vpack.c.b16 %v1089, %v1057
        %v1506 = vpack.c.b16 %v1090, %v1058
        %v1507 = vpack.c.b16 %v1091, %v1059
        %v1508 = vpack.c.b16 %v1092, %v1060
        %v1509 = vpack.c.b16 %v1093, %v1061
        %v1510 = vpack.c.b16 %v1094, %v1062
        %v1511 = vpack.c.b16 %v1095, %v1063
        %v1512 = vpack.c.b16 %v1096, %v1064
        %v1513 = vpack.c.b16 %v1097, %v1065
        %v1514 = vpack.c.b16 %v1098, %v1066
        %v1515 = vpack.c.b16 %v1099, %v1067
        %v1516 = vpack.c.b16 %v1132, %v1100
        %v1517 = vpack.c.b16 %v1133, %v1101
        %v1518 = vpack.c.b16 %v1134, %v1102
        %v1519 = vpack.c.b16 %v1135, %v1103
        %v1520 = vpack.c.b16 %v1136, %v1104
        %v1521 = vpack.c.b16 %v1137, %v1105
        %v1522 = vpack.c.b16 %v1138, %v1106
        %v1523 = vpack.c.b16 %v1139, %v1107
        %v1524 = vpack.c.b16 %v1140, %v1108
        %v1525 = vpack.c.b16 %v1141, %v1109
        %v1526 = vpack.c.b16 %v1142, %v1110
        %v1527 = vpack.c.b16 %v1143, %v1111
        %v1528 = vpack.c.b16 %v1144, %v1112
        %v1529 = vpack.c.b16 %v1145, %v1113
        %v1530 = vpack.c.b16 %v1146, %v1114
        %v1531 = vpack.c.b16 %v1147, %v1115
        %v1532 = vpack.c.b16 %v1148, %v1116
        %v1533 = vpack.c.b16 %v1149, %v1117
        %v1534 = vpack.c.b16 %v1150, %v1118
        %v1535 = vpack.c.b16 %v1151, %v1119
        %v1536 = vpack.c.b16 %v1152, %v1120
        %v1537 = vpack.c.b16 %v1153, %v1121
        %v1538 = vpack.c.b16 %v1154, %v1122
        %v1539 = vpack.c.b16 %v1155, %v1123
        %v1540 = vpack.c.b16 %v1156, %v1124
        %v1541 = vpack.c.b16 %v1157, %v1125
        %v1542 = vpack.c.b16 %v1158, %v1126
        %v1543 = vpack.c.b16 %v1159, %v1127
        %v1544 = vpack.c.b16 %v1160, %v1128
        %v1545 = vpack.c.b16 %v1161, %v1129
        %v1546 = vpack.c.b16 %v1162, %v1130
        %v1547 = vpack.c.b16 %v1163, %v1131
        %v1548 = vpack.c.b16 %v1196, %v1164
        %v1549 = vpack.c.b16 %v1197, %v1165
        %v1550 = vpack.c.b16 %v1198, %v1166
        %v1551 = vpack.c.b16 %v1199, %v1167
        %v1552 = vpack.c.b16 %v1200, %v1168
        %v1553 = vpack.c.b16 %v1201, %v1169
        %v1554 = vpack.c.b16 %v1202, %v1170
        %v1555 = vpack.c.b16 %v1203, %v1171
        %v1556 = vpack.c.b16 %v1204, %v1172
        %v1557 = vpack.c.b16 %v1205, %v1173
        %v1558 = vpack.c.b16 %v1206, %v1174
        %v1559 = vpack.c.b16 %v1207, %v1175
        %v1560 = vpack.c.b16 %v1208, %v1176
        %v1561 = vpack.c.b16 %v1209, %v1177
        %v1562 = vpack.c.b16 %v1210, %v1178
        %v1563 = vpack.c.b16 %v1211, %v1179
        %v1564 = vpack.c.b16 %v1212, %v1180
        %v1565 = vpack.c.b16 %v1213, %v1181
        %v1566 = vpack.c.b16 %v1214, %v1182
        %v1567 = vpack.c.b16 %v1215, %v1183
        %v1568 = vpack.c.b16 %v1216, %v1184
        %v1569 = vpack.c.b16 %v1217, %v1185
        %v1570 = vpack.c.b16 %v1218, %v1186
        %v1571 = vpack.c.b16 %v1219, %v1187
        %v1572 = vpack.c.b16 %v1220, %v1188
        %v1573 = vpack.c.b16 %v1221, %v1189
        %v1574 = vpack.c.b16 %v1222, %v1190
        %v1575 = vpack.c.b16 %v1223, %v1191
        %v1576 = vpack.c.b16 %v1224, %v1192
        %v1577 = vpack.c.b16 %v1225, %v1193
        %v1578 = vpack.c.b16 %v1226, %v1194
        %v1579 = vpack.c.b16 %v1227, %v1195
        %v1580 = vpack.c.b16 %v1260, %v1228
        %v1581 = vpack.c.b16 %v1261, %v1229
        %v1582 = vpack.c.b16 %v1262, %v1230
        %v1583 = vpack.c.b16 %v1263, %v1231
        %v1584 = vpack.c.b16 %v1264, %v1232
        %v1585 = vpack.c.b16 %v1265, %v1233
        %v1586 = vpack.c.b16 %v1266, %v1234
        %v1587 = vpack.c.b16 %v1267, %v1235
        %v1588 = vpack.c.b16 %v1268, %v1236
        %v1589 = vpack.c.b16 %v1269, %v1237
        %v1590 = vpack.c.b16 %v1270, %v1238
        %v1591 = vpack.c.b16 %v1271, %v1239
        %v1592 = vpack.c.b16 %v1272, %v1240
        %v1593 = vpack.c.b16 %v1273, %v1241
        %v1594 = vpack.c.b16 %v1274, %v1242
        %v1595 = vpack.c.b16 %v1275, %v1243
        %v1596 = vpack.c.b16 %v1276, %v1244
        %v1597 = vpack.c.b16 %v1277, %v1245
        %v1598 = vpack.c.b16 %v1278, %v1246
        %v1599 = vpack.c.b16 %v1279, %v1247
        %v1600 = vpack.c.b16 %v1280, %v1248
        %v1601 = vpack.c.b16 %v1281, %v1249
        %v1602 = vpack.c.b16 %v1282, %v1250
        %v1603 = vpack.c.b16 %v1283, %v1251
        %v1604 = vpack.c.b16 %v1284, %v1252
        %v1605 = vpack.c.b16 %v1285, %v1253
        %v1606 = vpack.c.b16 %v1286, %v1254
        %v1607 = vpack.c.b16 %v1287, %v1255
        %v1608 = vpack.c.b16 %v1288, %v1256
        %v1609 = vpack.c.b16 %v1289, %v1257
        %v1610 = vpack.c.b16 %v1290, %v1258
        %v1611 = vpack.c.b16 %v1291, %v1259
        %v1612 = vpack.c.b16 %v1324, %v1292
        %v1613 = vpack.c.b16 %v1325, %v1293
        %v1614 = vpack.c.b16 %v1326, %v1294
        %v1615 = vpack.c.b16 %v1327, %v1295
        %v1616 = vpack.c.b16 %v1328, %v1296
        %v1617 = vpack.c.b16 %v1329, %v1297
        %v1618 = vpack.c.b16 %v1330, %v1298
        %v1619 = vpack.c.b16 %v1331, %v1299
        %v1620 = vpack.c.b16 %v1332, %v1300
        %v1621 = vpack.c.b16 %v1333, %v1301
        %v1622 = vpack.c.b16 %v1334, %v1302
        %v1623 = vpack.c.b16 %v1335, %v1303
        %v1624 = vpack.c.b16 %v1336, %v1304
        %v1625 = vpack.c.b16 %v1337, %v1305
        %v1626 = vpack.c.b16 %v1338, %v1306
        %v1627 = vpack.c.b16 %v1339, %v1307
        %v1628 = vpack.c.b16 %v1340, %v1308
        %v1629 = vpack.c.b16 %v1341, %v1309
        %v1630 = vpack.c.b16 %v1342, %v1310
        %v1631 = vpack.c.b16 %v1343, %v1311
        %v1632 = vpack.c.b16 %v1344, %v1312
        %v1633 = vpack.c.b16 %v1345, %v1313
        %v1634 = vpack.c.b16 %v1346, %v1314
        %v1635 = vpack.c.b16 %v1347, %v1315
        %v1636 = vpack.c.b16 %v1348, %v1316
        %v1637 = vpack.c.b16 %v1349, %v1317
        %v1638 = vpack.c.b16 %v1350, %v1318
        %v1639 = vpack.c.b16 %v1351, %v1319
        %v1640 = vpack.c.b16 %v1352, %v1320
        %v1641 = vpack.c.b16 %v1353, %v1321
        %v1642 = vpack.c.b16 %v1354, %v1322
        %v1643 = vpack.c.b16 %v1355, %v1323
        %v1644 = vpack.c.b16 %v1388, %v1356
        %v1645 = vpack.c.b16 %v1389, %v1357
        %v1646 = vpack.c.b16 %v1390, %v1358
        %v1647 = vpack.c.b16 %v1391, %v1359
        %v1648 = vpack.c.b16 %v1392, %v1360
        %v1649 = vpack.c.b16 %v1393, %v1361
        %v1650 = vpack.c.b16 %v1394, %v1362
        %v1651 = vpack.c.b16 %v1395, %v1363
        %v1652 = vpack.c.b16 %v1396, %v1364
        %v1653 = vpack.c.b16 %v1397, %v1365
        %v1654 = vpack.c.b16 %v1398, %v1366
        %v1655 = vpack.c.b16 %v1399, %v1367
        %v1656 = vpack.c.b16 %v1400, %v1368
        %v1657 = vpack.c.b16 %v1401, %v1369
        %v1658 = vpack.c.b16 %v1402, %v1370
        %v1659 = vpack.c.b16 %v1403, %v1371
        %v1660 = vpack.c.b16 %v1404, %v1372
        %v1661 = vpack.c.b16 %v1405, %v1373
        %v1662 = vpack.c.b16 %v1406, %v1374
        %v1663 = vpack.c.b16 %v1407, %v1375
        %v1664 = vpack.c.b16 %v1408, %v1376
        %v1665 = vpack.c.b16 %v1409, %v1377
        %v1666 = vpack.c.b16 %v1410, %v1378
        %v1667 = vpack.c.b16 %v1411, %v1379
        %v1668 = vpack.c.b16 %v1412, %v1380
        %v1669 = vpack.c.b16 %v1413, %v1381
        %v1670 = vpack.c.b16 %v1414, %v1382
        %v1671 = vpack.c.b16 %v1415, %v1383
        %v1672 = vpack.c.b16 %v1416, %v1384
        %v1673 = vpack.c.b16 %v1417, %v1385
        %v1674 = vpack.c.b16 %v1418, %v1386
        %v1675 = vpack.c.b16 %v1419, %v1387
        %1932 = vmatprep.subr.bf16.mxu0 %v1421
        %1933 = vmatpush1.bf16.msra.mxu0 %v1420
        %1934 = vmatprep.subr.bf16.mxu0 %v1453
        %1935 = vmatpush1.bf16.msra.mxu0 %v1452
        %1936 = vmatprep.subr.bf16.mxu0 %v1485
        %1937 = vmatpush1.bf16.msra.mxu0 %v1484
        %1938 = vmatprep.subr.bf16.mxu0 %v1517
        %1939 = vmatpush1.bf16.msra.mxu0 %v1516
        %1940 = vmatprep.subr.bf16.mxu0 %v1549
        %1941 = vmatpush1.bf16.msra.mxu0 %v1548
        %1942 = vmatprep.subr.bf16.mxu0 %v1581
        %1943 = vmatpush1.bf16.msra.mxu0 %v1580
        %1944 = vmatprep.subr.bf16.mxu0 %v1613
        %1945 = vmatpush1.bf16.msra.mxu0 %v1612
        %1946 = vmatprep.subr.bf16.mxu0 %v1645
        %1947 = vmatpush1.bf16.msra.mxu0 %v1644
        %1948 = vmatprep.subr.bf16.mxu0 0
        %1949 = vmatpush1.bf16.msra.mxu0 0
        %1950 = vmatprep.subr.bf16.mxu0 0
        %1951 = vmatpush1.bf16.msra.mxu0 0
        %1952 = vmatprep.subr.bf16.mxu0 0
        %1953 = vmatpush1.bf16.msra.mxu0 0
        %1954 = vmatprep.subr.bf16.mxu0 0
        %1955 = vmatpush1.bf16.msra.mxu0 0
        %1956 = vmatprep.subr.bf16.mxu0 0
        %1957 = vmatpush1.bf16.msra.mxu0 0
        %1958 = vmatprep.subr.bf16.mxu0 0
        %1959 = vmatpush1.bf16.msra.mxu0 0
        %1960 = vmatprep.subr.bf16.mxu0 0
        %1961 = vmatpush1.bf16.msra.mxu0 0
        %1962 = vmatprep.subr.bf16.mxu0 0
        %1963 = vmatpush1.bf16.msra.mxu0 0
        %1964 = vmatprep.mubr.bf16.mxu0 0
        %1965 = vmatmul.mubr.bf16.gmra.mrb[0].mxu0 %v620
        %v1966 = vpop.f32.mrb[0].mxu0
        %v1967 = vadd.f32 0.0, %v1966
        %v1968 = vpop.f32.mrb[0].mxu0
        %v1969 = vadd.f32 0.0, %v1968
        %v1970 = vpop.f32.mrb[0].mxu0
        %v1971 = vadd.f32 0.0, %v1970
        %v1972 = vpop.f32.mrb[0].mxu0
        %v1973 = vadd.f32 0.0, %v1972
        %1974 = vmatprep.mubr.bf16.mxu0 0
        %1975 = vmatmul.mubr.bf16.gmra.mrb[0].mxu0 %v621
        %v1976 = vpop.f32.mrb[0].mxu0
        %v1977 = vadd.f32 0.0, %v1976
        %v1978 = vpop.f32.mrb[0].mxu0
        %v1979 = vadd.f32 0.0, %v1978
        %v1980 = vpop.f32.mrb[0].mxu0
        %v1981 = vadd.f32 0.0, %v1980
        %v1982 = vpop.f32.mrb[0].mxu0
        %v1983 = vadd.f32 0.0, %v1982
        %1984 = vmatprep.mubr.bf16.mxu0 0
        %1985 = vmatmul.mubr.bf16.gmra.mrb[0].mxu0 %v622
        %v1986 = vpop.f32.mrb[0].mxu0
        %v1987 = vadd.f32 0.0, %v1986
        %v1988 = vpop.f32.mrb[0].mxu0
        %v1989 = vadd.f32 0.0, %v1988
        %v1990 = vpop.f32.mrb[0].mxu0
        %v1991 = vadd.f32 0.0, %v1990
        %v1992 = vpop.f32.mrb[0].mxu0
        %v1993 = vadd.f32 0.0, %v1992
        %1994 = vmatprep.mubr.bf16.mxu0 0
        %1995 = vmatmul.mubr.bf16.gmra.mrb[0].mxu0 %v623
        %v1996 = vpop.f32.mrb[0].mxu0
        %v1997 = vadd.f32 0.0, %v1996
        %v1998 = vpop.f32.mrb[0].mxu0
        %v1999 = vadd.f32 0.0, %v1998
        %v2000 = vpop.f32.mrb[0].mxu0
        %v2001 = vadd.f32 0.0, %v2000
        %v2002 = vpop.f32.mrb[0].mxu0
        %v2003 = vadd.f32 0.0, %v2002
        %2004 = vmatprep.mubr.bf16.mxu0 0
        %2005 = vmatmul.mubr.bf16.gmra.mrb[0].mxu0 %v624
        %v2006 = vpop.f32.mrb[0].mxu0
        %v2007 = vadd.f32 0.0, %v2006
        %v2008 = vpop.f32.mrb[0].mxu0
        %v2009 = vadd.f32 0.0, %v2008
        %v2010 = vpop.f32.mrb[0].mxu0
        %v2011 = vadd.f32 0.0, %v2010
        %v2012 = vpop.f32.mrb[0].mxu0
        %v2013 = vadd.f32 0.0, %v2012
        %2014 = vmatprep.mubr.bf16.mxu0 0
        %2015 = vmatmul.mubr.bf16.gmra.mrb[0].mxu0 %v625
        %v2016 = vpop.f32.mrb[0].mxu0
        %v2017 = vadd.f32 0.0, %v2016
        %v2018 = vpop.f32.mrb[0].mxu0
        %v2019 = vadd.f32 0.0, %v2018
        %v2020 = vpop.f32.mrb[0].mxu0
        %v2021 = vadd.f32 0.0, %v2020
        %v2022 = vpop.f32.mrb[0].mxu0
        %v2023 = vadd.f32 0.0, %v2022
        %2024 = vmatprep.mubr.bf16.mxu0 0
        %2025 = vmatmul.mubr.bf16.gmra.mrb[0].mxu0 %v626
        %v2026 = vpop.f32.mrb[0].mxu0
        %v2027 = vadd.f32 0.0, %v2026
        %v2028 = vpop.f32.mrb[0].mxu0
        %v2029 = vadd.f32 0.0, %v2028
        %v2030 = vpop.f32.mrb[0].mxu0
        %v2031 = vadd.f32 0.0, %v2030
        %v2032 = vpop.f32.mrb[0].mxu0
        %v2033 = vadd.f32 0.0, %v2032
        %2034 = vmatprep.mubr.bf16.mxu0 0
        %2035 = vmatmul.mubr.bf16.gmra.mrb[0].mxu0 %v627
        %v2036 = vpop.f32.mrb[0].mxu0
        %v2037 = vadd.f32 0.0, %v2036
        %v2038 = vpop.f32.mrb[0].mxu0
        %v2039 = vadd.f32 0.0, %v2038
        %v2040 = vpop.f32.mrb[0].mxu0
        %v2041 = vadd.f32 0.0, %v2040
        %v2042 = vpop.f32.mrb[0].mxu0
        %v2043 = vadd.f32 0.0, %v2042
        %2044 = vmatprep.mubr.bf16.mxu0 0
        %2045 = vmatmul.mubr.bf16.gmra.mrb[0].mxu0 %v628
        %v2046 = vpop.f32.mrb[0].mxu0
        %v2047 = vadd.f32 0.0, %v2046
        %v2048 = vpop.f32.mrb[0].mxu0
        %v2049 = vadd.f32 0.0, %v2048
        %v2050 = vpop.f32.mrb[0].mxu0
        %v2051 = vadd.f32 0.0, %v2050
        %v2052 = vpop.f32.mrb[0].mxu0
        %v2053 = vadd.f32 0.0, %v2052
        %2054 = vmatprep.mubr.bf16.mxu0 0
        %2055 = vmatmul.mubr.bf16.gmra.mrb[0].mxu0 %v629
        %v2056 = vpop.f32.mrb[0].mxu0
        %v2057 = vadd.f32 0.0, %v2056
        %v2058 = vpop.f32.mrb[0].mxu0
        %v2059 = vadd.f32 0.0, %v2058
        %v2060 = vpop.f32.mrb[0].mxu0
        %v2061 = vadd.f32 0.0, %v2060
        %v2062 = vpop.f32.mrb[0].mxu0
        %v2063 = vadd.f32 0.0, %v2062
        %2064 = vmatprep.mubr.bf16.mxu0 0
        %2065 = vmatmul.mubr.bf16.gmra.mrb[0].mxu0 %v630
        %v2066 = vpop.f32.mrb[0].mxu0
        %v2067 = vadd.f32 0.0, %v2066
        %v2068 = vpop.f32.mrb[0].mxu0
        %v2069 = vadd.f32 0.0, %v2068
        %v2070 = vpop.f32.mrb[0].mxu0
        %v2071 = vadd.f32 0.0, %v2070
        %v2072 = vpop.f32.mrb[0].mxu0
        %v2073 = vadd.f32 0.0, %v2072
        %2074 = vmatprep.mubr.bf16.mxu0 0
        %2075 = vmatmul.mubr.bf16.gmra.mrb[0].mxu0 %v631
        %v2076 = vpop.f32.mrb[0].mxu0
        %v2077 = vadd.f32 0.0, %v2076
        %v2078 = vpop.f32.mrb[0].mxu0
        %v2079 = vadd.f32 0.0, %v2078
        %v2080 = vpop.f32.mrb[0].mxu0
        %v2081 = vadd.f32 0.0, %v2080
        %v2082 = vpop.f32.mrb[0].mxu0
        %v2083 = vadd.f32 0.0, %v2082
        %2084 = vmatprep.mubr.bf16.mxu0 0
        %2085 = vmatmul.mubr.bf16.gmra.mrb[0].mxu0 %v632
        %v2086 = vpop.f32.mrb[0].mxu0
        %v2087 = vadd.f32 0.0, %v2086
        %v2088 = vpop.f32.mrb[0].mxu0
        %v2089 = vadd.f32 0.0, %v2088
        %v2090 = vpop.f32.mrb[0].mxu0
        %v2091 = vadd.f32 0.0, %v2090
        %v2092 = vpop.f32.mrb[0].mxu0
        %v2093 = vadd.f32 0.0, %v2092
        %2094 = vmatprep.mubr.bf16.mxu0 0
        %2095 = vmatmul.mubr.bf16.gmra.mrb[0].mxu0 %v633
        %v2096 = vpop.f32.mrb[0].mxu0
        %v2097 = vadd.f32 0.0, %v2096
        %v2098 = vpop.f32.mrb[0].mxu0
        %v2099 = vadd.f32 0.0, %v2098
        %v2100 = vpop.f32.mrb[0].mxu0
        %v2101 = vadd.f32 0.0, %v2100
        %v2102 = vpop.f32.mrb[0].mxu0
        %v2103 = vadd.f32 0.0, %v2102
        %2104 = vmatprep.mubr.bf16.mxu0 0
        %2105 = vmatmul.mubr.bf16.gmra.mrb[0].mxu0 %v634
        %v2106 = vpop.f32.mrb[0].mxu0
        %v2107 = vadd.f32 0.0, %v2106
        %v2108 = vpop.f32.mrb[0].mxu0
        %v2109 = vadd.f32 0.0, %v2108
        %v2110 = vpop.f32.mrb[0].mxu0
        %v2111 = vadd.f32 0.0, %v2110
        %v2112 = vpop.f32.mrb[0].mxu0
        %v2113 = vadd.f32 0.0, %v2112
        %2114 = vmatprep.mubr.bf16.mxu0 0
        %2115 = vmatmul.mubr.bf16.gmra.mrb[0].mxu0 %v635
        %v2116 = vpop.f32.mrb[0].mxu0
        %v2117 = vadd.f32 0.0, %v2116
        %v2118 = vpop.f32.mrb[0].mxu0
        %v2119 = vadd.f32 0.0, %v2118
        %v2120 = vpop.f32.mrb[0].mxu0
        %v2121 = vadd.f32 0.0, %v2120
        %v2122 = vpop.f32.mrb[0].mxu0
        %v2123 = vadd.f32 0.0, %v2122
        %2124 = vdwg.mxu0
        %2125 = vmatprep.subr.bf16.mxu0 %v1423
        %2126 = vmatpush1.bf16.msra.mxu0 %v1422
        %2127 = vmatprep.subr.bf16.mxu0 %v1455
        %2128 = vmatpush1.bf16.msra.mxu0 %v1454
        %2129 = vmatprep.subr.bf16.mxu0 %v1487
        %2130 = vmatpush1.bf16.msra.mxu0 %v1486
        %2131 = vmatprep.subr.bf16.mxu0 %v1519
        %2132 = vmatpush1.bf16.msra.mxu0 %v1518
        %2133 = vmatprep.subr.bf16.mxu0 %v1551
        %2134 = vmatpush1.bf16.msra.mxu0 %v1550
        %2135 = vmatprep.subr.bf16.mxu0 %v1583
        %2136 = vmatpush1.bf16.msra.mxu0 %v1582
        %2137 = vmatprep.subr.bf16.mxu0 %v1615
        %2138 = vmatpush1.bf16.msra.mxu0 %v1614
        %2139 = vmatprep.subr.bf16.mxu0 %v1647
        %2140 = vmatpush1.bf16.msra.mxu0 %v1646
        %2141 = vmatprep.subr.bf16.mxu0 0
        %2142 = vmatpush1.bf16.msra.mxu0 0
        %2143 = vmatprep.subr.bf16.mxu0 0
        %2144 = vmatpush1.bf16.msra.mxu0 0
        %2145 = vmatprep.subr.bf16.mxu0 0
        %2146 = vmatpush1.bf16.msra.mxu0 0
        %2147 = vmatprep.subr.bf16.mxu0 0
        %2148 = vmatpush1.bf16.msra.mxu0 0
        %2149 = vmatprep.subr.bf16.mxu0 0
        %2150 = vmatpush1.bf16.msra.mxu0 0
        %2151 = vmatprep.subr.bf16.mxu0 0
        %2152 = vmatpush1.bf16.msra.mxu0 0
        %2153 = vmatprep.subr.bf16.mxu0 0
        %2154 = vmatpush1.bf16.msra.mxu0 0
        %2155 = vmatprep.subr.bf16.mxu0 0
        %2156 = vmatpush1.bf16.msra.mxu0 0
        %2157 = vmatprep.mubr.bf16.mxu0 0
        %2158 = vmatmul.mubr.bf16.gmra.mrb[0].mxu0 %v620
        %v2159 = vpop.f32.mrb[0].mxu0
        %v2160 = vadd.f32 0.0, %v2159
        %v2161 = vpop.f32.mrb[0].mxu0
        %v2162 = vadd.f32 0.0, %v2161
        %v2163 = vpop.f32.mrb[0].mxu0
        %v2164 = vadd.f32 0.0, %v2163
        %v2165 = vpop.f32.mrb[0].mxu0
        %v2166 = vadd.f32 0.0, %v2165
        %2167 = vmatprep.mubr.bf16.mxu0 0
        %2168 = vmatmul.mubr.bf16.gmra.mrb[0].mxu0 %v621
        %v2169 = vpop.f32.mrb[0].mxu0
        %v2170 = vadd.f32 0.0, %v2169
        %v2171 = vpop.f32.mrb[0].mxu0
        %v2172 = vadd.f32 0.0, %v2171
        %v2173 = vpop.f32.mrb[0].mxu0
        %v2174 = vadd.f32 0.0, %v2173
        %v2175 = vpop.f32.mrb[0].mxu0
        %v2176 = vadd.f32 0.0, %v2175
        %2177 = vmatprep.mubr.bf16.mxu0 0
        %2178 = vmatmul.mubr.bf16.gmra.mrb[0].mxu0 %v622
        %v2179 = vpop.f32.mrb[0].mxu0
        %v2180 = vadd.f32 0.0, %v2179
        %v2181 = vpop.f32.mrb[0].mxu0
        %v2182 = vadd.f32 0.0, %v2181
        %v2183 = vpop.f32.mrb[0].mxu0
        %v2184 = vadd.f32 0.0, %v2183
        %v2185 = vpop.f32.mrb[0].mxu0
        %v2186 = vadd.f32 0.0, %v2185
        %2187 = vmatprep.mubr.bf16.mxu0 0
        %2188 = vmatmul.mubr.bf16.gmra.mrb[0].mxu0 %v623
        %v2189 = vpop.f32.mrb[0].mxu0
        %v2190 = vadd.f32 0.0, %v2189
        %v2191 = vpop.f32.mrb[0].mxu0
        %v2192 = vadd.f32 0.0, %v2191
        %v2193 = vpop.f32.mrb[0].mxu0
        %v2194 = vadd.f32 0.0, %v2193
        %v2195 = vpop.f32.mrb[0].mxu0
        %v2196 = vadd.f32 0.0, %v2195
        %2197 = vmatprep.mubr.bf16.mxu0 0
        %2198 = vmatmul.mubr.bf16.gmra.mrb[0].mxu0 %v624
        %v2199 = vpop.f32.mrb[0].mxu0
        %v2200 = vadd.f32 0.0, %v2199
        %v2201 = vpop.f32.mrb[0].mxu0
        %v2202 = vadd.f32 0.0, %v2201
        %v2203 = vpop.f32.mrb[0].mxu0
        %v2204 = vadd.f32 0.0, %v2203
        %v2205 = vpop.f32.mrb[0].mxu0
        %v2206 = vadd.f32 0.0, %v2205
        %2207 = vmatprep.mubr.bf16.mxu0 0
        %2208 = vmatmul.mubr.bf16.gmra.mrb[0].mxu0 %v625
        %v2209 = vpop.f32.mrb[0].mxu0
        %v2210 = vadd.f32 0.0, %v2209
        %v2211 = vpop.f32.mrb[0].mxu0
        %v2212 = vadd.f32 0.0, %v2211
        %v2213 = vpop.f32.mrb[0].mxu0
        %v2214 = vadd.f32 0.0, %v2213
        %v2215 = vpop.f32.mrb[0].mxu0
        %v2216 = vadd.f32 0.0, %v2215
        %2217 = vmatprep.mubr.bf16.mxu0 0
        %2218 = vmatmul.mubr.bf16.gmra.mrb[0].mxu0 %v626
        %v2219 = vpop.f32.mrb[0].mxu0
        %v2220 = vadd.f32 0.0, %v2219
        %v2221 = vpop.f32.mrb[0].mxu0
        %v2222 = vadd.f32 0.0, %v2221
        %v2223 = vpop.f32.mrb[0].mxu0
        %v2224 = vadd.f32 0.0, %v2223
        %v2225 = vpop.f32.mrb[0].mxu0
        %v2226 = vadd.f32 0.0, %v2225
        %2227 = vmatprep.mubr.bf16.mxu0 0
        %2228 = vmatmul.mubr.bf16.gmra.mrb[0].mxu0 %v627
        %v2229 = vpop.f32.mrb[0].mxu0
        %v2230 = vadd.f32 0.0, %v2229
        %v2231 = vpop.f32.mrb[0].mxu0
        %v2232 = vadd.f32 0.0, %v2231
        %v2233 = vpop.f32.mrb[0].mxu0
        %v2234 = vadd.f32 0.0, %v2233
        %v2235 = vpop.f32.mrb[0].mxu0
        %v2236 = vadd.f32 0.0, %v2235
        %2237 = vmatprep.mubr.bf16.mxu0 0
        %2238 = vmatmul.mubr.bf16.gmra.mrb[0].mxu0 %v628
        %v2239 = vpop.f32.mrb[0].mxu0
        %v2240 = vadd.f32 0.0, %v2239
        %v2241 = vpop.f32.mrb[0].mxu0
        %v2242 = vadd.f32 0.0, %v2241
        %v2243 = vpop.f32.mrb[0].mxu0
        %v2244 = vadd.f32 0.0, %v2243
        %v2245 = vpop.f32.mrb[0].mxu0
        %v2246 = vadd.f32 0.0, %v2245
        %2247 = vmatprep.mubr.bf16.mxu0 0
        %2248 = vmatmul.mubr.bf16.gmra.mrb[0].mxu0 %v629
        %v2249 = vpop.f32.mrb[0].mxu0
        %v2250 = vadd.f32 0.0, %v2249
        %v2251 = vpop.f32.mrb[0].mxu0
        %v2252 = vadd.f32 0.0, %v2251
        %v2253 = vpop.f32.mrb[0].mxu0
        %v2254 = vadd.f32 0.0, %v2253
        %v2255 = vpop.f32.mrb[0].mxu0
        %v2256 = vadd.f32 0.0, %v2255
        %2257 = vmatprep.mubr.bf16.mxu0 0
        %2258 = vmatmul.mubr.bf16.gmra.mrb[0].mxu0 %v630
        %v2259 = vpop.f32.mrb[0].mxu0
        %v2260 = vadd.f32 0.0, %v2259
        %v2261 = vpop.f32.mrb[0].mxu0
        %v2262 = vadd.f32 0.0, %v2261
        %v2263 = vpop.f32.mrb[0].mxu0
        %v2264 = vadd.f32 0.0, %v2263
        %v2265 = vpop.f32.mrb[0].mxu0
        %v2266 = vadd.f32 0.0, %v2265
        %2267 = vmatprep.mubr.bf16.mxu0 0
        %2268 = vmatmul.mubr.bf16.gmra.mrb[0].mxu0 %v631
        %v2269 = vpop.f32.mrb[0].mxu0
        %v2270 = vadd.f32 0.0, %v2269
        %v2271 = vpop.f32.mrb[0].mxu0
        %v2272 = vadd.f32 0.0, %v2271
        %v2273 = vpop.f32.mrb[0].mxu0
        %v2274 = vadd.f32 0.0, %v2273
        %v2275 = vpop.f32.mrb[0].mxu0
        %v2276 = vadd.f32 0.0, %v2275
        %2277 = vmatprep.mubr.bf16.mxu0 0
        %2278 = vmatmul.mubr.bf16.gmra.mrb[0].mxu0 %v632
        %v2279 = vpop.f32.mrb[0].mxu0
        %v2280 = vadd.f32 0.0, %v2279
        %v2281 = vpop.f32.mrb[0].mxu0
        %v2282 = vadd.f32 0.0, %v2281
        %v2283 = vpop.f32.mrb[0].mxu0
        %v2284 = vadd.f32 0.0, %v2283
        %v2285 = vpop.f32.mrb[0].mxu0
        %v2286 = vadd.f32 0.0, %v2285
        %2287 = vmatprep.mubr.bf16.mxu0 0
        %2288 = vmatmul.mubr.bf16.gmra.mrb[0].mxu0 %v633
        %v2289 = vpop.f32.mrb[0].mxu0
        %v2290 = vadd.f32 0.0, %v2289
        %v2291 = vpop.f32.mrb[0].mxu0
        %v2292 = vadd.f32 0.0, %v2291
        %v2293 = vpop.f32.mrb[0].mxu0
        %v2294 = vadd.f32 0.0, %v2293
        %v2295 = vpop.f32.mrb[0].mxu0
        %v2296 = vadd.f32 0.0, %v2295
        %2297 = vmatprep.mubr.bf16.mxu0 0
        %2298 = vmatmul.mubr.bf16.gmra.mrb[0].mxu0 %v634
        %v2299 = vpop.f32.mrb[0].mxu0
        %v2300 = vadd.f32 0.0, %v2299
        %v2301 = vpop.f32.mrb[0].mxu0
        %v2302 = vadd.f32 0.0, %v2301
        %v2303 = vpop.f32.mrb[0].mxu0
        %v2304 = vadd.f32 0.0, %v2303
        %v2305 = vpop.f32.mrb[0].mxu0
        %v2306 = vadd.f32 0.0, %v2305
        %2307 = vmatprep.mubr.bf16.mxu0 0
        %2308 = vmatmul.mubr.bf16.gmra.mrb[0].mxu0 %v635
        %v2309 = vpop.f32.mrb[0].mxu0
        %v2310 = vadd.f32 0.0, %v2309
        %v2311 = vpop.f32.mrb[0].mxu0
        %v2312 = vadd.f32 0.0, %v2311
        %v2313 = vpop.f32.mrb[0].mxu0
        %v2314 = vadd.f32 0.0, %v2313
        %v2315 = vpop.f32.mrb[0].mxu0
        %v2316 = vadd.f32 0.0, %v2315
        %2317 = vdwg.mxu0
        %2318 = vmatprep.subr.bf16.mxu0 %v1425
        %2319 = vmatpush1.bf16.msra.mxu0 %v1424
        %2320 = vmatprep.subr.bf16.mxu0 %v1457
        %2321 = vmatpush1.bf16.msra.mxu0 %v1456
        %2322 = vmatprep.subr.bf16.mxu0 %v1489
        %2323 = vmatpush1.bf16.msra.mxu0 %v1488
        %2324 = vmatprep.subr.bf16.mxu0 %v1521
        %2325 = vmatpush1.bf16.msra.mxu0 %v1520
        %2326 = vmatprep.subr.bf16.mxu0 %v1553
        %2327 = vmatpush1.bf16.msra.mxu0 %v1552
        %2328 = vmatprep.subr.bf16.mxu0 %v1585
        %2329 = vmatpush1.bf16.msra.mxu0 %v1584
        %2330 = vmatprep.subr.bf16.mxu0 %v1617
        %2331 = vmatpush1.bf16.msra.mxu0 %v1616
        %2332 = vmatprep.subr.bf16.mxu0 %v1649
        %2333 = vmatpush1.bf16.msra.mxu0 %v1648
        %2334 = vmatprep.subr.bf16.mxu0 0
        %2335 = vmatpush1.bf16.msra.mxu0 0
        %2336 = vmatprep.subr.bf16.mxu0 0
        %2337 = vmatpush1.bf16.msra.mxu0 0
        %2338 = vmatprep.subr.bf16.mxu0 0
        %2339 = vmatpush1.bf16.msra.mxu0 0
        %2340 = vmatprep.subr.bf16.mxu0 0
        %2341 = vmatpush1.bf16.msra.mxu0 0
        %2342 = vmatprep.subr.bf16.mxu0 0
        %2343 = vmatpush1.bf16.msra.mxu0 0
        %2344 = vmatprep.subr.bf16.mxu0 0
        %2345 = vmatpush1.bf16.msra.mxu0 0
        %2346 = vmatprep.subr.bf16.mxu0 0
        %2347 = vmatpush1.bf16.msra.mxu0 0
        %2348 = vmatprep.subr.bf16.mxu0 0
        %2349 = vmatpush1.bf16.msra.mxu0 0
        %2350 = vmatprep.mubr.bf16.mxu0 0
        %2351 = vmatmul.mubr.bf16.gmra.mrb[0].mxu0 %v620
        %v2352 = vpop.f32.mrb[0].mxu0
        %v2353 = vadd.f32 0.0, %v2352
        %v2354 = vpop.f32.mrb[0].mxu0
        %v2355 = vadd.f32 0.0, %v2354
        %v2356 = vpop.f32.mrb[0].mxu0
        %v2357 = vadd.f32 0.0, %v2356
        %v2358 = vpop.f32.mrb[0].mxu0
        %v2359 = vadd.f32 0.0, %v2358
        %2360 = vmatprep.mubr.bf16.mxu0 0
        %2361 = vmatmul.mubr.bf16.gmra.mrb[0].mxu0 %v621
        %v2362 = vpop.f32.mrb[0].mxu0
        %v2363 = vadd.f32 0.0, %v2362
        %v2364 = vpop.f32.mrb[0].mxu0
        %v2365 = vadd.f32 0.0, %v2364
        %v2366 = vpop.f32.mrb[0].mxu0
        %v2367 = vadd.f32 0.0, %v2366
        %v2368 = vpop.f32.mrb[0].mxu0
        %v2369 = vadd.f32 0.0, %v2368
        %2370 = vmatprep.mubr.bf16.mxu0 0
        %2371 = vmatmul.mubr.bf16.gmra.mrb[0].mxu0 %v622
        %v2372 = vpop.f32.mrb[0].mxu0
        %v2373 = vadd.f32 0.0, %v2372
        %v2374 = vpop.f32.mrb[0].mxu0
        %v2375 = vadd.f32 0.0, %v2374
        %v2376 = vpop.f32.mrb[0].mxu0
        %v2377 = vadd.f32 0.0, %v2376
        %v2378 = vpop.f32.mrb[0].mxu0
        %v2379 = vadd.f32 0.0, %v2378
        %2380 = vmatprep.mubr.bf16.mxu0 0
        %2381 = vmatmul.mubr.bf16.gmra.mrb[0].mxu0 %v623
        %v2382 = vpop.f32.mrb[0].mxu0
        %v2383 = vadd.f32 0.0, %v2382
        %v2384 = vpop.f32.mrb[0].mxu0
        %v2385 = vadd.f32 0.0, %v2384
        %v2386 = vpop.f32.mrb[0].mxu0
        %v2387 = vadd.f32 0.0, %v2386
        %v2388 = vpop.f32.mrb[0].mxu0
        %v2389 = vadd.f32 0.0, %v2388
        %2390 = vmatprep.mubr.bf16.mxu0 0
        %2391 = vmatmul.mubr.bf16.gmra.mrb[0].mxu0 %v624
        %v2392 = vpop.f32.mrb[0].mxu0
        %v2393 = vadd.f32 0.0, %v2392
        %v2394 = vpop.f32.mrb[0].mxu0
        %v2395 = vadd.f32 0.0, %v2394
        %v2396 = vpop.f32.mrb[0].mxu0
        %v2397 = vadd.f32 0.0, %v2396
        %v2398 = vpop.f32.mrb[0].mxu0
        %v2399 = vadd.f32 0.0, %v2398
        %2400 = vmatprep.mubr.bf16.mxu0 0
        %2401 = vmatmul.mubr.bf16.gmra.mrb[0].mxu0 %v625
        %v2402 = vpop.f32.mrb[0].mxu0
        %v2403 = vadd.f32 0.0, %v2402
        %v2404 = vpop.f32.mrb[0].mxu0
        %v2405 = vadd.f32 0.0, %v2404
        %v2406 = vpop.f32.mrb[0].mxu0
        %v2407 = vadd.f32 0.0, %v2406
        %v2408 = vpop.f32.mrb[0].mxu0
        %v2409 = vadd.f32 0.0, %v2408
        %2410 = vmatprep.mubr.bf16.mxu0 0
        %2411 = vmatmul.mubr.bf16.gmra.mrb[0].mxu0 %v626
        %v2412 = vpop.f32.mrb[0].mxu0
        %v2413 = vadd.f32 0.0, %v2412
        %v2414 = vpop.f32.mrb[0].mxu0
        %v2415 = vadd.f32 0.0, %v2414
        %v2416 = vpop.f32.mrb[0].mxu0
        %v2417 = vadd.f32 0.0, %v2416
        %v2418 = vpop.f32.mrb[0].mxu0
        %v2419 = vadd.f32 0.0, %v2418
        %2420 = vmatprep.mubr.bf16.mxu0 0
        %2421 = vmatmul.mubr.bf16.gmra.mrb[0].mxu0 %v627
        %v2422 = vpop.f32.mrb[0].mxu0
        %v2423 = vadd.f32 0.0, %v2422
        %v2424 = vpop.f32.mrb[0].mxu0
        %v2425 = vadd.f32 0.0, %v2424
        %v2426 = vpop.f32.mrb[0].mxu0
        %v2427 = vadd.f32 0.0, %v2426
        %v2428 = vpop.f32.mrb[0].mxu0
        %v2429 = vadd.f32 0.0, %v2428
        %2430 = vmatprep.mubr.bf16.mxu0 0
        %2431 = vmatmul.mubr.bf16.gmra.mrb[0].mxu0 %v628
        %v2432 = vpop.f32.mrb[0].mxu0
        %v2433 = vadd.f32 0.0, %v2432
        %v2434 = vpop.f32.mrb[0].mxu0
        %v2435 = vadd.f32 0.0, %v2434
        %v2436 = vpop.f32.mrb[0].mxu0
        %v2437 = vadd.f32 0.0, %v2436
        %v2438 = vpop.f32.mrb[0].mxu0
        %v2439 = vadd.f32 0.0, %v2438
        %2440 = vmatprep.mubr.bf16.mxu0 0
        %2441 = vmatmul.mubr.bf16.gmra.mrb[0].mxu0 %v629
        %v2442 = vpop.f32.mrb[0].mxu0
        %v2443 = vadd.f32 0.0, %v2442
        %v2444 = vpop.f32.mrb[0].mxu0
        %v2445 = vadd.f32 0.0, %v2444
        %v2446 = vpop.f32.mrb[0].mxu0
        %v2447 = vadd.f32 0.0, %v2446
        %v2448 = vpop.f32.mrb[0].mxu0
        %v2449 = vadd.f32 0.0, %v2448
        %2450 = vmatprep.mubr.bf16.mxu0 0
        %2451 = vmatmul.mubr.bf16.gmra.mrb[0].mxu0 %v630
        %v2452 = vpop.f32.mrb[0].mxu0
        %v2453 = vadd.f32 0.0, %v2452
        %v2454 = vpop.f32.mrb[0].mxu0
        %v2455 = vadd.f32 0.0, %v2454
        %v2456 = vpop.f32.mrb[0].mxu0
        %v2457 = vadd.f32 0.0, %v2456
        %v2458 = vpop.f32.mrb[0].mxu0
        %v2459 = vadd.f32 0.0, %v2458
        %2460 = vmatprep.mubr.bf16.mxu0 0
        %2461 = vmatmul.mubr.bf16.gmra.mrb[0].mxu0 %v631
        %v2462 = vpop.f32.mrb[0].mxu0
        %v2463 = vadd.f32 0.0, %v2462
        %v2464 = vpop.f32.mrb[0].mxu0
        %v2465 = vadd.f32 0.0, %v2464
        %v2466 = vpop.f32.mrb[0].mxu0
        %v2467 = vadd.f32 0.0, %v2466
        %v2468 = vpop.f32.mrb[0].mxu0
        %v2469 = vadd.f32 0.0, %v2468
        %2470 = vmatprep.mubr.bf16.mxu0 0
        %2471 = vmatmul.mubr.bf16.gmra.mrb[0].mxu0 %v632
        %v2472 = vpop.f32.mrb[0].mxu0
        %v2473 = vadd.f32 0.0, %v2472
        %v2474 = vpop.f32.mrb[0].mxu0
        %v2475 = vadd.f32 0.0, %v2474
        %v2476 = vpop.f32.mrb[0].mxu0
        %v2477 = vadd.f32 0.0, %v2476
        %v2478 = vpop.f32.mrb[0].mxu0
        %v2479 = vadd.f32 0.0, %v2478
        %2480 = vmatprep.mubr.bf16.mxu0 0
        %2481 = vmatmul.mubr.bf16.gmra.mrb[0].mxu0 %v633
        %v2482 = vpop.f32.mrb[0].mxu0
        %v2483 = vadd.f32 0.0, %v2482
        %v2484 = vpop.f32.mrb[0].mxu0
        %v2485 = vadd.f32 0.0, %v2484
        %v2486 = vpop.f32.mrb[0].mxu0
        %v2487 = vadd.f32 0.0, %v2486
        %v2488 = vpop.f32.mrb[0].mxu0
        %v2489 = vadd.f32 0.0, %v2488
        %2490 = vmatprep.mubr.bf16.mxu0 0
        %2491 = vmatmul.mubr.bf16.gmra.mrb[0].mxu0 %v634
        %v2492 = vpop.f32.mrb[0].mxu0
        %v2493 = vadd.f32 0.0, %v2492
        %v2494 = vpop.f32.mrb[0].mxu0
        %v2495 = vadd.f32 0.0, %v2494
        %v2496 = vpop.f32.mrb[0].mxu0
        %v2497 = vadd.f32 0.0, %v2496
        %v2498 = vpop.f32.mrb[0].mxu0
        %v2499 = vadd.f32 0.0, %v2498
        %2500 = vmatprep.mubr.bf16.mxu0 0
        %2501 = vmatmul.mubr.bf16.gmra.mrb[0].mxu0 %v635
        %v2502 = vpop.f32.mrb[0].mxu0
        %v2503 = vadd.f32 0.0, %v2502
        %v2504 = vpop.f32.mrb[0].mxu0
        %v2505 = vadd.f32 0.0, %v2504
        %v2506 = vpop.f32.mrb[0].mxu0
        %v2507 = vadd.f32 0.0, %v2506
        %v2508 = vpop.f32.mrb[0].mxu0
        %v2509 = vadd.f32 0.0, %v2508
        %2510 = vdwg.mxu0
        %2511 = vmatprep.subr.bf16.mxu0 %v1427
        %2512 = vmatpush1.bf16.msra.mxu0 %v1426
        %2513 = vmatprep.subr.bf16.mxu0 %v1459
        %2514 = vmatpush1.bf16.msra.mxu0 %v1458
        %2515 = vmatprep.subr.bf16.mxu0 %v1491
        %2516 = vmatpush1.bf16.msra.mxu0 %v1490
        %2517 = vmatprep.subr.bf16.mxu0 %v1523
        %2518 = vmatpush1.bf16.msra.mxu0 %v1522
        %2519 = vmatprep.subr.bf16.mxu0 %v1555
        %2520 = vmatpush1.bf16.msra.mxu0 %v1554
        %2521 = vmatprep.subr.bf16.mxu0 %v1587
        %2522 = vmatpush1.bf16.msra.mxu0 %v1586
        %2523 = vmatprep.subr.bf16.mxu0 %v1619
        %2524 = vmatpush1.bf16.msra.mxu0 %v1618
        %2525 = vmatprep.subr.bf16.mxu0 %v1651
        %2526 = vmatpush1.bf16.msra.mxu0 %v1650
        %2527 = vmatprep.subr.bf16.mxu0 0
        %2528 = vmatpush1.bf16.msra.mxu0 0
        %2529 = vmatprep.subr.bf16.mxu0 0
        %2530 = vmatpush1.bf16.msra.mxu0 0
        %2531 = vmatprep.subr.bf16.mxu0 0
        %2532 = vmatpush1.bf16.msra.mxu0 0
        %2533 = vmatprep.subr.bf16.mxu0 0
        %2534 = vmatpush1.bf16.msra.mxu0 0
        %2535 = vmatprep.subr.bf16.mxu0 0
        %2536 = vmatpush1.bf16.msra.mxu0 0
        %2537 = vmatprep.subr.bf16.mxu0 0
        %2538 = vmatpush1.bf16.msra.mxu0 0
        %2539 = vmatprep.subr.bf16.mxu0 0
        %2540 = vmatpush1.bf16.msra.mxu0 0
        %2541 = vmatprep.subr.bf16.mxu0 0
        %2542 = vmatpush1.bf16.msra.mxu0 0
        %2543 = vmatprep.mubr.bf16.mxu0 0
        %2544 = vmatmul.mubr.bf16.gmra.mrb[0].mxu0 %v620
        %v2545 = vpop.f32.mrb[0].mxu0
        %v2546 = vadd.f32 0.0, %v2545
        %v2547 = vpop.f32.mrb[0].mxu0
        %v2548 = vadd.f32 0.0, %v2547
        %v2549 = vpop.f32.mrb[0].mxu0
        %v2550 = vadd.f32 0.0, %v2549
        %v2551 = vpop.f32.mrb[0].mxu0
        %v2552 = vadd.f32 0.0, %v2551
        %2553 = vmatprep.mubr.bf16.mxu0 0
        %2554 = vmatmul.mubr.bf16.gmra.mrb[0].mxu0 %v621
        %v2555 = vpop.f32.mrb[0].mxu0
        %v2556 = vadd.f32 0.0, %v2555
        %v2557 = vpop.f32.mrb[0].mxu0
        %v2558 = vadd.f32 0.0, %v2557
        %v2559 = vpop.f32.mrb[0].mxu0
        %v2560 = vadd.f32 0.0, %v2559
        %v2561 = vpop.f32.mrb[0].mxu0
        %v2562 = vadd.f32 0.0, %v2561
        %2563 = vmatprep.mubr.bf16.mxu0 0
        %2564 = vmatmul.mubr.bf16.gmra.mrb[0].mxu0 %v622
        %v2565 = vpop.f32.mrb[0].mxu0
        %v2566 = vadd.f32 0.0, %v2565
        %v2567 = vpop.f32.mrb[0].mxu0
        %v2568 = vadd.f32 0.0, %v2567
        %v2569 = vpop.f32.mrb[0].mxu0
        %v2570 = vadd.f32 0.0, %v2569
        %v2571 = vpop.f32.mrb[0].mxu0
        %v2572 = vadd.f32 0.0, %v2571
        %2573 = vmatprep.mubr.bf16.mxu0 0
        %2574 = vmatmul.mubr.bf16.gmra.mrb[0].mxu0 %v623
        %v2575 = vpop.f32.mrb[0].mxu0
        %v2576 = vadd.f32 0.0, %v2575
        %v2577 = vpop.f32.mrb[0].mxu0
        %v2578 = vadd.f32 0.0, %v2577
        %v2579 = vpop.f32.mrb[0].mxu0
        %v2580 = vadd.f32 0.0, %v2579
        %v2581 = vpop.f32.mrb[0].mxu0
        %v2582 = vadd.f32 0.0, %v2581
        %2583 = vmatprep.mubr.bf16.mxu0 0
        %2584 = vmatmul.mubr.bf16.gmra.mrb[0].mxu0 %v624
        %v2585 = vpop.f32.mrb[0].mxu0
        %v2586 = vadd.f32 0.0, %v2585
        %v2587 = vpop.f32.mrb[0].mxu0
        %v2588 = vadd.f32 0.0, %v2587
        %v2589 = vpop.f32.mrb[0].mxu0
        %v2590 = vadd.f32 0.0, %v2589
        %v2591 = vpop.f32.mrb[0].mxu0
        %v2592 = vadd.f32 0.0, %v2591
        %2593 = vmatprep.mubr.bf16.mxu0 0
        %2594 = vmatmul.mubr.bf16.gmra.mrb[0].mxu0 %v625
        %v2595 = vpop.f32.mrb[0].mxu0
        %v2596 = vadd.f32 0.0, %v2595
        %v2597 = vpop.f32.mrb[0].mxu0
        %v2598 = vadd.f32 0.0, %v2597
        %v2599 = vpop.f32.mrb[0].mxu0
        %v2600 = vadd.f32 0.0, %v2599
        %v2601 = vpop.f32.mrb[0].mxu0
        %v2602 = vadd.f32 0.0, %v2601
        %2603 = vmatprep.mubr.bf16.mxu0 0
        %2604 = vmatmul.mubr.bf16.gmra.mrb[0].mxu0 %v626
        %v2605 = vpop.f32.mrb[0].mxu0
        %v2606 = vadd.f32 0.0, %v2605
        %v2607 = vpop.f32.mrb[0].mxu0
        %v2608 = vadd.f32 0.0, %v2607
        %v2609 = vpop.f32.mrb[0].mxu0
        %v2610 = vadd.f32 0.0, %v2609
        %v2611 = vpop.f32.mrb[0].mxu0
        %v2612 = vadd.f32 0.0, %v2611
        %2613 = vmatprep.mubr.bf16.mxu0 0
        %2614 = vmatmul.mubr.bf16.gmra.mrb[0].mxu0 %v627
        %v2615 = vpop.f32.mrb[0].mxu0
        %v2616 = vadd.f32 0.0, %v2615
        %v2617 = vpop.f32.mrb[0].mxu0
        %v2618 = vadd.f32 0.0, %v2617
        %v2619 = vpop.f32.mrb[0].mxu0
        %v2620 = vadd.f32 0.0, %v2619
        %v2621 = vpop.f32.mrb[0].mxu0
        %v2622 = vadd.f32 0.0, %v2621
        %2623 = vmatprep.mubr.bf16.mxu0 0
        %2624 = vmatmul.mubr.bf16.gmra.mrb[0].mxu0 %v628
        %v2625 = vpop.f32.mrb[0].mxu0
        %v2626 = vadd.f32 0.0, %v2625
        %v2627 = vpop.f32.mrb[0].mxu0
        %v2628 = vadd.f32 0.0, %v2627
        %v2629 = vpop.f32.mrb[0].mxu0
        %v2630 = vadd.f32 0.0, %v2629
        %v2631 = vpop.f32.mrb[0].mxu0
        %v2632 = vadd.f32 0.0, %v2631
        %2633 = vmatprep.mubr.bf16.mxu0 0
        %2634 = vmatmul.mubr.bf16.gmra.mrb[0].mxu0 %v629
        %v2635 = vpop.f32.mrb[0].mxu0
        %v2636 = vadd.f32 0.0, %v2635
        %v2637 = vpop.f32.mrb[0].mxu0
        %v2638 = vadd.f32 0.0, %v2637
        %v2639 = vpop.f32.mrb[0].mxu0
        %v2640 = vadd.f32 0.0, %v2639
        %v2641 = vpop.f32.mrb[0].mxu0
        %v2642 = vadd.f32 0.0, %v2641
        %2643 = vmatprep.mubr.bf16.mxu0 0
        %2644 = vmatmul.mubr.bf16.gmra.mrb[0].mxu0 %v630
        %v2645 = vpop.f32.mrb[0].mxu0
        %v2646 = vadd.f32 0.0, %v2645
        %v2647 = vpop.f32.mrb[0].mxu0
        %v2648 = vadd.f32 0.0, %v2647
        %v2649 = vpop.f32.mrb[0].mxu0
        %v2650 = vadd.f32 0.0, %v2649
        %v2651 = vpop.f32.mrb[0].mxu0
        %v2652 = vadd.f32 0.0, %v2651
        %2653 = vmatprep.mubr.bf16.mxu0 0
        %2654 = vmatmul.mubr.bf16.gmra.mrb[0].mxu0 %v631
        %v2655 = vpop.f32.mrb[0].mxu0
        %v2656 = vadd.f32 0.0, %v2655
        %v2657 = vpop.f32.mrb[0].mxu0
        %v2658 = vadd.f32 0.0, %v2657
        %v2659 = vpop.f32.mrb[0].mxu0
        %v2660 = vadd.f32 0.0, %v2659
        %v2661 = vpop.f32.mrb[0].mxu0
        %v2662 = vadd.f32 0.0, %v2661
        %2663 = vmatprep.mubr.bf16.mxu0 0
        %2664 = vmatmul.mubr.bf16.gmra.mrb[0].mxu0 %v632
        %v2665 = vpop.f32.mrb[0].mxu0
        %v2666 = vadd.f32 0.0, %v2665
        %v2667 = vpop.f32.mrb[0].mxu0
        %v2668 = vadd.f32 0.0, %v2667
        %v2669 = vpop.f32.mrb[0].mxu0
        %v2670 = vadd.f32 0.0, %v2669
        %v2671 = vpop.f32.mrb[0].mxu0
        %v2672 = vadd.f32 0.0, %v2671
        %2673 = vmatprep.mubr.bf16.mxu0 0
        %2674 = vmatmul.mubr.bf16.gmra.mrb[0].mxu0 %v633
        %v2675 = vpop.f32.mrb[0].mxu0
        %v2676 = vadd.f32 0.0, %v2675
        %v2677 = vpop.f32.mrb[0].mxu0
        %v2678 = vadd.f32 0.0, %v2677
        %v2679 = vpop.f32.mrb[0].mxu0
        %v2680 = vadd.f32 0.0, %v2679
        %v2681 = vpop.f32.mrb[0].mxu0
        %v2682 = vadd.f32 0.0, %v2681
        %2683 = vmatprep.mubr.bf16.mxu0 0
        %2684 = vmatmul.mubr.bf16.gmra.mrb[0].mxu0 %v634
        %v2685 = vpop.f32.mrb[0].mxu0
        %v2686 = vadd.f32 0.0, %v2685
        %v2687 = vpop.f32.mrb[0].mxu0
        %v2688 = vadd.f32 0.0, %v2687
        %v2689 = vpop.f32.mrb[0].mxu0
        %v2690 = vadd.f32 0.0, %v2689
        %v2691 = vpop.f32.mrb[0].mxu0
        %v2692 = vadd.f32 0.0, %v2691
        %2693 = vmatprep.mubr.bf16.mxu0 0
        %2694 = vmatmul.mubr.bf16.gmra.mrb[0].mxu0 %v635
        %v2695 = vpop.f32.mrb[0].mxu0
        %v2696 = vadd.f32 0.0, %v2695
        %v2697 = vpop.f32.mrb[0].mxu0
        %v2698 = vadd.f32 0.0, %v2697
        %v2699 = vpop.f32.mrb[0].mxu0
        %v2700 = vadd.f32 0.0, %v2699
        %v2701 = vpop.f32.mrb[0].mxu0
        %v2702 = vadd.f32 0.0, %v2701
        %2703 = vdwg.mxu0
        %2704 = vmatprep.subr.bf16.mxu0 %v1429
        %2705 = vmatpush1.bf16.msra.mxu0 %v1428
        %2706 = vmatprep.subr.bf16.mxu0 %v1461
        %2707 = vmatpush1.bf16.msra.mxu0 %v1460
        %2708 = vmatprep.subr.bf16.mxu0 %v1493
        %2709 = vmatpush1.bf16.msra.mxu0 %v1492
        %2710 = vmatprep.subr.bf16.mxu0 %v1525
        %2711 = vmatpush1.bf16.msra.mxu0 %v1524
        %2712 = vmatprep.subr.bf16.mxu0 %v1557
        %2713 = vmatpush1.bf16.msra.mxu0 %v1556
        %2714 = vmatprep.subr.bf16.mxu0 %v1589
        %2715 = vmatpush1.bf16.msra.mxu0 %v1588
        %2716 = vmatprep.subr.bf16.mxu0 %v1621
        %2717 = vmatpush1.bf16.msra.mxu0 %v1620
        %2718 = vmatprep.subr.bf16.mxu0 %v1653
        %2719 = vmatpush1.bf16.msra.mxu0 %v1652
        %2720 = vmatprep.subr.bf16.mxu0 0
        %2721 = vmatpush1.bf16.msra.mxu0 0
        %2722 = vmatprep.subr.bf16.mxu0 0
        %2723 = vmatpush1.bf16.msra.mxu0 0
        %2724 = vmatprep.subr.bf16.mxu0 0
        %2725 = vmatpush1.bf16.msra.mxu0 0
        %2726 = vmatprep.subr.bf16.mxu0 0
        %2727 = vmatpush1.bf16.msra.mxu0 0
        %2728 = vmatprep.subr.bf16.mxu0 0
        %2729 = vmatpush1.bf16.msra.mxu0 0
        %2730 = vmatprep.subr.bf16.mxu0 0
        %2731 = vmatpush1.bf16.msra.mxu0 0
        %2732 = vmatprep.subr.bf16.mxu0 0
        %2733 = vmatpush1.bf16.msra.mxu0 0
        %2734 = vmatprep.subr.bf16.mxu0 0
        %2735 = vmatpush1.bf16.msra.mxu0 0
        %2736 = vmatprep.mubr.bf16.mxu0 0
        %2737 = vmatmul.mubr.bf16.gmra.mrb[0].mxu0 %v620
        %v2738 = vpop.f32.mrb[0].mxu0
        %v2739 = vadd.f32 0.0, %v2738
        %v2740 = vpop.f32.mrb[0].mxu0
        %v2741 = vadd.f32 0.0, %v2740
        %v2742 = vpop.f32.mrb[0].mxu0
        %v2743 = vadd.f32 0.0, %v2742
        %v2744 = vpop.f32.mrb[0].mxu0
        %v2745 = vadd.f32 0.0, %v2744
        %2746 = vmatprep.mubr.bf16.mxu0 0
        %2747 = vmatmul.mubr.bf16.gmra.mrb[0].mxu0 %v621
        %v2748 = vpop.f32.mrb[0].mxu0
        %v2749 = vadd.f32 0.0, %v2748
        %v2750 = vpop.f32.mrb[0].mxu0
        %v2751 = vadd.f32 0.0, %v2750
        %v2752 = vpop.f32.mrb[0].mxu0
        %v2753 = vadd.f32 0.0, %v2752
        %v2754 = vpop.f32.mrb[0].mxu0
        %v2755 = vadd.f32 0.0, %v2754
        %2756 = vmatprep.mubr.bf16.mxu0 0
        %2757 = vmatmul.mubr.bf16.gmra.mrb[0].mxu0 %v622
        %v2758 = vpop.f32.mrb[0].mxu0
        %v2759 = vadd.f32 0.0, %v2758
        %v2760 = vpop.f32.mrb[0].mxu0
        %v2761 = vadd.f32 0.0, %v2760
        %v2762 = vpop.f32.mrb[0].mxu0
        %v2763 = vadd.f32 0.0, %v2762
        %v2764 = vpop.f32.mrb[0].mxu0
        %v2765 = vadd.f32 0.0, %v2764
        %2766 = vmatprep.mubr.bf16.mxu0 0
        %2767 = vmatmul.mubr.bf16.gmra.mrb[0].mxu0 %v623
        %v2768 = vpop.f32.mrb[0].mxu0
        %v2769 = vadd.f32 0.0, %v2768
        %v2770 = vpop.f32.mrb[0].mxu0
        %v2771 = vadd.f32 0.0, %v2770
        %v2772 = vpop.f32.mrb[0].mxu0
        %v2773 = vadd.f32 0.0, %v2772
        %v2774 = vpop.f32.mrb[0].mxu0
        %v2775 = vadd.f32 0.0, %v2774
        %2776 = vmatprep.mubr.bf16.mxu0 0
        %2777 = vmatmul.mubr.bf16.gmra.mrb[0].mxu0 %v624
        %v2778 = vpop.f32.mrb[0].mxu0
        %v2779 = vadd.f32 0.0, %v2778
        %v2780 = vpop.f32.mrb[0].mxu0
        %v2781 = vadd.f32 0.0, %v2780
        %v2782 = vpop.f32.mrb[0].mxu0
        %v2783 = vadd.f32 0.0, %v2782
        %v2784 = vpop.f32.mrb[0].mxu0
        %v2785 = vadd.f32 0.0, %v2784
        %2786 = vmatprep.mubr.bf16.mxu0 0
        %2787 = vmatmul.mubr.bf16.gmra.mrb[0].mxu0 %v625
        %v2788 = vpop.f32.mrb[0].mxu0
        %v2789 = vadd.f32 0.0, %v2788
        %v2790 = vpop.f32.mrb[0].mxu0
        %v2791 = vadd.f32 0.0, %v2790
        %v2792 = vpop.f32.mrb[0].mxu0
        %v2793 = vadd.f32 0.0, %v2792
        %v2794 = vpop.f32.mrb[0].mxu0
        %v2795 = vadd.f32 0.0, %v2794
        %2796 = vmatprep.mubr.bf16.mxu0 0
        %2797 = vmatmul.mubr.bf16.gmra.mrb[0].mxu0 %v626
        %v2798 = vpop.f32.mrb[0].mxu0
        %v2799 = vadd.f32 0.0, %v2798
        %v2800 = vpop.f32.mrb[0].mxu0
        %v2801 = vadd.f32 0.0, %v2800
        %v2802 = vpop.f32.mrb[0].mxu0
        %v2803 = vadd.f32 0.0, %v2802
        %v2804 = vpop.f32.mrb[0].mxu0
        %v2805 = vadd.f32 0.0, %v2804
        %2806 = vmatprep.mubr.bf16.mxu0 0
        %2807 = vmatmul.mubr.bf16.gmra.mrb[0].mxu0 %v627
        %v2808 = vpop.f32.mrb[0].mxu0
        %v2809 = vadd.f32 0.0, %v2808
        %v2810 = vpop.f32.mrb[0].mxu0
        %v2811 = vadd.f32 0.0, %v2810
        %v2812 = vpop.f32.mrb[0].mxu0
        %v2813 = vadd.f32 0.0, %v2812
        %v2814 = vpop.f32.mrb[0].mxu0
        %v2815 = vadd.f32 0.0, %v2814
        %2816 = vmatprep.mubr.bf16.mxu0 0
        %2817 = vmatmul.mubr.bf16.gmra.mrb[0].mxu0 %v628
        %v2818 = vpop.f32.mrb[0].mxu0
        %v2819 = vadd.f32 0.0, %v2818
        %v2820 = vpop.f32.mrb[0].mxu0
        %v2821 = vadd.f32 0.0, %v2820
        %v2822 = vpop.f32.mrb[0].mxu0
        %v2823 = vadd.f32 0.0, %v2822
        %v2824 = vpop.f32.mrb[0].mxu0
        %v2825 = vadd.f32 0.0, %v2824
        %2826 = vmatprep.mubr.bf16.mxu0 0
        %2827 = vmatmul.mubr.bf16.gmra.mrb[0].mxu0 %v629
        %v2828 = vpop.f32.mrb[0].mxu0
        %v2829 = vadd.f32 0.0, %v2828
        %v2830 = vpop.f32.mrb[0].mxu0
        %v2831 = vadd.f32 0.0, %v2830
        %v2832 = vpop.f32.mrb[0].mxu0
        %v2833 = vadd.f32 0.0, %v2832
        %v2834 = vpop.f32.mrb[0].mxu0
        %v2835 = vadd.f32 0.0, %v2834
        %2836 = vmatprep.mubr.bf16.mxu0 0
        %2837 = vmatmul.mubr.bf16.gmra.mrb[0].mxu0 %v630
        %v2838 = vpop.f32.mrb[0].mxu0
        %v2839 = vadd.f32 0.0, %v2838
        %v2840 = vpop.f32.mrb[0].mxu0
        %v2841 = vadd.f32 0.0, %v2840
        %v2842 = vpop.f32.mrb[0].mxu0
        %v2843 = vadd.f32 0.0, %v2842
        %v2844 = vpop.f32.mrb[0].mxu0
        %v2845 = vadd.f32 0.0, %v2844
        %2846 = vmatprep.mubr.bf16.mxu0 0
        %2847 = vmatmul.mubr.bf16.gmra.mrb[0].mxu0 %v631
        %v2848 = vpop.f32.mrb[0].mxu0
        %v2849 = vadd.f32 0.0, %v2848
        %v2850 = vpop.f32.mrb[0].mxu0
        %v2851 = vadd.f32 0.0, %v2850
        %v2852 = vpop.f32.mrb[0].mxu0
        %v2853 = vadd.f32 0.0, %v2852
        %v2854 = vpop.f32.mrb[0].mxu0
        %v2855 = vadd.f32 0.0, %v2854
        %2856 = vmatprep.mubr.bf16.mxu0 0
        %2857 = vmatmul.mubr.bf16.gmra.mrb[0].mxu0 %v632
        %v2858 = vpop.f32.mrb[0].mxu0
        %v2859 = vadd.f32 0.0, %v2858
        %v2860 = vpop.f32.mrb[0].mxu0
        %v2861 = vadd.f32 0.0, %v2860
        %v2862 = vpop.f32.mrb[0].mxu0
        %v2863 = vadd.f32 0.0, %v2862
        %v2864 = vpop.f32.mrb[0].mxu0
        %v2865 = vadd.f32 0.0, %v2864
        %2866 = vmatprep.mubr.bf16.mxu0 0
        %2867 = vmatmul.mubr.bf16.gmra.mrb[0].mxu0 %v633
        %v2868 = vpop.f32.mrb[0].mxu0
        %v2869 = vadd.f32 0.0, %v2868
        %v2870 = vpop.f32.mrb[0].mxu0
        %v2871 = vadd.f32 0.0, %v2870
        %v2872 = vpop.f32.mrb[0].mxu0
        %v2873 = vadd.f32 0.0, %v2872
        %v2874 = vpop.f32.mrb[0].mxu0
        %v2875 = vadd.f32 0.0, %v2874
        %2876 = vmatprep.mubr.bf16.mxu0 0
        %2877 = vmatmul.mubr.bf16.gmra.mrb[0].mxu0 %v634
        %v2878 = vpop.f32.mrb[0].mxu0
        %v2879 = vadd.f32 0.0, %v2878
        %v2880 = vpop.f32.mrb[0].mxu0
        %v2881 = vadd.f32 0.0, %v2880
        %v2882 = vpop.f32.mrb[0].mxu0
        %v2883 = vadd.f32 0.0, %v2882
        %v2884 = vpop.f32.mrb[0].mxu0
        %v2885 = vadd.f32 0.0, %v2884
        %2886 = vmatprep.mubr.bf16.mxu0 0
        %2887 = vmatmul.mubr.bf16.gmra.mrb[0].mxu0 %v635
        %v2888 = vpop.f32.mrb[0].mxu0
        %v2889 = vadd.f32 0.0, %v2888
        %v2890 = vpop.f32.mrb[0].mxu0
        %v2891 = vadd.f32 0.0, %v2890
        %v2892 = vpop.f32.mrb[0].mxu0
        %v2893 = vadd.f32 0.0, %v2892
        %v2894 = vpop.f32.mrb[0].mxu0
        %v2895 = vadd.f32 0.0, %v2894
        %2896 = vdwg.mxu0
        %2897 = vmatprep.subr.bf16.mxu0 %v1431
        %2898 = vmatpush1.bf16.msra.mxu0 %v1430
        %2899 = vmatprep.subr.bf16.mxu0 %v1463
        %2900 = vmatpush1.bf16.msra.mxu0 %v1462
        %2901 = vmatprep.subr.bf16.mxu0 %v1495
        %2902 = vmatpush1.bf16.msra.mxu0 %v1494
        %2903 = vmatprep.subr.bf16.mxu0 %v1527
        %2904 = vmatpush1.bf16.msra.mxu0 %v1526
        %2905 = vmatprep.subr.bf16.mxu0 %v1559
        %2906 = vmatpush1.bf16.msra.mxu0 %v1558
        %2907 = vmatprep.subr.bf16.mxu0 %v1591
        %2908 = vmatpush1.bf16.msra.mxu0 %v1590
        %2909 = vmatprep.subr.bf16.mxu0 %v1623
        %2910 = vmatpush1.bf16.msra.mxu0 %v1622
        %2911 = vmatprep.subr.bf16.mxu0 %v1655
        %2912 = vmatpush1.bf16.msra.mxu0 %v1654
        %2913 = vmatprep.subr.bf16.mxu0 0
        %2914 = vmatpush1.bf16.msra.mxu0 0
        %2915 = vmatprep.subr.bf16.mxu0 0
        %2916 = vmatpush1.bf16.msra.mxu0 0
        %2917 = vmatprep.subr.bf16.mxu0 0
        %2918 = vmatpush1.bf16.msra.mxu0 0
        %2919 = vmatprep.subr.bf16.mxu0 0
        %2920 = vmatpush1.bf16.msra.mxu0 0
        %2921 = vmatprep.subr.bf16.mxu0 0
        %2922 = vmatpush1.bf16.msra.mxu0 0
        %2923 = vmatprep.subr.bf16.mxu0 0
        %2924 = vmatpush1.bf16.msra.mxu0 0
        %2925 = vmatprep.subr.bf16.mxu0 0
        %2926 = vmatpush1.bf16.msra.mxu0 0
        %2927 = vmatprep.subr.bf16.mxu0 0
        %2928 = vmatpush1.bf16.msra.mxu0 0
        %2929 = vmatprep.mubr.bf16.mxu0 0
        %2930 = vmatmul.mubr.bf16.gmra.mrb[0].mxu0 %v620
        %v2931 = vpop.f32.mrb[0].mxu0
        %v2932 = vadd.f32 0.0, %v2931
        %v2933 = vpop.f32.mrb[0].mxu0
        %v2934 = vadd.f32 0.0, %v2933
        %v2935 = vpop.f32.mrb[0].mxu0
        %v2936 = vadd.f32 0.0, %v2935
        %v2937 = vpop.f32.mrb[0].mxu0
        %v2938 = vadd.f32 0.0, %v2937
        %2939 = vmatprep.mubr.bf16.mxu0 0
        %2940 = vmatmul.mubr.bf16.gmra.mrb[0].mxu0 %v621
        %v2941 = vpop.f32.mrb[0].mxu0
        %v2942 = vadd.f32 0.0, %v2941
        %v2943 = vpop.f32.mrb[0].mxu0
        %v2944 = vadd.f32 0.0, %v2943
        %v2945 = vpop.f32.mrb[0].mxu0
        %v2946 = vadd.f32 0.0, %v2945
        %v2947 = vpop.f32.mrb[0].mxu0
        %v2948 = vadd.f32 0.0, %v2947
        %2949 = vmatprep.mubr.bf16.mxu0 0
        %2950 = vmatmul.mubr.bf16.gmra.mrb[0].mxu0 %v622
        %v2951 = vpop.f32.mrb[0].mxu0
        %v2952 = vadd.f32 0.0, %v2951
        %v2953 = vpop.f32.mrb[0].mxu0
        %v2954 = vadd.f32 0.0, %v2953
        %v2955 = vpop.f32.mrb[0].mxu0
        %v2956 = vadd.f32 0.0, %v2955
        %v2957 = vpop.f32.mrb[0].mxu0
        %v2958 = vadd.f32 0.0, %v2957
        %2959 = vmatprep.mubr.bf16.mxu0 0
        %2960 = vmatmul.mubr.bf16.gmra.mrb[0].mxu0 %v623
        %v2961 = vpop.f32.mrb[0].mxu0
        %v2962 = vadd.f32 0.0, %v2961
        %v2963 = vpop.f32.mrb[0].mxu0
        %v2964 = vadd.f32 0.0, %v2963
        %v2965 = vpop.f32.mrb[0].mxu0
        %v2966 = vadd.f32 0.0, %v2965
        %v2967 = vpop.f32.mrb[0].mxu0
        %v2968 = vadd.f32 0.0, %v2967
        %2969 = vmatprep.mubr.bf16.mxu0 0
        %2970 = vmatmul.mubr.bf16.gmra.mrb[0].mxu0 %v624
        %v2971 = vpop.f32.mrb[0].mxu0
        %v2972 = vadd.f32 0.0, %v2971
        %v2973 = vpop.f32.mrb[0].mxu0
        %v2974 = vadd.f32 0.0, %v2973
        %v2975 = vpop.f32.mrb[0].mxu0
        %v2976 = vadd.f32 0.0, %v2975
        %v2977 = vpop.f32.mrb[0].mxu0
        %v2978 = vadd.f32 0.0, %v2977
        %2979 = vmatprep.mubr.bf16.mxu0 0
        %2980 = vmatmul.mubr.bf16.gmra.mrb[0].mxu0 %v625
        %v2981 = vpop.f32.mrb[0].mxu0
        %v2982 = vadd.f32 0.0, %v2981
        %v2983 = vpop.f32.mrb[0].mxu0
        %v2984 = vadd.f32 0.0, %v2983
        %v2985 = vpop.f32.mrb[0].mxu0
        %v2986 = vadd.f32 0.0, %v2985
        %v2987 = vpop.f32.mrb[0].mxu0
        %v2988 = vadd.f32 0.0, %v2987
        %2989 = vmatprep.mubr.bf16.mxu0 0
        %2990 = vmatmul.mubr.bf16.gmra.mrb[0].mxu0 %v626
        %v2991 = vpop.f32.mrb[0].mxu0
        %v2992 = vadd.f32 0.0, %v2991
        %v2993 = vpop.f32.mrb[0].mxu0
        %v2994 = vadd.f32 0.0, %v2993
        %v2995 = vpop.f32.mrb[0].mxu0
        %v2996 = vadd.f32 0.0, %v2995
        %v2997 = vpop.f32.mrb[0].mxu0
        %v2998 = vadd.f32 0.0, %v2997
        %2999 = vmatprep.mubr.bf16.mxu0 0
        %3000 = vmatmul.mubr.bf16.gmra.mrb[0].mxu0 %v627
        %v3001 = vpop.f32.mrb[0].mxu0
        %v3002 = vadd.f32 0.0, %v3001
        %v3003 = vpop.f32.mrb[0].mxu0
        %v3004 = vadd.f32 0.0, %v3003
        %v3005 = vpop.f32.mrb[0].mxu0
        %v3006 = vadd.f32 0.0, %v3005
        %v3007 = vpop.f32.mrb[0].mxu0
        %v3008 = vadd.f32 0.0, %v3007
        %3009 = vmatprep.mubr.bf16.mxu0 0
        %3010 = vmatmul.mubr.bf16.gmra.mrb[0].mxu0 %v628
        %v3011 = vpop.f32.mrb[0].mxu0
        %v3012 = vadd.f32 0.0, %v3011
        %v3013 = vpop.f32.mrb[0].mxu0
        %v3014 = vadd.f32 0.0, %v3013
        %v3015 = vpop.f32.mrb[0].mxu0
        %v3016 = vadd.f32 0.0, %v3015
        %v3017 = vpop.f32.mrb[0].mxu0
        %v3018 = vadd.f32 0.0, %v3017
        %3019 = vmatprep.mubr.bf16.mxu0 0
        %3020 = vmatmul.mubr.bf16.gmra.mrb[0].mxu0 %v629
        %v3021 = vpop.f32.mrb[0].mxu0
        %v3022 = vadd.f32 0.0, %v3021
        %v3023 = vpop.f32.mrb[0].mxu0
        %v3024 = vadd.f32 0.0, %v3023
        %v3025 = vpop.f32.mrb[0].mxu0
        %v3026 = vadd.f32 0.0, %v3025
        %v3027 = vpop.f32.mrb[0].mxu0
        %v3028 = vadd.f32 0.0, %v3027
        %3029 = vmatprep.mubr.bf16.mxu0 0
        %3030 = vmatmul.mubr.bf16.gmra.mrb[0].mxu0 %v630
        %v3031 = vpop.f32.mrb[0].mxu0
        %v3032 = vadd.f32 0.0, %v3031
        %v3033 = vpop.f32.mrb[0].mxu0
        %v3034 = vadd.f32 0.0, %v3033
        %v3035 = vpop.f32.mrb[0].mxu0
        %v3036 = vadd.f32 0.0, %v3035
        %v3037 = vpop.f32.mrb[0].mxu0
        %v3038 = vadd.f32 0.0, %v3037
        %3039 = vmatprep.mubr.bf16.mxu0 0
        %3040 = vmatmul.mubr.bf16.gmra.mrb[0].mxu0 %v631
        %v3041 = vpop.f32.mrb[0].mxu0
        %v3042 = vadd.f32 0.0, %v3041
        %v3043 = vpop.f32.mrb[0].mxu0
        %v3044 = vadd.f32 0.0, %v3043
        %v3045 = vpop.f32.mrb[0].mxu0
        %v3046 = vadd.f32 0.0, %v3045
        %v3047 = vpop.f32.mrb[0].mxu0
        %v3048 = vadd.f32 0.0, %v3047
        %3049 = vmatprep.mubr.bf16.mxu0 0
        %3050 = vmatmul.mubr.bf16.gmra.mrb[0].mxu0 %v632
        %v3051 = vpop.f32.mrb[0].mxu0
        %v3052 = vadd.f32 0.0, %v3051
        %v3053 = vpop.f32.mrb[0].mxu0
        %v3054 = vadd.f32 0.0, %v3053
        %v3055 = vpop.f32.mrb[0].mxu0
        %v3056 = vadd.f32 0.0, %v3055
        %v3057 = vpop.f32.mrb[0].mxu0
        %v3058 = vadd.f32 0.0, %v3057
        %3059 = vmatprep.mubr.bf16.mxu0 0
        %3060 = vmatmul.mubr.bf16.gmra.mrb[0].mxu0 %v633
        %v3061 = vpop.f32.mrb[0].mxu0
        %v3062 = vadd.f32 0.0, %v3061
        %v3063 = vpop.f32.mrb[0].mxu0
        %v3064 = vadd.f32 0.0, %v3063
        %v3065 = vpop.f32.mrb[0].mxu0
        %v3066 = vadd.f32 0.0, %v3065
        %v3067 = vpop.f32.mrb[0].mxu0
        %v3068 = vadd.f32 0.0, %v3067
        %3069 = vmatprep.mubr.bf16.mxu0 0
        %3070 = vmatmul.mubr.bf16.gmra.mrb[0].mxu0 %v634
        %v3071 = vpop.f32.mrb[0].mxu0
        %v3072 = vadd.f32 0.0, %v3071
        %v3073 = vpop.f32.mrb[0].mxu0
        %v3074 = vadd.f32 0.0, %v3073
        %v3075 = vpop.f32.mrb[0].mxu0
        %v3076 = vadd.f32 0.0, %v3075
        %v3077 = vpop.f32.mrb[0].mxu0
        %v3078 = vadd.f32 0.0, %v3077
        %3079 = vmatprep.mubr.bf16.mxu0 0
        %3080 = vmatmul.mubr.bf16.gmra.mrb[0].mxu0 %v635
        %v3081 = vpop.f32.mrb[0].mxu0
        %v3082 = vadd.f32 0.0, %v3081
        %v3083 = vpop.f32.mrb[0].mxu0
        %v3084 = vadd.f32 0.0, %v3083
        %v3085 = vpop.f32.mrb[0].mxu0
        %v3086 = vadd.f32 0.0, %v3085
        %v3087 = vpop.f32.mrb[0].mxu0
        %v3088 = vadd.f32 0.0, %v3087
        %3089 = vdwg.mxu0
        %3090 = vmatprep.subr.bf16.mxu0 %v1433
        %3091 = vmatpush1.bf16.msra.mxu0 %v1432
        %3092 = vmatprep.subr.bf16.mxu0 %v1465
        %3093 = vmatpush1.bf16.msra.mxu0 %v1464
        %3094 = vmatprep.subr.bf16.mxu0 %v1497
        %3095 = vmatpush1.bf16.msra.mxu0 %v1496
        %3096 = vmatprep.subr.bf16.mxu0 %v1529
        %3097 = vmatpush1.bf16.msra.mxu0 %v1528
        %3098 = vmatprep.subr.bf16.mxu0 %v1561
        %3099 = vmatpush1.bf16.msra.mxu0 %v1560
        %3100 = vmatprep.subr.bf16.mxu0 %v1593
        %3101 = vmatpush1.bf16.msra.mxu0 %v1592
        %3102 = vmatprep.subr.bf16.mxu0 %v1625
        %3103 = vmatpush1.bf16.msra.mxu0 %v1624
        %3104 = vmatprep.subr.bf16.mxu0 %v1657
        %3105 = vmatpush1.bf16.msra.mxu0 %v1656
        %3106 = vmatprep.subr.bf16.mxu0 0
        %3107 = vmatpush1.bf16.msra.mxu0 0
        %3108 = vmatprep.subr.bf16.mxu0 0
        %3109 = vmatpush1.bf16.msra.mxu0 0
        %3110 = vmatprep.subr.bf16.mxu0 0
        %3111 = vmatpush1.bf16.msra.mxu0 0
        %3112 = vmatprep.subr.bf16.mxu0 0
        %3113 = vmatpush1.bf16.msra.mxu0 0
        %3114 = vmatprep.subr.bf16.mxu0 0
        %3115 = vmatpush1.bf16.msra.mxu0 0
        %3116 = vmatprep.subr.bf16.mxu0 0
        %3117 = vmatpush1.bf16.msra.mxu0 0
        %3118 = vmatprep.subr.bf16.mxu0 0
        %3119 = vmatpush1.bf16.msra.mxu0 0
        %3120 = vmatprep.subr.bf16.mxu0 0
        %3121 = vmatpush1.bf16.msra.mxu0 0
        %3122 = vmatprep.mubr.bf16.mxu0 0
        %3123 = vmatmul.mubr.bf16.gmra.mrb[0].mxu0 %v620
        %v3124 = vpop.f32.mrb[0].mxu0
        %v3125 = vadd.f32 0.0, %v3124
        %v3126 = vpop.f32.mrb[0].mxu0
        %v3127 = vadd.f32 0.0, %v3126
        %v3128 = vpop.f32.mrb[0].mxu0
        %v3129 = vadd.f32 0.0, %v3128
        %v3130 = vpop.f32.mrb[0].mxu0
        %v3131 = vadd.f32 0.0, %v3130
        %3132 = vmatprep.mubr.bf16.mxu0 0
        %3133 = vmatmul.mubr.bf16.gmra.mrb[0].mxu0 %v621
        %v3134 = vpop.f32.mrb[0].mxu0
        %v3135 = vadd.f32 0.0, %v3134
        %v3136 = vpop.f32.mrb[0].mxu0
        %v3137 = vadd.f32 0.0, %v3136
        %v3138 = vpop.f32.mrb[0].mxu0
        %v3139 = vadd.f32 0.0, %v3138
        %v3140 = vpop.f32.mrb[0].mxu0
        %v3141 = vadd.f32 0.0, %v3140
        %3142 = vmatprep.mubr.bf16.mxu0 0
        %3143 = vmatmul.mubr.bf16.gmra.mrb[0].mxu0 %v622
        %v3144 = vpop.f32.mrb[0].mxu0
        %v3145 = vadd.f32 0.0, %v3144
        %v3146 = vpop.f32.mrb[0].mxu0
        %v3147 = vadd.f32 0.0, %v3146
        %v3148 = vpop.f32.mrb[0].mxu0
        %v3149 = vadd.f32 0.0, %v3148
        %v3150 = vpop.f32.mrb[0].mxu0
        %v3151 = vadd.f32 0.0, %v3150
        %3152 = vmatprep.mubr.bf16.mxu0 0
        %3153 = vmatmul.mubr.bf16.gmra.mrb[0].mxu0 %v623
        %v3154 = vpop.f32.mrb[0].mxu0
        %v3155 = vadd.f32 0.0, %v3154
        %v3156 = vpop.f32.mrb[0].mxu0
        %v3157 = vadd.f32 0.0, %v3156
        %v3158 = vpop.f32.mrb[0].mxu0
        %v3159 = vadd.f32 0.0, %v3158
        %v3160 = vpop.f32.mrb[0].mxu0
        %v3161 = vadd.f32 0.0, %v3160
        %3162 = vmatprep.mubr.bf16.mxu0 0
        %3163 = vmatmul.mubr.bf16.gmra.mrb[0].mxu0 %v624
        %v3164 = vpop.f32.mrb[0].mxu0
        %v3165 = vadd.f32 0.0, %v3164
        %v3166 = vpop.f32.mrb[0].mxu0
        %v3167 = vadd.f32 0.0, %v3166
        %v3168 = vpop.f32.mrb[0].mxu0
        %v3169 = vadd.f32 0.0, %v3168
        %v3170 = vpop.f32.mrb[0].mxu0
        %v3171 = vadd.f32 0.0, %v3170
        %3172 = vmatprep.mubr.bf16.mxu0 0
        %3173 = vmatmul.mubr.bf16.gmra.mrb[0].mxu0 %v625
        %v3174 = vpop.f32.mrb[0].mxu0
        %v3175 = vadd.f32 0.0, %v3174
        %v3176 = vpop.f32.mrb[0].mxu0
        %v3177 = vadd.f32 0.0, %v3176
        %v3178 = vpop.f32.mrb[0].mxu0
        %v3179 = vadd.f32 0.0, %v3178
        %v3180 = vpop.f32.mrb[0].mxu0
        %v3181 = vadd.f32 0.0, %v3180
        %3182 = vmatprep.mubr.bf16.mxu0 0
        %3183 = vmatmul.mubr.bf16.gmra.mrb[0].mxu0 %v626
        %v3184 = vpop.f32.mrb[0].mxu0
        %v3185 = vadd.f32 0.0, %v3184
        %v3186 = vpop.f32.mrb[0].mxu0
        %v3187 = vadd.f32 0.0, %v3186
        %v3188 = vpop.f32.mrb[0].mxu0
        %v3189 = vadd.f32 0.0, %v3188
        %v3190 = vpop.f32.mrb[0].mxu0
        %v3191 = vadd.f32 0.0, %v3190
        %3192 = vmatprep.mubr.bf16.mxu0 0
        %3193 = vmatmul.mubr.bf16.gmra.mrb[0].mxu0 %v627
        %v3194 = vpop.f32.mrb[0].mxu0
        %v3195 = vadd.f32 0.0, %v3194
        %v3196 = vpop.f32.mrb[0].mxu0
        %v3197 = vadd.f32 0.0, %v3196
        %v3198 = vpop.f32.mrb[0].mxu0
        %v3199 = vadd.f32 0.0, %v3198
        %v3200 = vpop.f32.mrb[0].mxu0
        %v3201 = vadd.f32 0.0, %v3200
        %3202 = vmatprep.mubr.bf16.mxu0 0
        %3203 = vmatmul.mubr.bf16.gmra.mrb[0].mxu0 %v628
        %v3204 = vpop.f32.mrb[0].mxu0
        %v3205 = vadd.f32 0.0, %v3204
        %v3206 = vpop.f32.mrb[0].mxu0
        %v3207 = vadd.f32 0.0, %v3206
        %v3208 = vpop.f32.mrb[0].mxu0
        %v3209 = vadd.f32 0.0, %v3208
        %v3210 = vpop.f32.mrb[0].mxu0
        %v3211 = vadd.f32 0.0, %v3210
        %3212 = vmatprep.mubr.bf16.mxu0 0
        %3213 = vmatmul.mubr.bf16.gmra.mrb[0].mxu0 %v629
        %v3214 = vpop.f32.mrb[0].mxu0
        %v3215 = vadd.f32 0.0, %v3214
        %v3216 = vpop.f32.mrb[0].mxu0
        %v3217 = vadd.f32 0.0, %v3216
        %v3218 = vpop.f32.mrb[0].mxu0
        %v3219 = vadd.f32 0.0, %v3218
        %v3220 = vpop.f32.mrb[0].mxu0
        %v3221 = vadd.f32 0.0, %v3220
        %3222 = vmatprep.mubr.bf16.mxu0 0
        %3223 = vmatmul.mubr.bf16.gmra.mrb[0].mxu0 %v630
        %v3224 = vpop.f32.mrb[0].mxu0
        %v3225 = vadd.f32 0.0, %v3224
        %v3226 = vpop.f32.mrb[0].mxu0
        %v3227 = vadd.f32 0.0, %v3226
        %v3228 = vpop.f32.mrb[0].mxu0
        %v3229 = vadd.f32 0.0, %v3228
        %v3230 = vpop.f32.mrb[0].mxu0
        %v3231 = vadd.f32 0.0, %v3230
        %3232 = vmatprep.mubr.bf16.mxu0 0
        %3233 = vmatmul.mubr.bf16.gmra.mrb[0].mxu0 %v631
        %v3234 = vpop.f32.mrb[0].mxu0
        %v3235 = vadd.f32 0.0, %v3234
        %v3236 = vpop.f32.mrb[0].mxu0
        %v3237 = vadd.f32 0.0, %v3236
        %v3238 = vpop.f32.mrb[0].mxu0
        %v3239 = vadd.f32 0.0, %v3238
        %v3240 = vpop.f32.mrb[0].mxu0
        %v3241 = vadd.f32 0.0, %v3240
        %3242 = vmatprep.mubr.bf16.mxu0 0
        %3243 = vmatmul.mubr.bf16.gmra.mrb[0].mxu0 %v632
        %v3244 = vpop.f32.mrb[0].mxu0
        %v3245 = vadd.f32 0.0, %v3244
        %v3246 = vpop.f32.mrb[0].mxu0
        %v3247 = vadd.f32 0.0, %v3246
        %v3248 = vpop.f32.mrb[0].mxu0
        %v3249 = vadd.f32 0.0, %v3248
        %v3250 = vpop.f32.mrb[0].mxu0
        %v3251 = vadd.f32 0.0, %v3250
        %3252 = vmatprep.mubr.bf16.mxu0 0
        %3253 = vmatmul.mubr.bf16.gmra.mrb[0].mxu0 %v633
        %v3254 = vpop.f32.mrb[0].mxu0
        %v3255 = vadd.f32 0.0, %v3254
        %v3256 = vpop.f32.mrb[0].mxu0
        %v3257 = vadd.f32 0.0, %v3256
        %v3258 = vpop.f32.mrb[0].mxu0
        %v3259 = vadd.f32 0.0, %v3258
        %v3260 = vpop.f32.mrb[0].mxu0
        %v3261 = vadd.f32 0.0, %v3260
        %3262 = vmatprep.mubr.bf16.mxu0 0
        %3263 = vmatmul.mubr.bf16.gmra.mrb[0].mxu0 %v634
        %v3264 = vpop.f32.mrb[0].mxu0
        %v3265 = vadd.f32 0.0, %v3264
        %v3266 = vpop.f32.mrb[0].mxu0
        %v3267 = vadd.f32 0.0, %v3266
        %v3268 = vpop.f32.mrb[0].mxu0
        %v3269 = vadd.f32 0.0, %v3268
        %v3270 = vpop.f32.mrb[0].mxu0
        %v3271 = vadd.f32 0.0, %v3270
        %3272 = vmatprep.mubr.bf16.mxu0 0
        %3273 = vmatmul.mubr.bf16.gmra.mrb[0].mxu0 %v635
        %v3274 = vpop.f32.mrb[0].mxu0
        %v3275 = vadd.f32 0.0, %v3274
        %v3276 = vpop.f32.mrb[0].mxu0
        %v3277 = vadd.f32 0.0, %v3276
        %v3278 = vpop.f32.mrb[0].mxu0
        %v3279 = vadd.f32 0.0, %v3278
        %v3280 = vpop.f32.mrb[0].mxu0
        %v3281 = vadd.f32 0.0, %v3280
        %3282 = vdwg.mxu0
        %3283 = vmatprep.subr.bf16.mxu0 %v1435
        %3284 = vmatpush1.bf16.msra.mxu0 %v1434
        %3285 = vmatprep.subr.bf16.mxu0 %v1467
        %3286 = vmatpush1.bf16.msra.mxu0 %v1466
        %3287 = vmatprep.subr.bf16.mxu0 %v1499
        %3288 = vmatpush1.bf16.msra.mxu0 %v1498
        %3289 = vmatprep.subr.bf16.mxu0 %v1531
        %3290 = vmatpush1.bf16.msra.mxu0 %v1530
        %3291 = vmatprep.subr.bf16.mxu0 %v1563
        %3292 = vmatpush1.bf16.msra.mxu0 %v1562
        %3293 = vmatprep.subr.bf16.mxu0 %v1595
        %3294 = vmatpush1.bf16.msra.mxu0 %v1594
        %3295 = vmatprep.subr.bf16.mxu0 %v1627
        %3296 = vmatpush1.bf16.msra.mxu0 %v1626
        %3297 = vmatprep.subr.bf16.mxu0 %v1659
        %3298 = vmatpush1.bf16.msra.mxu0 %v1658
        %3299 = vmatprep.subr.bf16.mxu0 0
        %3300 = vmatpush1.bf16.msra.mxu0 0
        %3301 = vmatprep.subr.bf16.mxu0 0
        %3302 = vmatpush1.bf16.msra.mxu0 0
        %3303 = vmatprep.subr.bf16.mxu0 0
        %3304 = vmatpush1.bf16.msra.mxu0 0
        %3305 = vmatprep.subr.bf16.mxu0 0
        %3306 = vmatpush1.bf16.msra.mxu0 0
        %3307 = vmatprep.subr.bf16.mxu0 0
        %3308 = vmatpush1.bf16.msra.mxu0 0
        %3309 = vmatprep.subr.bf16.mxu0 0
        %3310 = vmatpush1.bf16.msra.mxu0 0
        %3311 = vmatprep.subr.bf16.mxu0 0
        %3312 = vmatpush1.bf16.msra.mxu0 0
        %3313 = vmatprep.subr.bf16.mxu0 0
        %3314 = vmatpush1.bf16.msra.mxu0 0
        %3315 = vmatprep.mubr.bf16.mxu0 0
        %3316 = vmatmul.mubr.bf16.gmra.mrb[0].mxu0 %v620
        %v3317 = vpop.f32.mrb[0].mxu0
        %v3318 = vadd.f32 0.0, %v3317
        %v3319 = vpop.f32.mrb[0].mxu0
        %v3320 = vadd.f32 0.0, %v3319
        %v3321 = vpop.f32.mrb[0].mxu0
        %v3322 = vadd.f32 0.0, %v3321
        %v3323 = vpop.f32.mrb[0].mxu0
        %v3324 = vadd.f32 0.0, %v3323
        %3325 = vmatprep.mubr.bf16.mxu0 0
        %3326 = vmatmul.mubr.bf16.gmra.mrb[0].mxu0 %v621
        %v3327 = vpop.f32.mrb[0].mxu0
        %v3328 = vadd.f32 0.0, %v3327
        %v3329 = vpop.f32.mrb[0].mxu0
        %v3330 = vadd.f32 0.0, %v3329
        %v3331 = vpop.f32.mrb[0].mxu0
        %v3332 = vadd.f32 0.0, %v3331
        %v3333 = vpop.f32.mrb[0].mxu0
        %v3334 = vadd.f32 0.0, %v3333
        %3335 = vmatprep.mubr.bf16.mxu0 0
        %3336 = vmatmul.mubr.bf16.gmra.mrb[0].mxu0 %v622
        %v3337 = vpop.f32.mrb[0].mxu0
        %v3338 = vadd.f32 0.0, %v3337
        %v3339 = vpop.f32.mrb[0].mxu0
        %v3340 = vadd.f32 0.0, %v3339
        %v3341 = vpop.f32.mrb[0].mxu0
        %v3342 = vadd.f32 0.0, %v3341
        %v3343 = vpop.f32.mrb[0].mxu0
        %v3344 = vadd.f32 0.0, %v3343
        %3345 = vmatprep.mubr.bf16.mxu0 0
        %3346 = vmatmul.mubr.bf16.gmra.mrb[0].mxu0 %v623
        %v3347 = vpop.f32.mrb[0].mxu0
        %v3348 = vadd.f32 0.0, %v3347
        %v3349 = vpop.f32.mrb[0].mxu0
        %v3350 = vadd.f32 0.0, %v3349
        %v3351 = vpop.f32.mrb[0].mxu0
        %v3352 = vadd.f32 0.0, %v3351
        %v3353 = vpop.f32.mrb[0].mxu0
        %v3354 = vadd.f32 0.0, %v3353
        %3355 = vmatprep.mubr.bf16.mxu0 0
        %3356 = vmatmul.mubr.bf16.gmra.mrb[0].mxu0 %v624
        %v3357 = vpop.f32.mrb[0].mxu0
        %v3358 = vadd.f32 0.0, %v3357
        %v3359 = vpop.f32.mrb[0].mxu0
        %v3360 = vadd.f32 0.0, %v3359
        %v3361 = vpop.f32.mrb[0].mxu0
        %v3362 = vadd.f32 0.0, %v3361
        %v3363 = vpop.f32.mrb[0].mxu0
        %v3364 = vadd.f32 0.0, %v3363
        %3365 = vmatprep.mubr.bf16.mxu0 0
        %3366 = vmatmul.mubr.bf16.gmra.mrb[0].mxu0 %v625
        %v3367 = vpop.f32.mrb[0].mxu0
        %v3368 = vadd.f32 0.0, %v3367
        %v3369 = vpop.f32.mrb[0].mxu0
        %v3370 = vadd.f32 0.0, %v3369
        %v3371 = vpop.f32.mrb[0].mxu0
        %v3372 = vadd.f32 0.0, %v3371
        %v3373 = vpop.f32.mrb[0].mxu0
        %v3374 = vadd.f32 0.0, %v3373
        %3375 = vmatprep.mubr.bf16.mxu0 0
        %3376 = vmatmul.mubr.bf16.gmra.mrb[0].mxu0 %v626
        %v3377 = vpop.f32.mrb[0].mxu0
        %v3378 = vadd.f32 0.0, %v3377
        %v3379 = vpop.f32.mrb[0].mxu0
        %v3380 = vadd.f32 0.0, %v3379
        %v3381 = vpop.f32.mrb[0].mxu0
        %v3382 = vadd.f32 0.0, %v3381
        %v3383 = vpop.f32.mrb[0].mxu0
        %v3384 = vadd.f32 0.0, %v3383
        %3385 = vmatprep.mubr.bf16.mxu0 0
        %3386 = vmatmul.mubr.bf16.gmra.mrb[0].mxu0 %v627
        %v3387 = vpop.f32.mrb[0].mxu0
        %v3388 = vadd.f32 0.0, %v3387
        %v3389 = vpop.f32.mrb[0].mxu0
        %v3390 = vadd.f32 0.0, %v3389
        %v3391 = vpop.f32.mrb[0].mxu0
        %v3392 = vadd.f32 0.0, %v3391
        %v3393 = vpop.f32.mrb[0].mxu0
        %v3394 = vadd.f32 0.0, %v3393
        %3395 = vmatprep.mubr.bf16.mxu0 0
        %3396 = vmatmul.mubr.bf16.gmra.mrb[0].mxu0 %v628
        %v3397 = vpop.f32.mrb[0].mxu0
        %v3398 = vadd.f32 0.0, %v3397
        %v3399 = vpop.f32.mrb[0].mxu0
        %v3400 = vadd.f32 0.0, %v3399
        %v3401 = vpop.f32.mrb[0].mxu0
        %v3402 = vadd.f32 0.0, %v3401
        %v3403 = vpop.f32.mrb[0].mxu0
        %v3404 = vadd.f32 0.0, %v3403
        %3405 = vmatprep.mubr.bf16.mxu0 0
        %3406 = vmatmul.mubr.bf16.gmra.mrb[0].mxu0 %v629
        %v3407 = vpop.f32.mrb[0].mxu0
        %v3408 = vadd.f32 0.0, %v3407
        %v3409 = vpop.f32.mrb[0].mxu0
        %v3410 = vadd.f32 0.0, %v3409
        %v3411 = vpop.f32.mrb[0].mxu0
        %v3412 = vadd.f32 0.0, %v3411
        %v3413 = vpop.f32.mrb[0].mxu0
        %v3414 = vadd.f32 0.0, %v3413
        %3415 = vmatprep.mubr.bf16.mxu0 0
        %3416 = vmatmul.mubr.bf16.gmra.mrb[0].mxu0 %v630
        %v3417 = vpop.f32.mrb[0].mxu0
        %v3418 = vadd.f32 0.0, %v3417
        %v3419 = vpop.f32.mrb[0].mxu0
        %v3420 = vadd.f32 0.0, %v3419
        %v3421 = vpop.f32.mrb[0].mxu0
        %v3422 = vadd.f32 0.0, %v3421
        %v3423 = vpop.f32.mrb[0].mxu0
        %v3424 = vadd.f32 0.0, %v3423
        %3425 = vmatprep.mubr.bf16.mxu0 0
        %3426 = vmatmul.mubr.bf16.gmra.mrb[0].mxu0 %v631
        %v3427 = vpop.f32.mrb[0].mxu0
        %v3428 = vadd.f32 0.0, %v3427
        %v3429 = vpop.f32.mrb[0].mxu0
        %v3430 = vadd.f32 0.0, %v3429
        %v3431 = vpop.f32.mrb[0].mxu0
        %v3432 = vadd.f32 0.0, %v3431
        %v3433 = vpop.f32.mrb[0].mxu0
        %v3434 = vadd.f32 0.0, %v3433
        %3435 = vmatprep.mubr.bf16.mxu0 0
        %3436 = vmatmul.mubr.bf16.gmra.mrb[0].mxu0 %v632
        %v3437 = vpop.f32.mrb[0].mxu0
        %v3438 = vadd.f32 0.0, %v3437
        %v3439 = vpop.f32.mrb[0].mxu0
        %v3440 = vadd.f32 0.0, %v3439
        %v3441 = vpop.f32.mrb[0].mxu0
        %v3442 = vadd.f32 0.0, %v3441
        %v3443 = vpop.f32.mrb[0].mxu0
        %v3444 = vadd.f32 0.0, %v3443
        %3445 = vmatprep.mubr.bf16.mxu0 0
        %3446 = vmatmul.mubr.bf16.gmra.mrb[0].mxu0 %v633
        %v3447 = vpop.f32.mrb[0].mxu0
        %v3448 = vadd.f32 0.0, %v3447
        %v3449 = vpop.f32.mrb[0].mxu0
        %v3450 = vadd.f32 0.0, %v3449
        %v3451 = vpop.f32.mrb[0].mxu0
        %v3452 = vadd.f32 0.0, %v3451
        %v3453 = vpop.f32.mrb[0].mxu0
        %v3454 = vadd.f32 0.0, %v3453
        %3455 = vmatprep.mubr.bf16.mxu0 0
        %3456 = vmatmul.mubr.bf16.gmra.mrb[0].mxu0 %v634
        %v3457 = vpop.f32.mrb[0].mxu0
        %v3458 = vadd.f32 0.0, %v3457
        %v3459 = vpop.f32.mrb[0].mxu0
        %v3460 = vadd.f32 0.0, %v3459
        %v3461 = vpop.f32.mrb[0].mxu0
        %v3462 = vadd.f32 0.0, %v3461
        %v3463 = vpop.f32.mrb[0].mxu0
        %v3464 = vadd.f32 0.0, %v3463
        %3465 = vmatprep.mubr.bf16.mxu0 0
        %3466 = vmatmul.mubr.bf16.gmra.mrb[0].mxu0 %v635
        %v3467 = vpop.f32.mrb[0].mxu0
        %v3468 = vadd.f32 0.0, %v3467
        %v3469 = vpop.f32.mrb[0].mxu0
        %v3470 = vadd.f32 0.0, %v3469
        %v3471 = vpop.f32.mrb[0].mxu0
        %v3472 = vadd.f32 0.0, %v3471
        %v3473 = vpop.f32.mrb[0].mxu0
        %v3474 = vadd.f32 0.0, %v3473
        %3475 = vdwg.mxu0
        %3476 = vmatprep.subr.bf16.mxu0 %v1437
        %3477 = vmatpush1.bf16.msra.mxu0 %v1436
        %3478 = vmatprep.subr.bf16.mxu0 %v1469
        %3479 = vmatpush1.bf16.msra.mxu0 %v1468
        %3480 = vmatprep.subr.bf16.mxu0 %v1501
        %3481 = vmatpush1.bf16.msra.mxu0 %v1500
        %3482 = vmatprep.subr.bf16.mxu0 %v1533
        %3483 = vmatpush1.bf16.msra.mxu0 %v1532
        %3484 = vmatprep.subr.bf16.mxu0 %v1565
        %3485 = vmatpush1.bf16.msra.mxu0 %v1564
        %3486 = vmatprep.subr.bf16.mxu0 %v1597
        %3487 = vmatpush1.bf16.msra.mxu0 %v1596
        %3488 = vmatprep.subr.bf16.mxu0 %v1629
        %3489 = vmatpush1.bf16.msra.mxu0 %v1628
        %3490 = vmatprep.subr.bf16.mxu0 %v1661
        %3491 = vmatpush1.bf16.msra.mxu0 %v1660
        %3492 = vmatprep.subr.bf16.mxu0 0
        %3493 = vmatpush1.bf16.msra.mxu0 0
        %3494 = vmatprep.subr.bf16.mxu0 0
        %3495 = vmatpush1.bf16.msra.mxu0 0
        %3496 = vmatprep.subr.bf16.mxu0 0
        %3497 = vmatpush1.bf16.msra.mxu0 0
        %3498 = vmatprep.subr.bf16.mxu0 0
        %3499 = vmatpush1.bf16.msra.mxu0 0
        %3500 = vmatprep.subr.bf16.mxu0 0
        %3501 = vmatpush1.bf16.msra.mxu0 0
        %3502 = vmatprep.subr.bf16.mxu0 0
        %3503 = vmatpush1.bf16.msra.mxu0 0
        %3504 = vmatprep.subr.bf16.mxu0 0
        %3505 = vmatpush1.bf16.msra.mxu0 0
        %3506 = vmatprep.subr.bf16.mxu0 0
        %3507 = vmatpush1.bf16.msra.mxu0 0
        %3508 = vmatprep.mubr.bf16.mxu0 0
        %3509 = vmatmul.mubr.bf16.gmra.mrb[0].mxu0 %v620
        %v3510 = vpop.f32.mrb[0].mxu0
        %v3511 = vadd.f32 0.0, %v3510
        %v3512 = vpop.f32.mrb[0].mxu0
        %v3513 = vadd.f32 0.0, %v3512
        %v3514 = vpop.f32.mrb[0].mxu0
        %v3515 = vadd.f32 0.0, %v3514
        %v3516 = vpop.f32.mrb[0].mxu0
        %v3517 = vadd.f32 0.0, %v3516
        %3518 = vmatprep.mubr.bf16.mxu0 0
        %3519 = vmatmul.mubr.bf16.gmra.mrb[0].mxu0 %v621
        %v3520 = vpop.f32.mrb[0].mxu0
        %v3521 = vadd.f32 0.0, %v3520
        %v3522 = vpop.f32.mrb[0].mxu0
        %v3523 = vadd.f32 0.0, %v3522
        %v3524 = vpop.f32.mrb[0].mxu0
        %v3525 = vadd.f32 0.0, %v3524
        %v3526 = vpop.f32.mrb[0].mxu0
        %v3527 = vadd.f32 0.0, %v3526
        %3528 = vmatprep.mubr.bf16.mxu0 0
        %3529 = vmatmul.mubr.bf16.gmra.mrb[0].mxu0 %v622
        %v3530 = vpop.f32.mrb[0].mxu0
        %v3531 = vadd.f32 0.0, %v3530
        %v3532 = vpop.f32.mrb[0].mxu0
        %v3533 = vadd.f32 0.0, %v3532
        %v3534 = vpop.f32.mrb[0].mxu0
        %v3535 = vadd.f32 0.0, %v3534
        %v3536 = vpop.f32.mrb[0].mxu0
        %v3537 = vadd.f32 0.0, %v3536
        %3538 = vmatprep.mubr.bf16.mxu0 0
        %3539 = vmatmul.mubr.bf16.gmra.mrb[0].mxu0 %v623
        %v3540 = vpop.f32.mrb[0].mxu0
        %v3541 = vadd.f32 0.0, %v3540
        %v3542 = vpop.f32.mrb[0].mxu0
        %v3543 = vadd.f32 0.0, %v3542
        %v3544 = vpop.f32.mrb[0].mxu0
        %v3545 = vadd.f32 0.0, %v3544
        %v3546 = vpop.f32.mrb[0].mxu0
        %v3547 = vadd.f32 0.0, %v3546
        %3548 = vmatprep.mubr.bf16.mxu0 0
        %3549 = vmatmul.mubr.bf16.gmra.mrb[0].mxu0 %v624
        %v3550 = vpop.f32.mrb[0].mxu0
        %v3551 = vadd.f32 0.0, %v3550
        %v3552 = vpop.f32.mrb[0].mxu0
        %v3553 = vadd.f32 0.0, %v3552
        %v3554 = vpop.f32.mrb[0].mxu0
        %v3555 = vadd.f32 0.0, %v3554
        %v3556 = vpop.f32.mrb[0].mxu0
        %v3557 = vadd.f32 0.0, %v3556
        %3558 = vmatprep.mubr.bf16.mxu0 0
        %3559 = vmatmul.mubr.bf16.gmra.mrb[0].mxu0 %v625
        %v3560 = vpop.f32.mrb[0].mxu0
        %v3561 = vadd.f32 0.0, %v3560
        %v3562 = vpop.f32.mrb[0].mxu0
        %v3563 = vadd.f32 0.0, %v3562
        %v3564 = vpop.f32.mrb[0].mxu0
        %v3565 = vadd.f32 0.0, %v3564
        %v3566 = vpop.f32.mrb[0].mxu0
        %v3567 = vadd.f32 0.0, %v3566
        %3568 = vmatprep.mubr.bf16.mxu0 0
        %3569 = vmatmul.mubr.bf16.gmra.mrb[0].mxu0 %v626
        %v3570 = vpop.f32.mrb[0].mxu0
        %v3571 = vadd.f32 0.0, %v3570
        %v3572 = vpop.f32.mrb[0].mxu0
        %v3573 = vadd.f32 0.0, %v3572
        %v3574 = vpop.f32.mrb[0].mxu0
        %v3575 = vadd.f32 0.0, %v3574
        %v3576 = vpop.f32.mrb[0].mxu0
        %v3577 = vadd.f32 0.0, %v3576
        %3578 = vmatprep.mubr.bf16.mxu0 0
        %3579 = vmatmul.mubr.bf16.gmra.mrb[0].mxu0 %v627
        %v3580 = vpop.f32.mrb[0].mxu0
        %v3581 = vadd.f32 0.0, %v3580
        %v3582 = vpop.f32.mrb[0].mxu0
        %v3583 = vadd.f32 0.0, %v3582
        %v3584 = vpop.f32.mrb[0].mxu0
        %v3585 = vadd.f32 0.0, %v3584
        %v3586 = vpop.f32.mrb[0].mxu0
        %v3587 = vadd.f32 0.0, %v3586
        %3588 = vmatprep.mubr.bf16.mxu0 0
        %3589 = vmatmul.mubr.bf16.gmra.mrb[0].mxu0 %v628
        %v3590 = vpop.f32.mrb[0].mxu0
        %v3591 = vadd.f32 0.0, %v3590
        %v3592 = vpop.f32.mrb[0].mxu0
        %v3593 = vadd.f32 0.0, %v3592
        %v3594 = vpop.f32.mrb[0].mxu0
        %v3595 = vadd.f32 0.0, %v3594
        %v3596 = vpop.f32.mrb[0].mxu0
        %v3597 = vadd.f32 0.0, %v3596
        %3598 = vmatprep.mubr.bf16.mxu0 0
        %3599 = vmatmul.mubr.bf16.gmra.mrb[0].mxu0 %v629
        %v3600 = vpop.f32.mrb[0].mxu0
        %v3601 = vadd.f32 0.0, %v3600
        %v3602 = vpop.f32.mrb[0].mxu0
        %v3603 = vadd.f32 0.0, %v3602
        %v3604 = vpop.f32.mrb[0].mxu0
        %v3605 = vadd.f32 0.0, %v3604
        %v3606 = vpop.f32.mrb[0].mxu0
        %v3607 = vadd.f32 0.0, %v3606
        %3608 = vmatprep.mubr.bf16.mxu0 0
        %3609 = vmatmul.mubr.bf16.gmra.mrb[0].mxu0 %v630
        %v3610 = vpop.f32.mrb[0].mxu0
        %v3611 = vadd.f32 0.0, %v3610
        %v3612 = vpop.f32.mrb[0].mxu0
        %v3613 = vadd.f32 0.0, %v3612
        %v3614 = vpop.f32.mrb[0].mxu0
        %v3615 = vadd.f32 0.0, %v3614
        %v3616 = vpop.f32.mrb[0].mxu0
        %v3617 = vadd.f32 0.0, %v3616
        %3618 = vmatprep.mubr.bf16.mxu0 0
        %3619 = vmatmul.mubr.bf16.gmra.mrb[0].mxu0 %v631
        %v3620 = vpop.f32.mrb[0].mxu0
        %v3621 = vadd.f32 0.0, %v3620
        %v3622 = vpop.f32.mrb[0].mxu0
        %v3623 = vadd.f32 0.0, %v3622
        %v3624 = vpop.f32.mrb[0].mxu0
        %v3625 = vadd.f32 0.0, %v3624
        %v3626 = vpop.f32.mrb[0].mxu0
        %v3627 = vadd.f32 0.0, %v3626
        %3628 = vmatprep.mubr.bf16.mxu0 0
        %3629 = vmatmul.mubr.bf16.gmra.mrb[0].mxu0 %v632
        %v3630 = vpop.f32.mrb[0].mxu0
        %v3631 = vadd.f32 0.0, %v3630
        %v3632 = vpop.f32.mrb[0].mxu0
        %v3633 = vadd.f32 0.0, %v3632
        %v3634 = vpop.f32.mrb[0].mxu0
        %v3635 = vadd.f32 0.0, %v3634
        %v3636 = vpop.f32.mrb[0].mxu0
        %v3637 = vadd.f32 0.0, %v3636
        %3638 = vmatprep.mubr.bf16.mxu0 0
        %3639 = vmatmul.mubr.bf16.gmra.mrb[0].mxu0 %v633
        %v3640 = vpop.f32.mrb[0].mxu0
        %v3641 = vadd.f32 0.0, %v3640
        %v3642 = vpop.f32.mrb[0].mxu0
        %v3643 = vadd.f32 0.0, %v3642
        %v3644 = vpop.f32.mrb[0].mxu0
        %v3645 = vadd.f32 0.0, %v3644
        %v3646 = vpop.f32.mrb[0].mxu0
        %v3647 = vadd.f32 0.0, %v3646
        %3648 = vmatprep.mubr.bf16.mxu0 0
        %3649 = vmatmul.mubr.bf16.gmra.mrb[0].mxu0 %v634
        %v3650 = vpop.f32.mrb[0].mxu0
        %v3651 = vadd.f32 0.0, %v3650
        %v3652 = vpop.f32.mrb[0].mxu0
        %v3653 = vadd.f32 0.0, %v3652
        %v3654 = vpop.f32.mrb[0].mxu0
        %v3655 = vadd.f32 0.0, %v3654
        %v3656 = vpop.f32.mrb[0].mxu0
        %v3657 = vadd.f32 0.0, %v3656
        %3658 = vmatprep.mubr.bf16.mxu0 0
        %3659 = vmatmul.mubr.bf16.gmra.mrb[0].mxu0 %v635
        %v3660 = vpop.f32.mrb[0].mxu0
        %v3661 = vadd.f32 0.0, %v3660
        %v3662 = vpop.f32.mrb[0].mxu0
        %v3663 = vadd.f32 0.0, %v3662
        %v3664 = vpop.f32.mrb[0].mxu0
        %v3665 = vadd.f32 0.0, %v3664
        %v3666 = vpop.f32.mrb[0].mxu0
        %v3667 = vadd.f32 0.0, %v3666
        %3668 = vdwg.mxu0
        %3669 = vmatprep.subr.bf16.mxu0 %v1439
        %3670 = vmatpush1.bf16.msra.mxu0 %v1438
        %3671 = vmatprep.subr.bf16.mxu0 %v1471
        %3672 = vmatpush1.bf16.msra.mxu0 %v1470
        %3673 = vmatprep.subr.bf16.mxu0 %v1503
        %3674 = vmatpush1.bf16.msra.mxu0 %v1502
        %3675 = vmatprep.subr.bf16.mxu0 %v1535
        %3676 = vmatpush1.bf16.msra.mxu0 %v1534
        %3677 = vmatprep.subr.bf16.mxu0 %v1567
        %3678 = vmatpush1.bf16.msra.mxu0 %v1566
        %3679 = vmatprep.subr.bf16.mxu0 %v1599
        %3680 = vmatpush1.bf16.msra.mxu0 %v1598
        %3681 = vmatprep.subr.bf16.mxu0 %v1631
        %3682 = vmatpush1.bf16.msra.mxu0 %v1630
        %3683 = vmatprep.subr.bf16.mxu0 %v1663
        %3684 = vmatpush1.bf16.msra.mxu0 %v1662
        %3685 = vmatprep.subr.bf16.mxu0 0
        %3686 = vmatpush1.bf16.msra.mxu0 0
        %3687 = vmatprep.subr.bf16.mxu0 0
        %3688 = vmatpush1.bf16.msra.mxu0 0
        %3689 = vmatprep.subr.bf16.mxu0 0
        %3690 = vmatpush1.bf16.msra.mxu0 0
        %3691 = vmatprep.subr.bf16.mxu0 0
        %3692 = vmatpush1.bf16.msra.mxu0 0
        %3693 = vmatprep.subr.bf16.mxu0 0
        %3694 = vmatpush1.bf16.msra.mxu0 0
        %3695 = vmatprep.subr.bf16.mxu0 0
        %3696 = vmatpush1.bf16.msra.mxu0 0
        %3697 = vmatprep.subr.bf16.mxu0 0
        %3698 = vmatpush1.bf16.msra.mxu0 0
        %3699 = vmatprep.subr.bf16.mxu0 0
        %3700 = vmatpush1.bf16.msra.mxu0 0
        %3701 = vmatprep.mubr.bf16.mxu0 0
        %3702 = vmatmul.mubr.bf16.gmra.mrb[0].mxu0 %v620
        %v3703 = vpop.f32.mrb[0].mxu0
        %v3704 = vadd.f32 0.0, %v3703
        %v3705 = vpop.f32.mrb[0].mxu0
        %v3706 = vadd.f32 0.0, %v3705
        %v3707 = vpop.f32.mrb[0].mxu0
        %v3708 = vadd.f32 0.0, %v3707
        %v3709 = vpop.f32.mrb[0].mxu0
        %v3710 = vadd.f32 0.0, %v3709
        %3711 = vmatprep.mubr.bf16.mxu0 0
        %3712 = vmatmul.mubr.bf16.gmra.mrb[0].mxu0 %v621
        %v3713 = vpop.f32.mrb[0].mxu0
        %v3714 = vadd.f32 0.0, %v3713
        %v3715 = vpop.f32.mrb[0].mxu0
        %v3716 = vadd.f32 0.0, %v3715
        %v3717 = vpop.f32.mrb[0].mxu0
        %v3718 = vadd.f32 0.0, %v3717
        %v3719 = vpop.f32.mrb[0].mxu0
        %v3720 = vadd.f32 0.0, %v3719
        %3721 = vmatprep.mubr.bf16.mxu0 0
        %3722 = vmatmul.mubr.bf16.gmra.mrb[0].mxu0 %v622
        %v3723 = vpop.f32.mrb[0].mxu0
        %v3724 = vadd.f32 0.0, %v3723
        %v3725 = vpop.f32.mrb[0].mxu0
        %v3726 = vadd.f32 0.0, %v3725
        %v3727 = vpop.f32.mrb[0].mxu0
        %v3728 = vadd.f32 0.0, %v3727
        %v3729 = vpop.f32.mrb[0].mxu0
        %v3730 = vadd.f32 0.0, %v3729
        %3731 = vmatprep.mubr.bf16.mxu0 0
        %3732 = vmatmul.mubr.bf16.gmra.mrb[0].mxu0 %v623
        %v3733 = vpop.f32.mrb[0].mxu0
        %v3734 = vadd.f32 0.0, %v3733
        %v3735 = vpop.f32.mrb[0].mxu0
        %v3736 = vadd.f32 0.0, %v3735
        %v3737 = vpop.f32.mrb[0].mxu0
        %v3738 = vadd.f32 0.0, %v3737
        %v3739 = vpop.f32.mrb[0].mxu0
        %v3740 = vadd.f32 0.0, %v3739
        %3741 = vmatprep.mubr.bf16.mxu0 0
        %3742 = vmatmul.mubr.bf16.gmra.mrb[0].mxu0 %v624
        %v3743 = vpop.f32.mrb[0].mxu0
        %v3744 = vadd.f32 0.0, %v3743
        %v3745 = vpop.f32.mrb[0].mxu0
        %v3746 = vadd.f32 0.0, %v3745
        %v3747 = vpop.f32.mrb[0].mxu0
        %v3748 = vadd.f32 0.0, %v3747
        %v3749 = vpop.f32.mrb[0].mxu0
        %v3750 = vadd.f32 0.0, %v3749
        %3751 = vmatprep.mubr.bf16.mxu0 0
        %3752 = vmatmul.mubr.bf16.gmra.mrb[0].mxu0 %v625
        %v3753 = vpop.f32.mrb[0].mxu0
        %v3754 = vadd.f32 0.0, %v3753
        %v3755 = vpop.f32.mrb[0].mxu0
        %v3756 = vadd.f32 0.0, %v3755
        %v3757 = vpop.f32.mrb[0].mxu0
        %v3758 = vadd.f32 0.0, %v3757
        %v3759 = vpop.f32.mrb[0].mxu0
        %v3760 = vadd.f32 0.0, %v3759
        %3761 = vmatprep.mubr.bf16.mxu0 0
        %3762 = vmatmul.mubr.bf16.gmra.mrb[0].mxu0 %v626
        %v3763 = vpop.f32.mrb[0].mxu0
        %v3764 = vadd.f32 0.0, %v3763
        %v3765 = vpop.f32.mrb[0].mxu0
        %v3766 = vadd.f32 0.0, %v3765
        %v3767 = vpop.f32.mrb[0].mxu0
        %v3768 = vadd.f32 0.0, %v3767
        %v3769 = vpop.f32.mrb[0].mxu0
        %v3770 = vadd.f32 0.0, %v3769
        %3771 = vmatprep.mubr.bf16.mxu0 0
        %3772 = vmatmul.mubr.bf16.gmra.mrb[0].mxu0 %v627
        %v3773 = vpop.f32.mrb[0].mxu0
        %v3774 = vadd.f32 0.0, %v3773
        %v3775 = vpop.f32.mrb[0].mxu0
        %v3776 = vadd.f32 0.0, %v3775
        %v3777 = vpop.f32.mrb[0].mxu0
        %v3778 = vadd.f32 0.0, %v3777
        %v3779 = vpop.f32.mrb[0].mxu0
        %v3780 = vadd.f32 0.0, %v3779
        %3781 = vmatprep.mubr.bf16.mxu0 0
        %3782 = vmatmul.mubr.bf16.gmra.mrb[0].mxu0 %v628
        %v3783 = vpop.f32.mrb[0].mxu0
        %v3784 = vadd.f32 0.0, %v3783
        %v3785 = vpop.f32.mrb[0].mxu0
        %v3786 = vadd.f32 0.0, %v3785
        %v3787 = vpop.f32.mrb[0].mxu0
        %v3788 = vadd.f32 0.0, %v3787
        %v3789 = vpop.f32.mrb[0].mxu0
        %v3790 = vadd.f32 0.0, %v3789
        %3791 = vmatprep.mubr.bf16.mxu0 0
        %3792 = vmatmul.mubr.bf16.gmra.mrb[0].mxu0 %v629
        %v3793 = vpop.f32.mrb[0].mxu0
        %v3794 = vadd.f32 0.0, %v3793
        %v3795 = vpop.f32.mrb[0].mxu0
        %v3796 = vadd.f32 0.0, %v3795
        %v3797 = vpop.f32.mrb[0].mxu0
        %v3798 = vadd.f32 0.0, %v3797
        %v3799 = vpop.f32.mrb[0].mxu0
        %v3800 = vadd.f32 0.0, %v3799
        %3801 = vmatprep.mubr.bf16.mxu0 0
        %3802 = vmatmul.mubr.bf16.gmra.mrb[0].mxu0 %v630
        %v3803 = vpop.f32.mrb[0].mxu0
        %v3804 = vadd.f32 0.0, %v3803
        %v3805 = vpop.f32.mrb[0].mxu0
        %v3806 = vadd.f32 0.0, %v3805
        %v3807 = vpop.f32.mrb[0].mxu0
        %v3808 = vadd.f32 0.0, %v3807
        %v3809 = vpop.f32.mrb[0].mxu0
        %v3810 = vadd.f32 0.0, %v3809
        %3811 = vmatprep.mubr.bf16.mxu0 0
        %3812 = vmatmul.mubr.bf16.gmra.mrb[0].mxu0 %v631
        %v3813 = vpop.f32.mrb[0].mxu0
        %v3814 = vadd.f32 0.0, %v3813
        %v3815 = vpop.f32.mrb[0].mxu0
        %v3816 = vadd.f32 0.0, %v3815
        %v3817 = vpop.f32.mrb[0].mxu0
        %v3818 = vadd.f32 0.0, %v3817
        %v3819 = vpop.f32.mrb[0].mxu0
        %v3820 = vadd.f32 0.0, %v3819
        %3821 = vmatprep.mubr.bf16.mxu0 0
        %3822 = vmatmul.mubr.bf16.gmra.mrb[0].mxu0 %v632
        %v3823 = vpop.f32.mrb[0].mxu0
        %v3824 = vadd.f32 0.0, %v3823
        %v3825 = vpop.f32.mrb[0].mxu0
        %v3826 = vadd.f32 0.0, %v3825
        %v3827 = vpop.f32.mrb[0].mxu0
        %v3828 = vadd.f32 0.0, %v3827
        %v3829 = vpop.f32.mrb[0].mxu0
        %v3830 = vadd.f32 0.0, %v3829
        %3831 = vmatprep.mubr.bf16.mxu0 0
        %3832 = vmatmul.mubr.bf16.gmra.mrb[0].mxu0 %v633
        %v3833 = vpop.f32.mrb[0].mxu0
        %v3834 = vadd.f32 0.0, %v3833
        %v3835 = vpop.f32.mrb[0].mxu0
        %v3836 = vadd.f32 0.0, %v3835
        %v3837 = vpop.f32.mrb[0].mxu0
        %v3838 = vadd.f32 0.0, %v3837
        %v3839 = vpop.f32.mrb[0].mxu0
        %v3840 = vadd.f32 0.0, %v3839
        %3841 = vmatprep.mubr.bf16.mxu0 0
        %3842 = vmatmul.mubr.bf16.gmra.mrb[0].mxu0 %v634
        %v3843 = vpop.f32.mrb[0].mxu0
        %v3844 = vadd.f32 0.0, %v3843
        %v3845 = vpop.f32.mrb[0].mxu0
        %v3846 = vadd.f32 0.0, %v3845
        %v3847 = vpop.f32.mrb[0].mxu0
        %v3848 = vadd.f32 0.0, %v3847
        %v3849 = vpop.f32.mrb[0].mxu0
        %v3850 = vadd.f32 0.0, %v3849
        %3851 = vmatprep.mubr.bf16.mxu0 0
        %3852 = vmatmul.mubr.bf16.gmra.mrb[0].mxu0 %v635
        %v3853 = vpop.f32.mrb[0].mxu0
        %v3854 = vadd.f32 0.0, %v3853
        %v3855 = vpop.f32.mrb[0].mxu0
        %v3856 = vadd.f32 0.0, %v3855
        %v3857 = vpop.f32.mrb[0].mxu0
        %v3858 = vadd.f32 0.0, %v3857
        %v3859 = vpop.f32.mrb[0].mxu0
        %v3860 = vadd.f32 0.0, %v3859
        %3861 = vdwg.mxu0
        %3862 = vmatprep.subr.bf16.mxu0 %v1441
        %3863 = vmatpush1.bf16.msra.mxu0 %v1440
        %3864 = vmatprep.subr.bf16.mxu0 %v1473
        %3865 = vmatpush1.bf16.msra.mxu0 %v1472
        %3866 = vmatprep.subr.bf16.mxu0 %v1505
        %3867 = vmatpush1.bf16.msra.mxu0 %v1504
        %3868 = vmatprep.subr.bf16.mxu0 %v1537
        %3869 = vmatpush1.bf16.msra.mxu0 %v1536
        %3870 = vmatprep.subr.bf16.mxu0 %v1569
        %3871 = vmatpush1.bf16.msra.mxu0 %v1568
        %3872 = vmatprep.subr.bf16.mxu0 %v1601
        %3873 = vmatpush1.bf16.msra.mxu0 %v1600
        %3874 = vmatprep.subr.bf16.mxu0 %v1633
        %3875 = vmatpush1.bf16.msra.mxu0 %v1632
        %3876 = vmatprep.subr.bf16.mxu0 %v1665
        %3877 = vmatpush1.bf16.msra.mxu0 %v1664
        %3878 = vmatprep.subr.bf16.mxu0 0
        %3879 = vmatpush1.bf16.msra.mxu0 0
        %3880 = vmatprep.subr.bf16.mxu0 0
        %3881 = vmatpush1.bf16.msra.mxu0 0
        %3882 = vmatprep.subr.bf16.mxu0 0
        %3883 = vmatpush1.bf16.msra.mxu0 0
        %3884 = vmatprep.subr.bf16.mxu0 0
        %3885 = vmatpush1.bf16.msra.mxu0 0
        %3886 = vmatprep.subr.bf16.mxu0 0
        %3887 = vmatpush1.bf16.msra.mxu0 0
        %3888 = vmatprep.subr.bf16.mxu0 0
        %3889 = vmatpush1.bf16.msra.mxu0 0
        %3890 = vmatprep.subr.bf16.mxu0 0
        %3891 = vmatpush1.bf16.msra.mxu0 0
        %3892 = vmatprep.subr.bf16.mxu0 0
        %3893 = vmatpush1.bf16.msra.mxu0 0
        %3894 = vmatprep.mubr.bf16.mxu0 0
        %3895 = vmatmul.mubr.bf16.gmra.mrb[0].mxu0 %v620
        %v3896 = vpop.f32.mrb[0].mxu0
        %v3897 = vadd.f32 0.0, %v3896
        %v3898 = vpop.f32.mrb[0].mxu0
        %v3899 = vadd.f32 0.0, %v3898
        %v3900 = vpop.f32.mrb[0].mxu0
        %v3901 = vadd.f32 0.0, %v3900
        %v3902 = vpop.f32.mrb[0].mxu0
        %v3903 = vadd.f32 0.0, %v3902
        %3904 = vmatprep.mubr.bf16.mxu0 0
        %3905 = vmatmul.mubr.bf16.gmra.mrb[0].mxu0 %v621
        %v3906 = vpop.f32.mrb[0].mxu0
        %v3907 = vadd.f32 0.0, %v3906
        %v3908 = vpop.f32.mrb[0].mxu0
        %v3909 = vadd.f32 0.0, %v3908
        %v3910 = vpop.f32.mrb[0].mxu0
        %v3911 = vadd.f32 0.0, %v3910
        %v3912 = vpop.f32.mrb[0].mxu0
        %v3913 = vadd.f32 0.0, %v3912
        %3914 = vmatprep.mubr.bf16.mxu0 0
        %3915 = vmatmul.mubr.bf16.gmra.mrb[0].mxu0 %v622
        %v3916 = vpop.f32.mrb[0].mxu0
        %v3917 = vadd.f32 0.0, %v3916
        %v3918 = vpop.f32.mrb[0].mxu0
        %v3919 = vadd.f32 0.0, %v3918
        %v3920 = vpop.f32.mrb[0].mxu0
        %v3921 = vadd.f32 0.0, %v3920
        %v3922 = vpop.f32.mrb[0].mxu0
        %v3923 = vadd.f32 0.0, %v3922
        %3924 = vmatprep.mubr.bf16.mxu0 0
        %3925 = vmatmul.mubr.bf16.gmra.mrb[0].mxu0 %v623
        %v3926 = vpop.f32.mrb[0].mxu0
        %v3927 = vadd.f32 0.0, %v3926
        %v3928 = vpop.f32.mrb[0].mxu0
        %v3929 = vadd.f32 0.0, %v3928
        %v3930 = vpop.f32.mrb[0].mxu0
        %v3931 = vadd.f32 0.0, %v3930
        %v3932 = vpop.f32.mrb[0].mxu0
        %v3933 = vadd.f32 0.0, %v3932
        %3934 = vmatprep.mubr.bf16.mxu0 0
        %3935 = vmatmul.mubr.bf16.gmra.mrb[0].mxu0 %v624
        %v3936 = vpop.f32.mrb[0].mxu0
        %v3937 = vadd.f32 0.0, %v3936
        %v3938 = vpop.f32.mrb[0].mxu0
        %v3939 = vadd.f32 0.0, %v3938
        %v3940 = vpop.f32.mrb[0].mxu0
        %v3941 = vadd.f32 0.0, %v3940
        %v3942 = vpop.f32.mrb[0].mxu0
        %v3943 = vadd.f32 0.0, %v3942
        %3944 = vmatprep.mubr.bf16.mxu0 0
        %3945 = vmatmul.mubr.bf16.gmra.mrb[0].mxu0 %v625
        %v3946 = vpop.f32.mrb[0].mxu0
        %v3947 = vadd.f32 0.0, %v3946
        %v3948 = vpop.f32.mrb[0].mxu0
        %v3949 = vadd.f32 0.0, %v3948
        %v3950 = vpop.f32.mrb[0].mxu0
        %v3951 = vadd.f32 0.0, %v3950
        %v3952 = vpop.f32.mrb[0].mxu0
        %v3953 = vadd.f32 0.0, %v3952
        %3954 = vmatprep.mubr.bf16.mxu0 0
        %3955 = vmatmul.mubr.bf16.gmra.mrb[0].mxu0 %v626
        %v3956 = vpop.f32.mrb[0].mxu0
        %v3957 = vadd.f32 0.0, %v3956
        %v3958 = vpop.f32.mrb[0].mxu0
        %v3959 = vadd.f32 0.0, %v3958
        %v3960 = vpop.f32.mrb[0].mxu0
        %v3961 = vadd.f32 0.0, %v3960
        %v3962 = vpop.f32.mrb[0].mxu0
        %v3963 = vadd.f32 0.0, %v3962
        %3964 = vmatprep.mubr.bf16.mxu0 0
        %3965 = vmatmul.mubr.bf16.gmra.mrb[0].mxu0 %v627
        %v3966 = vpop.f32.mrb[0].mxu0
        %v3967 = vadd.f32 0.0, %v3966
        %v3968 = vpop.f32.mrb[0].mxu0
        %v3969 = vadd.f32 0.0, %v3968
        %v3970 = vpop.f32.mrb[0].mxu0
        %v3971 = vadd.f32 0.0, %v3970
        %v3972 = vpop.f32.mrb[0].mxu0
        %v3973 = vadd.f32 0.0, %v3972
        %3974 = vmatprep.mubr.bf16.mxu0 0
        %3975 = vmatmul.mubr.bf16.gmra.mrb[0].mxu0 %v628
        %v3976 = vpop.f32.mrb[0].mxu0
        %v3977 = vadd.f32 0.0, %v3976
        %v3978 = vpop.f32.mrb[0].mxu0
        %v3979 = vadd.f32 0.0, %v3978
        %v3980 = vpop.f32.mrb[0].mxu0
        %v3981 = vadd.f32 0.0, %v3980
        %v3982 = vpop.f32.mrb[0].mxu0
        %v3983 = vadd.f32 0.0, %v3982
        %3984 = vmatprep.mubr.bf16.mxu0 0
        %3985 = vmatmul.mubr.bf16.gmra.mrb[0].mxu0 %v629
        %v3986 = vpop.f32.mrb[0].mxu0
        %v3987 = vadd.f32 0.0, %v3986
        %v3988 = vpop.f32.mrb[0].mxu0
        %v3989 = vadd.f32 0.0, %v3988
        %v3990 = vpop.f32.mrb[0].mxu0
        %v3991 = vadd.f32 0.0, %v3990
        %v3992 = vpop.f32.mrb[0].mxu0
        %v3993 = vadd.f32 0.0, %v3992
        %3994 = vmatprep.mubr.bf16.mxu0 0
        %3995 = vmatmul.mubr.bf16.gmra.mrb[0].mxu0 %v630
        %v3996 = vpop.f32.mrb[0].mxu0
        %v3997 = vadd.f32 0.0, %v3996
        %v3998 = vpop.f32.mrb[0].mxu0
        %v3999 = vadd.f32 0.0, %v3998
        %v4000 = vpop.f32.mrb[0].mxu0
        %v4001 = vadd.f32 0.0, %v4000
        %v4002 = vpop.f32.mrb[0].mxu0
        %v4003 = vadd.f32 0.0, %v4002
        %4004 = vmatprep.mubr.bf16.mxu0 0
        %4005 = vmatmul.mubr.bf16.gmra.mrb[0].mxu0 %v631
        %v4006 = vpop.f32.mrb[0].mxu0
        %v4007 = vadd.f32 0.0, %v4006
        %v4008 = vpop.f32.mrb[0].mxu0
        %v4009 = vadd.f32 0.0, %v4008
        %v4010 = vpop.f32.mrb[0].mxu0
        %v4011 = vadd.f32 0.0, %v4010
        %v4012 = vpop.f32.mrb[0].mxu0
        %v4013 = vadd.f32 0.0, %v4012
        %4014 = vmatprep.mubr.bf16.mxu0 0
        %4015 = vmatmul.mubr.bf16.gmra.mrb[0].mxu0 %v632
        %v4016 = vpop.f32.mrb[0].mxu0
        %v4017 = vadd.f32 0.0, %v4016
        %v4018 = vpop.f32.mrb[0].mxu0
        %v4019 = vadd.f32 0.0, %v4018
        %v4020 = vpop.f32.mrb[0].mxu0
        %v4021 = vadd.f32 0.0, %v4020
        %v4022 = vpop.f32.mrb[0].mxu0
        %v4023 = vadd.f32 0.0, %v4022
        %4024 = vmatprep.mubr.bf16.mxu0 0
        %4025 = vmatmul.mubr.bf16.gmra.mrb[0].mxu0 %v633
        %v4026 = vpop.f32.mrb[0].mxu0
        %v4027 = vadd.f32 0.0, %v4026
        %v4028 = vpop.f32.mrb[0].mxu0
        %v4029 = vadd.f32 0.0, %v4028
        %v4030 = vpop.f32.mrb[0].mxu0
        %v4031 = vadd.f32 0.0, %v4030
        %v4032 = vpop.f32.mrb[0].mxu0
        %v4033 = vadd.f32 0.0, %v4032
        %4034 = vmatprep.mubr.bf16.mxu0 0
        %4035 = vmatmul.mubr.bf16.gmra.mrb[0].mxu0 %v634
        %v4036 = vpop.f32.mrb[0].mxu0
        %v4037 = vadd.f32 0.0, %v4036
        %v4038 = vpop.f32.mrb[0].mxu0
        %v4039 = vadd.f32 0.0, %v4038
        %v4040 = vpop.f32.mrb[0].mxu0
        %v4041 = vadd.f32 0.0, %v4040
        %v4042 = vpop.f32.mrb[0].mxu0
        %v4043 = vadd.f32 0.0, %v4042
        %4044 = vmatprep.mubr.bf16.mxu0 0
        %4045 = vmatmul.mubr.bf16.gmra.mrb[0].mxu0 %v635
        %v4046 = vpop.f32.mrb[0].mxu0
        %v4047 = vadd.f32 0.0, %v4046
        %v4048 = vpop.f32.mrb[0].mxu0
        %v4049 = vadd.f32 0.0, %v4048
        %v4050 = vpop.f32.mrb[0].mxu0
        %v4051 = vadd.f32 0.0, %v4050
        %v4052 = vpop.f32.mrb[0].mxu0
        %v4053 = vadd.f32 0.0, %v4052
        %4054 = vdwg.mxu0
        %4055 = vmatprep.subr.bf16.mxu0 %v1443
        %4056 = vmatpush1.bf16.msra.mxu0 %v1442
        %4057 = vmatprep.subr.bf16.mxu0 %v1475
        %4058 = vmatpush1.bf16.msra.mxu0 %v1474
        %4059 = vmatprep.subr.bf16.mxu0 %v1507
        %4060 = vmatpush1.bf16.msra.mxu0 %v1506
        %4061 = vmatprep.subr.bf16.mxu0 %v1539
        %4062 = vmatpush1.bf16.msra.mxu0 %v1538
        %4063 = vmatprep.subr.bf16.mxu0 %v1571
        %4064 = vmatpush1.bf16.msra.mxu0 %v1570
        %4065 = vmatprep.subr.bf16.mxu0 %v1603
        %4066 = vmatpush1.bf16.msra.mxu0 %v1602
        %4067 = vmatprep.subr.bf16.mxu0 %v1635
        %4068 = vmatpush1.bf16.msra.mxu0 %v1634
        %4069 = vmatprep.subr.bf16.mxu0 %v1667
        %4070 = vmatpush1.bf16.msra.mxu0 %v1666
        %4071 = vmatprep.subr.bf16.mxu0 0
        %4072 = vmatpush1.bf16.msra.mxu0 0
        %4073 = vmatprep.subr.bf16.mxu0 0
        %4074 = vmatpush1.bf16.msra.mxu0 0
        %4075 = vmatprep.subr.bf16.mxu0 0
        %4076 = vmatpush1.bf16.msra.mxu0 0
        %4077 = vmatprep.subr.bf16.mxu0 0
        %4078 = vmatpush1.bf16.msra.mxu0 0
        %4079 = vmatprep.subr.bf16.mxu0 0
        %4080 = vmatpush1.bf16.msra.mxu0 0
        %4081 = vmatprep.subr.bf16.mxu0 0
        %4082 = vmatpush1.bf16.msra.mxu0 0
        %4083 = vmatprep.subr.bf16.mxu0 0
        %4084 = vmatpush1.bf16.msra.mxu0 0
        %4085 = vmatprep.subr.bf16.mxu0 0
        %4086 = vmatpush1.bf16.msra.mxu0 0
        %4087 = vmatprep.mubr.bf16.mxu0 0
        %4088 = vmatmul.mubr.bf16.gmra.mrb[0].mxu0 %v620
        %v4089 = vpop.f32.mrb[0].mxu0
        %v4090 = vadd.f32 0.0, %v4089
        %v4091 = vpop.f32.mrb[0].mxu0
        %v4092 = vadd.f32 0.0, %v4091
        %v4093 = vpop.f32.mrb[0].mxu0
        %v4094 = vadd.f32 0.0, %v4093
        %v4095 = vpop.f32.mrb[0].mxu0
        %v4096 = vadd.f32 0.0, %v4095
        %4097 = vmatprep.mubr.bf16.mxu0 0
        %4098 = vmatmul.mubr.bf16.gmra.mrb[0].mxu0 %v621
        %v4099 = vpop.f32.mrb[0].mxu0
        %v4100 = vadd.f32 0.0, %v4099
        %v4101 = vpop.f32.mrb[0].mxu0
        %v4102 = vadd.f32 0.0, %v4101
        %v4103 = vpop.f32.mrb[0].mxu0
        %v4104 = vadd.f32 0.0, %v4103
        %v4105 = vpop.f32.mrb[0].mxu0
        %v4106 = vadd.f32 0.0, %v4105
        %4107 = vmatprep.mubr.bf16.mxu0 0
        %4108 = vmatmul.mubr.bf16.gmra.mrb[0].mxu0 %v622
        %v4109 = vpop.f32.mrb[0].mxu0
        %v4110 = vadd.f32 0.0, %v4109
        %v4111 = vpop.f32.mrb[0].mxu0
        %v4112 = vadd.f32 0.0, %v4111
        %v4113 = vpop.f32.mrb[0].mxu0
        %v4114 = vadd.f32 0.0, %v4113
        %v4115 = vpop.f32.mrb[0].mxu0
        %v4116 = vadd.f32 0.0, %v4115
        %4117 = vmatprep.mubr.bf16.mxu0 0
        %4118 = vmatmul.mubr.bf16.gmra.mrb[0].mxu0 %v623
        %v4119 = vpop.f32.mrb[0].mxu0
        %v4120 = vadd.f32 0.0, %v4119
        %v4121 = vpop.f32.mrb[0].mxu0
        %v4122 = vadd.f32 0.0, %v4121
        %v4123 = vpop.f32.mrb[0].mxu0
        %v4124 = vadd.f32 0.0, %v4123
        %v4125 = vpop.f32.mrb[0].mxu0
        %v4126 = vadd.f32 0.0, %v4125
        %4127 = vmatprep.mubr.bf16.mxu0 0
        %4128 = vmatmul.mubr.bf16.gmra.mrb[0].mxu0 %v624
        %v4129 = vpop.f32.mrb[0].mxu0
        %v4130 = vadd.f32 0.0, %v4129
        %v4131 = vpop.f32.mrb[0].mxu0
        %v4132 = vadd.f32 0.0, %v4131
        %v4133 = vpop.f32.mrb[0].mxu0
        %v4134 = vadd.f32 0.0, %v4133
        %v4135 = vpop.f32.mrb[0].mxu0
        %v4136 = vadd.f32 0.0, %v4135
        %4137 = vmatprep.mubr.bf16.mxu0 0
        %4138 = vmatmul.mubr.bf16.gmra.mrb[0].mxu0 %v625
        %v4139 = vpop.f32.mrb[0].mxu0
        %v4140 = vadd.f32 0.0, %v4139
        %v4141 = vpop.f32.mrb[0].mxu0
        %v4142 = vadd.f32 0.0, %v4141
        %v4143 = vpop.f32.mrb[0].mxu0
        %v4144 = vadd.f32 0.0, %v4143
        %v4145 = vpop.f32.mrb[0].mxu0
        %v4146 = vadd.f32 0.0, %v4145
        %4147 = vmatprep.mubr.bf16.mxu0 0
        %4148 = vmatmul.mubr.bf16.gmra.mrb[0].mxu0 %v626
        %v4149 = vpop.f32.mrb[0].mxu0
        %v4150 = vadd.f32 0.0, %v4149
        %v4151 = vpop.f32.mrb[0].mxu0
        %v4152 = vadd.f32 0.0, %v4151
        %v4153 = vpop.f32.mrb[0].mxu0
        %v4154 = vadd.f32 0.0, %v4153
        %v4155 = vpop.f32.mrb[0].mxu0
        %v4156 = vadd.f32 0.0, %v4155
        %4157 = vmatprep.mubr.bf16.mxu0 0
        %4158 = vmatmul.mubr.bf16.gmra.mrb[0].mxu0 %v627
        %v4159 = vpop.f32.mrb[0].mxu0
        %v4160 = vadd.f32 0.0, %v4159
        %v4161 = vpop.f32.mrb[0].mxu0
        %v4162 = vadd.f32 0.0, %v4161
        %v4163 = vpop.f32.mrb[0].mxu0
        %v4164 = vadd.f32 0.0, %v4163
        %v4165 = vpop.f32.mrb[0].mxu0
        %v4166 = vadd.f32 0.0, %v4165
        %4167 = vmatprep.mubr.bf16.mxu0 0
        %4168 = vmatmul.mubr.bf16.gmra.mrb[0].mxu0 %v628
        %v4169 = vpop.f32.mrb[0].mxu0
        %v4170 = vadd.f32 0.0, %v4169
        %v4171 = vpop.f32.mrb[0].mxu0
        %v4172 = vadd.f32 0.0, %v4171
        %v4173 = vpop.f32.mrb[0].mxu0
        %v4174 = vadd.f32 0.0, %v4173
        %v4175 = vpop.f32.mrb[0].mxu0
        %v4176 = vadd.f32 0.0, %v4175
        %4177 = vmatprep.mubr.bf16.mxu0 0
        %4178 = vmatmul.mubr.bf16.gmra.mrb[0].mxu0 %v629
        %v4179 = vpop.f32.mrb[0].mxu0
        %v4180 = vadd.f32 0.0, %v4179
        %v4181 = vpop.f32.mrb[0].mxu0
        %v4182 = vadd.f32 0.0, %v4181
        %v4183 = vpop.f32.mrb[0].mxu0
        %v4184 = vadd.f32 0.0, %v4183
        %v4185 = vpop.f32.mrb[0].mxu0
        %v4186 = vadd.f32 0.0, %v4185
        %4187 = vmatprep.mubr.bf16.mxu0 0
        %4188 = vmatmul.mubr.bf16.gmra.mrb[0].mxu0 %v630
        %v4189 = vpop.f32.mrb[0].mxu0
        %v4190 = vadd.f32 0.0, %v4189
        %v4191 = vpop.f32.mrb[0].mxu0
        %v4192 = vadd.f32 0.0, %v4191
        %v4193 = vpop.f32.mrb[0].mxu0
        %v4194 = vadd.f32 0.0, %v4193
        %v4195 = vpop.f32.mrb[0].mxu0
        %v4196 = vadd.f32 0.0, %v4195
        %4197 = vmatprep.mubr.bf16.mxu0 0
        %4198 = vmatmul.mubr.bf16.gmra.mrb[0].mxu0 %v631
        %v4199 = vpop.f32.mrb[0].mxu0
        %v4200 = vadd.f32 0.0, %v4199
        %v4201 = vpop.f32.mrb[0].mxu0
        %v4202 = vadd.f32 0.0, %v4201
        %v4203 = vpop.f32.mrb[0].mxu0
        %v4204 = vadd.f32 0.0, %v4203
        %v4205 = vpop.f32.mrb[0].mxu0
        %v4206 = vadd.f32 0.0, %v4205
        %4207 = vmatprep.mubr.bf16.mxu0 0
        %4208 = vmatmul.mubr.bf16.gmra.mrb[0].mxu0 %v632
        %v4209 = vpop.f32.mrb[0].mxu0
        %v4210 = vadd.f32 0.0, %v4209
        %v4211 = vpop.f32.mrb[0].mxu0
        %v4212 = vadd.f32 0.0, %v4211
        %v4213 = vpop.f32.mrb[0].mxu0
        %v4214 = vadd.f32 0.0, %v4213
        %v4215 = vpop.f32.mrb[0].mxu0
        %v4216 = vadd.f32 0.0, %v4215
        %4217 = vmatprep.mubr.bf16.mxu0 0
        %4218 = vmatmul.mubr.bf16.gmra.mrb[0].mxu0 %v633
        %v4219 = vpop.f32.mrb[0].mxu0
        %v4220 = vadd.f32 0.0, %v4219
        %v4221 = vpop.f32.mrb[0].mxu0
        %v4222 = vadd.f32 0.0, %v4221
        %v4223 = vpop.f32.mrb[0].mxu0
        %v4224 = vadd.f32 0.0, %v4223
        %v4225 = vpop.f32.mrb[0].mxu0
        %v4226 = vadd.f32 0.0, %v4225
        %4227 = vmatprep.mubr.bf16.mxu0 0
        %4228 = vmatmul.mubr.bf16.gmra.mrb[0].mxu0 %v634
        %v4229 = vpop.f32.mrb[0].mxu0
        %v4230 = vadd.f32 0.0, %v4229
        %v4231 = vpop.f32.mrb[0].mxu0
        %v4232 = vadd.f32 0.0, %v4231
        %v4233 = vpop.f32.mrb[0].mxu0
        %v4234 = vadd.f32 0.0, %v4233
        %v4235 = vpop.f32.mrb[0].mxu0
        %v4236 = vadd.f32 0.0, %v4235
        %4237 = vmatprep.mubr.bf16.mxu0 0
        %4238 = vmatmul.mubr.bf16.gmra.mrb[0].mxu0 %v635
        %v4239 = vpop.f32.mrb[0].mxu0
        %v4240 = vadd.f32 0.0, %v4239
        %v4241 = vpop.f32.mrb[0].mxu0
        %v4242 = vadd.f32 0.0, %v4241
        %v4243 = vpop.f32.mrb[0].mxu0
        %v4244 = vadd.f32 0.0, %v4243
        %v4245 = vpop.f32.mrb[0].mxu0
        %v4246 = vadd.f32 0.0, %v4245
        %4247 = vdwg.mxu0
        %4248 = vmatprep.subr.bf16.mxu0 %v1445
        %4249 = vmatpush1.bf16.msra.mxu0 %v1444
        %4250 = vmatprep.subr.bf16.mxu0 %v1477
        %4251 = vmatpush1.bf16.msra.mxu0 %v1476
        %4252 = vmatprep.subr.bf16.mxu0 %v1509
        %4253 = vmatpush1.bf16.msra.mxu0 %v1508
        %4254 = vmatprep.subr.bf16.mxu0 %v1541
        %4255 = vmatpush1.bf16.msra.mxu0 %v1540
        %4256 = vmatprep.subr.bf16.mxu0 %v1573
        %4257 = vmatpush1.bf16.msra.mxu0 %v1572
        %4258 = vmatprep.subr.bf16.mxu0 %v1605
        %4259 = vmatpush1.bf16.msra.mxu0 %v1604
        %4260 = vmatprep.subr.bf16.mxu0 %v1637
        %4261 = vmatpush1.bf16.msra.mxu0 %v1636
        %4262 = vmatprep.subr.bf16.mxu0 %v1669
        %4263 = vmatpush1.bf16.msra.mxu0 %v1668
        %4264 = vmatprep.subr.bf16.mxu0 0
        %4265 = vmatpush1.bf16.msra.mxu0 0
        %4266 = vmatprep.subr.bf16.mxu0 0
        %4267 = vmatpush1.bf16.msra.mxu0 0
        %4268 = vmatprep.subr.bf16.mxu0 0
        %4269 = vmatpush1.bf16.msra.mxu0 0
        %4270 = vmatprep.subr.bf16.mxu0 0
        %4271 = vmatpush1.bf16.msra.mxu0 0
        %4272 = vmatprep.subr.bf16.mxu0 0
        %4273 = vmatpush1.bf16.msra.mxu0 0
        %4274 = vmatprep.subr.bf16.mxu0 0
        %4275 = vmatpush1.bf16.msra.mxu0 0
        %4276 = vmatprep.subr.bf16.mxu0 0
        %4277 = vmatpush1.bf16.msra.mxu0 0
        %4278 = vmatprep.subr.bf16.mxu0 0
        %4279 = vmatpush1.bf16.msra.mxu0 0
        %4280 = vmatprep.mubr.bf16.mxu0 0
        %4281 = vmatmul.mubr.bf16.gmra.mrb[0].mxu0 %v620
        %v4282 = vpop.f32.mrb[0].mxu0
        %v4283 = vadd.f32 0.0, %v4282
        %v4284 = vpop.f32.mrb[0].mxu0
        %v4285 = vadd.f32 0.0, %v4284
        %v4286 = vpop.f32.mrb[0].mxu0
        %v4287 = vadd.f32 0.0, %v4286
        %v4288 = vpop.f32.mrb[0].mxu0
        %v4289 = vadd.f32 0.0, %v4288
        %4290 = vmatprep.mubr.bf16.mxu0 0
        %4291 = vmatmul.mubr.bf16.gmra.mrb[0].mxu0 %v621
        %v4292 = vpop.f32.mrb[0].mxu0
        %v4293 = vadd.f32 0.0, %v4292
        %v4294 = vpop.f32.mrb[0].mxu0
        %v4295 = vadd.f32 0.0, %v4294
        %v4296 = vpop.f32.mrb[0].mxu0
        %v4297 = vadd.f32 0.0, %v4296
        %v4298 = vpop.f32.mrb[0].mxu0
        %v4299 = vadd.f32 0.0, %v4298
        %4300 = vmatprep.mubr.bf16.mxu0 0
        %4301 = vmatmul.mubr.bf16.gmra.mrb[0].mxu0 %v622
        %v4302 = vpop.f32.mrb[0].mxu0
        %v4303 = vadd.f32 0.0, %v4302
        %v4304 = vpop.f32.mrb[0].mxu0
        %v4305 = vadd.f32 0.0, %v4304
        %v4306 = vpop.f32.mrb[0].mxu0
        %v4307 = vadd.f32 0.0, %v4306
        %v4308 = vpop.f32.mrb[0].mxu0
        %v4309 = vadd.f32 0.0, %v4308
        %4310 = vmatprep.mubr.bf16.mxu0 0
        %4311 = vmatmul.mubr.bf16.gmra.mrb[0].mxu0 %v623
        %v4312 = vpop.f32.mrb[0].mxu0
        %v4313 = vadd.f32 0.0, %v4312
        %v4314 = vpop.f32.mrb[0].mxu0
        %v4315 = vadd.f32 0.0, %v4314
        %v4316 = vpop.f32.mrb[0].mxu0
        %v4317 = vadd.f32 0.0, %v4316
        %v4318 = vpop.f32.mrb[0].mxu0
        %v4319 = vadd.f32 0.0, %v4318
        %4320 = vmatprep.mubr.bf16.mxu0 0
        %4321 = vmatmul.mubr.bf16.gmra.mrb[0].mxu0 %v624
        %v4322 = vpop.f32.mrb[0].mxu0
        %v4323 = vadd.f32 0.0, %v4322
        %v4324 = vpop.f32.mrb[0].mxu0
        %v4325 = vadd.f32 0.0, %v4324
        %v4326 = vpop.f32.mrb[0].mxu0
        %v4327 = vadd.f32 0.0, %v4326
        %v4328 = vpop.f32.mrb[0].mxu0
        %v4329 = vadd.f32 0.0, %v4328
        %4330 = vmatprep.mubr.bf16.mxu0 0
        %4331 = vmatmul.mubr.bf16.gmra.mrb[0].mxu0 %v625
        %v4332 = vpop.f32.mrb[0].mxu0
        %v4333 = vadd.f32 0.0, %v4332
        %v4334 = vpop.f32.mrb[0].mxu0
        %v4335 = vadd.f32 0.0, %v4334
        %v4336 = vpop.f32.mrb[0].mxu0
        %v4337 = vadd.f32 0.0, %v4336
        %v4338 = vpop.f32.mrb[0].mxu0
        %v4339 = vadd.f32 0.0, %v4338
        %4340 = vmatprep.mubr.bf16.mxu0 0
        %4341 = vmatmul.mubr.bf16.gmra.mrb[0].mxu0 %v626
        %v4342 = vpop.f32.mrb[0].mxu0
        %v4343 = vadd.f32 0.0, %v4342
        %v4344 = vpop.f32.mrb[0].mxu0
        %v4345 = vadd.f32 0.0, %v4344
        %v4346 = vpop.f32.mrb[0].mxu0
        %v4347 = vadd.f32 0.0, %v4346
        %v4348 = vpop.f32.mrb[0].mxu0
        %v4349 = vadd.f32 0.0, %v4348
        %4350 = vmatprep.mubr.bf16.mxu0 0
        %4351 = vmatmul.mubr.bf16.gmra.mrb[0].mxu0 %v627
        %v4352 = vpop.f32.mrb[0].mxu0
        %v4353 = vadd.f32 0.0, %v4352
        %v4354 = vpop.f32.mrb[0].mxu0
        %v4355 = vadd.f32 0.0, %v4354
        %v4356 = vpop.f32.mrb[0].mxu0
        %v4357 = vadd.f32 0.0, %v4356
        %v4358 = vpop.f32.mrb[0].mxu0
        %v4359 = vadd.f32 0.0, %v4358
        %4360 = vmatprep.mubr.bf16.mxu0 0
        %4361 = vmatmul.mubr.bf16.gmra.mrb[0].mxu0 %v628
        %v4362 = vpop.f32.mrb[0].mxu0
        %v4363 = vadd.f32 0.0, %v4362
        %v4364 = vpop.f32.mrb[0].mxu0
        %v4365 = vadd.f32 0.0, %v4364
        %v4366 = vpop.f32.mrb[0].mxu0
        %v4367 = vadd.f32 0.0, %v4366
        %v4368 = vpop.f32.mrb[0].mxu0
        %v4369 = vadd.f32 0.0, %v4368
        %4370 = vmatprep.mubr.bf16.mxu0 0
        %4371 = vmatmul.mubr.bf16.gmra.mrb[0].mxu0 %v629
        %v4372 = vpop.f32.mrb[0].mxu0
        %v4373 = vadd.f32 0.0, %v4372
        %v4374 = vpop.f32.mrb[0].mxu0
        %v4375 = vadd.f32 0.0, %v4374
        %v4376 = vpop.f32.mrb[0].mxu0
        %v4377 = vadd.f32 0.0, %v4376
        %v4378 = vpop.f32.mrb[0].mxu0
        %v4379 = vadd.f32 0.0, %v4378
        %4380 = vmatprep.mubr.bf16.mxu0 0
        %4381 = vmatmul.mubr.bf16.gmra.mrb[0].mxu0 %v630
        %v4382 = vpop.f32.mrb[0].mxu0
        %v4383 = vadd.f32 0.0, %v4382
        %v4384 = vpop.f32.mrb[0].mxu0
        %v4385 = vadd.f32 0.0, %v4384
        %v4386 = vpop.f32.mrb[0].mxu0
        %v4387 = vadd.f32 0.0, %v4386
        %v4388 = vpop.f32.mrb[0].mxu0
        %v4389 = vadd.f32 0.0, %v4388
        %4390 = vmatprep.mubr.bf16.mxu0 0
        %4391 = vmatmul.mubr.bf16.gmra.mrb[0].mxu0 %v631
        %v4392 = vpop.f32.mrb[0].mxu0
        %v4393 = vadd.f32 0.0, %v4392
        %v4394 = vpop.f32.mrb[0].mxu0
        %v4395 = vadd.f32 0.0, %v4394
        %v4396 = vpop.f32.mrb[0].mxu0
        %v4397 = vadd.f32 0.0, %v4396
        %v4398 = vpop.f32.mrb[0].mxu0
        %v4399 = vadd.f32 0.0, %v4398
        %4400 = vmatprep.mubr.bf16.mxu0 0
        %4401 = vmatmul.mubr.bf16.gmra.mrb[0].mxu0 %v632
        %v4402 = vpop.f32.mrb[0].mxu0
        %v4403 = vadd.f32 0.0, %v4402
        %v4404 = vpop.f32.mrb[0].mxu0
        %v4405 = vadd.f32 0.0, %v4404
        %v4406 = vpop.f32.mrb[0].mxu0
        %v4407 = vadd.f32 0.0, %v4406
        %v4408 = vpop.f32.mrb[0].mxu0
        %v4409 = vadd.f32 0.0, %v4408
        %4410 = vmatprep.mubr.bf16.mxu0 0
        %4411 = vmatmul.mubr.bf16.gmra.mrb[0].mxu0 %v633
        %v4412 = vpop.f32.mrb[0].mxu0
        %v4413 = vadd.f32 0.0, %v4412
        %v4414 = vpop.f32.mrb[0].mxu0
        %v4415 = vadd.f32 0.0, %v4414
        %v4416 = vpop.f32.mrb[0].mxu0
        %v4417 = vadd.f32 0.0, %v4416
        %v4418 = vpop.f32.mrb[0].mxu0
        %v4419 = vadd.f32 0.0, %v4418
        %4420 = vmatprep.mubr.bf16.mxu0 0
        %4421 = vmatmul.mubr.bf16.gmra.mrb[0].mxu0 %v634
        %v4422 = vpop.f32.mrb[0].mxu0
        %v4423 = vadd.f32 0.0, %v4422
        %v4424 = vpop.f32.mrb[0].mxu0
        %v4425 = vadd.f32 0.0, %v4424
        %v4426 = vpop.f32.mrb[0].mxu0
        %v4427 = vadd.f32 0.0, %v4426
        %v4428 = vpop.f32.mrb[0].mxu0
        %v4429 = vadd.f32 0.0, %v4428
        %4430 = vmatprep.mubr.bf16.mxu0 0
        %4431 = vmatmul.mubr.bf16.gmra.mrb[0].mxu0 %v635
        %v4432 = vpop.f32.mrb[0].mxu0
        %v4433 = vadd.f32 0.0, %v4432
        %v4434 = vpop.f32.mrb[0].mxu0
        %v4435 = vadd.f32 0.0, %v4434
        %v4436 = vpop.f32.mrb[0].mxu0
        %v4437 = vadd.f32 0.0, %v4436
        %v4438 = vpop.f32.mrb[0].mxu0
        %v4439 = vadd.f32 0.0, %v4438
        %4440 = vdwg.mxu0
        %4441 = vmatprep.subr.bf16.mxu0 %v1447
        %4442 = vmatpush1.bf16.msra.mxu0 %v1446
        %4443 = vmatprep.subr.bf16.mxu0 %v1479
        %4444 = vmatpush1.bf16.msra.mxu0 %v1478
        %4445 = vmatprep.subr.bf16.mxu0 %v1511
        %4446 = vmatpush1.bf16.msra.mxu0 %v1510
        %4447 = vmatprep.subr.bf16.mxu0 %v1543
        %4448 = vmatpush1.bf16.msra.mxu0 %v1542
        %4449 = vmatprep.subr.bf16.mxu0 %v1575
        %4450 = vmatpush1.bf16.msra.mxu0 %v1574
        %4451 = vmatprep.subr.bf16.mxu0 %v1607
        %4452 = vmatpush1.bf16.msra.mxu0 %v1606
        %4453 = vmatprep.subr.bf16.mxu0 %v1639
        %4454 = vmatpush1.bf16.msra.mxu0 %v1638
        %4455 = vmatprep.subr.bf16.mxu0 %v1671
        %4456 = vmatpush1.bf16.msra.mxu0 %v1670
        %4457 = vmatprep.subr.bf16.mxu0 0
        %4458 = vmatpush1.bf16.msra.mxu0 0
        %4459 = vmatprep.subr.bf16.mxu0 0
        %4460 = vmatpush1.bf16.msra.mxu0 0
        %4461 = vmatprep.subr.bf16.mxu0 0
        %4462 = vmatpush1.bf16.msra.mxu0 0
        %4463 = vmatprep.subr.bf16.mxu0 0
        %4464 = vmatpush1.bf16.msra.mxu0 0
        %4465 = vmatprep.subr.bf16.mxu0 0
        %4466 = vmatpush1.bf16.msra.mxu0 0
        %4467 = vmatprep.subr.bf16.mxu0 0
        %4468 = vmatpush1.bf16.msra.mxu0 0
        %4469 = vmatprep.subr.bf16.mxu0 0
        %4470 = vmatpush1.bf16.msra.mxu0 0
        %4471 = vmatprep.subr.bf16.mxu0 0
        %4472 = vmatpush1.bf16.msra.mxu0 0
        %4473 = vmatprep.mubr.bf16.mxu0 0
        %4474 = vmatmul.mubr.bf16.gmra.mrb[0].mxu0 %v620
        %v4475 = vpop.f32.mrb[0].mxu0
        %v4476 = vadd.f32 0.0, %v4475
        %v4477 = vpop.f32.mrb[0].mxu0
        %v4478 = vadd.f32 0.0, %v4477
        %v4479 = vpop.f32.mrb[0].mxu0
        %v4480 = vadd.f32 0.0, %v4479
        %v4481 = vpop.f32.mrb[0].mxu0
        %v4482 = vadd.f32 0.0, %v4481
        %4483 = vmatprep.mubr.bf16.mxu0 0
        %4484 = vmatmul.mubr.bf16.gmra.mrb[0].mxu0 %v621
        %v4485 = vpop.f32.mrb[0].mxu0
        %v4486 = vadd.f32 0.0, %v4485
        %v4487 = vpop.f32.mrb[0].mxu0
        %v4488 = vadd.f32 0.0, %v4487
        %v4489 = vpop.f32.mrb[0].mxu0
        %v4490 = vadd.f32 0.0, %v4489
        %v4491 = vpop.f32.mrb[0].mxu0
        %v4492 = vadd.f32 0.0, %v4491
        %4493 = vmatprep.mubr.bf16.mxu0 0
        %4494 = vmatmul.mubr.bf16.gmra.mrb[0].mxu0 %v622
        %v4495 = vpop.f32.mrb[0].mxu0
        %v4496 = vadd.f32 0.0, %v4495
        %v4497 = vpop.f32.mrb[0].mxu0
        %v4498 = vadd.f32 0.0, %v4497
        %v4499 = vpop.f32.mrb[0].mxu0
        %v4500 = vadd.f32 0.0, %v4499
        %v4501 = vpop.f32.mrb[0].mxu0
        %v4502 = vadd.f32 0.0, %v4501
        %4503 = vmatprep.mubr.bf16.mxu0 0
        %4504 = vmatmul.mubr.bf16.gmra.mrb[0].mxu0 %v623
        %v4505 = vpop.f32.mrb[0].mxu0
        %v4506 = vadd.f32 0.0, %v4505
        %v4507 = vpop.f32.mrb[0].mxu0
        %v4508 = vadd.f32 0.0, %v4507
        %v4509 = vpop.f32.mrb[0].mxu0
        %v4510 = vadd.f32 0.0, %v4509
        %v4511 = vpop.f32.mrb[0].mxu0
        %v4512 = vadd.f32 0.0, %v4511
        %4513 = vmatprep.mubr.bf16.mxu0 0
        %4514 = vmatmul.mubr.bf16.gmra.mrb[0].mxu0 %v624
        %v4515 = vpop.f32.mrb[0].mxu0
        %v4516 = vadd.f32 0.0, %v4515
        %v4517 = vpop.f32.mrb[0].mxu0
        %v4518 = vadd.f32 0.0, %v4517
        %v4519 = vpop.f32.mrb[0].mxu0
        %v4520 = vadd.f32 0.0, %v4519
        %v4521 = vpop.f32.mrb[0].mxu0
        %v4522 = vadd.f32 0.0, %v4521
        %4523 = vmatprep.mubr.bf16.mxu0 0
        %4524 = vmatmul.mubr.bf16.gmra.mrb[0].mxu0 %v625
        %v4525 = vpop.f32.mrb[0].mxu0
        %v4526 = vadd.f32 0.0, %v4525
        %v4527 = vpop.f32.mrb[0].mxu0
        %v4528 = vadd.f32 0.0, %v4527
        %v4529 = vpop.f32.mrb[0].mxu0
        %v4530 = vadd.f32 0.0, %v4529
        %v4531 = vpop.f32.mrb[0].mxu0
        %v4532 = vadd.f32 0.0, %v4531
        %4533 = vmatprep.mubr.bf16.mxu0 0
        %4534 = vmatmul.mubr.bf16.gmra.mrb[0].mxu0 %v626
        %v4535 = vpop.f32.mrb[0].mxu0
        %v4536 = vadd.f32 0.0, %v4535
        %v4537 = vpop.f32.mrb[0].mxu0
        %v4538 = vadd.f32 0.0, %v4537
        %v4539 = vpop.f32.mrb[0].mxu0
        %v4540 = vadd.f32 0.0, %v4539
        %v4541 = vpop.f32.mrb[0].mxu0
        %v4542 = vadd.f32 0.0, %v4541
        %4543 = vmatprep.mubr.bf16.mxu0 0
        %4544 = vmatmul.mubr.bf16.gmra.mrb[0].mxu0 %v627
        %v4545 = vpop.f32.mrb[0].mxu0
        %v4546 = vadd.f32 0.0, %v4545
        %v4547 = vpop.f32.mrb[0].mxu0
        %v4548 = vadd.f32 0.0, %v4547
        %v4549 = vpop.f32.mrb[0].mxu0
        %v4550 = vadd.f32 0.0, %v4549
        %v4551 = vpop.f32.mrb[0].mxu0
        %v4552 = vadd.f32 0.0, %v4551
        %4553 = vmatprep.mubr.bf16.mxu0 0
        %4554 = vmatmul.mubr.bf16.gmra.mrb[0].mxu0 %v628
        %v4555 = vpop.f32.mrb[0].mxu0
        %v4556 = vadd.f32 0.0, %v4555
        %v4557 = vpop.f32.mrb[0].mxu0
        %v4558 = vadd.f32 0.0, %v4557
        %v4559 = vpop.f32.mrb[0].mxu0
        %v4560 = vadd.f32 0.0, %v4559
        %v4561 = vpop.f32.mrb[0].mxu0
        %v4562 = vadd.f32 0.0, %v4561
        %4563 = vmatprep.mubr.bf16.mxu0 0
        %4564 = vmatmul.mubr.bf16.gmra.mrb[0].mxu0 %v629
        %v4565 = vpop.f32.mrb[0].mxu0
        %v4566 = vadd.f32 0.0, %v4565
        %v4567 = vpop.f32.mrb[0].mxu0
        %v4568 = vadd.f32 0.0, %v4567
        %v4569 = vpop.f32.mrb[0].mxu0
        %v4570 = vadd.f32 0.0, %v4569
        %v4571 = vpop.f32.mrb[0].mxu0
        %v4572 = vadd.f32 0.0, %v4571
        %4573 = vmatprep.mubr.bf16.mxu0 0
        %4574 = vmatmul.mubr.bf16.gmra.mrb[0].mxu0 %v630
        %v4575 = vpop.f32.mrb[0].mxu0
        %v4576 = vadd.f32 0.0, %v4575
        %v4577 = vpop.f32.mrb[0].mxu0
        %v4578 = vadd.f32 0.0, %v4577
        %v4579 = vpop.f32.mrb[0].mxu0
        %v4580 = vadd.f32 0.0, %v4579
        %v4581 = vpop.f32.mrb[0].mxu0
        %v4582 = vadd.f32 0.0, %v4581
        %4583 = vmatprep.mubr.bf16.mxu0 0
        %4584 = vmatmul.mubr.bf16.gmra.mrb[0].mxu0 %v631
        %v4585 = vpop.f32.mrb[0].mxu0
        %v4586 = vadd.f32 0.0, %v4585
        %v4587 = vpop.f32.mrb[0].mxu0
        %v4588 = vadd.f32 0.0, %v4587
        %v4589 = vpop.f32.mrb[0].mxu0
        %v4590 = vadd.f32 0.0, %v4589
        %v4591 = vpop.f32.mrb[0].mxu0
        %v4592 = vadd.f32 0.0, %v4591
        %4593 = vmatprep.mubr.bf16.mxu0 0
        %4594 = vmatmul.mubr.bf16.gmra.mrb[0].mxu0 %v632
        %v4595 = vpop.f32.mrb[0].mxu0
        %v4596 = vadd.f32 0.0, %v4595
        %v4597 = vpop.f32.mrb[0].mxu0
        %v4598 = vadd.f32 0.0, %v4597
        %v4599 = vpop.f32.mrb[0].mxu0
        %v4600 = vadd.f32 0.0, %v4599
        %v4601 = vpop.f32.mrb[0].mxu0
        %v4602 = vadd.f32 0.0, %v4601
        %4603 = vmatprep.mubr.bf16.mxu0 0
        %4604 = vmatmul.mubr.bf16.gmra.mrb[0].mxu0 %v633
        %v4605 = vpop.f32.mrb[0].mxu0
        %v4606 = vadd.f32 0.0, %v4605
        %v4607 = vpop.f32.mrb[0].mxu0
        %v4608 = vadd.f32 0.0, %v4607
        %v4609 = vpop.f32.mrb[0].mxu0
        %v4610 = vadd.f32 0.0, %v4609
        %v4611 = vpop.f32.mrb[0].mxu0
        %v4612 = vadd.f32 0.0, %v4611
        %4613 = vmatprep.mubr.bf16.mxu0 0
        %4614 = vmatmul.mubr.bf16.gmra.mrb[0].mxu0 %v634
        %v4615 = vpop.f32.mrb[0].mxu0
        %v4616 = vadd.f32 0.0, %v4615
        %v4617 = vpop.f32.mrb[0].mxu0
        %v4618 = vadd.f32 0.0, %v4617
        %v4619 = vpop.f32.mrb[0].mxu0
        %v4620 = vadd.f32 0.0, %v4619
        %v4621 = vpop.f32.mrb[0].mxu0
        %v4622 = vadd.f32 0.0, %v4621
        %4623 = vmatprep.mubr.bf16.mxu0 0
        %4624 = vmatmul.mubr.bf16.gmra.mrb[0].mxu0 %v635
        %v4625 = vpop.f32.mrb[0].mxu0
        %v4626 = vadd.f32 0.0, %v4625
        %v4627 = vpop.f32.mrb[0].mxu0
        %v4628 = vadd.f32 0.0, %v4627
        %v4629 = vpop.f32.mrb[0].mxu0
        %v4630 = vadd.f32 0.0, %v4629
        %v4631 = vpop.f32.mrb[0].mxu0
        %v4632 = vadd.f32 0.0, %v4631
        %4633 = vdwg.mxu0
        %4634 = vmatprep.subr.bf16.mxu0 %v1449
        %4635 = vmatpush1.bf16.msra.mxu0 %v1448
        %4636 = vmatprep.subr.bf16.mxu0 %v1481
        %4637 = vmatpush1.bf16.msra.mxu0 %v1480
        %4638 = vmatprep.subr.bf16.mxu0 %v1513
        %4639 = vmatpush1.bf16.msra.mxu0 %v1512
        %4640 = vmatprep.subr.bf16.mxu0 %v1545
        %4641 = vmatpush1.bf16.msra.mxu0 %v1544
        %4642 = vmatprep.subr.bf16.mxu0 %v1577
        %4643 = vmatpush1.bf16.msra.mxu0 %v1576
        %4644 = vmatprep.subr.bf16.mxu0 %v1609
        %4645 = vmatpush1.bf16.msra.mxu0 %v1608
        %4646 = vmatprep.subr.bf16.mxu0 %v1641
        %4647 = vmatpush1.bf16.msra.mxu0 %v1640
        %4648 = vmatprep.subr.bf16.mxu0 %v1673
        %4649 = vmatpush1.bf16.msra.mxu0 %v1672
        %4650 = vmatprep.subr.bf16.mxu0 0
        %4651 = vmatpush1.bf16.msra.mxu0 0
        %4652 = vmatprep.subr.bf16.mxu0 0
        %4653 = vmatpush1.bf16.msra.mxu0 0
        %4654 = vmatprep.subr.bf16.mxu0 0
        %4655 = vmatpush1.bf16.msra.mxu0 0
        %4656 = vmatprep.subr.bf16.mxu0 0
        %4657 = vmatpush1.bf16.msra.mxu0 0
        %4658 = vmatprep.subr.bf16.mxu0 0
        %4659 = vmatpush1.bf16.msra.mxu0 0
        %4660 = vmatprep.subr.bf16.mxu0 0
        %4661 = vmatpush1.bf16.msra.mxu0 0
        %4662 = vmatprep.subr.bf16.mxu0 0
        %4663 = vmatpush1.bf16.msra.mxu0 0
        %4664 = vmatprep.subr.bf16.mxu0 0
        %4665 = vmatpush1.bf16.msra.mxu0 0
        %4666 = vmatprep.mubr.bf16.mxu0 0
        %4667 = vmatmul.mubr.bf16.gmra.mrb[0].mxu0 %v620
        %v4668 = vpop.f32.mrb[0].mxu0
        %v4669 = vadd.f32 0.0, %v4668
        %v4670 = vpop.f32.mrb[0].mxu0
        %v4671 = vadd.f32 0.0, %v4670
        %v4672 = vpop.f32.mrb[0].mxu0
        %v4673 = vadd.f32 0.0, %v4672
        %v4674 = vpop.f32.mrb[0].mxu0
        %v4675 = vadd.f32 0.0, %v4674
        %4676 = vmatprep.mubr.bf16.mxu0 0
        %4677 = vmatmul.mubr.bf16.gmra.mrb[0].mxu0 %v621
        %v4678 = vpop.f32.mrb[0].mxu0
        %v4679 = vadd.f32 0.0, %v4678
        %v4680 = vpop.f32.mrb[0].mxu0
        %v4681 = vadd.f32 0.0, %v4680
        %v4682 = vpop.f32.mrb[0].mxu0
        %v4683 = vadd.f32 0.0, %v4682
        %v4684 = vpop.f32.mrb[0].mxu0
        %v4685 = vadd.f32 0.0, %v4684
        %4686 = vmatprep.mubr.bf16.mxu0 0
        %4687 = vmatmul.mubr.bf16.gmra.mrb[0].mxu0 %v622
        %v4688 = vpop.f32.mrb[0].mxu0
        %v4689 = vadd.f32 0.0, %v4688
        %v4690 = vpop.f32.mrb[0].mxu0
        %v4691 = vadd.f32 0.0, %v4690
        %v4692 = vpop.f32.mrb[0].mxu0
        %v4693 = vadd.f32 0.0, %v4692
        %v4694 = vpop.f32.mrb[0].mxu0
        %v4695 = vadd.f32 0.0, %v4694
        %4696 = vmatprep.mubr.bf16.mxu0 0
        %4697 = vmatmul.mubr.bf16.gmra.mrb[0].mxu0 %v623
        %v4698 = vpop.f32.mrb[0].mxu0
        %v4699 = vadd.f32 0.0, %v4698
        %v4700 = vpop.f32.mrb[0].mxu0
        %v4701 = vadd.f32 0.0, %v4700
        %v4702 = vpop.f32.mrb[0].mxu0
        %v4703 = vadd.f32 0.0, %v4702
        %v4704 = vpop.f32.mrb[0].mxu0
        %v4705 = vadd.f32 0.0, %v4704
        %4706 = vmatprep.mubr.bf16.mxu0 0
        %4707 = vmatmul.mubr.bf16.gmra.mrb[0].mxu0 %v624
        %v4708 = vpop.f32.mrb[0].mxu0
        %v4709 = vadd.f32 0.0, %v4708
        %v4710 = vpop.f32.mrb[0].mxu0
        %v4711 = vadd.f32 0.0, %v4710
        %v4712 = vpop.f32.mrb[0].mxu0
        %v4713 = vadd.f32 0.0, %v4712
        %v4714 = vpop.f32.mrb[0].mxu0
        %v4715 = vadd.f32 0.0, %v4714
        %4716 = vmatprep.mubr.bf16.mxu0 0
        %4717 = vmatmul.mubr.bf16.gmra.mrb[0].mxu0 %v625
        %v4718 = vpop.f32.mrb[0].mxu0
        %v4719 = vadd.f32 0.0, %v4718
        %v4720 = vpop.f32.mrb[0].mxu0
        %v4721 = vadd.f32 0.0, %v4720
        %v4722 = vpop.f32.mrb[0].mxu0
        %v4723 = vadd.f32 0.0, %v4722
        %v4724 = vpop.f32.mrb[0].mxu0
        %v4725 = vadd.f32 0.0, %v4724
        %4726 = vmatprep.mubr.bf16.mxu0 0
        %4727 = vmatmul.mubr.bf16.gmra.mrb[0].mxu0 %v626
        %v4728 = vpop.f32.mrb[0].mxu0
        %v4729 = vadd.f32 0.0, %v4728
        %v4730 = vpop.f32.mrb[0].mxu0
        %v4731 = vadd.f32 0.0, %v4730
        %v4732 = vpop.f32.mrb[0].mxu0
        %v4733 = vadd.f32 0.0, %v4732
        %v4734 = vpop.f32.mrb[0].mxu0
        %v4735 = vadd.f32 0.0, %v4734
        %4736 = vmatprep.mubr.bf16.mxu0 0
        %4737 = vmatmul.mubr.bf16.gmra.mrb[0].mxu0 %v627
        %v4738 = vpop.f32.mrb[0].mxu0
        %v4739 = vadd.f32 0.0, %v4738
        %v4740 = vpop.f32.mrb[0].mxu0
        %v4741 = vadd.f32 0.0, %v4740
        %v4742 = vpop.f32.mrb[0].mxu0
        %v4743 = vadd.f32 0.0, %v4742
        %v4744 = vpop.f32.mrb[0].mxu0
        %v4745 = vadd.f32 0.0, %v4744
        %4746 = vmatprep.mubr.bf16.mxu0 0
        %4747 = vmatmul.mubr.bf16.gmra.mrb[0].mxu0 %v628
        %v4748 = vpop.f32.mrb[0].mxu0
        %v4749 = vadd.f32 0.0, %v4748
        %v4750 = vpop.f32.mrb[0].mxu0
        %v4751 = vadd.f32 0.0, %v4750
        %v4752 = vpop.f32.mrb[0].mxu0
        %v4753 = vadd.f32 0.0, %v4752
        %v4754 = vpop.f32.mrb[0].mxu0
        %v4755 = vadd.f32 0.0, %v4754
        %4756 = vmatprep.mubr.bf16.mxu0 0
        %4757 = vmatmul.mubr.bf16.gmra.mrb[0].mxu0 %v629
        %v4758 = vpop.f32.mrb[0].mxu0
        %v4759 = vadd.f32 0.0, %v4758
        %v4760 = vpop.f32.mrb[0].mxu0
        %v4761 = vadd.f32 0.0, %v4760
        %v4762 = vpop.f32.mrb[0].mxu0
        %v4763 = vadd.f32 0.0, %v4762
        %v4764 = vpop.f32.mrb[0].mxu0
        %v4765 = vadd.f32 0.0, %v4764
        %4766 = vmatprep.mubr.bf16.mxu0 0
        %4767 = vmatmul.mubr.bf16.gmra.mrb[0].mxu0 %v630
        %v4768 = vpop.f32.mrb[0].mxu0
        %v4769 = vadd.f32 0.0, %v4768
        %v4770 = vpop.f32.mrb[0].mxu0
        %v4771 = vadd.f32 0.0, %v4770
        %v4772 = vpop.f32.mrb[0].mxu0
        %v4773 = vadd.f32 0.0, %v4772
        %v4774 = vpop.f32.mrb[0].mxu0
        %v4775 = vadd.f32 0.0, %v4774
        %4776 = vmatprep.mubr.bf16.mxu0 0
        %4777 = vmatmul.mubr.bf16.gmra.mrb[0].mxu0 %v631
        %v4778 = vpop.f32.mrb[0].mxu0
        %v4779 = vadd.f32 0.0, %v4778
        %v4780 = vpop.f32.mrb[0].mxu0
        %v4781 = vadd.f32 0.0, %v4780
        %v4782 = vpop.f32.mrb[0].mxu0
        %v4783 = vadd.f32 0.0, %v4782
        %v4784 = vpop.f32.mrb[0].mxu0
        %v4785 = vadd.f32 0.0, %v4784
        %4786 = vmatprep.mubr.bf16.mxu0 0
        %4787 = vmatmul.mubr.bf16.gmra.mrb[0].mxu0 %v632
        %v4788 = vpop.f32.mrb[0].mxu0
        %v4789 = vadd.f32 0.0, %v4788
        %v4790 = vpop.f32.mrb[0].mxu0
        %v4791 = vadd.f32 0.0, %v4790
        %v4792 = vpop.f32.mrb[0].mxu0
        %v4793 = vadd.f32 0.0, %v4792
        %v4794 = vpop.f32.mrb[0].mxu0
        %v4795 = vadd.f32 0.0, %v4794
        %4796 = vmatprep.mubr.bf16.mxu0 0
        %4797 = vmatmul.mubr.bf16.gmra.mrb[0].mxu0 %v633
        %v4798 = vpop.f32.mrb[0].mxu0
        %v4799 = vadd.f32 0.0, %v4798
        %v4800 = vpop.f32.mrb[0].mxu0
        %v4801 = vadd.f32 0.0, %v4800
        %v4802 = vpop.f32.mrb[0].mxu0
        %v4803 = vadd.f32 0.0, %v4802
        %v4804 = vpop.f32.mrb[0].mxu0
        %v4805 = vadd.f32 0.0, %v4804
        %4806 = vmatprep.mubr.bf16.mxu0 0
        %4807 = vmatmul.mubr.bf16.gmra.mrb[0].mxu0 %v634
        %v4808 = vpop.f32.mrb[0].mxu0
        %v4809 = vadd.f32 0.0, %v4808
        %v4810 = vpop.f32.mrb[0].mxu0
        %v4811 = vadd.f32 0.0, %v4810
        %v4812 = vpop.f32.mrb[0].mxu0
        %v4813 = vadd.f32 0.0, %v4812
        %v4814 = vpop.f32.mrb[0].mxu0
        %v4815 = vadd.f32 0.0, %v4814
        %4816 = vmatprep.mubr.bf16.mxu0 0
        %4817 = vmatmul.mubr.bf16.gmra.mrb[0].mxu0 %v635
        %v4818 = vpop.f32.mrb[0].mxu0
        %v4819 = vadd.f32 0.0, %v4818
        %v4820 = vpop.f32.mrb[0].mxu0
        %v4821 = vadd.f32 0.0, %v4820
        %v4822 = vpop.f32.mrb[0].mxu0
        %v4823 = vadd.f32 0.0, %v4822
        %v4824 = vpop.f32.mrb[0].mxu0
        %v4825 = vadd.f32 0.0, %v4824
        %4826 = vdwg.mxu0
        %4827 = vmatprep.subr.bf16.mxu0 %v1451
        %4828 = vmatpush1.bf16.msra.mxu0 %v1450
        %4829 = vmatprep.subr.bf16.mxu0 %v1483
        %4830 = vmatpush1.bf16.msra.mxu0 %v1482
        %4831 = vmatprep.subr.bf16.mxu0 %v1515
        %4832 = vmatpush1.bf16.msra.mxu0 %v1514
        %4833 = vmatprep.subr.bf16.mxu0 %v1547
        %4834 = vmatpush1.bf16.msra.mxu0 %v1546
        %4835 = vmatprep.subr.bf16.mxu0 %v1579
        %4836 = vmatpush1.bf16.msra.mxu0 %v1578
        %4837 = vmatprep.subr.bf16.mxu0 %v1611
        %4838 = vmatpush1.bf16.msra.mxu0 %v1610
        %4839 = vmatprep.subr.bf16.mxu0 %v1643
        %4840 = vmatpush1.bf16.msra.mxu0 %v1642
        %4841 = vmatprep.subr.bf16.mxu0 %v1675
        %4842 = vmatpush1.bf16.msra.mxu0 %v1674
        %4843 = vmatprep.subr.bf16.mxu0 0
        %4844 = vmatpush1.bf16.msra.mxu0 0
        %4845 = vmatprep.subr.bf16.mxu0 0
        %4846 = vmatpush1.bf16.msra.mxu0 0
        %4847 = vmatprep.subr.bf16.mxu0 0
        %4848 = vmatpush1.bf16.msra.mxu0 0
        %4849 = vmatprep.subr.bf16.mxu0 0
        %4850 = vmatpush1.bf16.msra.mxu0 0
        %4851 = vmatprep.subr.bf16.mxu0 0
        %4852 = vmatpush1.bf16.msra.mxu0 0
        %4853 = vmatprep.subr.bf16.mxu0 0
        %4854 = vmatpush1.bf16.msra.mxu0 0
        %4855 = vmatprep.subr.bf16.mxu0 0
        %4856 = vmatpush1.bf16.msra.mxu0 0
        %4857 = vmatprep.subr.bf16.mxu0 0
        %4858 = vmatpush1.bf16.msra.mxu0 0
        %4859 = vmatprep.mubr.bf16.mxu0 0
        %4860 = vmatmul.mubr.bf16.gmra.mrb[0].mxu0 %v620
        %v4861 = vpop.f32.mrb[0].mxu0
        %v4862 = vadd.f32 0.0, %v4861
        %v4863 = vpop.f32.mrb[0].mxu0
        %v4864 = vadd.f32 0.0, %v4863
        %v4865 = vpop.f32.mrb[0].mxu0
        %v4866 = vadd.f32 0.0, %v4865
        %v4867 = vpop.f32.mrb[0].mxu0
        %v4868 = vadd.f32 0.0, %v4867
        %4869 = vmatprep.mubr.bf16.mxu0 0
        %4870 = vmatmul.mubr.bf16.gmra.mrb[0].mxu0 %v621
        %v4871 = vpop.f32.mrb[0].mxu0
        %v4872 = vadd.f32 0.0, %v4871
        %v4873 = vpop.f32.mrb[0].mxu0
        %v4874 = vadd.f32 0.0, %v4873
        %v4875 = vpop.f32.mrb[0].mxu0
        %v4876 = vadd.f32 0.0, %v4875
        %v4877 = vpop.f32.mrb[0].mxu0
        %v4878 = vadd.f32 0.0, %v4877
        %4879 = vmatprep.mubr.bf16.mxu0 0
        %4880 = vmatmul.mubr.bf16.gmra.mrb[0].mxu0 %v622
        %v4881 = vpop.f32.mrb[0].mxu0
        %v4882 = vadd.f32 0.0, %v4881
        %v4883 = vpop.f32.mrb[0].mxu0
        %v4884 = vadd.f32 0.0, %v4883
        %v4885 = vpop.f32.mrb[0].mxu0
        %v4886 = vadd.f32 0.0, %v4885
        %v4887 = vpop.f32.mrb[0].mxu0
        %v4888 = vadd.f32 0.0, %v4887
        %4889 = vmatprep.mubr.bf16.mxu0 0
        %4890 = vmatmul.mubr.bf16.gmra.mrb[0].mxu0 %v623
        %v4891 = vpop.f32.mrb[0].mxu0
        %v4892 = vadd.f32 0.0, %v4891
        %v4893 = vpop.f32.mrb[0].mxu0
        %v4894 = vadd.f32 0.0, %v4893
        %v4895 = vpop.f32.mrb[0].mxu0
        %v4896 = vadd.f32 0.0, %v4895
        %v4897 = vpop.f32.mrb[0].mxu0
        %v4898 = vadd.f32 0.0, %v4897
        %4899 = vmatprep.mubr.bf16.mxu0 0
        %4900 = vmatmul.mubr.bf16.gmra.mrb[0].mxu0 %v624
        %v4901 = vpop.f32.mrb[0].mxu0
        %v4902 = vadd.f32 0.0, %v4901
        %v4903 = vpop.f32.mrb[0].mxu0
        %v4904 = vadd.f32 0.0, %v4903
        %v4905 = vpop.f32.mrb[0].mxu0
        %v4906 = vadd.f32 0.0, %v4905
        %v4907 = vpop.f32.mrb[0].mxu0
        %v4908 = vadd.f32 0.0, %v4907
        %4909 = vmatprep.mubr.bf16.mxu0 0
        %4910 = vmatmul.mubr.bf16.gmra.mrb[0].mxu0 %v625
        %v4911 = vpop.f32.mrb[0].mxu0
        %v4912 = vadd.f32 0.0, %v4911
        %v4913 = vpop.f32.mrb[0].mxu0
        %v4914 = vadd.f32 0.0, %v4913
        %v4915 = vpop.f32.mrb[0].mxu0
        %v4916 = vadd.f32 0.0, %v4915
        %v4917 = vpop.f32.mrb[0].mxu0
        %v4918 = vadd.f32 0.0, %v4917
        %4919 = vmatprep.mubr.bf16.mxu0 0
        %4920 = vmatmul.mubr.bf16.gmra.mrb[0].mxu0 %v626
        %v4921 = vpop.f32.mrb[0].mxu0
        %v4922 = vadd.f32 0.0, %v4921
        %v4923 = vpop.f32.mrb[0].mxu0
        %v4924 = vadd.f32 0.0, %v4923
        %v4925 = vpop.f32.mrb[0].mxu0
        %v4926 = vadd.f32 0.0, %v4925
        %v4927 = vpop.f32.mrb[0].mxu0
        %v4928 = vadd.f32 0.0, %v4927
        %4929 = vmatprep.mubr.bf16.mxu0 0
        %4930 = vmatmul.mubr.bf16.gmra.mrb[0].mxu0 %v627
        %v4931 = vpop.f32.mrb[0].mxu0
        %v4932 = vadd.f32 0.0, %v4931
        %v4933 = vpop.f32.mrb[0].mxu0
        %v4934 = vadd.f32 0.0, %v4933
        %v4935 = vpop.f32.mrb[0].mxu0
        %v4936 = vadd.f32 0.0, %v4935
        %v4937 = vpop.f32.mrb[0].mxu0
        %v4938 = vadd.f32 0.0, %v4937
        %4939 = vmatprep.mubr.bf16.mxu0 0
        %4940 = vmatmul.mubr.bf16.gmra.mrb[0].mxu0 %v628
        %v4941 = vpop.f32.mrb[0].mxu0
        %v4942 = vadd.f32 0.0, %v4941
        %v4943 = vpop.f32.mrb[0].mxu0
        %v4944 = vadd.f32 0.0, %v4943
        %v4945 = vpop.f32.mrb[0].mxu0
        %v4946 = vadd.f32 0.0, %v4945
        %v4947 = vpop.f32.mrb[0].mxu0
        %v4948 = vadd.f32 0.0, %v4947
        %4949 = vmatprep.mubr.bf16.mxu0 0
        %4950 = vmatmul.mubr.bf16.gmra.mrb[0].mxu0 %v629
        %v4951 = vpop.f32.mrb[0].mxu0
        %v4952 = vadd.f32 0.0, %v4951
        %v4953 = vpop.f32.mrb[0].mxu0
        %v4954 = vadd.f32 0.0, %v4953
        %v4955 = vpop.f32.mrb[0].mxu0
        %v4956 = vadd.f32 0.0, %v4955
        %v4957 = vpop.f32.mrb[0].mxu0
        %v4958 = vadd.f32 0.0, %v4957
        %4959 = vmatprep.mubr.bf16.mxu0 0
        %4960 = vmatmul.mubr.bf16.gmra.mrb[0].mxu0 %v630
        %v4961 = vpop.f32.mrb[0].mxu0
        %v4962 = vadd.f32 0.0, %v4961
        %v4963 = vpop.f32.mrb[0].mxu0
        %v4964 = vadd.f32 0.0, %v4963
        %v4965 = vpop.f32.mrb[0].mxu0
        %v4966 = vadd.f32 0.0, %v4965
        %v4967 = vpop.f32.mrb[0].mxu0
        %v4968 = vadd.f32 0.0, %v4967
        %4969 = vmatprep.mubr.bf16.mxu0 0
        %4970 = vmatmul.mubr.bf16.gmra.mrb[0].mxu0 %v631
        %v4971 = vpop.f32.mrb[0].mxu0
        %v4972 = vadd.f32 0.0, %v4971
        %v4973 = vpop.f32.mrb[0].mxu0
        %v4974 = vadd.f32 0.0, %v4973
        %v4975 = vpop.f32.mrb[0].mxu0
        %v4976 = vadd.f32 0.0, %v4975
        %v4977 = vpop.f32.mrb[0].mxu0
        %v4978 = vadd.f32 0.0, %v4977
        %4979 = vmatprep.mubr.bf16.mxu0 0
        %4980 = vmatmul.mubr.bf16.gmra.mrb[0].mxu0 %v632
        %v4981 = vpop.f32.mrb[0].mxu0
        %v4982 = vadd.f32 0.0, %v4981
        %v4983 = vpop.f32.mrb[0].mxu0
        %v4984 = vadd.f32 0.0, %v4983
        %v4985 = vpop.f32.mrb[0].mxu0
        %v4986 = vadd.f32 0.0, %v4985
        %v4987 = vpop.f32.mrb[0].mxu0
        %v4988 = vadd.f32 0.0, %v4987
        %4989 = vmatprep.mubr.bf16.mxu0 0
        %4990 = vmatmul.mubr.bf16.gmra.mrb[0].mxu0 %v633
        %v4991 = vpop.f32.mrb[0].mxu0
        %v4992 = vadd.f32 0.0, %v4991
        %v4993 = vpop.f32.mrb[0].mxu0
        %v4994 = vadd.f32 0.0, %v4993
        %v4995 = vpop.f32.mrb[0].mxu0
        %v4996 = vadd.f32 0.0, %v4995
        %v4997 = vpop.f32.mrb[0].mxu0
        %v4998 = vadd.f32 0.0, %v4997
        %4999 = vmatprep.mubr.bf16.mxu0 0
        %5000 = vmatmul.mubr.bf16.gmra.mrb[0].mxu0 %v634
        %v5001 = vpop.f32.mrb[0].mxu0
        %v5002 = vadd.f32 0.0, %v5001
        %v5003 = vpop.f32.mrb[0].mxu0
        %v5004 = vadd.f32 0.0, %v5003
        %v5005 = vpop.f32.mrb[0].mxu0
        %v5006 = vadd.f32 0.0, %v5005
        %v5007 = vpop.f32.mrb[0].mxu0
        %v5008 = vadd.f32 0.0, %v5007
        %5009 = vmatprep.mubr.bf16.mxu0 0
        %5010 = vmatmul.mubr.bf16.gmra.mrb[0].mxu0 %v635
        %v5011 = vpop.f32.mrb[0].mxu0
        %v5012 = vadd.f32 0.0, %v5011
        %v5013 = vpop.f32.mrb[0].mxu0
        %v5014 = vadd.f32 0.0, %v5013
        %v5015 = vpop.f32.mrb[0].mxu0
        %v5016 = vadd.f32 0.0, %v5015
        %v5017 = vpop.f32.mrb[0].mxu0
        %v5018 = vadd.f32 0.0, %v5017
        %5019 = vdwg.mxu0
        %v5020 = vld [vmem:[%s224] sm:$0xff]
        %v5021 = vld [vmem:[%s224 + $0x8] sm:$0xff]
        %v5022 = vld [vmem:[%s224 + $0x10] sm:$0xff]
        %v5023 = vld [vmem:[%s224 + $0x18] sm:$0xff]
        %v5028 = vlaneseq
        %v5029 = vshrl.u32 %v5028, 7
        %v5030 = vsub.s32 0, %v5029
        %v5031 = vrot.slane %v5020, %v5030
        %v5032 = vlaneseq
        %v5033 = vshrl.u32 %v5032, 7
        %v5034 = vsub.s32 1, %v5033
        %v5035 = vrot.slane %v5020, %v5034
        %v5036 = vlaneseq
        %v5037 = vshrl.u32 %v5036, 7
        %v5038 = vsub.s32 2, %v5037
        %v5039 = vrot.slane %v5020, %v5038
        %v5040 = vlaneseq
        %v5041 = vshrl.u32 %v5040, 7
        %v5042 = vsub.s32 3, %v5041
        %v5043 = vrot.slane %v5020, %v5042
        %v5044 = vlaneseq
        %v5045 = vshrl.u32 %v5044, 7
        %v5046 = vsub.s32 4, %v5045
        %v5047 = vrot.slane %v5020, %v5046
        %v5048 = vlaneseq
        %v5049 = vshrl.u32 %v5048, 7
        %v5050 = vsub.s32 5, %v5049
        %v5051 = vrot.slane %v5020, %v5050
        %v5052 = vlaneseq
        %v5053 = vshrl.u32 %v5052, 7
        %v5054 = vsub.s32 6, %v5053
        %v5055 = vrot.slane %v5020, %v5054
        %v5056 = vlaneseq
        %v5057 = vshrl.u32 %v5056, 7
        %v5058 = vsub.s32 7, %v5057
        %v5059 = vrot.slane %v5020, %v5058
        %v5060 = vlaneseq
        %v5061 = vshrl.u32 %v5060, 7
        %v5062 = vsub.s32 0, %v5061
        %v5063 = vrot.slane %v5021, %v5062
        %v5064 = vlaneseq
        %v5065 = vshrl.u32 %v5064, 7
        %v5066 = vsub.s32 1, %v5065
        %v5067 = vrot.slane %v5021, %v5066
        %v5068 = vlaneseq
        %v5069 = vshrl.u32 %v5068, 7
        %v5070 = vsub.s32 2, %v5069
        %v5071 = vrot.slane %v5021, %v5070
        %v5072 = vlaneseq
        %v5073 = vshrl.u32 %v5072, 7
        %v5074 = vsub.s32 3, %v5073
        %v5075 = vrot.slane %v5021, %v5074
        %v5076 = vlaneseq
        %v5077 = vshrl.u32 %v5076, 7
        %v5078 = vsub.s32 4, %v5077
        %v5079 = vrot.slane %v5021, %v5078
        %v5080 = vlaneseq
        %v5081 = vshrl.u32 %v5080, 7
        %v5082 = vsub.s32 5, %v5081
        %v5083 = vrot.slane %v5021, %v5082
        %v5084 = vlaneseq
        %v5085 = vshrl.u32 %v5084, 7
        %v5086 = vsub.s32 6, %v5085
        %v5087 = vrot.slane %v5021, %v5086
        %v5088 = vlaneseq
        %v5089 = vshrl.u32 %v5088, 7
        %v5090 = vsub.s32 7, %v5089
        %v5091 = vrot.slane %v5021, %v5090
        %v5092 = vlaneseq
        %v5093 = vshrl.u32 %v5092, 7
        %v5094 = vsub.s32 0, %v5093
        %v5095 = vrot.slane %v5022, %v5094
        %v5096 = vlaneseq
        %v5097 = vshrl.u32 %v5096, 7
        %v5098 = vsub.s32 1, %v5097
        %v5099 = vrot.slane %v5022, %v5098
        %v5100 = vlaneseq
        %v5101 = vshrl.u32 %v5100, 7
        %v5102 = vsub.s32 2, %v5101
        %v5103 = vrot.slane %v5022, %v5102
        %v5104 = vlaneseq
        %v5105 = vshrl.u32 %v5104, 7
        %v5106 = vsub.s32 3, %v5105
        %v5107 = vrot.slane %v5022, %v5106
        %v5108 = vlaneseq
        %v5109 = vshrl.u32 %v5108, 7
        %v5110 = vsub.s32 4, %v5109
        %v5111 = vrot.slane %v5022, %v5110
        %v5112 = vlaneseq
        %v5113 = vshrl.u32 %v5112, 7
        %v5114 = vsub.s32 5, %v5113
        %v5115 = vrot.slane %v5022, %v5114
        %v5116 = vlaneseq
        %v5117 = vshrl.u32 %v5116, 7
        %v5118 = vsub.s32 6, %v5117
        %v5119 = vrot.slane %v5022, %v5118
        %v5120 = vlaneseq
        %v5121 = vshrl.u32 %v5120, 7
        %v5122 = vsub.s32 7, %v5121
        %v5123 = vrot.slane %v5022, %v5122
        %v5124 = vlaneseq
        %v5125 = vshrl.u32 %v5124, 7
        %v5126 = vsub.s32 0, %v5125
        %v5127 = vrot.slane %v5023, %v5126
        %v5128 = vlaneseq
        %v5129 = vshrl.u32 %v5128, 7
        %v5130 = vsub.s32 1, %v5129
        %v5131 = vrot.slane %v5023, %v5130
        %v5132 = vlaneseq
        %v5133 = vshrl.u32 %v5132, 7
        %v5134 = vsub.s32 2, %v5133
        %v5135 = vrot.slane %v5023, %v5134
        %v5136 = vlaneseq
        %v5137 = vshrl.u32 %v5136, 7
        %v5138 = vsub.s32 3, %v5137
        %v5139 = vrot.slane %v5023, %v5138
        %v5140 = vlaneseq
        %v5141 = vshrl.u32 %v5140, 7
        %v5142 = vsub.s32 4, %v5141
        %v5143 = vrot.slane %v5023, %v5142
        %v5144 = vlaneseq
        %v5145 = vshrl.u32 %v5144, 7
        %v5146 = vsub.s32 5, %v5145
        %v5147 = vrot.slane %v5023, %v5146
        %v5148 = vlaneseq
        %v5149 = vshrl.u32 %v5148, 7
        %v5150 = vsub.s32 6, %v5149
        %v5151 = vrot.slane %v5023, %v5150
        %v5152 = vlaneseq
        %v5153 = vshrl.u32 %v5152, 7
        %v5154 = vsub.s32 7, %v5153
        %v5155 = vrot.slane %v5023, %v5154
        %v5188 = vmul.f32 %v1967, %v5031
        %v5189 = vmul.f32 %v1969, %v5035
        %v5190 = vmul.f32 %v2160, %v5039
        %v5191 = vmul.f32 %v2162, %v5043
        %v5192 = vmul.f32 %v2353, %v5047
        %v5193 = vmul.f32 %v2355, %v5051
        %v5194 = vmul.f32 %v2546, %v5055
        %v5195 = vmul.f32 %v2548, %v5059
        %v5196 = vmul.f32 %v2739, %v5063
        %v5197 = vmul.f32 %v2741, %v5067
        %v5198 = vmul.f32 %v2932, %v5071
        %v5199 = vmul.f32 %v2934, %v5075
        %v5200 = vmul.f32 %v3125, %v5079
        %v5201 = vmul.f32 %v3127, %v5083
        %v5202 = vmul.f32 %v3318, %v5087
        %v5203 = vmul.f32 %v3320, %v5091
        %v5204 = vmul.f32 %v3511, %v5095
        %v5205 = vmul.f32 %v3513, %v5099
        %v5206 = vmul.f32 %v3704, %v5103
        %v5207 = vmul.f32 %v3706, %v5107
        %v5208 = vmul.f32 %v3897, %v5111
        %v5209 = vmul.f32 %v3899, %v5115
        %v5210 = vmul.f32 %v4090, %v5119
        %v5211 = vmul.f32 %v4092, %v5123
        %v5212 = vmul.f32 %v4283, %v5127
        %v5213 = vmul.f32 %v4285, %v5131
        %v5214 = vmul.f32 %v4476, %v5135
        %v5215 = vmul.f32 %v4478, %v5139
        %v5216 = vmul.f32 %v4669, %v5143
        %v5217 = vmul.f32 %v4671, %v5147
        %v5218 = vmul.f32 %v4862, %v5151
        %v5219 = vmul.f32 %v4864, %v5155
        %v5220 = vmul.f32 %v1971, %v5031
        %v5221 = vmul.f32 %v1973, %v5035
        %v5222 = vmul.f32 %v2164, %v5039
        %v5223 = vmul.f32 %v2166, %v5043
        %v5224 = vmul.f32 %v2357, %v5047
        %v5225 = vmul.f32 %v2359, %v5051
        %v5226 = vmul.f32 %v2550, %v5055
        %v5227 = vmul.f32 %v2552, %v5059
        %v5228 = vmul.f32 %v2743, %v5063
        %v5229 = vmul.f32 %v2745, %v5067
        %v5230 = vmul.f32 %v2936, %v5071
        %v5231 = vmul.f32 %v2938, %v5075
        %v5232 = vmul.f32 %v3129, %v5079
        %v5233 = vmul.f32 %v3131, %v5083
        %v5234 = vmul.f32 %v3322, %v5087
        %v5235 = vmul.f32 %v3324, %v5091
        %v5236 = vmul.f32 %v3515, %v5095
        %v5237 = vmul.f32 %v3517, %v5099
        %v5238 = vmul.f32 %v3708, %v5103
        %v5239 = vmul.f32 %v3710, %v5107
        %v5240 = vmul.f32 %v3901, %v5111
        %v5241 = vmul.f32 %v3903, %v5115
        %v5242 = vmul.f32 %v4094, %v5119
        %v5243 = vmul.f32 %v4096, %v5123
        %v5244 = vmul.f32 %v4287, %v5127
        %v5245 = vmul.f32 %v4289, %v5131
        %v5246 = vmul.f32 %v4480, %v5135
        %v5247 = vmul.f32 %v4482, %v5139
        %v5248 = vmul.f32 %v4673, %v5143
        %v5249 = vmul.f32 %v4675, %v5147
        %v5250 = vmul.f32 %v4866, %v5151
        %v5251 = vmul.f32 %v4868, %v5155
        %v5252 = vmul.f32 %v1977, %v5031
        %v5253 = vmul.f32 %v1979, %v5035
        %v5254 = vmul.f32 %v2170, %v5039
        %v5255 = vmul.f32 %v2172, %v5043
        %v5256 = vmul.f32 %v2363, %v5047
        %v5257 = vmul.f32 %v2365, %v5051
        %v5258 = vmul.f32 %v2556, %v5055
        %v5259 = vmul.f32 %v2558, %v5059
        %v5260 = vmul.f32 %v2749, %v5063
        %v5261 = vmul.f32 %v2751, %v5067
        %v5262 = vmul.f32 %v2942, %v5071
        %v5263 = vmul.f32 %v2944, %v5075
        %v5264 = vmul.f32 %v3135, %v5079
        %v5265 = vmul.f32 %v3137, %v5083
        %v5266 = vmul.f32 %v3328, %v5087
        %v5267 = vmul.f32 %v3330, %v5091
        %v5268 = vmul.f32 %v3521, %v5095
        %v5269 = vmul.f32 %v3523, %v5099
        %v5270 = vmul.f32 %v3714, %v5103
        %v5271 = vmul.f32 %v3716, %v5107
        %v5272 = vmul.f32 %v3907, %v5111
        %v5273 = vmul.f32 %v3909, %v5115
        %v5274 = vmul.f32 %v4100, %v5119
        %v5275 = vmul.f32 %v4102, %v5123
        %v5276 = vmul.f32 %v4293, %v5127
        %v5277 = vmul.f32 %v4295, %v5131
        %v5278 = vmul.f32 %v4486, %v5135
        %v5279 = vmul.f32 %v4488, %v5139
        %v5280 = vmul.f32 %v4679, %v5143
        %v5281 = vmul.f32 %v4681, %v5147
        %v5282 = vmul.f32 %v4872, %v5151
        %v5283 = vmul.f32 %v4874, %v5155
        %v5284 = vmul.f32 %v1981, %v5031
        %v5285 = vmul.f32 %v1983, %v5035
        %v5286 = vmul.f32 %v2174, %v5039
        %v5287 = vmul.f32 %v2176, %v5043
        %v5288 = vmul.f32 %v2367, %v5047
        %v5289 = vmul.f32 %v2369, %v5051
        %v5290 = vmul.f32 %v2560, %v5055
        %v5291 = vmul.f32 %v2562, %v5059
        %v5292 = vmul.f32 %v2753, %v5063
        %v5293 = vmul.f32 %v2755, %v5067
        %v5294 = vmul.f32 %v2946, %v5071
        %v5295 = vmul.f32 %v2948, %v5075
        %v5296 = vmul.f32 %v3139, %v5079
        %v5297 = vmul.f32 %v3141, %v5083
        %v5298 = vmul.f32 %v3332, %v5087
        %v5299 = vmul.f32 %v3334, %v5091
        %v5300 = vmul.f32 %v3525, %v5095
        %v5301 = vmul.f32 %v3527, %v5099
        %v5302 = vmul.f32 %v3718, %v5103
        %v5303 = vmul.f32 %v3720, %v5107
        %v5304 = vmul.f32 %v3911, %v5111
        %v5305 = vmul.f32 %v3913, %v5115
        %v5306 = vmul.f32 %v4104, %v5119
        %v5307 = vmul.f32 %v4106, %v5123
        %v5308 = vmul.f32 %v4297, %v5127
        %v5309 = vmul.f32 %v4299, %v5131
        %v5310 = vmul.f32 %v4490, %v5135
        %v5311 = vmul.f32 %v4492, %v5139
        %v5312 = vmul.f32 %v4683, %v5143
        %v5313 = vmul.f32 %v4685, %v5147
        %v5314 = vmul.f32 %v4876, %v5151
        %v5315 = vmul.f32 %v4878, %v5155
        %v5316 = vmul.f32 %v1987, %v5031
        %v5317 = vmul.f32 %v1989, %v5035
        %v5318 = vmul.f32 %v2180, %v5039
        %v5319 = vmul.f32 %v2182, %v5043
        %v5320 = vmul.f32 %v2373, %v5047
        %v5321 = vmul.f32 %v2375, %v5051
        %v5322 = vmul.f32 %v2566, %v5055
        %v5323 = vmul.f32 %v2568, %v5059
        %v5324 = vmul.f32 %v2759, %v5063
        %v5325 = vmul.f32 %v2761, %v5067
        %v5326 = vmul.f32 %v2952, %v5071
        %v5327 = vmul.f32 %v2954, %v5075
        %v5328 = vmul.f32 %v3145, %v5079
        %v5329 = vmul.f32 %v3147, %v5083
        %v5330 = vmul.f32 %v3338, %v5087
        %v5331 = vmul.f32 %v3340, %v5091
        %v5332 = vmul.f32 %v3531, %v5095
        %v5333 = vmul.f32 %v3533, %v5099
        %v5334 = vmul.f32 %v3724, %v5103
        %v5335 = vmul.f32 %v3726, %v5107
        %v5336 = vmul.f32 %v3917, %v5111
        %v5337 = vmul.f32 %v3919, %v5115
        %v5338 = vmul.f32 %v4110, %v5119
        %v5339 = vmul.f32 %v4112, %v5123
        %v5340 = vmul.f32 %v4303, %v5127
        %v5341 = vmul.f32 %v4305, %v5131
        %v5342 = vmul.f32 %v4496, %v5135
        %v5343 = vmul.f32 %v4498, %v5139
        %v5344 = vmul.f32 %v4689, %v5143
        %v5345 = vmul.f32 %v4691, %v5147
        %v5346 = vmul.f32 %v4882, %v5151
        %v5347 = vmul.f32 %v4884, %v5155
        %v5348 = vmul.f32 %v1991, %v5031
        %v5349 = vmul.f32 %v1993, %v5035
        %v5350 = vmul.f32 %v2184, %v5039
        %v5351 = vmul.f32 %v2186, %v5043
        %v5352 = vmul.f32 %v2377, %v5047
        %v5353 = vmul.f32 %v2379, %v5051
        %v5354 = vmul.f32 %v2570, %v5055
        %v5355 = vmul.f32 %v2572, %v5059
        %v5356 = vmul.f32 %v2763, %v5063
        %v5357 = vmul.f32 %v2765, %v5067
        %v5358 = vmul.f32 %v2956, %v5071
        %v5359 = vmul.f32 %v2958, %v5075
        %v5360 = vmul.f32 %v3149, %v5079
        %v5361 = vmul.f32 %v3151, %v5083
        %v5362 = vmul.f32 %v3342, %v5087
        %v5363 = vmul.f32 %v3344, %v5091
        %v5364 = vmul.f32 %v3535, %v5095
        %v5365 = vmul.f32 %v3537, %v5099
        %v5366 = vmul.f32 %v3728, %v5103
        %v5367 = vmul.f32 %v3730, %v5107
        %v5368 = vmul.f32 %v3921, %v5111
        %v5369 = vmul.f32 %v3923, %v5115
        %v5370 = vmul.f32 %v4114, %v5119
        %v5371 = vmul.f32 %v4116, %v5123
        %v5372 = vmul.f32 %v4307, %v5127
        %v5373 = vmul.f32 %v4309, %v5131
        %v5374 = vmul.f32 %v4500, %v5135
        %v5375 = vmul.f32 %v4502, %v5139
        %v5376 = vmul.f32 %v4693, %v5143
        %v5377 = vmul.f32 %v4695, %v5147
        %v5378 = vmul.f32 %v4886, %v5151
        %v5379 = vmul.f32 %v4888, %v5155
        %v5380 = vmul.f32 %v1997, %v5031
        %v5381 = vmul.f32 %v1999, %v5035
        %v5382 = vmul.f32 %v2190, %v5039
        %v5383 = vmul.f32 %v2192, %v5043
        %v5384 = vmul.f32 %v2383, %v5047
        %v5385 = vmul.f32 %v2385, %v5051
        %v5386 = vmul.f32 %v2576, %v5055
        %v5387 = vmul.f32 %v2578, %v5059
        %v5388 = vmul.f32 %v2769, %v5063
        %v5389 = vmul.f32 %v2771, %v5067
        %v5390 = vmul.f32 %v2962, %v5071
        %v5391 = vmul.f32 %v2964, %v5075
        %v5392 = vmul.f32 %v3155, %v5079
        %v5393 = vmul.f32 %v3157, %v5083
        %v5394 = vmul.f32 %v3348, %v5087
        %v5395 = vmul.f32 %v3350, %v5091
        %v5396 = vmul.f32 %v3541, %v5095
        %v5397 = vmul.f32 %v3543, %v5099
        %v5398 = vmul.f32 %v3734, %v5103
        %v5399 = vmul.f32 %v3736, %v5107
        %v5400 = vmul.f32 %v3927, %v5111
        %v5401 = vmul.f32 %v3929, %v5115
        %v5402 = vmul.f32 %v4120, %v5119
        %v5403 = vmul.f32 %v4122, %v5123
        %v5404 = vmul.f32 %v4313, %v5127
        %v5405 = vmul.f32 %v4315, %v5131
        %v5406 = vmul.f32 %v4506, %v5135
        %v5407 = vmul.f32 %v4508, %v5139
        %v5408 = vmul.f32 %v4699, %v5143
        %v5409 = vmul.f32 %v4701, %v5147
        %v5410 = vmul.f32 %v4892, %v5151
        %v5411 = vmul.f32 %v4894, %v5155
        %v5412 = vmul.f32 %v2001, %v5031
        %v5413 = vmul.f32 %v2003, %v5035
        %v5414 = vmul.f32 %v2194, %v5039
        %v5415 = vmul.f32 %v2196, %v5043
        %v5416 = vmul.f32 %v2387, %v5047
        %v5417 = vmul.f32 %v2389, %v5051
        %v5418 = vmul.f32 %v2580, %v5055
        %v5419 = vmul.f32 %v2582, %v5059
        %v5420 = vmul.f32 %v2773, %v5063
        %v5421 = vmul.f32 %v2775, %v5067
        %v5422 = vmul.f32 %v2966, %v5071
        %v5423 = vmul.f32 %v2968, %v5075
        %v5424 = vmul.f32 %v3159, %v5079
        %v5425 = vmul.f32 %v3161, %v5083
        %v5426 = vmul.f32 %v3352, %v5087
        %v5427 = vmul.f32 %v3354, %v5091
        %v5428 = vmul.f32 %v3545, %v5095
        %v5429 = vmul.f32 %v3547, %v5099
        %v5430 = vmul.f32 %v3738, %v5103
        %v5431 = vmul.f32 %v3740, %v5107
        %v5432 = vmul.f32 %v3931, %v5111
        %v5433 = vmul.f32 %v3933, %v5115
        %v5434 = vmul.f32 %v4124, %v5119
        %v5435 = vmul.f32 %v4126, %v5123
        %v5436 = vmul.f32 %v4317, %v5127
        %v5437 = vmul.f32 %v4319, %v5131
        %v5438 = vmul.f32 %v4510, %v5135
        %v5439 = vmul.f32 %v4512, %v5139
        %v5440 = vmul.f32 %v4703, %v5143
        %v5441 = vmul.f32 %v4705, %v5147
        %v5442 = vmul.f32 %v4896, %v5151
        %v5443 = vmul.f32 %v4898, %v5155
        %v5444 = vmul.f32 %v2007, %v5031
        %v5445 = vmul.f32 %v2009, %v5035
        %v5446 = vmul.f32 %v2200, %v5039
        %v5447 = vmul.f32 %v2202, %v5043
        %v5448 = vmul.f32 %v2393, %v5047
        %v5449 = vmul.f32 %v2395, %v5051
        %v5450 = vmul.f32 %v2586, %v5055
        %v5451 = vmul.f32 %v2588, %v5059
        %v5452 = vmul.f32 %v2779, %v5063
        %v5453 = vmul.f32 %v2781, %v5067
        %v5454 = vmul.f32 %v2972, %v5071
        %v5455 = vmul.f32 %v2974, %v5075
        %v5456 = vmul.f32 %v3165, %v5079
        %v5457 = vmul.f32 %v3167, %v5083
        %v5458 = vmul.f32 %v3358, %v5087
        %v5459 = vmul.f32 %v3360, %v5091
        %v5460 = vmul.f32 %v3551, %v5095
        %v5461 = vmul.f32 %v3553, %v5099
        %v5462 = vmul.f32 %v3744, %v5103
        %v5463 = vmul.f32 %v3746, %v5107
        %v5464 = vmul.f32 %v3937, %v5111
        %v5465 = vmul.f32 %v3939, %v5115
        %v5466 = vmul.f32 %v4130, %v5119
        %v5467 = vmul.f32 %v4132, %v5123
        %v5468 = vmul.f32 %v4323, %v5127
        %v5469 = vmul.f32 %v4325, %v5131
        %v5470 = vmul.f32 %v4516, %v5135
        %v5471 = vmul.f32 %v4518, %v5139
        %v5472 = vmul.f32 %v4709, %v5143
        %v5473 = vmul.f32 %v4711, %v5147
        %v5474 = vmul.f32 %v4902, %v5151
        %v5475 = vmul.f32 %v4904, %v5155
        %v5476 = vmul.f32 %v2011, %v5031
        %v5477 = vmul.f32 %v2013, %v5035
        %v5478 = vmul.f32 %v2204, %v5039
        %v5479 = vmul.f32 %v2206, %v5043
        %v5480 = vmul.f32 %v2397, %v5047
        %v5481 = vmul.f32 %v2399, %v5051
        %v5482 = vmul.f32 %v2590, %v5055
        %v5483 = vmul.f32 %v2592, %v5059
        %v5484 = vmul.f32 %v2783, %v5063
        %v5485 = vmul.f32 %v2785, %v5067
        %v5486 = vmul.f32 %v2976, %v5071
        %v5487 = vmul.f32 %v2978, %v5075
        %v5488 = vmul.f32 %v3169, %v5079
        %v5489 = vmul.f32 %v3171, %v5083
        %v5490 = vmul.f32 %v3362, %v5087
        %v5491 = vmul.f32 %v3364, %v5091
        %v5492 = vmul.f32 %v3555, %v5095
        %v5493 = vmul.f32 %v3557, %v5099
        %v5494 = vmul.f32 %v3748, %v5103
        %v5495 = vmul.f32 %v3750, %v5107
        %v5496 = vmul.f32 %v3941, %v5111
        %v5497 = vmul.f32 %v3943, %v5115
        %v5498 = vmul.f32 %v4134, %v5119
        %v5499 = vmul.f32 %v4136, %v5123
        %v5500 = vmul.f32 %v4327, %v5127
        %v5501 = vmul.f32 %v4329, %v5131
        %v5502 = vmul.f32 %v4520, %v5135
        %v5503 = vmul.f32 %v4522, %v5139
        %v5504 = vmul.f32 %v4713, %v5143
        %v5505 = vmul.f32 %v4715, %v5147
        %v5506 = vmul.f32 %v4906, %v5151
        %v5507 = vmul.f32 %v4908, %v5155
        %v5508 = vmul.f32 %v2017, %v5031
        %v5509 = vmul.f32 %v2019, %v5035
        %v5510 = vmul.f32 %v2210, %v5039
        %v5511 = vmul.f32 %v2212, %v5043
        %v5512 = vmul.f32 %v2403, %v5047
        %v5513 = vmul.f32 %v2405, %v5051
        %v5514 = vmul.f32 %v2596, %v5055
        %v5515 = vmul.f32 %v2598, %v5059
        %v5516 = vmul.f32 %v2789, %v5063
        %v5517 = vmul.f32 %v2791, %v5067
        %v5518 = vmul.f32 %v2982, %v5071
        %v5519 = vmul.f32 %v2984, %v5075
        %v5520 = vmul.f32 %v3175, %v5079
        %v5521 = vmul.f32 %v3177, %v5083
        %v5522 = vmul.f32 %v3368, %v5087
        %v5523 = vmul.f32 %v3370, %v5091
        %v5524 = vmul.f32 %v3561, %v5095
        %v5525 = vmul.f32 %v3563, %v5099
        %v5526 = vmul.f32 %v3754, %v5103
        %v5527 = vmul.f32 %v3756, %v5107
        %v5528 = vmul.f32 %v3947, %v5111
        %v5529 = vmul.f32 %v3949, %v5115
        %v5530 = vmul.f32 %v4140, %v5119
        %v5531 = vmul.f32 %v4142, %v5123
        %v5532 = vmul.f32 %v4333, %v5127
        %v5533 = vmul.f32 %v4335, %v5131
        %v5534 = vmul.f32 %v4526, %v5135
        %v5535 = vmul.f32 %v4528, %v5139
        %v5536 = vmul.f32 %v4719, %v5143
        %v5537 = vmul.f32 %v4721, %v5147
        %v5538 = vmul.f32 %v4912, %v5151
        %v5539 = vmul.f32 %v4914, %v5155
        %v5540 = vmul.f32 %v2021, %v5031
        %v5541 = vmul.f32 %v2023, %v5035
        %v5542 = vmul.f32 %v2214, %v5039
        %v5543 = vmul.f32 %v2216, %v5043
        %v5544 = vmul.f32 %v2407, %v5047
        %v5545 = vmul.f32 %v2409, %v5051
        %v5546 = vmul.f32 %v2600, %v5055
        %v5547 = vmul.f32 %v2602, %v5059
        %v5548 = vmul.f32 %v2793, %v5063
        %v5549 = vmul.f32 %v2795, %v5067
        %v5550 = vmul.f32 %v2986, %v5071
        %v5551 = vmul.f32 %v2988, %v5075
        %v5552 = vmul.f32 %v3179, %v5079
        %v5553 = vmul.f32 %v3181, %v5083
        %v5554 = vmul.f32 %v3372, %v5087
        %v5555 = vmul.f32 %v3374, %v5091
        %v5556 = vmul.f32 %v3565, %v5095
        %v5557 = vmul.f32 %v3567, %v5099
        %v5558 = vmul.f32 %v3758, %v5103
        %v5559 = vmul.f32 %v3760, %v5107
        %v5560 = vmul.f32 %v3951, %v5111
        %v5561 = vmul.f32 %v3953, %v5115
        %v5562 = vmul.f32 %v4144, %v5119
        %v5563 = vmul.f32 %v4146, %v5123
        %v5564 = vmul.f32 %v4337, %v5127
        %v5565 = vmul.f32 %v4339, %v5131
        %v5566 = vmul.f32 %v4530, %v5135
        %v5567 = vmul.f32 %v4532, %v5139
        %v5568 = vmul.f32 %v4723, %v5143
        %v5569 = vmul.f32 %v4725, %v5147
        %v5570 = vmul.f32 %v4916, %v5151
        %v5571 = vmul.f32 %v4918, %v5155
        %v5572 = vmul.f32 %v2027, %v5031
        %v5573 = vmul.f32 %v2029, %v5035
        %v5574 = vmul.f32 %v2220, %v5039
        %v5575 = vmul.f32 %v2222, %v5043
        %v5576 = vmul.f32 %v2413, %v5047
        %v5577 = vmul.f32 %v2415, %v5051
        %v5578 = vmul.f32 %v2606, %v5055
        %v5579 = vmul.f32 %v2608, %v5059
        %v5580 = vmul.f32 %v2799, %v5063
        %v5581 = vmul.f32 %v2801, %v5067
        %v5582 = vmul.f32 %v2992, %v5071
        %v5583 = vmul.f32 %v2994, %v5075
        %v5584 = vmul.f32 %v3185, %v5079
        %v5585 = vmul.f32 %v3187, %v5083
        %v5586 = vmul.f32 %v3378, %v5087
        %v5587 = vmul.f32 %v3380, %v5091
        %v5588 = vmul.f32 %v3571, %v5095
        %v5589 = vmul.f32 %v3573, %v5099
        %v5590 = vmul.f32 %v3764, %v5103
        %v5591 = vmul.f32 %v3766, %v5107
        %v5592 = vmul.f32 %v3957, %v5111
        %v5593 = vmul.f32 %v3959, %v5115
        %v5594 = vmul.f32 %v4150, %v5119
        %v5595 = vmul.f32 %v4152, %v5123
        %v5596 = vmul.f32 %v4343, %v5127
        %v5597 = vmul.f32 %v4345, %v5131
        %v5598 = vmul.f32 %v4536, %v5135
        %v5599 = vmul.f32 %v4538, %v5139
        %v5600 = vmul.f32 %v4729, %v5143
        %v5601 = vmul.f32 %v4731, %v5147
        %v5602 = vmul.f32 %v4922, %v5151
        %v5603 = vmul.f32 %v4924, %v5155
        %v5604 = vmul.f32 %v2031, %v5031
        %v5605 = vmul.f32 %v2033, %v5035
        %v5606 = vmul.f32 %v2224, %v5039
        %v5607 = vmul.f32 %v2226, %v5043
        %v5608 = vmul.f32 %v2417, %v5047
        %v5609 = vmul.f32 %v2419, %v5051
        %v5610 = vmul.f32 %v2610, %v5055
        %v5611 = vmul.f32 %v2612, %v5059
        %v5612 = vmul.f32 %v2803, %v5063
        %v5613 = vmul.f32 %v2805, %v5067
        %v5614 = vmul.f32 %v2996, %v5071
        %v5615 = vmul.f32 %v2998, %v5075
        %v5616 = vmul.f32 %v3189, %v5079
        %v5617 = vmul.f32 %v3191, %v5083
        %v5618 = vmul.f32 %v3382, %v5087
        %v5619 = vmul.f32 %v3384, %v5091
        %v5620 = vmul.f32 %v3575, %v5095
        %v5621 = vmul.f32 %v3577, %v5099
        %v5622 = vmul.f32 %v3768, %v5103
        %v5623 = vmul.f32 %v3770, %v5107
        %v5624 = vmul.f32 %v3961, %v5111
        %v5625 = vmul.f32 %v3963, %v5115
        %v5626 = vmul.f32 %v4154, %v5119
        %v5627 = vmul.f32 %v4156, %v5123
        %v5628 = vmul.f32 %v4347, %v5127
        %v5629 = vmul.f32 %v4349, %v5131
        %v5630 = vmul.f32 %v4540, %v5135
        %v5631 = vmul.f32 %v4542, %v5139
        %v5632 = vmul.f32 %v4733, %v5143
        %v5633 = vmul.f32 %v4735, %v5147
        %v5634 = vmul.f32 %v4926, %v5151
        %v5635 = vmul.f32 %v4928, %v5155
        %v5636 = vmul.f32 %v2037, %v5031
        %v5637 = vmul.f32 %v2039, %v5035
        %v5638 = vmul.f32 %v2230, %v5039
        %v5639 = vmul.f32 %v2232, %v5043
        %v5640 = vmul.f32 %v2423, %v5047
        %v5641 = vmul.f32 %v2425, %v5051
        %v5642 = vmul.f32 %v2616, %v5055
        %v5643 = vmul.f32 %v2618, %v5059
        %v5644 = vmul.f32 %v2809, %v5063
        %v5645 = vmul.f32 %v2811, %v5067
        %v5646 = vmul.f32 %v3002, %v5071
        %v5647 = vmul.f32 %v3004, %v5075
        %v5648 = vmul.f32 %v3195, %v5079
        %v5649 = vmul.f32 %v3197, %v5083
        %v5650 = vmul.f32 %v3388, %v5087
        %v5651 = vmul.f32 %v3390, %v5091
        %v5652 = vmul.f32 %v3581, %v5095
        %v5653 = vmul.f32 %v3583, %v5099
        %v5654 = vmul.f32 %v3774, %v5103
        %v5655 = vmul.f32 %v3776, %v5107
        %v5656 = vmul.f32 %v3967, %v5111
        %v5657 = vmul.f32 %v3969, %v5115
        %v5658 = vmul.f32 %v4160, %v5119
        %v5659 = vmul.f32 %v4162, %v5123
        %v5660 = vmul.f32 %v4353, %v5127
        %v5661 = vmul.f32 %v4355, %v5131
        %v5662 = vmul.f32 %v4546, %v5135
        %v5663 = vmul.f32 %v4548, %v5139
        %v5664 = vmul.f32 %v4739, %v5143
        %v5665 = vmul.f32 %v4741, %v5147
        %v5666 = vmul.f32 %v4932, %v5151
        %v5667 = vmul.f32 %v4934, %v5155
        %v5668 = vmul.f32 %v2041, %v5031
        %v5669 = vmul.f32 %v2043, %v5035
        %v5670 = vmul.f32 %v2234, %v5039
        %v5671 = vmul.f32 %v2236, %v5043
        %v5672 = vmul.f32 %v2427, %v5047
        %v5673 = vmul.f32 %v2429, %v5051
        %v5674 = vmul.f32 %v2620, %v5055
        %v5675 = vmul.f32 %v2622, %v5059
        %v5676 = vmul.f32 %v2813, %v5063
        %v5677 = vmul.f32 %v2815, %v5067
        %v5678 = vmul.f32 %v3006, %v5071
        %v5679 = vmul.f32 %v3008, %v5075
        %v5680 = vmul.f32 %v3199, %v5079
        %v5681 = vmul.f32 %v3201, %v5083
        %v5682 = vmul.f32 %v3392, %v5087
        %v5683 = vmul.f32 %v3394, %v5091
        %v5684 = vmul.f32 %v3585, %v5095
        %v5685 = vmul.f32 %v3587, %v5099
        %v5686 = vmul.f32 %v3778, %v5103
        %v5687 = vmul.f32 %v3780, %v5107
        %v5688 = vmul.f32 %v3971, %v5111
        %v5689 = vmul.f32 %v3973, %v5115
        %v5690 = vmul.f32 %v4164, %v5119
        %v5691 = vmul.f32 %v4166, %v5123
        %v5692 = vmul.f32 %v4357, %v5127
        %v5693 = vmul.f32 %v4359, %v5131
        %v5694 = vmul.f32 %v4550, %v5135
        %v5695 = vmul.f32 %v4552, %v5139
        %v5696 = vmul.f32 %v4743, %v5143
        %v5697 = vmul.f32 %v4745, %v5147
        %v5698 = vmul.f32 %v4936, %v5151
        %v5699 = vmul.f32 %v4938, %v5155
        %v5700 = vmul.f32 %v2047, %v5031
        %v5701 = vmul.f32 %v2049, %v5035
        %v5702 = vmul.f32 %v2240, %v5039
        %v5703 = vmul.f32 %v2242, %v5043
        %v5704 = vmul.f32 %v2433, %v5047
        %v5705 = vmul.f32 %v2435, %v5051
        %v5706 = vmul.f32 %v2626, %v5055
        %v5707 = vmul.f32 %v2628, %v5059
        %v5708 = vmul.f32 %v2819, %v5063
        %v5709 = vmul.f32 %v2821, %v5067
        %v5710 = vmul.f32 %v3012, %v5071
        %v5711 = vmul.f32 %v3014, %v5075
        %v5712 = vmul.f32 %v3205, %v5079
        %v5713 = vmul.f32 %v3207, %v5083
        %v5714 = vmul.f32 %v3398, %v5087
        %v5715 = vmul.f32 %v3400, %v5091
        %v5716 = vmul.f32 %v3591, %v5095
        %v5717 = vmul.f32 %v3593, %v5099
        %v5718 = vmul.f32 %v3784, %v5103
        %v5719 = vmul.f32 %v3786, %v5107
        %v5720 = vmul.f32 %v3977, %v5111
        %v5721 = vmul.f32 %v3979, %v5115
        %v5722 = vmul.f32 %v4170, %v5119
        %v5723 = vmul.f32 %v4172, %v5123
        %v5724 = vmul.f32 %v4363, %v5127
        %v5725 = vmul.f32 %v4365, %v5131
        %v5726 = vmul.f32 %v4556, %v5135
        %v5727 = vmul.f32 %v4558, %v5139
        %v5728 = vmul.f32 %v4749, %v5143
        %v5729 = vmul.f32 %v4751, %v5147
        %v5730 = vmul.f32 %v4942, %v5151
        %v5731 = vmul.f32 %v4944, %v5155
        %v5732 = vmul.f32 %v2051, %v5031
        %v5733 = vmul.f32 %v2053, %v5035
        %v5734 = vmul.f32 %v2244, %v5039
        %v5735 = vmul.f32 %v2246, %v5043
        %v5736 = vmul.f32 %v2437, %v5047
        %v5737 = vmul.f32 %v2439, %v5051
        %v5738 = vmul.f32 %v2630, %v5055
        %v5739 = vmul.f32 %v2632, %v5059
        %v5740 = vmul.f32 %v2823, %v5063
        %v5741 = vmul.f32 %v2825, %v5067
        %v5742 = vmul.f32 %v3016, %v5071
        %v5743 = vmul.f32 %v3018, %v5075
        %v5744 = vmul.f32 %v3209, %v5079
        %v5745 = vmul.f32 %v3211, %v5083
        %v5746 = vmul.f32 %v3402, %v5087
        %v5747 = vmul.f32 %v3404, %v5091
        %v5748 = vmul.f32 %v3595, %v5095
        %v5749 = vmul.f32 %v3597, %v5099
        %v5750 = vmul.f32 %v3788, %v5103
        %v5751 = vmul.f32 %v3790, %v5107
        %v5752 = vmul.f32 %v3981, %v5111
        %v5753 = vmul.f32 %v3983, %v5115
        %v5754 = vmul.f32 %v4174, %v5119
        %v5755 = vmul.f32 %v4176, %v5123
        %v5756 = vmul.f32 %v4367, %v5127
        %v5757 = vmul.f32 %v4369, %v5131
        %v5758 = vmul.f32 %v4560, %v5135
        %v5759 = vmul.f32 %v4562, %v5139
        %v5760 = vmul.f32 %v4753, %v5143
        %v5761 = vmul.f32 %v4755, %v5147
        %v5762 = vmul.f32 %v4946, %v5151
        %v5763 = vmul.f32 %v4948, %v5155
        %v5764 = vmul.f32 %v2057, %v5031
        %v5765 = vmul.f32 %v2059, %v5035
        %v5766 = vmul.f32 %v2250, %v5039
        %v5767 = vmul.f32 %v2252, %v5043
        %v5768 = vmul.f32 %v2443, %v5047
        %v5769 = vmul.f32 %v2445, %v5051
        %v5770 = vmul.f32 %v2636, %v5055
        %v5771 = vmul.f32 %v2638, %v5059
        %v5772 = vmul.f32 %v2829, %v5063
        %v5773 = vmul.f32 %v2831, %v5067
        %v5774 = vmul.f32 %v3022, %v5071
        %v5775 = vmul.f32 %v3024, %v5075
        %v5776 = vmul.f32 %v3215, %v5079
        %v5777 = vmul.f32 %v3217, %v5083
        %v5778 = vmul.f32 %v3408, %v5087
        %v5779 = vmul.f32 %v3410, %v5091
        %v5780 = vmul.f32 %v3601, %v5095
        %v5781 = vmul.f32 %v3603, %v5099
        %v5782 = vmul.f32 %v3794, %v5103
        %v5783 = vmul.f32 %v3796, %v5107
        %v5784 = vmul.f32 %v3987, %v5111
        %v5785 = vmul.f32 %v3989, %v5115
        %v5786 = vmul.f32 %v4180, %v5119
        %v5787 = vmul.f32 %v4182, %v5123
        %v5788 = vmul.f32 %v4373, %v5127
        %v5789 = vmul.f32 %v4375, %v5131
        %v5790 = vmul.f32 %v4566, %v5135
        %v5791 = vmul.f32 %v4568, %v5139
        %v5792 = vmul.f32 %v4759, %v5143
        %v5793 = vmul.f32 %v4761, %v5147
        %v5794 = vmul.f32 %v4952, %v5151
        %v5795 = vmul.f32 %v4954, %v5155
        %v5796 = vmul.f32 %v2061, %v5031
        %v5797 = vmul.f32 %v2063, %v5035
        %v5798 = vmul.f32 %v2254, %v5039
        %v5799 = vmul.f32 %v2256, %v5043
        %v5800 = vmul.f32 %v2447, %v5047
        %v5801 = vmul.f32 %v2449, %v5051
        %v5802 = vmul.f32 %v2640, %v5055
        %v5803 = vmul.f32 %v2642, %v5059
        %v5804 = vmul.f32 %v2833, %v5063
        %v5805 = vmul.f32 %v2835, %v5067
        %v5806 = vmul.f32 %v3026, %v5071
        %v5807 = vmul.f32 %v3028, %v5075
        %v5808 = vmul.f32 %v3219, %v5079
        %v5809 = vmul.f32 %v3221, %v5083
        %v5810 = vmul.f32 %v3412, %v5087
        %v5811 = vmul.f32 %v3414, %v5091
        %v5812 = vmul.f32 %v3605, %v5095
        %v5813 = vmul.f32 %v3607, %v5099
        %v5814 = vmul.f32 %v3798, %v5103
        %v5815 = vmul.f32 %v3800, %v5107
        %v5816 = vmul.f32 %v3991, %v5111
        %v5817 = vmul.f32 %v3993, %v5115
        %v5818 = vmul.f32 %v4184, %v5119
        %v5819 = vmul.f32 %v4186, %v5123
        %v5820 = vmul.f32 %v4377, %v5127
        %v5821 = vmul.f32 %v4379, %v5131
        %v5822 = vmul.f32 %v4570, %v5135
        %v5823 = vmul.f32 %v4572, %v5139
        %v5824 = vmul.f32 %v4763, %v5143
        %v5825 = vmul.f32 %v4765, %v5147
        %v5826 = vmul.f32 %v4956, %v5151
        %v5827 = vmul.f32 %v4958, %v5155
        %v5828 = vmul.f32 %v2067, %v5031
        %v5829 = vmul.f32 %v2069, %v5035
        %v5830 = vmul.f32 %v2260, %v5039
        %v5831 = vmul.f32 %v2262, %v5043
        %v5832 = vmul.f32 %v2453, %v5047
        %v5833 = vmul.f32 %v2455, %v5051
        %v5834 = vmul.f32 %v2646, %v5055
        %v5835 = vmul.f32 %v2648, %v5059
        %v5836 = vmul.f32 %v2839, %v5063
        %v5837 = vmul.f32 %v2841, %v5067
        %v5838 = vmul.f32 %v3032, %v5071
        %v5839 = vmul.f32 %v3034, %v5075
        %v5840 = vmul.f32 %v3225, %v5079
        %v5841 = vmul.f32 %v3227, %v5083
        %v5842 = vmul.f32 %v3418, %v5087
        %v5843 = vmul.f32 %v3420, %v5091
        %v5844 = vmul.f32 %v3611, %v5095
        %v5845 = vmul.f32 %v3613, %v5099
        %v5846 = vmul.f32 %v3804, %v5103
        %v5847 = vmul.f32 %v3806, %v5107
        %v5848 = vmul.f32 %v3997, %v5111
        %v5849 = vmul.f32 %v3999, %v5115
        %v5850 = vmul.f32 %v4190, %v5119
        %v5851 = vmul.f32 %v4192, %v5123
        %v5852 = vmul.f32 %v4383, %v5127
        %v5853 = vmul.f32 %v4385, %v5131
        %v5854 = vmul.f32 %v4576, %v5135
        %v5855 = vmul.f32 %v4578, %v5139
        %v5856 = vmul.f32 %v4769, %v5143
        %v5857 = vmul.f32 %v4771, %v5147
        %v5858 = vmul.f32 %v4962, %v5151
        %v5859 = vmul.f32 %v4964, %v5155
        %v5860 = vmul.f32 %v2071, %v5031
        %v5861 = vmul.f32 %v2073, %v5035
        %v5862 = vmul.f32 %v2264, %v5039
        %v5863 = vmul.f32 %v2266, %v5043
        %v5864 = vmul.f32 %v2457, %v5047
        %v5865 = vmul.f32 %v2459, %v5051
        %v5866 = vmul.f32 %v2650, %v5055
        %v5867 = vmul.f32 %v2652, %v5059
        %v5868 = vmul.f32 %v2843, %v5063
        %v5869 = vmul.f32 %v2845, %v5067
        %v5870 = vmul.f32 %v3036, %v5071
        %v5871 = vmul.f32 %v3038, %v5075
        %v5872 = vmul.f32 %v3229, %v5079
        %v5873 = vmul.f32 %v3231, %v5083
        %v5874 = vmul.f32 %v3422, %v5087
        %v5875 = vmul.f32 %v3424, %v5091
        %v5876 = vmul.f32 %v3615, %v5095
        %v5877 = vmul.f32 %v3617, %v5099
        %v5878 = vmul.f32 %v3808, %v5103
        %v5879 = vmul.f32 %v3810, %v5107
        %v5880 = vmul.f32 %v4001, %v5111
        %v5881 = vmul.f32 %v4003, %v5115
        %v5882 = vmul.f32 %v4194, %v5119
        %v5883 = vmul.f32 %v4196, %v5123
        %v5884 = vmul.f32 %v4387, %v5127
        %v5885 = vmul.f32 %v4389, %v5131
        %v5886 = vmul.f32 %v4580, %v5135
        %v5887 = vmul.f32 %v4582, %v5139
        %v5888 = vmul.f32 %v4773, %v5143
        %v5889 = vmul.f32 %v4775, %v5147
        %v5890 = vmul.f32 %v4966, %v5151
        %v5891 = vmul.f32 %v4968, %v5155
        %v5892 = vmul.f32 %v2077, %v5031
        %v5893 = vmul.f32 %v2079, %v5035
        %v5894 = vmul.f32 %v2270, %v5039
        %v5895 = vmul.f32 %v2272, %v5043
        %v5896 = vmul.f32 %v2463, %v5047
        %v5897 = vmul.f32 %v2465, %v5051
        %v5898 = vmul.f32 %v2656, %v5055
        %v5899 = vmul.f32 %v2658, %v5059
        %v5900 = vmul.f32 %v2849, %v5063
        %v5901 = vmul.f32 %v2851, %v5067
        %v5902 = vmul.f32 %v3042, %v5071
        %v5903 = vmul.f32 %v3044, %v5075
        %v5904 = vmul.f32 %v3235, %v5079
        %v5905 = vmul.f32 %v3237, %v5083
        %v5906 = vmul.f32 %v3428, %v5087
        %v5907 = vmul.f32 %v3430, %v5091
        %v5908 = vmul.f32 %v3621, %v5095
        %v5909 = vmul.f32 %v3623, %v5099
        %v5910 = vmul.f32 %v3814, %v5103
        %v5911 = vmul.f32 %v3816, %v5107
        %v5912 = vmul.f32 %v4007, %v5111
        %v5913 = vmul.f32 %v4009, %v5115
        %v5914 = vmul.f32 %v4200, %v5119
        %v5915 = vmul.f32 %v4202, %v5123
        %v5916 = vmul.f32 %v4393, %v5127
        %v5917 = vmul.f32 %v4395, %v5131
        %v5918 = vmul.f32 %v4586, %v5135
        %v5919 = vmul.f32 %v4588, %v5139
        %v5920 = vmul.f32 %v4779, %v5143
        %v5921 = vmul.f32 %v4781, %v5147
        %v5922 = vmul.f32 %v4972, %v5151
        %v5923 = vmul.f32 %v4974, %v5155
        %v5924 = vmul.f32 %v2081, %v5031
        %v5925 = vmul.f32 %v2083, %v5035
        %v5926 = vmul.f32 %v2274, %v5039
        %v5927 = vmul.f32 %v2276, %v5043
        %v5928 = vmul.f32 %v2467, %v5047
        %v5929 = vmul.f32 %v2469, %v5051
        %v5930 = vmul.f32 %v2660, %v5055
        %v5931 = vmul.f32 %v2662, %v5059
        %v5932 = vmul.f32 %v2853, %v5063
        %v5933 = vmul.f32 %v2855, %v5067
        %v5934 = vmul.f32 %v3046, %v5071
        %v5935 = vmul.f32 %v3048, %v5075
        %v5936 = vmul.f32 %v3239, %v5079
        %v5937 = vmul.f32 %v3241, %v5083
        %v5938 = vmul.f32 %v3432, %v5087
        %v5939 = vmul.f32 %v3434, %v5091
        %v5940 = vmul.f32 %v3625, %v5095
        %v5941 = vmul.f32 %v3627, %v5099
        %v5942 = vmul.f32 %v3818, %v5103
        %v5943 = vmul.f32 %v3820, %v5107
        %v5944 = vmul.f32 %v4011, %v5111
        %v5945 = vmul.f32 %v4013, %v5115
        %v5946 = vmul.f32 %v4204, %v5119
        %v5947 = vmul.f32 %v4206, %v5123
        %v5948 = vmul.f32 %v4397, %v5127
        %v5949 = vmul.f32 %v4399, %v5131
        %v5950 = vmul.f32 %v4590, %v5135
        %v5951 = vmul.f32 %v4592, %v5139
        %v5952 = vmul.f32 %v4783, %v5143
        %v5953 = vmul.f32 %v4785, %v5147
        %v5954 = vmul.f32 %v4976, %v5151
        %v5955 = vmul.f32 %v4978, %v5155
        %v5956 = vmul.f32 %v2087, %v5031
        %v5957 = vmul.f32 %v2089, %v5035
        %v5958 = vmul.f32 %v2280, %v5039
        %v5959 = vmul.f32 %v2282, %v5043
        %v5960 = vmul.f32 %v2473, %v5047
        %v5961 = vmul.f32 %v2475, %v5051
        %v5962 = vmul.f32 %v2666, %v5055
        %v5963 = vmul.f32 %v2668, %v5059
        %v5964 = vmul.f32 %v2859, %v5063
        %v5965 = vmul.f32 %v2861, %v5067
        %v5966 = vmul.f32 %v3052, %v5071
        %v5967 = vmul.f32 %v3054, %v5075
        %v5968 = vmul.f32 %v3245, %v5079
        %v5969 = vmul.f32 %v3247, %v5083
        %v5970 = vmul.f32 %v3438, %v5087
        %v5971 = vmul.f32 %v3440, %v5091
        %v5972 = vmul.f32 %v3631, %v5095
        %v5973 = vmul.f32 %v3633, %v5099
        %v5974 = vmul.f32 %v3824, %v5103
        %v5975 = vmul.f32 %v3826, %v5107
        %v5976 = vmul.f32 %v4017, %v5111
        %v5977 = vmul.f32 %v4019, %v5115
        %v5978 = vmul.f32 %v4210, %v5119
        %v5979 = vmul.f32 %v4212, %v5123
        %v5980 = vmul.f32 %v4403, %v5127
        %v5981 = vmul.f32 %v4405, %v5131
        %v5982 = vmul.f32 %v4596, %v5135
        %v5983 = vmul.f32 %v4598, %v5139
        %v5984 = vmul.f32 %v4789, %v5143
        %v5985 = vmul.f32 %v4791, %v5147
        %v5986 = vmul.f32 %v4982, %v5151
        %v5987 = vmul.f32 %v4984, %v5155
        %v5988 = vmul.f32 %v2091, %v5031
        %v5989 = vmul.f32 %v2093, %v5035
        %v5990 = vmul.f32 %v2284, %v5039
        %v5991 = vmul.f32 %v2286, %v5043
        %v5992 = vmul.f32 %v2477, %v5047
        %v5993 = vmul.f32 %v2479, %v5051
        %v5994 = vmul.f32 %v2670, %v5055
        %v5995 = vmul.f32 %v2672, %v5059
        %v5996 = vmul.f32 %v2863, %v5063
        %v5997 = vmul.f32 %v2865, %v5067
        %v5998 = vmul.f32 %v3056, %v5071
        %v5999 = vmul.f32 %v3058, %v5075
        %v6000 = vmul.f32 %v3249, %v5079
        %v6001 = vmul.f32 %v3251, %v5083
        %v6002 = vmul.f32 %v3442, %v5087
        %v6003 = vmul.f32 %v3444, %v5091
        %v6004 = vmul.f32 %v3635, %v5095
        %v6005 = vmul.f32 %v3637, %v5099
        %v6006 = vmul.f32 %v3828, %v5103
        %v6007 = vmul.f32 %v3830, %v5107
        %v6008 = vmul.f32 %v4021, %v5111
        %v6009 = vmul.f32 %v4023, %v5115
        %v6010 = vmul.f32 %v4214, %v5119
        %v6011 = vmul.f32 %v4216, %v5123
        %v6012 = vmul.f32 %v4407, %v5127
        %v6013 = vmul.f32 %v4409, %v5131
        %v6014 = vmul.f32 %v4600, %v5135
        %v6015 = vmul.f32 %v4602, %v5139
        %v6016 = vmul.f32 %v4793, %v5143
        %v6017 = vmul.f32 %v4795, %v5147
        %v6018 = vmul.f32 %v4986, %v5151
        %v6019 = vmul.f32 %v4988, %v5155
        %v6020 = vmul.f32 %v2097, %v5031
        %v6021 = vmul.f32 %v2099, %v5035
        %v6022 = vmul.f32 %v2290, %v5039
        %v6023 = vmul.f32 %v2292, %v5043
        %v6024 = vmul.f32 %v2483, %v5047
        %v6025 = vmul.f32 %v2485, %v5051
        %v6026 = vmul.f32 %v2676, %v5055
        %v6027 = vmul.f32 %v2678, %v5059
        %v6028 = vmul.f32 %v2869, %v5063
        %v6029 = vmul.f32 %v2871, %v5067
        %v6030 = vmul.f32 %v3062, %v5071
        %v6031 = vmul.f32 %v3064, %v5075
        %v6032 = vmul.f32 %v3255, %v5079
        %v6033 = vmul.f32 %v3257, %v5083
        %v6034 = vmul.f32 %v3448, %v5087
        %v6035 = vmul.f32 %v3450, %v5091
        %v6036 = vmul.f32 %v3641, %v5095
        %v6037 = vmul.f32 %v3643, %v5099
        %v6038 = vmul.f32 %v3834, %v5103
        %v6039 = vmul.f32 %v3836, %v5107
        %v6040 = vmul.f32 %v4027, %v5111
        %v6041 = vmul.f32 %v4029, %v5115
        %v6042 = vmul.f32 %v4220, %v5119
        %v6043 = vmul.f32 %v4222, %v5123
        %v6044 = vmul.f32 %v4413, %v5127
        %v6045 = vmul.f32 %v4415, %v5131
        %v6046 = vmul.f32 %v4606, %v5135
        %v6047 = vmul.f32 %v4608, %v5139
        %v6048 = vmul.f32 %v4799, %v5143
        %v6049 = vmul.f32 %v4801, %v5147
        %v6050 = vmul.f32 %v4992, %v5151
        %v6051 = vmul.f32 %v4994, %v5155
        %v6052 = vmul.f32 %v2101, %v5031
        %v6053 = vmul.f32 %v2103, %v5035
        %v6054 = vmul.f32 %v2294, %v5039
        %v6055 = vmul.f32 %v2296, %v5043
        %v6056 = vmul.f32 %v2487, %v5047
        %v6057 = vmul.f32 %v2489, %v5051
        %v6058 = vmul.f32 %v2680, %v5055
        %v6059 = vmul.f32 %v2682, %v5059
        %v6060 = vmul.f32 %v2873, %v5063
        %v6061 = vmul.f32 %v2875, %v5067
        %v6062 = vmul.f32 %v3066, %v5071
        %v6063 = vmul.f32 %v3068, %v5075
        %v6064 = vmul.f32 %v3259, %v5079
        %v6065 = vmul.f32 %v3261, %v5083
        %v6066 = vmul.f32 %v3452, %v5087
        %v6067 = vmul.f32 %v3454, %v5091
        %v6068 = vmul.f32 %v3645, %v5095
        %v6069 = vmul.f32 %v3647, %v5099
        %v6070 = vmul.f32 %v3838, %v5103
        %v6071 = vmul.f32 %v3840, %v5107
        %v6072 = vmul.f32 %v4031, %v5111
        %v6073 = vmul.f32 %v4033, %v5115
        %v6074 = vmul.f32 %v4224, %v5119
        %v6075 = vmul.f32 %v4226, %v5123
        %v6076 = vmul.f32 %v4417, %v5127
        %v6077 = vmul.f32 %v4419, %v5131
        %v6078 = vmul.f32 %v4610, %v5135
        %v6079 = vmul.f32 %v4612, %v5139
        %v6080 = vmul.f32 %v4803, %v5143
        %v6081 = vmul.f32 %v4805, %v5147
        %v6082 = vmul.f32 %v4996, %v5151
        %v6083 = vmul.f32 %v4998, %v5155
        %v6084 = vmul.f32 %v2107, %v5031
        %v6085 = vmul.f32 %v2109, %v5035
        %v6086 = vmul.f32 %v2300, %v5039
        %v6087 = vmul.f32 %v2302, %v5043
        %v6088 = vmul.f32 %v2493, %v5047
        %v6089 = vmul.f32 %v2495, %v5051
        %v6090 = vmul.f32 %v2686, %v5055
        %v6091 = vmul.f32 %v2688, %v5059
        %v6092 = vmul.f32 %v2879, %v5063
        %v6093 = vmul.f32 %v2881, %v5067
        %v6094 = vmul.f32 %v3072, %v5071
        %v6095 = vmul.f32 %v3074, %v5075
        %v6096 = vmul.f32 %v3265, %v5079
        %v6097 = vmul.f32 %v3267, %v5083
        %v6098 = vmul.f32 %v3458, %v5087
        %v6099 = vmul.f32 %v3460, %v5091
        %v6100 = vmul.f32 %v3651, %v5095
        %v6101 = vmul.f32 %v3653, %v5099
        %v6102 = vmul.f32 %v3844, %v5103
        %v6103 = vmul.f32 %v3846, %v5107
        %v6104 = vmul.f32 %v4037, %v5111
        %v6105 = vmul.f32 %v4039, %v5115
        %v6106 = vmul.f32 %v4230, %v5119
        %v6107 = vmul.f32 %v4232, %v5123
        %v6108 = vmul.f32 %v4423, %v5127
        %v6109 = vmul.f32 %v4425, %v5131
        %v6110 = vmul.f32 %v4616, %v5135
        %v6111 = vmul.f32 %v4618, %v5139
        %v6112 = vmul.f32 %v4809, %v5143
        %v6113 = vmul.f32 %v4811, %v5147
        %v6114 = vmul.f32 %v5002, %v5151
        %v6115 = vmul.f32 %v5004, %v5155
        %v6116 = vmul.f32 %v2111, %v5031
        %v6117 = vmul.f32 %v2113, %v5035
        %v6118 = vmul.f32 %v2304, %v5039
        %v6119 = vmul.f32 %v2306, %v5043
        %v6120 = vmul.f32 %v2497, %v5047
        %v6121 = vmul.f32 %v2499, %v5051
        %v6122 = vmul.f32 %v2690, %v5055
        %v6123 = vmul.f32 %v2692, %v5059
        %v6124 = vmul.f32 %v2883, %v5063
        %v6125 = vmul.f32 %v2885, %v5067
        %v6126 = vmul.f32 %v3076, %v5071
        %v6127 = vmul.f32 %v3078, %v5075
        %v6128 = vmul.f32 %v3269, %v5079
        %v6129 = vmul.f32 %v3271, %v5083
        %v6130 = vmul.f32 %v3462, %v5087
        %v6131 = vmul.f32 %v3464, %v5091
        %v6132 = vmul.f32 %v3655, %v5095
        %v6133 = vmul.f32 %v3657, %v5099
        %v6134 = vmul.f32 %v3848, %v5103
        %v6135 = vmul.f32 %v3850, %v5107
        %v6136 = vmul.f32 %v4041, %v5111
        %v6137 = vmul.f32 %v4043, %v5115
        %v6138 = vmul.f32 %v4234, %v5119
        %v6139 = vmul.f32 %v4236, %v5123
        %v6140 = vmul.f32 %v4427, %v5127
        %v6141 = vmul.f32 %v4429, %v5131
        %v6142 = vmul.f32 %v4620, %v5135
        %v6143 = vmul.f32 %v4622, %v5139
        %v6144 = vmul.f32 %v4813, %v5143
        %v6145 = vmul.f32 %v4815, %v5147
        %v6146 = vmul.f32 %v5006, %v5151
        %v6147 = vmul.f32 %v5008, %v5155
        %v6148 = vmul.f32 %v2117, %v5031
        %v6149 = vmul.f32 %v2119, %v5035
        %v6150 = vmul.f32 %v2310, %v5039
        %v6151 = vmul.f32 %v2312, %v5043
        %v6152 = vmul.f32 %v2503, %v5047
        %v6153 = vmul.f32 %v2505, %v5051
        %v6154 = vmul.f32 %v2696, %v5055
        %v6155 = vmul.f32 %v2698, %v5059
        %v6156 = vmul.f32 %v2889, %v5063
        %v6157 = vmul.f32 %v2891, %v5067
        %v6158 = vmul.f32 %v3082, %v5071
        %v6159 = vmul.f32 %v3084, %v5075
        %v6160 = vmul.f32 %v3275, %v5079
        %v6161 = vmul.f32 %v3277, %v5083
        %v6162 = vmul.f32 %v3468, %v5087
        %v6163 = vmul.f32 %v3470, %v5091
        %v6164 = vmul.f32 %v3661, %v5095
        %v6165 = vmul.f32 %v3663, %v5099
        %v6166 = vmul.f32 %v3854, %v5103
        %v6167 = vmul.f32 %v3856, %v5107
        %v6168 = vmul.f32 %v4047, %v5111
        %v6169 = vmul.f32 %v4049, %v5115
        %v6170 = vmul.f32 %v4240, %v5119
        %v6171 = vmul.f32 %v4242, %v5123
        %v6172 = vmul.f32 %v4433, %v5127
        %v6173 = vmul.f32 %v4435, %v5131
        %v6174 = vmul.f32 %v4626, %v5135
        %v6175 = vmul.f32 %v4628, %v5139
        %v6176 = vmul.f32 %v4819, %v5143
        %v6177 = vmul.f32 %v4821, %v5147
        %v6178 = vmul.f32 %v5012, %v5151
        %v6179 = vmul.f32 %v5014, %v5155
        %v6180 = vmul.f32 %v2121, %v5031
        %v6181 = vmul.f32 %v2123, %v5035
        %v6182 = vmul.f32 %v2314, %v5039
        %v6183 = vmul.f32 %v2316, %v5043
        %v6184 = vmul.f32 %v2507, %v5047
        %v6185 = vmul.f32 %v2509, %v5051
        %v6186 = vmul.f32 %v2700, %v5055
        %v6187 = vmul.f32 %v2702, %v5059
        %v6188 = vmul.f32 %v2893, %v5063
        %v6189 = vmul.f32 %v2895, %v5067
        %v6190 = vmul.f32 %v3086, %v5071
        %v6191 = vmul.f32 %v3088, %v5075
        %v6192 = vmul.f32 %v3279, %v5079
        %v6193 = vmul.f32 %v3281, %v5083
        %v6194 = vmul.f32 %v3472, %v5087
        %v6195 = vmul.f32 %v3474, %v5091
        %v6196 = vmul.f32 %v3665, %v5095
        %v6197 = vmul.f32 %v3667, %v5099
        %v6198 = vmul.f32 %v3858, %v5103
        %v6199 = vmul.f32 %v3860, %v5107
        %v6200 = vmul.f32 %v4051, %v5111
        %v6201 = vmul.f32 %v4053, %v5115
        %v6202 = vmul.f32 %v4244, %v5119
        %v6203 = vmul.f32 %v4246, %v5123
        %v6204 = vmul.f32 %v4437, %v5127
        %v6205 = vmul.f32 %v4439, %v5131
        %v6206 = vmul.f32 %v4630, %v5135
        %v6207 = vmul.f32 %v4632, %v5139
        %v6208 = vmul.f32 %v4823, %v5143
        %v6209 = vmul.f32 %v4825, %v5147
        %v6210 = vmul.f32 %v5016, %v5151
        %v6211 = vmul.f32 %v5018, %v5155
        %6212 = vst [vmem:[%s256] sm:$0xff] %v5188
        %6213 = vst [vmem:[%s256 + $0x8] sm:$0xff] %v5189
        %6214 = vst [vmem:[%s256 + $0x10] sm:$0xff] %v5190
        %6215 = vst [vmem:[%s256 + $0x18] sm:$0xff] %v5191
        %6216 = vst [vmem:[%s256 + $0x20] sm:$0xff] %v5192
        %6217 = vst [vmem:[%s256 + $0x28] sm:$0xff] %v5193
        %6218 = vst [vmem:[%s256 + $0x30] sm:$0xff] %v5194
        %6219 = vst [vmem:[%s256 + $0x38] sm:$0xff] %v5195
        %6220 = vst [vmem:[%s256 + $0x40] sm:$0xff] %v5196
        %6221 = vst [vmem:[%s256 + $0x48] sm:$0xff] %v5197
        %6222 = vst [vmem:[%s256 + $0x50] sm:$0xff] %v5198
        %6223 = vst [vmem:[%s256 + $0x58] sm:$0xff] %v5199
        %6224 = vst [vmem:[%s256 + $0x60] sm:$0xff] %v5200
        %6225 = vst [vmem:[%s256 + $0x68] sm:$0xff] %v5201
        %6226 = vst [vmem:[%s256 + $0x70] sm:$0xff] %v5202
        %6227 = vst [vmem:[%s256 + $0x78] sm:$0xff] %v5203
        %6228 = vst [vmem:[%s256 + $0x80] sm:$0xff] %v5204
        %6229 = vst [vmem:[%s256 + $0x88] sm:$0xff] %v5205
        %6230 = vst [vmem:[%s256 + $0x90] sm:$0xff] %v5206
        %6231 = vst [vmem:[%s256 + $0x98] sm:$0xff] %v5207
        %6232 = vst [vmem:[%s256 + $0xa0] sm:$0xff] %v5208
        %6233 = vst [vmem:[%s256 + $0xa8] sm:$0xff] %v5209
        %6234 = vst [vmem:[%s256 + $0xb0] sm:$0xff] %v5210
        %6235 = vst [vmem:[%s256 + $0xb8] sm:$0xff] %v5211
        %6236 = vst [vmem:[%s256 + $0xc0] sm:$0xff] %v5212
        %6237 = vst [vmem:[%s256 + $0xc8] sm:$0xff] %v5213
        %6238 = vst [vmem:[%s256 + $0xd0] sm:$0xff] %v5214
        %6239 = vst [vmem:[%s256 + $0xd8] sm:$0xff] %v5215
        %6240 = vst [vmem:[%s256 + $0xe0] sm:$0xff] %v5216
        %6241 = vst [vmem:[%s256 + $0xe8] sm:$0xff] %v5217
        %6242 = vst [vmem:[%s256 + $0xf0] sm:$0xff] %v5218
        %6243 = vst [vmem:[%s256 + $0xf8] sm:$0xff] %v5219
        %6244 = vst [vmem:[%s256 + $0x100] sm:$0xff] %v5220
        %6245 = vst [vmem:[%s256 + $0x108] sm:$0xff] %v5221
        %6246 = vst [vmem:[%s256 + $0x110] sm:$0xff] %v5222
        %6247 = vst [vmem:[%s256 + $0x118] sm:$0xff] %v5223
        %6248 = vst [vmem:[%s256 + $0x120] sm:$0xff] %v5224
        %6249 = vst [vmem:[%s256 + $0x128] sm:$0xff] %v5225
        %6250 = vst [vmem:[%s256 + $0x130] sm:$0xff] %v5226
        %6251 = vst [vmem:[%s256 + $0x138] sm:$0xff] %v5227
        %6252 = vst [vmem:[%s256 + $0x140] sm:$0xff] %v5228
        %6253 = vst [vmem:[%s256 + $0x148] sm:$0xff] %v5229
        %6254 = vst [vmem:[%s256 + $0x150] sm:$0xff] %v5230
        %6255 = vst [vmem:[%s256 + $0x158] sm:$0xff] %v5231
        %6256 = vst [vmem:[%s256 + $0x160] sm:$0xff] %v5232
        %6257 = vst [vmem:[%s256 + $0x168] sm:$0xff] %v5233
        %6258 = vst [vmem:[%s256 + $0x170] sm:$0xff] %v5234
        %6259 = vst [vmem:[%s256 + $0x178] sm:$0xff] %v5235
        %6260 = vst [vmem:[%s256 + $0x180] sm:$0xff] %v5236
        %6261 = vst [vmem:[%s256 + $0x188] sm:$0xff] %v5237
        %6262 = vst [vmem:[%s256 + $0x190] sm:$0xff] %v5238
        %6263 = vst [vmem:[%s256 + $0x198] sm:$0xff] %v5239
        %6264 = vst [vmem:[%s256 + $0x1a0] sm:$0xff] %v5240
        %6265 = vst [vmem:[%s256 + $0x1a8] sm:$0xff] %v5241
        %6266 = vst [vmem:[%s256 + $0x1b0] sm:$0xff] %v5242
        %6267 = vst [vmem:[%s256 + $0x1b8] sm:$0xff] %v5243
        %6268 = vst [vmem:[%s256 + $0x1c0] sm:$0xff] %v5244
        %6269 = vst [vmem:[%s256 + $0x1c8] sm:$0xff] %v5245
        %6270 = vst [vmem:[%s256 + $0x1d0] sm:$0xff] %v5246
        %6271 = vst [vmem:[%s256 + $0x1d8] sm:$0xff] %v5247
        %6272 = vst [vmem:[%s256 + $0x1e0] sm:$0xff] %v5248
        %6273 = vst [vmem:[%s256 + $0x1e8] sm:$0xff] %v5249
        %6274 = vst [vmem:[%s256 + $0x1f0] sm:$0xff] %v5250
        %6275 = vst [vmem:[%s256 + $0x1f8] sm:$0xff] %v5251
        %6276 = vst [vmem:[%s256 + $0x200] sm:$0xff] %v5252
        %6277 = vst [vmem:[%s256 + $0x208] sm:$0xff] %v5253
        %6278 = vst [vmem:[%s256 + $0x210] sm:$0xff] %v5254
        %6279 = vst [vmem:[%s256 + $0x218] sm:$0xff] %v5255
        %6280 = vst [vmem:[%s256 + $0x220] sm:$0xff] %v5256
        %6281 = vst [vmem:[%s256 + $0x228] sm:$0xff] %v5257
        %6282 = vst [vmem:[%s256 + $0x230] sm:$0xff] %v5258
        %6283 = vst [vmem:[%s256 + $0x238] sm:$0xff] %v5259
        %6284 = vst [vmem:[%s256 + $0x240] sm:$0xff] %v5260
        %6285 = vst [vmem:[%s256 + $0x248] sm:$0xff] %v5261
        %6286 = vst [vmem:[%s256 + $0x250] sm:$0xff] %v5262
        %6287 = vst [vmem:[%s256 + $0x258] sm:$0xff] %v5263
        %6288 = vst [vmem:[%s256 + $0x260] sm:$0xff] %v5264
        %6289 = vst [vmem:[%s256 + $0x268] sm:$0xff] %v5265
        %6290 = vst [vmem:[%s256 + $0x270] sm:$0xff] %v5266
        %6291 = vst [vmem:[%s256 + $0x278] sm:$0xff] %v5267
        %6292 = vst [vmem:[%s256 + $0x280] sm:$0xff] %v5268
        %6293 = vst [vmem:[%s256 + $0x288] sm:$0xff] %v5269
        %6294 = vst [vmem:[%s256 + $0x290] sm:$0xff] %v5270
        %6295 = vst [vmem:[%s256 + $0x298] sm:$0xff] %v5271
        %6296 = vst [vmem:[%s256 + $0x2a0] sm:$0xff] %v5272
        %6297 = vst [vmem:[%s256 + $0x2a8] sm:$0xff] %v5273
        %6298 = vst [vmem:[%s256 + $0x2b0] sm:$0xff] %v5274
        %6299 = vst [vmem:[%s256 + $0x2b8] sm:$0xff] %v5275
        %6300 = vst [vmem:[%s256 + $0x2c0] sm:$0xff] %v5276
        %6301 = vst [vmem:[%s256 + $0x2c8] sm:$0xff] %v5277
        %6302 = vst [vmem:[%s256 + $0x2d0] sm:$0xff] %v5278
        %6303 = vst [vmem:[%s256 + $0x2d8] sm:$0xff] %v5279
        %6304 = vst [vmem:[%s256 + $0x2e0] sm:$0xff] %v5280
        %6305 = vst [vmem:[%s256 + $0x2e8] sm:$0xff] %v5281
        %6306 = vst [vmem:[%s256 + $0x2f0] sm:$0xff] %v5282
        %6307 = vst [vmem:[%s256 + $0x2f8] sm:$0xff] %v5283
        %6308 = vst [vmem:[%s256 + $0x300] sm:$0xff] %v5284
        %6309 = vst [vmem:[%s256 + $0x308] sm:$0xff] %v5285
        %6310 = vst [vmem:[%s256 + $0x310] sm:$0xff] %v5286
        %6311 = vst [vmem:[%s256 + $0x318] sm:$0xff] %v5287
        %6312 = vst [vmem:[%s256 + $0x320] sm:$0xff] %v5288
        %6313 = vst [vmem:[%s256 + $0x328] sm:$0xff] %v5289
        %6314 = vst [vmem:[%s256 + $0x330] sm:$0xff] %v5290
        %6315 = vst [vmem:[%s256 + $0x338] sm:$0xff] %v5291
        %6316 = vst [vmem:[%s256 + $0x340] sm:$0xff] %v5292
        %6317 = vst [vmem:[%s256 + $0x348] sm:$0xff] %v5293
        %6318 = vst [vmem:[%s256 + $0x350] sm:$0xff] %v5294
        %6319 = vst [vmem:[%s256 + $0x358] sm:$0xff] %v5295
        %6320 = vst [vmem:[%s256 + $0x360] sm:$0xff] %v5296
        %6321 = vst [vmem:[%s256 + $0x368] sm:$0xff] %v5297
        %6322 = vst [vmem:[%s256 + $0x370] sm:$0xff] %v5298
        %6323 = vst [vmem:[%s256 + $0x378] sm:$0xff] %v5299
        %6324 = vst [vmem:[%s256 + $0x380] sm:$0xff] %v5300
        %6325 = vst [vmem:[%s256 + $0x388] sm:$0xff] %v5301
        %6326 = vst [vmem:[%s256 + $0x390] sm:$0xff] %v5302
        %6327 = vst [vmem:[%s256 + $0x398] sm:$0xff] %v5303
        %6328 = vst [vmem:[%s256 + $0x3a0] sm:$0xff] %v5304
        %6329 = vst [vmem:[%s256 + $0x3a8] sm:$0xff] %v5305
        %6330 = vst [vmem:[%s256 + $0x3b0] sm:$0xff] %v5306
        %6331 = vst [vmem:[%s256 + $0x3b8] sm:$0xff] %v5307
        %6332 = vst [vmem:[%s256 + $0x3c0] sm:$0xff] %v5308
        %6333 = vst [vmem:[%s256 + $0x3c8] sm:$0xff] %v5309
        %6334 = vst [vmem:[%s256 + $0x3d0] sm:$0xff] %v5310
        %6335 = vst [vmem:[%s256 + $0x3d8] sm:$0xff] %v5311
        %6336 = vst [vmem:[%s256 + $0x3e0] sm:$0xff] %v5312
        %6337 = vst [vmem:[%s256 + $0x3e8] sm:$0xff] %v5313
        %6338 = vst [vmem:[%s256 + $0x3f0] sm:$0xff] %v5314
        %6339 = vst [vmem:[%s256 + $0x3f8] sm:$0xff] %v5315
        %6340 = vst [vmem:[%s256 + $0x400] sm:$0xff] %v5316
        %6341 = vst [vmem:[%s256 + $0x408] sm:$0xff] %v5317
        %6342 = vst [vmem:[%s256 + $0x410] sm:$0xff] %v5318
        %6343 = vst [vmem:[%s256 + $0x418] sm:$0xff] %v5319
        %6344 = vst [vmem:[%s256 + $0x420] sm:$0xff] %v5320
        %6345 = vst [vmem:[%s256 + $0x428] sm:$0xff] %v5321
        %6346 = vst [vmem:[%s256 + $0x430] sm:$0xff] %v5322
        %6347 = vst [vmem:[%s256 + $0x438] sm:$0xff] %v5323
        %6348 = vst [vmem:[%s256 + $0x440] sm:$0xff] %v5324
        %6349 = vst [vmem:[%s256 + $0x448] sm:$0xff] %v5325
        %6350 = vst [vmem:[%s256 + $0x450] sm:$0xff] %v5326
        %6351 = vst [vmem:[%s256 + $0x458] sm:$0xff] %v5327
        %6352 = vst [vmem:[%s256 + $0x460] sm:$0xff] %v5328
        %6353 = vst [vmem:[%s256 + $0x468] sm:$0xff] %v5329
        %6354 = vst [vmem:[%s256 + $0x470] sm:$0xff] %v5330
        %6355 = vst [vmem:[%s256 + $0x478] sm:$0xff] %v5331
        %6356 = vst [vmem:[%s256 + $0x480] sm:$0xff] %v5332
        %6357 = vst [vmem:[%s256 + $0x488] sm:$0xff] %v5333
        %6358 = vst [vmem:[%s256 + $0x490] sm:$0xff] %v5334
        %6359 = vst [vmem:[%s256 + $0x498] sm:$0xff] %v5335
        %6360 = vst [vmem:[%s256 + $0x4a0] sm:$0xff] %v5336
        %6361 = vst [vmem:[%s256 + $0x4a8] sm:$0xff] %v5337
        %6362 = vst [vmem:[%s256 + $0x4b0] sm:$0xff] %v5338
        %6363 = vst [vmem:[%s256 + $0x4b8] sm:$0xff] %v5339
        %6364 = vst [vmem:[%s256 + $0x4c0] sm:$0xff] %v5340
        %6365 = vst [vmem:[%s256 + $0x4c8] sm:$0xff] %v5341
        %6366 = vst [vmem:[%s256 + $0x4d0] sm:$0xff] %v5342
        %6367 = vst [vmem:[%s256 + $0x4d8] sm:$0xff] %v5343
        %6368 = vst [vmem:[%s256 + $0x4e0] sm:$0xff] %v5344
        %6369 = vst [vmem:[%s256 + $0x4e8] sm:$0xff] %v5345
        %6370 = vst [vmem:[%s256 + $0x4f0] sm:$0xff] %v5346
        %6371 = vst [vmem:[%s256 + $0x4f8] sm:$0xff] %v5347
        %6372 = vst [vmem:[%s256 + $0x500] sm:$0xff] %v5348
        %6373 = vst [vmem:[%s256 + $0x508] sm:$0xff] %v5349
        %6374 = vst [vmem:[%s256 + $0x510] sm:$0xff] %v5350
        %6375 = vst [vmem:[%s256 + $0x518] sm:$0xff] %v5351
        %6376 = vst [vmem:[%s256 + $0x520] sm:$0xff] %v5352
        %6377 = vst [vmem:[%s256 + $0x528] sm:$0xff] %v5353
        %6378 = vst [vmem:[%s256 + $0x530] sm:$0xff] %v5354
        %6379 = vst [vmem:[%s256 + $0x538] sm:$0xff] %v5355
        %6380 = vst [vmem:[%s256 + $0x540] sm:$0xff] %v5356
        %6381 = vst [vmem:[%s256 + $0x548] sm:$0xff] %v5357
        %6382 = vst [vmem:[%s256 + $0x550] sm:$0xff] %v5358
        %6383 = vst [vmem:[%s256 + $0x558] sm:$0xff] %v5359
        %6384 = vst [vmem:[%s256 + $0x560] sm:$0xff] %v5360
        %6385 = vst [vmem:[%s256 + $0x568] sm:$0xff] %v5361
        %6386 = vst [vmem:[%s256 + $0x570] sm:$0xff] %v5362
        %6387 = vst [vmem:[%s256 + $0x578] sm:$0xff] %v5363
        %6388 = vst [vmem:[%s256 + $0x580] sm:$0xff] %v5364
        %6389 = vst [vmem:[%s256 + $0x588] sm:$0xff] %v5365
        %6390 = vst [vmem:[%s256 + $0x590] sm:$0xff] %v5366
        %6391 = vst [vmem:[%s256 + $0x598] sm:$0xff] %v5367
        %6392 = vst [vmem:[%s256 + $0x5a0] sm:$0xff] %v5368
        %6393 = vst [vmem:[%s256 + $0x5a8] sm:$0xff] %v5369
        %6394 = vst [vmem:[%s256 + $0x5b0] sm:$0xff] %v5370
        %6395 = vst [vmem:[%s256 + $0x5b8] sm:$0xff] %v5371
        %6396 = vst [vmem:[%s256 + $0x5c0] sm:$0xff] %v5372
        %6397 = vst [vmem:[%s256 + $0x5c8] sm:$0xff] %v5373
        %6398 = vst [vmem:[%s256 + $0x5d0] sm:$0xff] %v5374
        %6399 = vst [vmem:[%s256 + $0x5d8] sm:$0xff] %v5375
        %6400 = vst [vmem:[%s256 + $0x5e0] sm:$0xff] %v5376
        %6401 = vst [vmem:[%s256 + $0x5e8] sm:$0xff] %v5377
        %6402 = vst [vmem:[%s256 + $0x5f0] sm:$0xff] %v5378
        %6403 = vst [vmem:[%s256 + $0x5f8] sm:$0xff] %v5379
        %6404 = vst [vmem:[%s256 + $0x600] sm:$0xff] %v5380
        %6405 = vst [vmem:[%s256 + $0x608] sm:$0xff] %v5381
        %6406 = vst [vmem:[%s256 + $0x610] sm:$0xff] %v5382
        %6407 = vst [vmem:[%s256 + $0x618] sm:$0xff] %v5383
        %6408 = vst [vmem:[%s256 + $0x620] sm:$0xff] %v5384
        %6409 = vst [vmem:[%s256 + $0x628] sm:$0xff] %v5385
        %6410 = vst [vmem:[%s256 + $0x630] sm:$0xff] %v5386
        %6411 = vst [vmem:[%s256 + $0x638] sm:$0xff] %v5387
        %6412 = vst [vmem:[%s256 + $0x640] sm:$0xff] %v5388
        %6413 = vst [vmem:[%s256 + $0x648] sm:$0xff] %v5389
        %6414 = vst [vmem:[%s256 + $0x650] sm:$0xff] %v5390
        %6415 = vst [vmem:[%s256 + $0x658] sm:$0xff] %v5391
        %6416 = vst [vmem:[%s256 + $0x660] sm:$0xff] %v5392
        %6417 = vst [vmem:[%s256 + $0x668] sm:$0xff] %v5393
        %6418 = vst [vmem:[%s256 + $0x670] sm:$0xff] %v5394
        %6419 = vst [vmem:[%s256 + $0x678] sm:$0xff] %v5395
        %6420 = vst [vmem:[%s256 + $0x680] sm:$0xff] %v5396
        %6421 = vst [vmem:[%s256 + $0x688] sm:$0xff] %v5397
        %6422 = vst [vmem:[%s256 + $0x690] sm:$0xff] %v5398
        %6423 = vst [vmem:[%s256 + $0x698] sm:$0xff] %v5399
        %6424 = vst [vmem:[%s256 + $0x6a0] sm:$0xff] %v5400
        %6425 = vst [vmem:[%s256 + $0x6a8] sm:$0xff] %v5401
        %6426 = vst [vmem:[%s256 + $0x6b0] sm:$0xff] %v5402
        %6427 = vst [vmem:[%s256 + $0x6b8] sm:$0xff] %v5403
        %6428 = vst [vmem:[%s256 + $0x6c0] sm:$0xff] %v5404
        %6429 = vst [vmem:[%s256 + $0x6c8] sm:$0xff] %v5405
        %6430 = vst [vmem:[%s256 + $0x6d0] sm:$0xff] %v5406
        %6431 = vst [vmem:[%s256 + $0x6d8] sm:$0xff] %v5407
        %6432 = vst [vmem:[%s256 + $0x6e0] sm:$0xff] %v5408
        %6433 = vst [vmem:[%s256 + $0x6e8] sm:$0xff] %v5409
        %6434 = vst [vmem:[%s256 + $0x6f0] sm:$0xff] %v5410
        %6435 = vst [vmem:[%s256 + $0x6f8] sm:$0xff] %v5411
        %6436 = vst [vmem:[%s256 + $0x700] sm:$0xff] %v5412
        %6437 = vst [vmem:[%s256 + $0x708] sm:$0xff] %v5413
        %6438 = vst [vmem:[%s256 + $0x710] sm:$0xff] %v5414
        %6439 = vst [vmem:[%s256 + $0x718] sm:$0xff] %v5415
        %6440 = vst [vmem:[%s256 + $0x720] sm:$0xff] %v5416
        %6441 = vst [vmem:[%s256 + $0x728] sm:$0xff] %v5417
        %6442 = vst [vmem:[%s256 + $0x730] sm:$0xff] %v5418
        %6443 = vst [vmem:[%s256 + $0x738] sm:$0xff] %v5419
        %6444 = vst [vmem:[%s256 + $0x740] sm:$0xff] %v5420
        %6445 = vst [vmem:[%s256 + $0x748] sm:$0xff] %v5421
        %6446 = vst [vmem:[%s256 + $0x750] sm:$0xff] %v5422
        %6447 = vst [vmem:[%s256 + $0x758] sm:$0xff] %v5423
        %6448 = vst [vmem:[%s256 + $0x760] sm:$0xff] %v5424
        %6449 = vst [vmem:[%s256 + $0x768] sm:$0xff] %v5425
        %6450 = vst [vmem:[%s256 + $0x770] sm:$0xff] %v5426
        %6451 = vst [vmem:[%s256 + $0x778] sm:$0xff] %v5427
        %6452 = vst [vmem:[%s256 + $0x780] sm:$0xff] %v5428
        %6453 = vst [vmem:[%s256 + $0x788] sm:$0xff] %v5429
        %6454 = vst [vmem:[%s256 + $0x790] sm:$0xff] %v5430
        %6455 = vst [vmem:[%s256 + $0x798] sm:$0xff] %v5431
        %6456 = vst [vmem:[%s256 + $0x7a0] sm:$0xff] %v5432
        %6457 = vst [vmem:[%s256 + $0x7a8] sm:$0xff] %v5433
        %6458 = vst [vmem:[%s256 + $0x7b0] sm:$0xff] %v5434
        %6459 = vst [vmem:[%s256 + $0x7b8] sm:$0xff] %v5435
        %6460 = vst [vmem:[%s256 + $0x7c0] sm:$0xff] %v5436
        %6461 = vst [vmem:[%s256 + $0x7c8] sm:$0xff] %v5437
        %6462 = vst [vmem:[%s256 + $0x7d0] sm:$0xff] %v5438
        %6463 = vst [vmem:[%s256 + $0x7d8] sm:$0xff] %v5439
        %6464 = vst [vmem:[%s256 + $0x7e0] sm:$0xff] %v5440
        %6465 = vst [vmem:[%s256 + $0x7e8] sm:$0xff] %v5441
        %6466 = vst [vmem:[%s256 + $0x7f0] sm:$0xff] %v5442
        %6467 = vst [vmem:[%s256 + $0x7f8] sm:$0xff] %v5443
        %6468 = vst [vmem:[%s256 + $0x800] sm:$0xff] %v5444
        %6469 = vst [vmem:[%s256 + $0x808] sm:$0xff] %v5445
        %6470 = vst [vmem:[%s256 + $0x810] sm:$0xff] %v5446
        %6471 = vst [vmem:[%s256 + $0x818] sm:$0xff] %v5447
        %6472 = vst [vmem:[%s256 + $0x820] sm:$0xff] %v5448
        %6473 = vst [vmem:[%s256 + $0x828] sm:$0xff] %v5449
        %6474 = vst [vmem:[%s256 + $0x830] sm:$0xff] %v5450
        %6475 = vst [vmem:[%s256 + $0x838] sm:$0xff] %v5451
        %6476 = vst [vmem:[%s256 + $0x840] sm:$0xff] %v5452
        %6477 = vst [vmem:[%s256 + $0x848] sm:$0xff] %v5453
        %6478 = vst [vmem:[%s256 + $0x850] sm:$0xff] %v5454
        %6479 = vst [vmem:[%s256 + $0x858] sm:$0xff] %v5455
        %6480 = vst [vmem:[%s256 + $0x860] sm:$0xff] %v5456
        %6481 = vst [vmem:[%s256 + $0x868] sm:$0xff] %v5457
        %6482 = vst [vmem:[%s256 + $0x870] sm:$0xff] %v5458
        %6483 = vst [vmem:[%s256 + $0x878] sm:$0xff] %v5459
        %6484 = vst [vmem:[%s256 + $0x880] sm:$0xff] %v5460
        %6485 = vst [vmem:[%s256 + $0x888] sm:$0xff] %v5461
        %6486 = vst [vmem:[%s256 + $0x890] sm:$0xff] %v5462
        %6487 = vst [vmem:[%s256 + $0x898] sm:$0xff] %v5463
        %6488 = vst [vmem:[%s256 + $0x8a0] sm:$0xff] %v5464
        %6489 = vst [vmem:[%s256 + $0x8a8] sm:$0xff] %v5465
        %6490 = vst [vmem:[%s256 + $0x8b0] sm:$0xff] %v5466
        %6491 = vst [vmem:[%s256 + $0x8b8] sm:$0xff] %v5467
        %6492 = vst [vmem:[%s256 + $0x8c0] sm:$0xff] %v5468
        %6493 = vst [vmem:[%s256 + $0x8c8] sm:$0xff] %v5469
        %6494 = vst [vmem:[%s256 + $0x8d0] sm:$0xff] %v5470
        %6495 = vst [vmem:[%s256 + $0x8d8] sm:$0xff] %v5471
        %6496 = vst [vmem:[%s256 + $0x8e0] sm:$0xff] %v5472
        %6497 = vst [vmem:[%s256 + $0x8e8] sm:$0xff] %v5473
        %6498 = vst [vmem:[%s256 + $0x8f0] sm:$0xff] %v5474
        %6499 = vst [vmem:[%s256 + $0x8f8] sm:$0xff] %v5475
        %6500 = vst [vmem:[%s256 + $0x900] sm:$0xff] %v5476
        %6501 = vst [vmem:[%s256 + $0x908] sm:$0xff] %v5477
        %6502 = vst [vmem:[%s256 + $0x910] sm:$0xff] %v5478
        %6503 = vst [vmem:[%s256 + $0x918] sm:$0xff] %v5479
        %6504 = vst [vmem:[%s256 + $0x920] sm:$0xff] %v5480
        %6505 = vst [vmem:[%s256 + $0x928] sm:$0xff] %v5481
        %6506 = vst [vmem:[%s256 + $0x930] sm:$0xff] %v5482
        %6507 = vst [vmem:[%s256 + $0x938] sm:$0xff] %v5483
        %6508 = vst [vmem:[%s256 + $0x940] sm:$0xff] %v5484
        %6509 = vst [vmem:[%s256 + $0x948] sm:$0xff] %v5485
        %6510 = vst [vmem:[%s256 + $0x950] sm:$0xff] %v5486
        %6511 = vst [vmem:[%s256 + $0x958] sm:$0xff] %v5487
        %6512 = vst [vmem:[%s256 + $0x960] sm:$0xff] %v5488
        %6513 = vst [vmem:[%s256 + $0x968] sm:$0xff] %v5489
        %6514 = vst [vmem:[%s256 + $0x970] sm:$0xff] %v5490
        %6515 = vst [vmem:[%s256 + $0x978] sm:$0xff] %v5491
        %6516 = vst [vmem:[%s256 + $0x980] sm:$0xff] %v5492
        %6517 = vst [vmem:[%s256 + $0x988] sm:$0xff] %v5493
        %6518 = vst [vmem:[%s256 + $0x990] sm:$0xff] %v5494
        %6519 = vst [vmem:[%s256 + $0x998] sm:$0xff] %v5495
        %6520 = vst [vmem:[%s256 + $0x9a0] sm:$0xff] %v5496
        %6521 = vst [vmem:[%s256 + $0x9a8] sm:$0xff] %v5497
        %6522 = vst [vmem:[%s256 + $0x9b0] sm:$0xff] %v5498
        %6523 = vst [vmem:[%s256 + $0x9b8] sm:$0xff] %v5499
        %6524 = vst [vmem:[%s256 + $0x9c0] sm:$0xff] %v5500
        %6525 = vst [vmem:[%s256 + $0x9c8] sm:$0xff] %v5501
        %6526 = vst [vmem:[%s256 + $0x9d0] sm:$0xff] %v5502
        %6527 = vst [vmem:[%s256 + $0x9d8] sm:$0xff] %v5503
        %6528 = vst [vmem:[%s256 + $0x9e0] sm:$0xff] %v5504
        %6529 = vst [vmem:[%s256 + $0x9e8] sm:$0xff] %v5505
        %6530 = vst [vmem:[%s256 + $0x9f0] sm:$0xff] %v5506
        %6531 = vst [vmem:[%s256 + $0x9f8] sm:$0xff] %v5507
        %6532 = vst [vmem:[%s256 + $0xa00] sm:$0xff] %v5508
        %6533 = vst [vmem:[%s256 + $0xa08] sm:$0xff] %v5509
        %6534 = vst [vmem:[%s256 + $0xa10] sm:$0xff] %v5510
        %6535 = vst [vmem:[%s256 + $0xa18] sm:$0xff] %v5511
        %6536 = vst [vmem:[%s256 + $0xa20] sm:$0xff] %v5512
        %6537 = vst [vmem:[%s256 + $0xa28] sm:$0xff] %v5513
        %6538 = vst [vmem:[%s256 + $0xa30] sm:$0xff] %v5514
        %6539 = vst [vmem:[%s256 + $0xa38] sm:$0xff] %v5515
        %6540 = vst [vmem:[%s256 + $0xa40] sm:$0xff] %v5516
        %6541 = vst [vmem:[%s256 + $0xa48] sm:$0xff] %v5517
        %6542 = vst [vmem:[%s256 + $0xa50] sm:$0xff] %v5518
        %6543 = vst [vmem:[%s256 + $0xa58] sm:$0xff] %v5519
        %6544 = vst [vmem:[%s256 + $0xa60] sm:$0xff] %v5520
        %6545 = vst [vmem:[%s256 + $0xa68] sm:$0xff] %v5521
        %6546 = vst [vmem:[%s256 + $0xa70] sm:$0xff] %v5522
        %6547 = vst [vmem:[%s256 + $0xa78] sm:$0xff] %v5523
        %6548 = vst [vmem:[%s256 + $0xa80] sm:$0xff] %v5524
        %6549 = vst [vmem:[%s256 + $0xa88] sm:$0xff] %v5525
        %6550 = vst [vmem:[%s256 + $0xa90] sm:$0xff] %v5526
        %6551 = vst [vmem:[%s256 + $0xa98] sm:$0xff] %v5527
        %6552 = vst [vmem:[%s256 + $0xaa0] sm:$0xff] %v5528
        %6553 = vst [vmem:[%s256 + $0xaa8] sm:$0xff] %v5529
        %6554 = vst [vmem:[%s256 + $0xab0] sm:$0xff] %v5530
        %6555 = vst [vmem:[%s256 + $0xab8] sm:$0xff] %v5531
        %6556 = vst [vmem:[%s256 + $0xac0] sm:$0xff] %v5532
        %6557 = vst [vmem:[%s256 + $0xac8] sm:$0xff] %v5533
        %6558 = vst [vmem:[%s256 + $0xad0] sm:$0xff] %v5534
        %6559 = vst [vmem:[%s256 + $0xad8] sm:$0xff] %v5535
        %6560 = vst [vmem:[%s256 + $0xae0] sm:$0xff] %v5536
        %6561 = vst [vmem:[%s256 + $0xae8] sm:$0xff] %v5537
        %6562 = vst [vmem:[%s256 + $0xaf0] sm:$0xff] %v5538
        %6563 = vst [vmem:[%s256 + $0xaf8] sm:$0xff] %v5539
        %6564 = vst [vmem:[%s256 + $0xb00] sm:$0xff] %v5540
        %6565 = vst [vmem:[%s256 + $0xb08] sm:$0xff] %v5541
        %6566 = vst [vmem:[%s256 + $0xb10] sm:$0xff] %v5542
        %6567 = vst [vmem:[%s256 + $0xb18] sm:$0xff] %v5543
        %6568 = vst [vmem:[%s256 + $0xb20] sm:$0xff] %v5544
        %6569 = vst [vmem:[%s256 + $0xb28] sm:$0xff] %v5545
        %6570 = vst [vmem:[%s256 + $0xb30] sm:$0xff] %v5546
        %6571 = vst [vmem:[%s256 + $0xb38] sm:$0xff] %v5547
        %6572 = vst [vmem:[%s256 + $0xb40] sm:$0xff] %v5548
        %6573 = vst [vmem:[%s256 + $0xb48] sm:$0xff] %v5549
        %6574 = vst [vmem:[%s256 + $0xb50] sm:$0xff] %v5550
        %6575 = vst [vmem:[%s256 + $0xb58] sm:$0xff] %v5551
        %6576 = vst [vmem:[%s256 + $0xb60] sm:$0xff] %v5552
        %6577 = vst [vmem:[%s256 + $0xb68] sm:$0xff] %v5553
        %6578 = vst [vmem:[%s256 + $0xb70] sm:$0xff] %v5554
        %6579 = vst [vmem:[%s256 + $0xb78] sm:$0xff] %v5555
        %6580 = vst [vmem:[%s256 + $0xb80] sm:$0xff] %v5556
        %6581 = vst [vmem:[%s256 + $0xb88] sm:$0xff] %v5557
        %6582 = vst [vmem:[%s256 + $0xb90] sm:$0xff] %v5558
        %6583 = vst [vmem:[%s256 + $0xb98] sm:$0xff] %v5559
        %6584 = vst [vmem:[%s256 + $0xba0] sm:$0xff] %v5560
        %6585 = vst [vmem:[%s256 + $0xba8] sm:$0xff] %v5561
        %6586 = vst [vmem:[%s256 + $0xbb0] sm:$0xff] %v5562
        %6587 = vst [vmem:[%s256 + $0xbb8] sm:$0xff] %v5563
        %6588 = vst [vmem:[%s256 + $0xbc0] sm:$0xff] %v5564
        %6589 = vst [vmem:[%s256 + $0xbc8] sm:$0xff] %v5565
        %6590 = vst [vmem:[%s256 + $0xbd0] sm:$0xff] %v5566
        %6591 = vst [vmem:[%s256 + $0xbd8] sm:$0xff] %v5567
        %6592 = vst [vmem:[%s256 + $0xbe0] sm:$0xff] %v5568
        %6593 = vst [vmem:[%s256 + $0xbe8] sm:$0xff] %v5569
        %6594 = vst [vmem:[%s256 + $0xbf0] sm:$0xff] %v5570
        %6595 = vst [vmem:[%s256 + $0xbf8] sm:$0xff] %v5571
        %6596 = vst [vmem:[%s256 + $0xc00] sm:$0xff] %v5572
        %6597 = vst [vmem:[%s256 + $0xc08] sm:$0xff] %v5573
        %6598 = vst [vmem:[%s256 + $0xc10] sm:$0xff] %v5574
        %6599 = vst [vmem:[%s256 + $0xc18] sm:$0xff] %v5575
        %6600 = vst [vmem:[%s256 + $0xc20] sm:$0xff] %v5576
        %6601 = vst [vmem:[%s256 + $0xc28] sm:$0xff] %v5577
        %6602 = vst [vmem:[%s256 + $0xc30] sm:$0xff] %v5578
        %6603 = vst [vmem:[%s256 + $0xc38] sm:$0xff] %v5579
        %6604 = vst [vmem:[%s256 + $0xc40] sm:$0xff] %v5580
        %6605 = vst [vmem:[%s256 + $0xc48] sm:$0xff] %v5581
        %6606 = vst [vmem:[%s256 + $0xc50] sm:$0xff] %v5582
        %6607 = vst [vmem:[%s256 + $0xc58] sm:$0xff] %v5583
        %6608 = vst [vmem:[%s256 + $0xc60] sm:$0xff] %v5584
        %6609 = vst [vmem:[%s256 + $0xc68] sm:$0xff] %v5585
        %6610 = vst [vmem:[%s256 + $0xc70] sm:$0xff] %v5586
        %6611 = vst [vmem:[%s256 + $0xc78] sm:$0xff] %v5587
        %6612 = vst [vmem:[%s256 + $0xc80] sm:$0xff] %v5588
        %6613 = vst [vmem:[%s256 + $0xc88] sm:$0xff] %v5589
        %6614 = vst [vmem:[%s256 + $0xc90] sm:$0xff] %v5590
        %6615 = vst [vmem:[%s256 + $0xc98] sm:$0xff] %v5591
        %6616 = vst [vmem:[%s256 + $0xca0] sm:$0xff] %v5592
        %6617 = vst [vmem:[%s256 + $0xca8] sm:$0xff] %v5593
        %6618 = vst [vmem:[%s256 + $0xcb0] sm:$0xff] %v5594
        %6619 = vst [vmem:[%s256 + $0xcb8] sm:$0xff] %v5595
        %6620 = vst [vmem:[%s256 + $0xcc0] sm:$0xff] %v5596
        %6621 = vst [vmem:[%s256 + $0xcc8] sm:$0xff] %v5597
        %6622 = vst [vmem:[%s256 + $0xcd0] sm:$0xff] %v5598
        %6623 = vst [vmem:[%s256 + $0xcd8] sm:$0xff] %v5599
        %6624 = vst [vmem:[%s256 + $0xce0] sm:$0xff] %v5600
        %6625 = vst [vmem:[%s256 + $0xce8] sm:$0xff] %v5601
        %6626 = vst [vmem:[%s256 + $0xcf0] sm:$0xff] %v5602
        %6627 = vst [vmem:[%s256 + $0xcf8] sm:$0xff] %v5603
        %6628 = vst [vmem:[%s256 + $0xd00] sm:$0xff] %v5604
        %6629 = vst [vmem:[%s256 + $0xd08] sm:$0xff] %v5605
        %6630 = vst [vmem:[%s256 + $0xd10] sm:$0xff] %v5606
        %6631 = vst [vmem:[%s256 + $0xd18] sm:$0xff] %v5607
        %6632 = vst [vmem:[%s256 + $0xd20] sm:$0xff] %v5608
        %6633 = vst [vmem:[%s256 + $0xd28] sm:$0xff] %v5609
        %6634 = vst [vmem:[%s256 + $0xd30] sm:$0xff] %v5610
        %6635 = vst [vmem:[%s256 + $0xd38] sm:$0xff] %v5611
        %6636 = vst [vmem:[%s256 + $0xd40] sm:$0xff] %v5612
        %6637 = vst [vmem:[%s256 + $0xd48] sm:$0xff] %v5613
        %6638 = vst [vmem:[%s256 + $0xd50] sm:$0xff] %v5614
        %6639 = vst [vmem:[%s256 + $0xd58] sm:$0xff] %v5615
        %6640 = vst [vmem:[%s256 + $0xd60] sm:$0xff] %v5616
        %6641 = vst [vmem:[%s256 + $0xd68] sm:$0xff] %v5617
        %6642 = vst [vmem:[%s256 + $0xd70] sm:$0xff] %v5618
        %6643 = vst [vmem:[%s256 + $0xd78] sm:$0xff] %v5619
        %6644 = vst [vmem:[%s256 + $0xd80] sm:$0xff] %v5620
        %6645 = vst [vmem:[%s256 + $0xd88] sm:$0xff] %v5621
        %6646 = vst [vmem:[%s256 + $0xd90] sm:$0xff] %v5622
        %6647 = vst [vmem:[%s256 + $0xd98] sm:$0xff] %v5623
        %6648 = vst [vmem:[%s256 + $0xda0] sm:$0xff] %v5624
        %6649 = vst [vmem:[%s256 + $0xda8] sm:$0xff] %v5625
        %6650 = vst [vmem:[%s256 + $0xdb0] sm:$0xff] %v5626
        %6651 = vst [vmem:[%s256 + $0xdb8] sm:$0xff] %v5627
        %6652 = vst [vmem:[%s256 + $0xdc0] sm:$0xff] %v5628
        %6653 = vst [vmem:[%s256 + $0xdc8] sm:$0xff] %v5629
        %6654 = vst [vmem:[%s256 + $0xdd0] sm:$0xff] %v5630
        %6655 = vst [vmem:[%s256 + $0xdd8] sm:$0xff] %v5631
        %6656 = vst [vmem:[%s256 + $0xde0] sm:$0xff] %v5632
        %6657 = vst [vmem:[%s256 + $0xde8] sm:$0xff] %v5633
        %6658 = vst [vmem:[%s256 + $0xdf0] sm:$0xff] %v5634
        %6659 = vst [vmem:[%s256 + $0xdf8] sm:$0xff] %v5635
        %6660 = vst [vmem:[%s256 + $0xe00] sm:$0xff] %v5636
        %6661 = vst [vmem:[%s256 + $0xe08] sm:$0xff] %v5637
        %6662 = vst [vmem:[%s256 + $0xe10] sm:$0xff] %v5638
        %6663 = vst [vmem:[%s256 + $0xe18] sm:$0xff] %v5639
        %6664 = vst [vmem:[%s256 + $0xe20] sm:$0xff] %v5640
        %6665 = vst [vmem:[%s256 + $0xe28] sm:$0xff] %v5641
        %6666 = vst [vmem:[%s256 + $0xe30] sm:$0xff] %v5642
        %6667 = vst [vmem:[%s256 + $0xe38] sm:$0xff] %v5643
        %6668 = vst [vmem:[%s256 + $0xe40] sm:$0xff] %v5644
        %6669 = vst [vmem:[%s256 + $0xe48] sm:$0xff] %v5645
        %6670 = vst [vmem:[%s256 + $0xe50] sm:$0xff] %v5646
        %6671 = vst [vmem:[%s256 + $0xe58] sm:$0xff] %v5647
        %6672 = vst [vmem:[%s256 + $0xe60] sm:$0xff] %v5648
        %6673 = vst [vmem:[%s256 + $0xe68] sm:$0xff] %v5649
        %6674 = vst [vmem:[%s256 + $0xe70] sm:$0xff] %v5650
        %6675 = vst [vmem:[%s256 + $0xe78] sm:$0xff] %v5651
        %6676 = vst [vmem:[%s256 + $0xe80] sm:$0xff] %v5652
        %6677 = vst [vmem:[%s256 + $0xe88] sm:$0xff] %v5653
        %6678 = vst [vmem:[%s256 + $0xe90] sm:$0xff] %v5654
        %6679 = vst [vmem:[%s256 + $0xe98] sm:$0xff] %v5655
        %6680 = vst [vmem:[%s256 + $0xea0] sm:$0xff] %v5656
        %6681 = vst [vmem:[%s256 + $0xea8] sm:$0xff] %v5657
        %6682 = vst [vmem:[%s256 + $0xeb0] sm:$0xff] %v5658
        %6683 = vst [vmem:[%s256 + $0xeb8] sm:$0xff] %v5659
        %6684 = vst [vmem:[%s256 + $0xec0] sm:$0xff] %v5660
        %6685 = vst [vmem:[%s256 + $0xec8] sm:$0xff] %v5661
        %6686 = vst [vmem:[%s256 + $0xed0] sm:$0xff] %v5662
        %6687 = vst [vmem:[%s256 + $0xed8] sm:$0xff] %v5663
        %6688 = vst [vmem:[%s256 + $0xee0] sm:$0xff] %v5664
        %6689 = vst [vmem:[%s256 + $0xee8] sm:$0xff] %v5665
        %6690 = vst [vmem:[%s256 + $0xef0] sm:$0xff] %v5666
        %6691 = vst [vmem:[%s256 + $0xef8] sm:$0xff] %v5667
        %6692 = vst [vmem:[%s256 + $0xf00] sm:$0xff] %v5668
        %6693 = vst [vmem:[%s256 + $0xf08] sm:$0xff] %v5669
        %6694 = vst [vmem:[%s256 + $0xf10] sm:$0xff] %v5670
        %6695 = vst [vmem:[%s256 + $0xf18] sm:$0xff] %v5671
        %6696 = vst [vmem:[%s256 + $0xf20] sm:$0xff] %v5672
        %6697 = vst [vmem:[%s256 + $0xf28] sm:$0xff] %v5673
        %6698 = vst [vmem:[%s256 + $0xf30] sm:$0xff] %v5674
        %6699 = vst [vmem:[%s256 + $0xf38] sm:$0xff] %v5675
        %6700 = vst [vmem:[%s256 + $0xf40] sm:$0xff] %v5676
        %6701 = vst [vmem:[%s256 + $0xf48] sm:$0xff] %v5677
        %6702 = vst [vmem:[%s256 + $0xf50] sm:$0xff] %v5678
        %6703 = vst [vmem:[%s256 + $0xf58] sm:$0xff] %v5679
        %6704 = vst [vmem:[%s256 + $0xf60] sm:$0xff] %v5680
        %6705 = vst [vmem:[%s256 + $0xf68] sm:$0xff] %v5681
        %6706 = vst [vmem:[%s256 + $0xf70] sm:$0xff] %v5682
        %6707 = vst [vmem:[%s256 + $0xf78] sm:$0xff] %v5683
        %6708 = vst [vmem:[%s256 + $0xf80] sm:$0xff] %v5684
        %6709 = vst [vmem:[%s256 + $0xf88] sm:$0xff] %v5685
        %6710 = vst [vmem:[%s256 + $0xf90] sm:$0xff] %v5686
        %6711 = vst [vmem:[%s256 + $0xf98] sm:$0xff] %v5687
        %6712 = vst [vmem:[%s256 + $0xfa0] sm:$0xff] %v5688
        %6713 = vst [vmem:[%s256 + $0xfa8] sm:$0xff] %v5689
        %6714 = vst [vmem:[%s256 + $0xfb0] sm:$0xff] %v5690
        %6715 = vst [vmem:[%s256 + $0xfb8] sm:$0xff] %v5691
        %6716 = vst [vmem:[%s256 + $0xfc0] sm:$0xff] %v5692
        %6717 = vst [vmem:[%s256 + $0xfc8] sm:$0xff] %v5693
        %6718 = vst [vmem:[%s256 + $0xfd0] sm:$0xff] %v5694
        %6719 = vst [vmem:[%s256 + $0xfd8] sm:$0xff] %v5695
        %6720 = vst [vmem:[%s256 + $0xfe0] sm:$0xff] %v5696
        %6721 = vst [vmem:[%s256 + $0xfe8] sm:$0xff] %v5697
        %6722 = vst [vmem:[%s256 + $0xff0] sm:$0xff] %v5698
        %6723 = vst [vmem:[%s256 + $0xff8] sm:$0xff] %v5699
        %6724 = vst [vmem:[%s256 + $0x1000] sm:$0xff] %v5700
        %6725 = vst [vmem:[%s256 + $0x1008] sm:$0xff] %v5701
        %6726 = vst [vmem:[%s256 + $0x1010] sm:$0xff] %v5702
        %6727 = vst [vmem:[%s256 + $0x1018] sm:$0xff] %v5703
        %6728 = vst [vmem:[%s256 + $0x1020] sm:$0xff] %v5704
        %6729 = vst [vmem:[%s256 + $0x1028] sm:$0xff] %v5705
        %6730 = vst [vmem:[%s256 + $0x1030] sm:$0xff] %v5706
        %6731 = vst [vmem:[%s256 + $0x1038] sm:$0xff] %v5707
        %6732 = vst [vmem:[%s256 + $0x1040] sm:$0xff] %v5708
        %6733 = vst [vmem:[%s256 + $0x1048] sm:$0xff] %v5709
        %6734 = vst [vmem:[%s256 + $0x1050] sm:$0xff] %v5710
        %6735 = vst [vmem:[%s256 + $0x1058] sm:$0xff] %v5711
        %6736 = vst [vmem:[%s256 + $0x1060] sm:$0xff] %v5712
        %6737 = vst [vmem:[%s256 + $0x1068] sm:$0xff] %v5713
        %6738 = vst [vmem:[%s256 + $0x1070] sm:$0xff] %v5714
        %6739 = vst [vmem:[%s256 + $0x1078] sm:$0xff] %v5715
        %6740 = vst [vmem:[%s256 + $0x1080] sm:$0xff] %v5716
        %6741 = vst [vmem:[%s256 + $0x1088] sm:$0xff] %v5717
        %6742 = vst [vmem:[%s256 + $0x1090] sm:$0xff] %v5718
        %6743 = vst [vmem:[%s256 + $0x1098] sm:$0xff] %v5719
        %6744 = vst [vmem:[%s256 + $0x10a0] sm:$0xff] %v5720
        %6745 = vst [vmem:[%s256 + $0x10a8] sm:$0xff] %v5721
        %6746 = vst [vmem:[%s256 + $0x10b0] sm:$0xff] %v5722
        %6747 = vst [vmem:[%s256 + $0x10b8] sm:$0xff] %v5723
        %6748 = vst [vmem:[%s256 + $0x10c0] sm:$0xff] %v5724
        %6749 = vst [vmem:[%s256 + $0x10c8] sm:$0xff] %v5725
        %6750 = vst [vmem:[%s256 + $0x10d0] sm:$0xff] %v5726
        %6751 = vst [vmem:[%s256 + $0x10d8] sm:$0xff] %v5727
        %6752 = vst [vmem:[%s256 + $0x10e0] sm:$0xff] %v5728
        %6753 = vst [vmem:[%s256 + $0x10e8] sm:$0xff] %v5729
        %6754 = vst [vmem:[%s256 + $0x10f0] sm:$0xff] %v5730
        %6755 = vst [vmem:[%s256 + $0x10f8] sm:$0xff] %v5731
        %6756 = vst [vmem:[%s256 + $0x1100] sm:$0xff] %v5732
        %6757 = vst [vmem:[%s256 + $0x1108] sm:$0xff] %v5733
        %6758 = vst [vmem:[%s256 + $0x1110] sm:$0xff] %v5734
        %6759 = vst [vmem:[%s256 + $0x1118] sm:$0xff] %v5735
        %6760 = vst [vmem:[%s256 + $0x1120] sm:$0xff] %v5736
        %6761 = vst [vmem:[%s256 + $0x1128] sm:$0xff] %v5737
        %6762 = vst [vmem:[%s256 + $0x1130] sm:$0xff] %v5738
        %6763 = vst [vmem:[%s256 + $0x1138] sm:$0xff] %v5739
        %6764 = vst [vmem:[%s256 + $0x1140] sm:$0xff] %v5740
        %6765 = vst [vmem:[%s256 + $0x1148] sm:$0xff] %v5741
        %6766 = vst [vmem:[%s256 + $0x1150] sm:$0xff] %v5742
        %6767 = vst [vmem:[%s256 + $0x1158] sm:$0xff] %v5743
        %6768 = vst [vmem:[%s256 + $0x1160] sm:$0xff] %v5744
        %6769 = vst [vmem:[%s256 + $0x1168] sm:$0xff] %v5745
        %6770 = vst [vmem:[%s256 + $0x1170] sm:$0xff] %v5746
        %6771 = vst [vmem:[%s256 + $0x1178] sm:$0xff] %v5747
        %6772 = vst [vmem:[%s256 + $0x1180] sm:$0xff] %v5748
        %6773 = vst [vmem:[%s256 + $0x1188] sm:$0xff] %v5749
        %6774 = vst [vmem:[%s256 + $0x1190] sm:$0xff] %v5750
        %6775 = vst [vmem:[%s256 + $0x1198] sm:$0xff] %v5751
        %6776 = vst [vmem:[%s256 + $0x11a0] sm:$0xff] %v5752
        %6777 = vst [vmem:[%s256 + $0x11a8] sm:$0xff] %v5753
        %6778 = vst [vmem:[%s256 + $0x11b0] sm:$0xff] %v5754
        %6779 = vst [vmem:[%s256 + $0x11b8] sm:$0xff] %v5755
        %6780 = vst [vmem:[%s256 + $0x11c0] sm:$0xff] %v5756
        %6781 = vst [vmem:[%s256 + $0x11c8] sm:$0xff] %v5757
        %6782 = vst [vmem:[%s256 + $0x11d0] sm:$0xff] %v5758
        %6783 = vst [vmem:[%s256 + $0x11d8] sm:$0xff] %v5759
        %6784 = vst [vmem:[%s256 + $0x11e0] sm:$0xff] %v5760
        %6785 = vst [vmem:[%s256 + $0x11e8] sm:$0xff] %v5761
        %6786 = vst [vmem:[%s256 + $0x11f0] sm:$0xff] %v5762
        %6787 = vst [vmem:[%s256 + $0x11f8] sm:$0xff] %v5763
        %6788 = vst [vmem:[%s256 + $0x1200] sm:$0xff] %v5764
        %6789 = vst [vmem:[%s256 + $0x1208] sm:$0xff] %v5765
        %6790 = vst [vmem:[%s256 + $0x1210] sm:$0xff] %v5766
        %6791 = vst [vmem:[%s256 + $0x1218] sm:$0xff] %v5767
        %6792 = vst [vmem:[%s256 + $0x1220] sm:$0xff] %v5768
        %6793 = vst [vmem:[%s256 + $0x1228] sm:$0xff] %v5769
        %6794 = vst [vmem:[%s256 + $0x1230] sm:$0xff] %v5770
        %6795 = vst [vmem:[%s256 + $0x1238] sm:$0xff] %v5771
        %6796 = vst [vmem:[%s256 + $0x1240] sm:$0xff] %v5772
        %6797 = vst [vmem:[%s256 + $0x1248] sm:$0xff] %v5773
        %6798 = vst [vmem:[%s256 + $0x1250] sm:$0xff] %v5774
        %6799 = vst [vmem:[%s256 + $0x1258] sm:$0xff] %v5775
        %6800 = vst [vmem:[%s256 + $0x1260] sm:$0xff] %v5776
        %6801 = vst [vmem:[%s256 + $0x1268] sm:$0xff] %v5777
        %6802 = vst [vmem:[%s256 + $0x1270] sm:$0xff] %v5778
        %6803 = vst [vmem:[%s256 + $0x1278] sm:$0xff] %v5779
        %6804 = vst [vmem:[%s256 + $0x1280] sm:$0xff] %v5780
        %6805 = vst [vmem:[%s256 + $0x1288] sm:$0xff] %v5781
        %6806 = vst [vmem:[%s256 + $0x1290] sm:$0xff] %v5782
        %6807 = vst [vmem:[%s256 + $0x1298] sm:$0xff] %v5783
        %6808 = vst [vmem:[%s256 + $0x12a0] sm:$0xff] %v5784
        %6809 = vst [vmem:[%s256 + $0x12a8] sm:$0xff] %v5785
        %6810 = vst [vmem:[%s256 + $0x12b0] sm:$0xff] %v5786
        %6811 = vst [vmem:[%s256 + $0x12b8] sm:$0xff] %v5787
        %6812 = vst [vmem:[%s256 + $0x12c0] sm:$0xff] %v5788
        %6813 = vst [vmem:[%s256 + $0x12c8] sm:$0xff] %v5789
        %6814 = vst [vmem:[%s256 + $0x12d0] sm:$0xff] %v5790
        %6815 = vst [vmem:[%s256 + $0x12d8] sm:$0xff] %v5791
        %6816 = vst [vmem:[%s256 + $0x12e0] sm:$0xff] %v5792
        %6817 = vst [vmem:[%s256 + $0x12e8] sm:$0xff] %v5793
        %6818 = vst [vmem:[%s256 + $0x12f0] sm:$0xff] %v5794
        %6819 = vst [vmem:[%s256 + $0x12f8] sm:$0xff] %v5795
        %6820 = vst [vmem:[%s256 + $0x1300] sm:$0xff] %v5796
        %6821 = vst [vmem:[%s256 + $0x1308] sm:$0xff] %v5797
        %6822 = vst [vmem:[%s256 + $0x1310] sm:$0xff] %v5798
        %6823 = vst [vmem:[%s256 + $0x1318] sm:$0xff] %v5799
        %6824 = vst [vmem:[%s256 + $0x1320] sm:$0xff] %v5800
        %6825 = vst [vmem:[%s256 + $0x1328] sm:$0xff] %v5801
        %6826 = vst [vmem:[%s256 + $0x1330] sm:$0xff] %v5802
        %6827 = vst [vmem:[%s256 + $0x1338] sm:$0xff] %v5803
        %6828 = vst [vmem:[%s256 + $0x1340] sm:$0xff] %v5804
        %6829 = vst [vmem:[%s256 + $0x1348] sm:$0xff] %v5805
        %6830 = vst [vmem:[%s256 + $0x1350] sm:$0xff] %v5806
        %6831 = vst [vmem:[%s256 + $0x1358] sm:$0xff] %v5807
        %6832 = vst [vmem:[%s256 + $0x1360] sm:$0xff] %v5808
        %6833 = vst [vmem:[%s256 + $0x1368] sm:$0xff] %v5809
        %6834 = vst [vmem:[%s256 + $0x1370] sm:$0xff] %v5810
        %6835 = vst [vmem:[%s256 + $0x1378] sm:$0xff] %v5811
        %6836 = vst [vmem:[%s256 + $0x1380] sm:$0xff] %v5812
        %6837 = vst [vmem:[%s256 + $0x1388] sm:$0xff] %v5813
        %6838 = vst [vmem:[%s256 + $0x1390] sm:$0xff] %v5814
        %6839 = vst [vmem:[%s256 + $0x1398] sm:$0xff] %v5815
        %6840 = vst [vmem:[%s256 + $0x13a0] sm:$0xff] %v5816
        %6841 = vst [vmem:[%s256 + $0x13a8] sm:$0xff] %v5817
        %6842 = vst [vmem:[%s256 + $0x13b0] sm:$0xff] %v5818
        %6843 = vst [vmem:[%s256 + $0x13b8] sm:$0xff] %v5819
        %6844 = vst [vmem:[%s256 + $0x13c0] sm:$0xff] %v5820
        %6845 = vst [vmem:[%s256 + $0x13c8] sm:$0xff] %v5821
        %6846 = vst [vmem:[%s256 + $0x13d0] sm:$0xff] %v5822
        %6847 = vst [vmem:[%s256 + $0x13d8] sm:$0xff] %v5823
        %6848 = vst [vmem:[%s256 + $0x13e0] sm:$0xff] %v5824
        %6849 = vst [vmem:[%s256 + $0x13e8] sm:$0xff] %v5825
        %6850 = vst [vmem:[%s256 + $0x13f0] sm:$0xff] %v5826
        %6851 = vst [vmem:[%s256 + $0x13f8] sm:$0xff] %v5827
        %6852 = vst [vmem:[%s256 + $0x1400] sm:$0xff] %v5828
        %6853 = vst [vmem:[%s256 + $0x1408] sm:$0xff] %v5829
        %6854 = vst [vmem:[%s256 + $0x1410] sm:$0xff] %v5830
        %6855 = vst [vmem:[%s256 + $0x1418] sm:$0xff] %v5831
        %6856 = vst [vmem:[%s256 + $0x1420] sm:$0xff] %v5832
        %6857 = vst [vmem:[%s256 + $0x1428] sm:$0xff] %v5833
        %6858 = vst [vmem:[%s256 + $0x1430] sm:$0xff] %v5834
        %6859 = vst [vmem:[%s256 + $0x1438] sm:$0xff] %v5835
        %6860 = vst [vmem:[%s256 + $0x1440] sm:$0xff] %v5836
        %6861 = vst [vmem:[%s256 + $0x1448] sm:$0xff] %v5837
        %6862 = vst [vmem:[%s256 + $0x1450] sm:$0xff] %v5838
        %6863 = vst [vmem:[%s256 + $0x1458] sm:$0xff] %v5839
        %6864 = vst [vmem:[%s256 + $0x1460] sm:$0xff] %v5840
        %6865 = vst [vmem:[%s256 + $0x1468] sm:$0xff] %v5841
        %6866 = vst [vmem:[%s256 + $0x1470] sm:$0xff] %v5842
        %6867 = vst [vmem:[%s256 + $0x1478] sm:$0xff] %v5843
        %6868 = vst [vmem:[%s256 + $0x1480] sm:$0xff] %v5844
        %6869 = vst [vmem:[%s256 + $0x1488] sm:$0xff] %v5845
        %6870 = vst [vmem:[%s256 + $0x1490] sm:$0xff] %v5846
        %6871 = vst [vmem:[%s256 + $0x1498] sm:$0xff] %v5847
        %6872 = vst [vmem:[%s256 + $0x14a0] sm:$0xff] %v5848
        %6873 = vst [vmem:[%s256 + $0x14a8] sm:$0xff] %v5849
        %6874 = vst [vmem:[%s256 + $0x14b0] sm:$0xff] %v5850
        %6875 = vst [vmem:[%s256 + $0x14b8] sm:$0xff] %v5851
        %6876 = vst [vmem:[%s256 + $0x14c0] sm:$0xff] %v5852
        %6877 = vst [vmem:[%s256 + $0x14c8] sm:$0xff] %v5853
        %6878 = vst [vmem:[%s256 + $0x14d0] sm:$0xff] %v5854
        %6879 = vst [vmem:[%s256 + $0x14d8] sm:$0xff] %v5855
        %6880 = vst [vmem:[%s256 + $0x14e0] sm:$0xff] %v5856
        %6881 = vst [vmem:[%s256 + $0x14e8] sm:$0xff] %v5857
        %6882 = vst [vmem:[%s256 + $0x14f0] sm:$0xff] %v5858
        %6883 = vst [vmem:[%s256 + $0x14f8] sm:$0xff] %v5859
        %6884 = vst [vmem:[%s256 + $0x1500] sm:$0xff] %v5860
        %6885 = vst [vmem:[%s256 + $0x1508] sm:$0xff] %v5861
        %6886 = vst [vmem:[%s256 + $0x1510] sm:$0xff] %v5862
        %6887 = vst [vmem:[%s256 + $0x1518] sm:$0xff] %v5863
        %6888 = vst [vmem:[%s256 + $0x1520] sm:$0xff] %v5864
        %6889 = vst [vmem:[%s256 + $0x1528] sm:$0xff] %v5865
        %6890 = vst [vmem:[%s256 + $0x1530] sm:$0xff] %v5866
        %6891 = vst [vmem:[%s256 + $0x1538] sm:$0xff] %v5867
        %6892 = vst [vmem:[%s256 + $0x1540] sm:$0xff] %v5868
        %6893 = vst [vmem:[%s256 + $0x1548] sm:$0xff] %v5869
        %6894 = vst [vmem:[%s256 + $0x1550] sm:$0xff] %v5870
        %6895 = vst [vmem:[%s256 + $0x1558] sm:$0xff] %v5871
        %6896 = vst [vmem:[%s256 + $0x1560] sm:$0xff] %v5872
        %6897 = vst [vmem:[%s256 + $0x1568] sm:$0xff] %v5873
        %6898 = vst [vmem:[%s256 + $0x1570] sm:$0xff] %v5874
        %6899 = vst [vmem:[%s256 + $0x1578] sm:$0xff] %v5875
        %6900 = vst [vmem:[%s256 + $0x1580] sm:$0xff] %v5876
        %6901 = vst [vmem:[%s256 + $0x1588] sm:$0xff] %v5877
        %6902 = vst [vmem:[%s256 + $0x1590] sm:$0xff] %v5878
        %6903 = vst [vmem:[%s256 + $0x1598] sm:$0xff] %v5879
        %6904 = vst [vmem:[%s256 + $0x15a0] sm:$0xff] %v5880
        %6905 = vst [vmem:[%s256 + $0x15a8] sm:$0xff] %v5881
        %6906 = vst [vmem:[%s256 + $0x15b0] sm:$0xff] %v5882
        %6907 = vst [vmem:[%s256 + $0x15b8] sm:$0xff] %v5883
        %6908 = vst [vmem:[%s256 + $0x15c0] sm:$0xff] %v5884
        %6909 = vst [vmem:[%s256 + $0x15c8] sm:$0xff] %v5885
        %6910 = vst [vmem:[%s256 + $0x15d0] sm:$0xff] %v5886
        %6911 = vst [vmem:[%s256 + $0x15d8] sm:$0xff] %v5887
        %6912 = vst [vmem:[%s256 + $0x15e0] sm:$0xff] %v5888
        %6913 = vst [vmem:[%s256 + $0x15e8] sm:$0xff] %v5889
        %6914 = vst [vmem:[%s256 + $0x15f0] sm:$0xff] %v5890
        %6915 = vst [vmem:[%s256 + $0x15f8] sm:$0xff] %v5891
        %6916 = vst [vmem:[%s256 + $0x1600] sm:$0xff] %v5892
        %6917 = vst [vmem:[%s256 + $0x1608] sm:$0xff] %v5893
        %6918 = vst [vmem:[%s256 + $0x1610] sm:$0xff] %v5894
        %6919 = vst [vmem:[%s256 + $0x1618] sm:$0xff] %v5895
        %6920 = vst [vmem:[%s256 + $0x1620] sm:$0xff] %v5896
        %6921 = vst [vmem:[%s256 + $0x1628] sm:$0xff] %v5897
        %6922 = vst [vmem:[%s256 + $0x1630] sm:$0xff] %v5898
        %6923 = vst [vmem:[%s256 + $0x1638] sm:$0xff] %v5899
        %6924 = vst [vmem:[%s256 + $0x1640] sm:$0xff] %v5900
        %6925 = vst [vmem:[%s256 + $0x1648] sm:$0xff] %v5901
        %6926 = vst [vmem:[%s256 + $0x1650] sm:$0xff] %v5902
        %6927 = vst [vmem:[%s256 + $0x1658] sm:$0xff] %v5903
        %6928 = vst [vmem:[%s256 + $0x1660] sm:$0xff] %v5904
        %6929 = vst [vmem:[%s256 + $0x1668] sm:$0xff] %v5905
        %6930 = vst [vmem:[%s256 + $0x1670] sm:$0xff] %v5906
        %6931 = vst [vmem:[%s256 + $0x1678] sm:$0xff] %v5907
        %6932 = vst [vmem:[%s256 + $0x1680] sm:$0xff] %v5908
        %6933 = vst [vmem:[%s256 + $0x1688] sm:$0xff] %v5909
        %6934 = vst [vmem:[%s256 + $0x1690] sm:$0xff] %v5910
        %6935 = vst [vmem:[%s256 + $0x1698] sm:$0xff] %v5911
        %6936 = vst [vmem:[%s256 + $0x16a0] sm:$0xff] %v5912
        %6937 = vst [vmem:[%s256 + $0x16a8] sm:$0xff] %v5913
        %6938 = vst [vmem:[%s256 + $0x16b0] sm:$0xff] %v5914
        %6939 = vst [vmem:[%s256 + $0x16b8] sm:$0xff] %v5915
        %6940 = vst [vmem:[%s256 + $0x16c0] sm:$0xff] %v5916
        %6941 = vst [vmem:[%s256 + $0x16c8] sm:$0xff] %v5917
        %6942 = vst [vmem:[%s256 + $0x16d0] sm:$0xff] %v5918
        %6943 = vst [vmem:[%s256 + $0x16d8] sm:$0xff] %v5919
        %6944 = vst [vmem:[%s256 + $0x16e0] sm:$0xff] %v5920
        %6945 = vst [vmem:[%s256 + $0x16e8] sm:$0xff] %v5921
        %6946 = vst [vmem:[%s256 + $0x16f0] sm:$0xff] %v5922
        %6947 = vst [vmem:[%s256 + $0x16f8] sm:$0xff] %v5923
        %6948 = vst [vmem:[%s256 + $0x1700] sm:$0xff] %v5924
        %6949 = vst [vmem:[%s256 + $0x1708] sm:$0xff] %v5925
        %6950 = vst [vmem:[%s256 + $0x1710] sm:$0xff] %v5926
        %6951 = vst [vmem:[%s256 + $0x1718] sm:$0xff] %v5927
        %6952 = vst [vmem:[%s256 + $0x1720] sm:$0xff] %v5928
        %6953 = vst [vmem:[%s256 + $0x1728] sm:$0xff] %v5929
        %6954 = vst [vmem:[%s256 + $0x1730] sm:$0xff] %v5930
        %6955 = vst [vmem:[%s256 + $0x1738] sm:$0xff] %v5931
        %6956 = vst [vmem:[%s256 + $0x1740] sm:$0xff] %v5932
        %6957 = vst [vmem:[%s256 + $0x1748] sm:$0xff] %v5933
        %6958 = vst [vmem:[%s256 + $0x1750] sm:$0xff] %v5934
        %6959 = vst [vmem:[%s256 + $0x1758] sm:$0xff] %v5935
        %6960 = vst [vmem:[%s256 + $0x1760] sm:$0xff] %v5936
        %6961 = vst [vmem:[%s256 + $0x1768] sm:$0xff] %v5937
        %6962 = vst [vmem:[%s256 + $0x1770] sm:$0xff] %v5938
        %6963 = vst [vmem:[%s256 + $0x1778] sm:$0xff] %v5939
        %6964 = vst [vmem:[%s256 + $0x1780] sm:$0xff] %v5940
        %6965 = vst [vmem:[%s256 + $0x1788] sm:$0xff] %v5941
        %6966 = vst [vmem:[%s256 + $0x1790] sm:$0xff] %v5942
        %6967 = vst [vmem:[%s256 + $0x1798] sm:$0xff] %v5943
        %6968 = vst [vmem:[%s256 + $0x17a0] sm:$0xff] %v5944
        %6969 = vst [vmem:[%s256 + $0x17a8] sm:$0xff] %v5945
        %6970 = vst [vmem:[%s256 + $0x17b0] sm:$0xff] %v5946
        %6971 = vst [vmem:[%s256 + $0x17b8] sm:$0xff] %v5947
        %6972 = vst [vmem:[%s256 + $0x17c0] sm:$0xff] %v5948
        %6973 = vst [vmem:[%s256 + $0x17c8] sm:$0xff] %v5949
        %6974 = vst [vmem:[%s256 + $0x17d0] sm:$0xff] %v5950
        %6975 = vst [vmem:[%s256 + $0x17d8] sm:$0xff] %v5951
        %6976 = vst [vmem:[%s256 + $0x17e0] sm:$0xff] %v5952
        %6977 = vst [vmem:[%s256 + $0x17e8] sm:$0xff] %v5953
        %6978 = vst [vmem:[%s256 + $0x17f0] sm:$0xff] %v5954
        %6979 = vst [vmem:[%s256 + $0x17f8] sm:$0xff] %v5955
        %6980 = vst [vmem:[%s256 + $0x1800] sm:$0xff] %v5956
        %6981 = vst [vmem:[%s256 + $0x1808] sm:$0xff] %v5957
        %6982 = vst [vmem:[%s256 + $0x1810] sm:$0xff] %v5958
        %6983 = vst [vmem:[%s256 + $0x1818] sm:$0xff] %v5959
        %6984 = vst [vmem:[%s256 + $0x1820] sm:$0xff] %v5960
        %6985 = vst [vmem:[%s256 + $0x1828] sm:$0xff] %v5961
        %6986 = vst [vmem:[%s256 + $0x1830] sm:$0xff] %v5962
        %6987 = vst [vmem:[%s256 + $0x1838] sm:$0xff] %v5963
        %6988 = vst [vmem:[%s256 + $0x1840] sm:$0xff] %v5964
        %6989 = vst [vmem:[%s256 + $0x1848] sm:$0xff] %v5965
        %6990 = vst [vmem:[%s256 + $0x1850] sm:$0xff] %v5966
        %6991 = vst [vmem:[%s256 + $0x1858] sm:$0xff] %v5967
        %6992 = vst [vmem:[%s256 + $0x1860] sm:$0xff] %v5968
        %6993 = vst [vmem:[%s256 + $0x1868] sm:$0xff] %v5969
        %6994 = vst [vmem:[%s256 + $0x1870] sm:$0xff] %v5970
        %6995 = vst [vmem:[%s256 + $0x1878] sm:$0xff] %v5971
        %6996 = vst [vmem:[%s256 + $0x1880] sm:$0xff] %v5972
        %6997 = vst [vmem:[%s256 + $0x1888] sm:$0xff] %v5973
        %6998 = vst [vmem:[%s256 + $0x1890] sm:$0xff] %v5974
        %6999 = vst [vmem:[%s256 + $0x1898] sm:$0xff] %v5975
        %7000 = vst [vmem:[%s256 + $0x18a0] sm:$0xff] %v5976
        %7001 = vst [vmem:[%s256 + $0x18a8] sm:$0xff] %v5977
        %7002 = vst [vmem:[%s256 + $0x18b0] sm:$0xff] %v5978
        %7003 = vst [vmem:[%s256 + $0x18b8] sm:$0xff] %v5979
        %7004 = vst [vmem:[%s256 + $0x18c0] sm:$0xff] %v5980
        %7005 = vst [vmem:[%s256 + $0x18c8] sm:$0xff] %v5981
        %7006 = vst [vmem:[%s256 + $0x18d0] sm:$0xff] %v5982
        %7007 = vst [vmem:[%s256 + $0x18d8] sm:$0xff] %v5983
        %7008 = vst [vmem:[%s256 + $0x18e0] sm:$0xff] %v5984
        %7009 = vst [vmem:[%s256 + $0x18e8] sm:$0xff] %v5985
        %7010 = vst [vmem:[%s256 + $0x18f0] sm:$0xff] %v5986
        %7011 = vst [vmem:[%s256 + $0x18f8] sm:$0xff] %v5987
        %7012 = vst [vmem:[%s256 + $0x1900] sm:$0xff] %v5988
        %7013 = vst [vmem:[%s256 + $0x1908] sm:$0xff] %v5989
        %7014 = vst [vmem:[%s256 + $0x1910] sm:$0xff] %v5990
        %7015 = vst [vmem:[%s256 + $0x1918] sm:$0xff] %v5991
        %7016 = vst [vmem:[%s256 + $0x1920] sm:$0xff] %v5992
        %7017 = vst [vmem:[%s256 + $0x1928] sm:$0xff] %v5993
        %7018 = vst [vmem:[%s256 + $0x1930] sm:$0xff] %v5994
        %7019 = vst [vmem:[%s256 + $0x1938] sm:$0xff] %v5995
        %7020 = vst [vmem:[%s256 + $0x1940] sm:$0xff] %v5996
        %7021 = vst [vmem:[%s256 + $0x1948] sm:$0xff] %v5997
        %7022 = vst [vmem:[%s256 + $0x1950] sm:$0xff] %v5998
        %7023 = vst [vmem:[%s256 + $0x1958] sm:$0xff] %v5999
        %7024 = vst [vmem:[%s256 + $0x1960] sm:$0xff] %v6000
        %7025 = vst [vmem:[%s256 + $0x1968] sm:$0xff] %v6001
        %7026 = vst [vmem:[%s256 + $0x1970] sm:$0xff] %v6002
        %7027 = vst [vmem:[%s256 + $0x1978] sm:$0xff] %v6003
        %7028 = vst [vmem:[%s256 + $0x1980] sm:$0xff] %v6004
        %7029 = vst [vmem:[%s256 + $0x1988] sm:$0xff] %v6005
        %7030 = vst [vmem:[%s256 + $0x1990] sm:$0xff] %v6006
        %7031 = vst [vmem:[%s256 + $0x1998] sm:$0xff] %v6007
        %7032 = vst [vmem:[%s256 + $0x19a0] sm:$0xff] %v6008
        %7033 = vst [vmem:[%s256 + $0x19a8] sm:$0xff] %v6009
        %7034 = vst [vmem:[%s256 + $0x19b0] sm:$0xff] %v6010
        %7035 = vst [vmem:[%s256 + $0x19b8] sm:$0xff] %v6011
        %7036 = vst [vmem:[%s256 + $0x19c0] sm:$0xff] %v6012
        %7037 = vst [vmem:[%s256 + $0x19c8] sm:$0xff] %v6013
        %7038 = vst [vmem:[%s256 + $0x19d0] sm:$0xff] %v6014
        %7039 = vst [vmem:[%s256 + $0x19d8] sm:$0xff] %v6015
        %7040 = vst [vmem:[%s256 + $0x19e0] sm:$0xff] %v6016
        %7041 = vst [vmem:[%s256 + $0x19e8] sm:$0xff] %v6017
        %7042 = vst [vmem:[%s256 + $0x19f0] sm:$0xff] %v6018
        %7043 = vst [vmem:[%s256 + $0x19f8] sm:$0xff] %v6019
        %7044 = vst [vmem:[%s256 + $0x1a00] sm:$0xff] %v6020
        %7045 = vst [vmem:[%s256 + $0x1a08] sm:$0xff] %v6021
        %7046 = vst [vmem:[%s256 + $0x1a10] sm:$0xff] %v6022
        %7047 = vst [vmem:[%s256 + $0x1a18] sm:$0xff] %v6023
        %7048 = vst [vmem:[%s256 + $0x1a20] sm:$0xff] %v6024
        %7049 = vst [vmem:[%s256 + $0x1a28] sm:$0xff] %v6025
        %7050 = vst [vmem:[%s256 + $0x1a30] sm:$0xff] %v6026
        %7051 = vst [vmem:[%s256 + $0x1a38] sm:$0xff] %v6027
        %7052 = vst [vmem:[%s256 + $0x1a40] sm:$0xff] %v6028
        %7053 = vst [vmem:[%s256 + $0x1a48] sm:$0xff] %v6029
        %7054 = vst [vmem:[%s256 + $0x1a50] sm:$0xff] %v6030
        %7055 = vst [vmem:[%s256 + $0x1a58] sm:$0xff] %v6031
        %7056 = vst [vmem:[%s256 + $0x1a60] sm:$0xff] %v6032
        %7057 = vst [vmem:[%s256 + $0x1a68] sm:$0xff] %v6033
        %7058 = vst [vmem:[%s256 + $0x1a70] sm:$0xff] %v6034
        %7059 = vst [vmem:[%s256 + $0x1a78] sm:$0xff] %v6035
        %7060 = vst [vmem:[%s256 + $0x1a80] sm:$0xff] %v6036
        %7061 = vst [vmem:[%s256 + $0x1a88] sm:$0xff] %v6037
        %7062 = vst [vmem:[%s256 + $0x1a90] sm:$0xff] %v6038
        %7063 = vst [vmem:[%s256 + $0x1a98] sm:$0xff] %v6039
        %7064 = vst [vmem:[%s256 + $0x1aa0] sm:$0xff] %v6040
        %7065 = vst [vmem:[%s256 + $0x1aa8] sm:$0xff] %v6041
        %7066 = vst [vmem:[%s256 + $0x1ab0] sm:$0xff] %v6042
        %7067 = vst [vmem:[%s256 + $0x1ab8] sm:$0xff] %v6043
        %7068 = vst [vmem:[%s256 + $0x1ac0] sm:$0xff] %v6044
        %7069 = vst [vmem:[%s256 + $0x1ac8] sm:$0xff] %v6045
        %7070 = vst [vmem:[%s256 + $0x1ad0] sm:$0xff] %v6046
        %7071 = vst [vmem:[%s256 + $0x1ad8] sm:$0xff] %v6047
        %7072 = vst [vmem:[%s256 + $0x1ae0] sm:$0xff] %v6048
        %7073 = vst [vmem:[%s256 + $0x1ae8] sm:$0xff] %v6049
        %7074 = vst [vmem:[%s256 + $0x1af0] sm:$0xff] %v6050
        %7075 = vst [vmem:[%s256 + $0x1af8] sm:$0xff] %v6051
        %7076 = vst [vmem:[%s256 + $0x1b00] sm:$0xff] %v6052
        %7077 = vst [vmem:[%s256 + $0x1b08] sm:$0xff] %v6053
        %7078 = vst [vmem:[%s256 + $0x1b10] sm:$0xff] %v6054
        %7079 = vst [vmem:[%s256 + $0x1b18] sm:$0xff] %v6055
        %7080 = vst [vmem:[%s256 + $0x1b20] sm:$0xff] %v6056
        %7081 = vst [vmem:[%s256 + $0x1b28] sm:$0xff] %v6057
        %7082 = vst [vmem:[%s256 + $0x1b30] sm:$0xff] %v6058
        %7083 = vst [vmem:[%s256 + $0x1b38] sm:$0xff] %v6059
        %7084 = vst [vmem:[%s256 + $0x1b40] sm:$0xff] %v6060
        %7085 = vst [vmem:[%s256 + $0x1b48] sm:$0xff] %v6061
        %7086 = vst [vmem:[%s256 + $0x1b50] sm:$0xff] %v6062
        %7087 = vst [vmem:[%s256 + $0x1b58] sm:$0xff] %v6063
        %7088 = vst [vmem:[%s256 + $0x1b60] sm:$0xff] %v6064
        %7089 = vst [vmem:[%s256 + $0x1b68] sm:$0xff] %v6065
        %7090 = vst [vmem:[%s256 + $0x1b70] sm:$0xff] %v6066
        %7091 = vst [vmem:[%s256 + $0x1b78] sm:$0xff] %v6067
        %7092 = vst [vmem:[%s256 + $0x1b80] sm:$0xff] %v6068
        %7093 = vst [vmem:[%s256 + $0x1b88] sm:$0xff] %v6069
        %7094 = vst [vmem:[%s256 + $0x1b90] sm:$0xff] %v6070
        %7095 = vst [vmem:[%s256 + $0x1b98] sm:$0xff] %v6071
        %7096 = vst [vmem:[%s256 + $0x1ba0] sm:$0xff] %v6072
        %7097 = vst [vmem:[%s256 + $0x1ba8] sm:$0xff] %v6073
        %7098 = vst [vmem:[%s256 + $0x1bb0] sm:$0xff] %v6074
        %7099 = vst [vmem:[%s256 + $0x1bb8] sm:$0xff] %v6075
        %7100 = vst [vmem:[%s256 + $0x1bc0] sm:$0xff] %v6076
        %7101 = vst [vmem:[%s256 + $0x1bc8] sm:$0xff] %v6077
        %7102 = vst [vmem:[%s256 + $0x1bd0] sm:$0xff] %v6078
        %7103 = vst [vmem:[%s256 + $0x1bd8] sm:$0xff] %v6079
        %7104 = vst [vmem:[%s256 + $0x1be0] sm:$0xff] %v6080
        %7105 = vst [vmem:[%s256 + $0x1be8] sm:$0xff] %v6081
        %7106 = vst [vmem:[%s256 + $0x1bf0] sm:$0xff] %v6082
        %7107 = vst [vmem:[%s256 + $0x1bf8] sm:$0xff] %v6083
        %7108 = vst [vmem:[%s256 + $0x1c00] sm:$0xff] %v6084
        %7109 = vst [vmem:[%s256 + $0x1c08] sm:$0xff] %v6085
        %7110 = vst [vmem:[%s256 + $0x1c10] sm:$0xff] %v6086
        %7111 = vst [vmem:[%s256 + $0x1c18] sm:$0xff] %v6087
        %7112 = vst [vmem:[%s256 + $0x1c20] sm:$0xff] %v6088
        %7113 = vst [vmem:[%s256 + $0x1c28] sm:$0xff] %v6089
        %7114 = vst [vmem:[%s256 + $0x1c30] sm:$0xff] %v6090
        %7115 = vst [vmem:[%s256 + $0x1c38] sm:$0xff] %v6091
        %7116 = vst [vmem:[%s256 + $0x1c40] sm:$0xff] %v6092
        %7117 = vst [vmem:[%s256 + $0x1c48] sm:$0xff] %v6093
        %7118 = vst [vmem:[%s256 + $0x1c50] sm:$0xff] %v6094
        %7119 = vst [vmem:[%s256 + $0x1c58] sm:$0xff] %v6095
        %7120 = vst [vmem:[%s256 + $0x1c60] sm:$0xff] %v6096
        %7121 = vst [vmem:[%s256 + $0x1c68] sm:$0xff] %v6097
        %7122 = vst [vmem:[%s256 + $0x1c70] sm:$0xff] %v6098
        %7123 = vst [vmem:[%s256 + $0x1c78] sm:$0xff] %v6099
        %7124 = vst [vmem:[%s256 + $0x1c80] sm:$0xff] %v6100
        %7125 = vst [vmem:[%s256 + $0x1c88] sm:$0xff] %v6101
        %7126 = vst [vmem:[%s256 + $0x1c90] sm:$0xff] %v6102
        %7127 = vst [vmem:[%s256 + $0x1c98] sm:$0xff] %v6103
        %7128 = vst [vmem:[%s256 + $0x1ca0] sm:$0xff] %v6104
        %7129 = vst [vmem:[%s256 + $0x1ca8] sm:$0xff] %v6105
        %7130 = vst [vmem:[%s256 + $0x1cb0] sm:$0xff] %v6106
        %7131 = vst [vmem:[%s256 + $0x1cb8] sm:$0xff] %v6107
        %7132 = vst [vmem:[%s256 + $0x1cc0] sm:$0xff] %v6108
        %7133 = vst [vmem:[%s256 + $0x1cc8] sm:$0xff] %v6109
        %7134 = vst [vmem:[%s256 + $0x1cd0] sm:$0xff] %v6110
        %7135 = vst [vmem:[%s256 + $0x1cd8] sm:$0xff] %v6111
        %7136 = vst [vmem:[%s256 + $0x1ce0] sm:$0xff] %v6112
        %7137 = vst [vmem:[%s256 + $0x1ce8] sm:$0xff] %v6113
        %7138 = vst [vmem:[%s256 + $0x1cf0] sm:$0xff] %v6114
        %7139 = vst [vmem:[%s256 + $0x1cf8] sm:$0xff] %v6115
        %7140 = vst [vmem:[%s256 + $0x1d00] sm:$0xff] %v6116
        %7141 = vst [vmem:[%s256 + $0x1d08] sm:$0xff] %v6117
        %7142 = vst [vmem:[%s256 + $0x1d10] sm:$0xff] %v6118
        %7143 = vst [vmem:[%s256 + $0x1d18] sm:$0xff] %v6119
        %7144 = vst [vmem:[%s256 + $0x1d20] sm:$0xff] %v6120
        %7145 = vst [vmem:[%s256 + $0x1d28] sm:$0xff] %v6121
        %7146 = vst [vmem:[%s256 + $0x1d30] sm:$0xff] %v6122
        %7147 = vst [vmem:[%s256 + $0x1d38] sm:$0xff] %v6123
        %7148 = vst [vmem:[%s256 + $0x1d40] sm:$0xff] %v6124
        %7149 = vst [vmem:[%s256 + $0x1d48] sm:$0xff] %v6125
        %7150 = vst [vmem:[%s256 + $0x1d50] sm:$0xff] %v6126
        %7151 = vst [vmem:[%s256 + $0x1d58] sm:$0xff] %v6127
        %7152 = vst [vmem:[%s256 + $0x1d60] sm:$0xff] %v6128
        %7153 = vst [vmem:[%s256 + $0x1d68] sm:$0xff] %v6129
        %7154 = vst [vmem:[%s256 + $0x1d70] sm:$0xff] %v6130
        %7155 = vst [vmem:[%s256 + $0x1d78] sm:$0xff] %v6131
        %7156 = vst [vmem:[%s256 + $0x1d80] sm:$0xff] %v6132
        %7157 = vst [vmem:[%s256 + $0x1d88] sm:$0xff] %v6133
        %7158 = vst [vmem:[%s256 + $0x1d90] sm:$0xff] %v6134
        %7159 = vst [vmem:[%s256 + $0x1d98] sm:$0xff] %v6135
        %7160 = vst [vmem:[%s256 + $0x1da0] sm:$0xff] %v6136
        %7161 = vst [vmem:[%s256 + $0x1da8] sm:$0xff] %v6137
        %7162 = vst [vmem:[%s256 + $0x1db0] sm:$0xff] %v6138
        %7163 = vst [vmem:[%s256 + $0x1db8] sm:$0xff] %v6139
        %7164 = vst [vmem:[%s256 + $0x1dc0] sm:$0xff] %v6140
        %7165 = vst [vmem:[%s256 + $0x1dc8] sm:$0xff] %v6141
        %7166 = vst [vmem:[%s256 + $0x1dd0] sm:$0xff] %v6142
        %7167 = vst [vmem:[%s256 + $0x1dd8] sm:$0xff] %v6143
        %7168 = vst [vmem:[%s256 + $0x1de0] sm:$0xff] %v6144
        %7169 = vst [vmem:[%s256 + $0x1de8] sm:$0xff] %v6145
        %7170 = vst [vmem:[%s256 + $0x1df0] sm:$0xff] %v6146
        %7171 = vst [vmem:[%s256 + $0x1df8] sm:$0xff] %v6147
        %7172 = vst [vmem:[%s256 + $0x1e00] sm:$0xff] %v6148
        %7173 = vst [vmem:[%s256 + $0x1e08] sm:$0xff] %v6149
        %7174 = vst [vmem:[%s256 + $0x1e10] sm:$0xff] %v6150
        %7175 = vst [vmem:[%s256 + $0x1e18] sm:$0xff] %v6151
        %7176 = vst [vmem:[%s256 + $0x1e20] sm:$0xff] %v6152
        %7177 = vst [vmem:[%s256 + $0x1e28] sm:$0xff] %v6153
        %7178 = vst [vmem:[%s256 + $0x1e30] sm:$0xff] %v6154
        %7179 = vst [vmem:[%s256 + $0x1e38] sm:$0xff] %v6155
        %7180 = vst [vmem:[%s256 + $0x1e40] sm:$0xff] %v6156
        %7181 = vst [vmem:[%s256 + $0x1e48] sm:$0xff] %v6157
        %7182 = vst [vmem:[%s256 + $0x1e50] sm:$0xff] %v6158
        %7183 = vst [vmem:[%s256 + $0x1e58] sm:$0xff] %v6159
        %7184 = vst [vmem:[%s256 + $0x1e60] sm:$0xff] %v6160
        %7185 = vst [vmem:[%s256 + $0x1e68] sm:$0xff] %v6161
        %7186 = vst [vmem:[%s256 + $0x1e70] sm:$0xff] %v6162
        %7187 = vst [vmem:[%s256 + $0x1e78] sm:$0xff] %v6163
        %7188 = vst [vmem:[%s256 + $0x1e80] sm:$0xff] %v6164
        %7189 = vst [vmem:[%s256 + $0x1e88] sm:$0xff] %v6165
        %7190 = vst [vmem:[%s256 + $0x1e90] sm:$0xff] %v6166
        %7191 = vst [vmem:[%s256 + $0x1e98] sm:$0xff] %v6167
        %7192 = vst [vmem:[%s256 + $0x1ea0] sm:$0xff] %v6168
        %7193 = vst [vmem:[%s256 + $0x1ea8] sm:$0xff] %v6169
        %7194 = vst [vmem:[%s256 + $0x1eb0] sm:$0xff] %v6170
        %7195 = vst [vmem:[%s256 + $0x1eb8] sm:$0xff] %v6171
        %7196 = vst [vmem:[%s256 + $0x1ec0] sm:$0xff] %v6172
        %7197 = vst [vmem:[%s256 + $0x1ec8] sm:$0xff] %v6173
        %7198 = vst [vmem:[%s256 + $0x1ed0] sm:$0xff] %v6174
        %7199 = vst [vmem:[%s256 + $0x1ed8] sm:$0xff] %v6175
        %7200 = vst [vmem:[%s256 + $0x1ee0] sm:$0xff] %v6176
        %7201 = vst [vmem:[%s256 + $0x1ee8] sm:$0xff] %v6177
        %7202 = vst [vmem:[%s256 + $0x1ef0] sm:$0xff] %v6178
        %7203 = vst [vmem:[%s256 + $0x1ef8] sm:$0xff] %v6179
        %7204 = vst [vmem:[%s256 + $0x1f00] sm:$0xff] %v6180
        %7205 = vst [vmem:[%s256 + $0x1f08] sm:$0xff] %v6181
        %7206 = vst [vmem:[%s256 + $0x1f10] sm:$0xff] %v6182
        %7207 = vst [vmem:[%s256 + $0x1f18] sm:$0xff] %v6183
        %7208 = vst [vmem:[%s256 + $0x1f20] sm:$0xff] %v6184
        %7209 = vst [vmem:[%s256 + $0x1f28] sm:$0xff] %v6185
        %7210 = vst [vmem:[%s256 + $0x1f30] sm:$0xff] %v6186
        %7211 = vst [vmem:[%s256 + $0x1f38] sm:$0xff] %v6187
        %7212 = vst [vmem:[%s256 + $0x1f40] sm:$0xff] %v6188
        %7213 = vst [vmem:[%s256 + $0x1f48] sm:$0xff] %v6189
        %7214 = vst [vmem:[%s256 + $0x1f50] sm:$0xff] %v6190
        %7215 = vst [vmem:[%s256 + $0x1f58] sm:$0xff] %v6191
        %7216 = vst [vmem:[%s256 + $0x1f60] sm:$0xff] %v6192
        %7217 = vst [vmem:[%s256 + $0x1f68] sm:$0xff] %v6193
        %7218 = vst [vmem:[%s256 + $0x1f70] sm:$0xff] %v6194
        %7219 = vst [vmem:[%s256 + $0x1f78] sm:$0xff] %v6195
        %7220 = vst [vmem:[%s256 + $0x1f80] sm:$0xff] %v6196
        %7221 = vst [vmem:[%s256 + $0x1f88] sm:$0xff] %v6197
        %7222 = vst [vmem:[%s256 + $0x1f90] sm:$0xff] %v6198
        %7223 = vst [vmem:[%s256 + $0x1f98] sm:$0xff] %v6199
        %7224 = vst [vmem:[%s256 + $0x1fa0] sm:$0xff] %v6200
        %7225 = vst [vmem:[%s256 + $0x1fa8] sm:$0xff] %v6201
        %7226 = vst [vmem:[%s256 + $0x1fb0] sm:$0xff] %v6202
        %7227 = vst [vmem:[%s256 + $0x1fb8] sm:$0xff] %v6203
        %7228 = vst [vmem:[%s256 + $0x1fc0] sm:$0xff] %v6204
        %7229 = vst [vmem:[%s256 + $0x1fc8] sm:$0xff] %v6205
        %7230 = vst [vmem:[%s256 + $0x1fd0] sm:$0xff] %v6206
        %7231 = vst [vmem:[%s256 + $0x1fd8] sm:$0xff] %v6207
        %7232 = vst [vmem:[%s256 + $0x1fe0] sm:$0xff] %v6208
        %7233 = vst [vmem:[%s256 + $0x1fe8] sm:$0xff] %v6209
        %7234 = vst [vmem:[%s256 + $0x1ff0] sm:$0xff] %v6210
        %7235 = vst [vmem:[%s256 + $0x1ff8] sm:$0xff] %v6211
        %s7236 = sand.u32 %s123, 1
        %s7237 = scalar_lea.sflag [#allocation4], %s7236
        %s7238 = sand.u32 %s123, 1
        %s7239 = smul.addr %s7238, 8192
        %s7240 = scalar_lea.vmem [#allocation7], %s7239
        // Predicated region
        $region41: #{dino_head_forward.3} parent=31 // pred_check
          %p7241 = pneg %p133
        $region42: #{dino_head_forward.3} parent=31 // pred_check_branch
          %7243 = sbr.rel (%p7241) target = $region44
        $region43: #{dino_head_forward.3} parent=31 // pred_region
          %s7244 = smul.u32 32, %s28
          %s7245 = smul.u32 32, %s27
          %s7247 = ssub.s32 131072, 131072
          %7248 = vsyncadd %s7237, %s7247
          %s7249 = smul.addr %s7244, 64
          %s7250 = sadd.s32 %s7245, %s7249
          %s7251 = smul.addr %s7250, 128
          %s7252 = scalar_lea.hbm %s3, %s7251
          %s7253 = sshll.u32 %s7240, 4
          %s7254 = int_to_ptr.vmem [resolvable:$true] %s7253
          %7259 = dma.vmem_to_hbm [thread:$0]  %s7254, 131072, %s7252, %s7237, 4096, 8192, 256
        $region44: #{dino_head_forward.3} parent=31 // pred_fallthru
          _
      $region32: #{dino_head_forward.3} parent=5 // pred_fallthru
        _
      %p7260 = scmp.le.s32.totalorder 2, %s18
      // Predicated region
      $region45: #{dino_head_forward.3} parent=5 // pred_check
        %p7261 = pneg %p7260
      $region46: #{dino_head_forward.3} parent=5 // pred_check_branch
        %7263 = sbr.rel (%p7261) target = $region48
      $region47: #{dino_head_forward.3} parent=5 // pred_region
        %s7264 = ssub.s32 %s18, 2
        // Predicated region
        $region49: #{dino_head_forward.3} parent=47 // pred_check
          %p7265 = pneg %p139
        $region50: #{dino_head_forward.3} parent=47 // pred_check_branch
          %7267 = sbr.rel (%p7265) target = $region52
        $region51: #{dino_head_forward.3} parent=47 // pred_region
          %s7268 = sand.u32 %s124, 1
          %s7269 = scalar_lea.sflag [#allocation4], %s7268
          %s7270 = sand.u32 %s124, 1
          %s7271 = smul.addr %s7270, 8192
          %s7272 = scalar_lea.vmem [#allocation7], %s7271
          %7273 = dma.done %s7269, 131072
        $region52: #{dino_head_forward.3} parent=47 // pred_fallthru
          _
      $region48: #{dino_head_forward.3} parent=5 // pred_fallthru
        _
    $region6: #{dino_head_forward.3} parent=1 // loop_footer
      %s22 = sadd.s32 1, %s18
    $region7: #{dino_head_forward.3} parent=1 // loop_footer_branch
      %17 = sbr.rel target = $region3
    $region8: #{dino_head_forward.3} parent=1 // loop_exit
      _
    %7274 = vsyncpa [#allocation3], 1
    %s7275 = scalar_lea.sflag [#allocation3], 1
    %7276 = vsyncpa %s7275, 1
    %7277 = vsyncpa [#allocation6], 1
    %s7278 = scalar_lea.sflag [#allocation6], 1
    %7279 = vsyncpa %s7278, 1
    %7280 = vsyncpa [#allocation4], 1
    %s7281 = scalar_lea.sflag [#allocation4], 1
    %7282 = vsyncpa %s7281, 1

</llo_original>
